<compile_context>
chip_gen: v7x
topology: tpu7x:2x2x1
jax: 0.10.0
libtpu: 0.0.40
codegen_flags: <defaults>
</compile_context>

<pallas_src>
import jax
import jax.numpy as jnp
import numpy as np
from jax.experimental import pallas as pl
from jax.experimental.pallas import tpu as pltpu


# ----------------------------------------------------------------------------
# Small helpers
# ----------------------------------------------------------------------------
def _round_up(x, m):
    return ((x + m - 1) // m) * m


def _pad_gate_cols(w, H, Hp):
    """(R, 4H) -> (R, 4Hp): place each PyTorch gate block [i|f|g|o] at a
    128-aligned column offset, zero elsewhere."""
    R = w.shape[0]
    out = jnp.zeros((R, 4 * Hp), w.dtype)
    for k in range(4):
        out = out.at[:, k * Hp:k * Hp + H].set(w[:, k * H:(k + 1) * H])
    return out


def _pad_whh(w, H, Hp):
    """(H, 4H) -> (Hp, 4Hp): zero-padded recurrent weights (padded h lanes
    stay exactly 0: gate preact 0 -> i=f=o=0.5, g=0 -> c_pad=h_pad=0)."""
    return jnp.zeros((Hp, 4 * Hp), w.dtype).at[:H, :].set(_pad_gate_cols(w, H, Hp))


# ----------------------------------------------------------------------------
# Kernel 1: fused bidirectional LSTM recurrence.
#   Grid = (time-chunk,).  Each grid step processes TCH timesteps of BOTH
#   directions (forward chunk t, backward chunk nTB-1-t walked in reverse).
#   Per step:  gates = x @ Wih + h @ Whh + b  (PyTorch gate order i,f,g,o,
#   each Hp lanes wide).  Masked packed-sequence semantics: padded steps emit
#   zeros and do not advance h/c.
# ----------------------------------------------------------------------------
def bilstm_kernel(xf_ref, xb_ref, mf_ref, mb_ref, wih_ref, whh_ref, bias_ref,
                  of_ref, ob_ref, hf_sc, hb_sc, cf_sc, cb_sc):
    t = pl.program_id(0)

    @pl.when(t == 0)
    def _():                    # reset recurrent state at the start of the sweep
        hf_sc[...] = jnp.zeros_like(hf_sc)
        hb_sc[...] = jnp.zeros_like(hb_sc)
        cf_sc[...] = jnp.zeros_like(cf_sc)
        cb_sc[...] = jnp.zeros_like(cb_sc)

    TC, B, Hp = of_ref.shape
    f32 = jnp.float32

    # Hoisted per-chunk mask loads + (1 - m) (off the serial chain).
    m_f = mf_ref[...]                               # (TC, B, 1) f32
    m_b = mb_ref[...]
    nm_f = 1.0 - m_f
    nm_b = 1.0 - m_b

    h_f, h_b = hf_sc[...], hb_sc[...]               # f32 state
    c_f, c_b = cf_sc[...], cb_sc[...]

    def cell(gates, c_prev):                        # all math in f32
        i_g = jax.nn.sigmoid(gates[:, 0 * Hp:1 * Hp])
        f_g = jax.nn.sigmoid(gates[:, 1 * Hp:2 * Hp])
        g_g = jnp.tanh(gates[:, 2 * Hp:3 * Hp])
        o_g = jax.nn.sigmoid(gates[:, 3 * Hp:4 * Hp])
        c_new = f_g * c_prev + i_g * g_g
        h_new = o_g * jnp.tanh(c_new)
        return h_new, c_new

    # Fully unrolled chunk loop (TC small & static).  The two directions are
    # independent dependency chains, so their matmuls / EUP work overlap.
    for i in range(TC):
        j = TC - 1 - i          # backward direction's local index in its chunk

        # input->gates (bf16 x bf16 -> f32); not on the h chain, overlaps freely
        gx_f = jnp.dot(xf_ref[i], wih_ref[0], preferred_element_type=f32)
        gx_b = jnp.dot(xb_ref[j], wih_ref[1], preferred_element_type=f32)
        # recurrent matmuls (the serial chain); h cast to bf16 for the MXU,
        # state itself stays f32
        gh_f = jnp.dot(h_f.astype(jnp.bfloat16), whh_ref[0],
                       preferred_element_type=f32)
        gh_b = jnp.dot(h_b.astype(jnp.bfloat16), whh_ref[1],
                       preferred_element_type=f32)

        h_f_new, c_f_new = cell(gx_f + gh_f + bias_ref[0], c_f)
        h_b_new, c_b_new = cell(gx_b + gh_b + bias_ref[1], c_b)

        # packed-sequence mask: padded steps emit zeros and freeze the state
        mf_i, nf_i = m_f[i], nm_f[i]                # (B, 1)
        mb_i, nb_i = m_b[j], nm_b[j]
        ho_f = mf_i * h_f_new
        ho_b = mb_i * h_b_new
        of_ref[i] = ho_f.astype(of_ref.dtype)
        ob_ref[j] = ho_b.astype(ob_ref.dtype)
        h_f = ho_f + nf_i * h_f
        h_b = ho_b + nb_i * h_b
        c_f = mf_i * c_f_new + nf_i * c_f
        c_b = mb_i * c_b_new + nb_i * c_b

    hf_sc[...], hb_sc[...] = h_f, h_b
    cf_sc[...], cb_sc[...] = c_f, c_b


# ----------------------------------------------------------------------------
# Kernel 2: hidden2tag = Linear(D,D) [BatchNorm folded in] -> ReLU
#           -> Dropout(identity, inference) -> Linear(D, n_out), row-tiled.
#   The first Linear is split over the fwd/bwd feature halves so the two LSTM
#   output buffers are consumed directly (no concat).
# ----------------------------------------------------------------------------
def hidden2tag_kernel(xf_ref, xb_ref, w1f_ref, w1b_ref, b1_ref, w2_ref, b2_ref,
                      o_ref):
    f32 = jnp.float32
    h = (jnp.dot(xf_ref[...], w1f_ref[...], preferred_element_type=f32)
         + jnp.dot(xb_ref[...], w1b_ref[...], preferred_element_type=f32)
         + b1_ref[...])
    h = jnp.maximum(h, 0.0)     # ReLU (BN folded into w1/b1; dropout = identity)
    o_ref[...] = (jnp.dot(h.astype(jnp.bfloat16), w2_ref[...],
                          preferred_element_type=f32)
                  + b2_ref[...]).astype(o_ref.dtype)


# ----------------------------------------------------------------------------
# Wrapper
# ----------------------------------------------------------------------------
def entity_detection_forward(seqs, lengths, p):
    B, T = seqs.shape
    E = p["embedding"].shape[1]
    H = p["whh"].shape[1]
    D = 2 * H
    n_out = p["w2"].shape[1]
    eps = 1e-5

    Ep = _round_up(E, 128)      # lane-dense embedding width
    Hp = _round_up(H, 128)      # lane-dense LSTM hidden width
    Dp = _round_up(D, 128)      # lane-dense MLP hidden width
    Kp = _round_up(n_out, 128)  # lane-dense tag width

    TCH = 8                     # fixed timesteps per grid step
    Tp = _round_up(T, TCH)      # padded time extent (mask=0 on padded steps)
    nTB = Tp // TCH

    # ---- parameters: lane-dense, bf16 weights / f32 biases (one-time glue) --
    emb_tbl = p["embedding"].astype(jnp.bfloat16)

    def pad_wih(w):             # (E, 4H) -> (Ep, 4Hp)
        return jnp.zeros((Ep, 4 * Hp), jnp.float32).at[:E].set(
            _pad_gate_cols(w, H, Hp))

    wih_p = jnp.stack([pad_wih(p["wih"][0]),
                       pad_wih(p["wih"][1])]).astype(jnp.bfloat16)   # (2,Ep,4Hp)
    whh_p = jnp.stack([_pad_whh(p["whh"][0], H, Hp),
                       _pad_whh(p["whh"][1], H, Hp)]).astype(jnp.bfloat16)  # (2,Hp,4Hp)
    bias_p = jnp.stack([_pad_gate_cols(p["bias"][0], H, Hp),
                        _pad_gate_cols(p["bias"][1], H, Hp)])        # (2,1,4Hp) f32

    # Fold BatchNorm1d (inference: running statistics) into the first Linear.
    scale = p["bn_gamma"] * jax.lax.rsqrt(p["bn_var"] + eps)         # (1, D)
    w1f = p["w1"] * scale                                            # (D, D)
    b1f = (p["b1"] - p["bn_mean"]) * scale + p["bn_beta"]            # (1, D)
    w1a = jnp.zeros((Hp, Dp), jnp.float32).at[:H, :D].set(w1f[:H]).astype(jnp.bfloat16)
    w1b = jnp.zeros((Hp, Dp), jnp.float32).at[:H, :D].set(w1f[H:]).astype(jnp.bfloat16)
    b1p = jnp.zeros((1, Dp), jnp.float32).at[:, :D].set(b1f)
    w2p = jnp.zeros((Dp, Kp), jnp.float32).at[:D, :n_out].set(p["w2"]).astype(jnp.bfloat16)
    b2p = jnp.zeros((1, Kp), jnp.float32).at[:, :n_out].set(p["b2"])

    # ---- activations: gather straight into time-major, pad, bf16 ------------
    x_tm = jnp.take(emb_tbl, seqs.T, axis=0)                         # (T, B, E) bf16
    x_tm = jnp.pad(x_tm, ((0, Tp - T), (0, 0), (0, Ep - E)))         # (Tp, B, Ep)
    mask = (jnp.arange(T)[None, :] < lengths[:, None]).astype(jnp.float32)  # (B,T)
    mask_tm = jnp.pad(mask.T, ((0, Tp - T), (0, 0)))[:, :, None]     # (Tp, B, 1)

    # ---- Kernel 1: fused bidirectional LSTM recurrence ----------------------
    out_f, out_b = pl.pallas_call(
        bilstm_kernel,
        out_shape=(jax.ShapeDtypeStruct((Tp, B, Hp), jnp.bfloat16),
                   jax.ShapeDtypeStruct((Tp, B, Hp), jnp.bfloat16)),
        grid=(nTB,),
        in_specs=[
            pl.BlockSpec((TCH, B, Ep), lambda t: (t, 0, 0)),             # x, fwd chunk
            pl.BlockSpec((TCH, B, Ep), lambda t: (nTB - 1 - t, 0, 0)),   # x, bwd chunk
            pl.BlockSpec((TCH, B, 1), lambda t: (t, 0, 0)),              # mask, fwd
            pl.BlockSpec((TCH, B, 1), lambda t: (nTB - 1 - t, 0, 0)),    # mask, bwd
            pl.BlockSpec((2, Ep, 4 * Hp), lambda t: (0, 0, 0)),          # Wih (resident)
            pl.BlockSpec((2, Hp, 4 * Hp), lambda t: (0, 0, 0)),          # Whh (resident)
            pl.BlockSpec((2, 1, 4 * Hp), lambda t: (0, 0, 0)),           # bias (resident)
        ],
        out_specs=(pl.BlockSpec((TCH, B, Hp), lambda t: (t, 0, 0)),
                   pl.BlockSpec((TCH, B, Hp), lambda t: (nTB - 1 - t, 0, 0))),
        scratch_shapes=[pltpu.VMEM((B, Hp), jnp.float32) for _ in range(4)],
        compiler_params=pltpu.CompilerParams(
            dimension_semantics=("arbitrary",),      # serial time sweep
            vmem_limit_bytes=32 * 1024 * 1024),
    )(x_tm, x_tm, mask_tm, mask_tm, wih_p, whh_p, bias_p)

    # ---- Kernel 2: hidden2tag MLP over flattened (time-major) rows ----------
    N = Tp * B
    xf_flat = out_f.reshape(N, Hp)                                   # free reshape
    xb_flat = out_b.reshape(N, Hp)
    TM = N if N <= 1024 else 1024                 # N is a multiple of 8 (Tp is)
    scores_p = pl.pallas_call(
        hidden2tag_kernel,
        out_shape=jax.ShapeDtypeStruct((N, Kp), jnp.float32),
        grid=(pl.cdiv(N, TM),),
        in_specs=[pl.BlockSpec((TM, Hp), lambda i: (i, 0)),
                  pl.BlockSpec((TM, Hp), lambda i: (i, 0)),
                  pl.BlockSpec((Hp, Dp), lambda i: (0, 0)),
                  pl.BlockSpec((Hp, Dp), lambda i: (0, 0)),
                  pl.BlockSpec((1, Dp), lambda i: (0, 0)),
                  pl.BlockSpec((Dp, Kp), lambda i: (0, 0)),
                  pl.BlockSpec((1, Kp), lambda i: (0, 0))],
        out_specs=pl.BlockSpec((TM, Kp), lambda i: (i, 0)),
        compiler_params=pltpu.CompilerParams(
            dimension_semantics=("parallel",),
            vmem_limit_bytes=32 * 1024 * 1024),
    )(xf_flat, xb_flat, w1a, w1b, b1p, w2p, b2p)

    # Only the SMALL (T, B, n_out) tensor is sliced / transposed in the wrapper.
    scores = scores_p.reshape(Tp, B, Kp)[:T, :, :n_out]
    return jnp.transpose(scores, (1, 0, 2))                          # (B, T, n_out)


# ----------------------------------------------------------------------------
# Deterministic parameter initialisation (shapes follow the PyTorch module).
# ----------------------------------------------------------------------------
def init_params(key, V, E, H, n_out):
    ks = jax.random.split(key, 9)
    s = 1.0 / np.sqrt(H)
    D = 2 * H
    s1 = 1.0 / np.sqrt(D)
    emb = jax.random.normal(ks[0], (V, E), jnp.float32) * 0.1
    wih = jax.random.uniform(ks[1], (2, E, 4 * H), jnp.float32, -s, s)
    whh = jax.random.uniform(ks[2], (2, H, 4 * H), jnp.float32, -s, s)
    bih = jax.random.uniform(ks[3], (2, 1, 4 * H), jnp.float32, -s, s)
    bhh = jax.random.uniform(ks[4], (2, 1, 4 * H), jnp.float32, -s, s)
    w1 = jax.random.uniform(ks[5], (D, D), jnp.float32, -s1, s1)
    b1 = jax.random.uniform(ks[6], (1, D), jnp.float32, -s1, s1)
    w2 = jax.random.uniform(ks[7], (D, n_out), jnp.float32, -s1, s1)
    b2 = jax.random.uniform(ks[8], (1, n_out), jnp.float32, -s1, s1)
    return dict(
        embedding=emb, wih=wih, whh=whh, bias=bih + bhh,
        w1=w1, b1=b1, w2=w2, b2=b2,
        bn_gamma=jnp.ones((1, D), jnp.float32),
        bn_beta=jnp.zeros((1, D), jnp.float32),
        bn_mean=jnp.zeros((1, D), jnp.float32),
        bn_var=jnp.ones((1, D), jnp.float32),
    )


# ----------------------------------------------------------------------------
# Pure-JAX (f32) reference for correctness checking.
# ----------------------------------------------------------------------------
def reference_forward(seqs, lengths, p):
    emb = jnp.take(p["embedding"], seqs, axis=0).astype(jnp.float32)
    B, T, E = emb.shape
    H = p["whh"].shape[1]
    mask = (jnp.arange(T)[None, :] < lengths[:, None]).astype(jnp.float32)

    def run_dir(d):
        wih, whh, bias = p["wih"][d], p["whh"][d], p["bias"][d]
        h = jnp.zeros((B, H), jnp.float32)
        c = jnp.zeros((B, H), jnp.float32)
        out = [None] * T
        ts = range(T) if d == 0 else range(T - 1, -1, -1)
        for t in ts:
            m = mask[:, t][:, None]
            g = emb[:, t, :] @ wih + h @ whh + bias
            i_g = jax.nn.sigmoid(g[:, :H])
            f_g = jax.nn.sigmoid(g[:, H:2 * H])
            g_g = jnp.tanh(g[:, 2 * H:3 * H])
            o_g = jax.nn.sigmoid(g[:, 3 * H:])
            c_new = f_g * c + i_g * g_g
            h_new = o_g * jnp.tanh(c_new)
            out[t] = m * h_new
            h = m * h_new + (1.0 - m) * h
            c = m * c_new + (1.0 - m) * c
        return jnp.stack(out, axis=1)                    # (B, T, H)

    rnn = jnp.concatenate([run_dir(0), run_dir(1)], axis=-1)   # (B, T, 2H)
    flat = rnn.reshape(B * T, -1)
    h1 = flat @ p["w1"] + p["b1"]
    h1 = (h1 - p["bn_mean"]) * jax.lax.rsqrt(p["bn_var"] + 1e-5) * p["bn_gamma"] + p["bn_beta"]
    h1 = jnp.maximum(h1, 0.0)
    out = h1 @ p["w2"] + p["b2"]
    return out.reshape(B, T, -1)


if __name__ == "__main__":
    B, T, V, E, H, n_out = 2, 8, 50, 32, 32, 5
    key = jax.random.PRNGKey(0)
    kp, ks = jax.random.split(key)
    params = init_params(kp, V, E, H, n_out)

    seqs = jax.random.randint(ks, (B, T), 0, V, dtype=jnp.int32)
    lengths = jnp.array([T, 5], dtype=jnp.int32)   # sorted descending, max == T

    scores = entity_detection_forward(seqs, lengths, params)
    scores = jax.block_until_ready(scores)

    ref = reference_forward(seqs, lengths, params)
    assert scores.shape == (B, T, n_out)
    max_err = float(jnp.max(jnp.abs(scores - ref)))
    # bf16 weights/activations with f32 accumulation -> loosened tolerance.
    assert max_err < 3e-2, f"mismatch vs reference, max abs err = {max_err}"
    print("KERNEL_OK")
</pallas_src>

<mosaic_0001>
module attributes {stable_mosaic.version = 11 : i64} {
  func.func @bilstm_kernel(%arg0: i32, %arg1: memref<8x2x128xbf16, #tpu.memory_space<vmem>>, %arg2: memref<8x2x128xbf16, #tpu.memory_space<vmem>>, %arg3: memref<8x2x1xf32, #tpu.memory_space<vmem>>, %arg4: memref<8x2x1xf32, #tpu.memory_space<vmem>>, %arg5: memref<2x128x512xbf16, #tpu.memory_space<vmem>>, %arg6: memref<2x128x512xbf16, #tpu.memory_space<vmem>>, %arg7: memref<2x1x512xf32, #tpu.memory_space<vmem>>, %arg8: memref<8x2x128xbf16, #tpu.memory_space<vmem>>, %arg9: memref<8x2x128xbf16, #tpu.memory_space<vmem>>, %arg10: memref<2x128xf32, #tpu.memory_space<vmem>>, %arg11: memref<2x128xf32, #tpu.memory_space<vmem>>, %arg12: memref<2x128xf32, #tpu.memory_space<vmem>>, %arg13: memref<2x128xf32, #tpu.memory_space<vmem>>) attributes {dimension_semantics = [#tpu.dimension_semantics<arbitrary>], iteration_bounds = array<i64: 1>, scalar_prefetch = 0 : i64, scratch_operands = 4 : i64, tpu.core_type = #tpu.core_type<tc>, window_params = [{transform_indices = @transform_0, window_bounds = array<i64: 8, 2, 128>}, {transform_indices = @transform_1, window_bounds = array<i64: 8, 2, 128>}, {transform_indices = @transform_2, window_bounds = array<i64: 8, 2, 1>}, {transform_indices = @transform_3, window_bounds = array<i64: 8, 2, 1>}, {pipeline_mode = #tpu.pipeline_mode<synchronous>, transform_indices = @transform_4, window_bounds = array<i64: 2, 128, 512>}, {pipeline_mode = #tpu.pipeline_mode<synchronous>, transform_indices = @transform_5, window_bounds = array<i64: 2, 128, 512>}, {pipeline_mode = #tpu.pipeline_mode<synchronous>, transform_indices = @transform_6, window_bounds = array<i64: 2, 1, 512>}, {transform_indices = @transform_7, window_bounds = array<i64: 8, 2, 128>}, {transform_indices = @transform_8, window_bounds = array<i64: 8, 2, 128>}]} {
    %c0_i32 = arith.constant 0 : i32
    %0 = arith.cmpi eq, %arg0, %c0_i32 : i32
    %1 = arith.extui %0 : i1 to i32
    %c0_i32_0 = arith.constant 0 : i32
    %2 = arith.cmpi ne, %1, %c0_i32_0 : i32
    scf.if %2 {
      %cst_336 = arith.constant 0.000000e+00 : f32
      %929 = vector.broadcast %cst_336 : f32 to vector<2x128xf32>
      %c0_337 = arith.constant 0 : index
      %c0_338 = arith.constant 0 : index
      %930 = vector.load %arg10[%c0_337, %c0_338] : memref<2x128xf32, #tpu.memory_space<vmem>>, vector<2x128xf32>
      tpu.vector_store %arg10[%c0_337, %c0_338], %929 {strides = array<i32>} : memref<2x128xf32, #tpu.memory_space<vmem>>, vector<2x128xf32>,
      %cst_339 = arith.constant 0.000000e+00 : f32
      %931 = vector.broadcast %cst_339 : f32 to vector<2x128xf32>
      %c0_340 = arith.constant 0 : index
      %c0_341 = arith.constant 0 : index
      %932 = vector.load %arg11[%c0_340, %c0_341] : memref<2x128xf32, #tpu.memory_space<vmem>>, vector<2x128xf32>
      tpu.vector_store %arg11[%c0_340, %c0_341], %931 {strides = array<i32>} : memref<2x128xf32, #tpu.memory_space<vmem>>, vector<2x128xf32>,
      %cst_342 = arith.constant 0.000000e+00 : f32
      %933 = vector.broadcast %cst_342 : f32 to vector<2x128xf32>
      %c0_343 = arith.constant 0 : index
      %c0_344 = arith.constant 0 : index
      %934 = vector.load %arg12[%c0_343, %c0_344] : memref<2x128xf32, #tpu.memory_space<vmem>>, vector<2x128xf32>
      tpu.vector_store %arg12[%c0_343, %c0_344], %933 {strides = array<i32>} : memref<2x128xf32, #tpu.memory_space<vmem>>, vector<2x128xf32>,
      %cst_345 = arith.constant 0.000000e+00 : f32
      %935 = vector.broadcast %cst_345 : f32 to vector<2x128xf32>
      %c0_346 = arith.constant 0 : index
      %c0_347 = arith.constant 0 : index
      %936 = vector.load %arg13[%c0_346, %c0_347] : memref<2x128xf32, #tpu.memory_space<vmem>>, vector<2x128xf32>
      tpu.vector_store %arg13[%c0_346, %c0_347], %935 {strides = array<i32>} : memref<2x128xf32, #tpu.memory_space<vmem>>, vector<2x128xf32>,
    } else {
    }
    %c0 = arith.constant 0 : index
    %c0_1 = arith.constant 0 : index
    %c0_2 = arith.constant 0 : index
    %3 = vector.load %arg3[%c0, %c0_1, %c0_2] : memref<8x2x1xf32, #tpu.memory_space<vmem>>, vector<8x2x1xf32>
    %c0_3 = arith.constant 0 : index
    %c0_4 = arith.constant 0 : index
    %c0_5 = arith.constant 0 : index
    %4 = vector.load %arg4[%c0_3, %c0_4, %c0_5] : memref<8x2x1xf32, #tpu.memory_space<vmem>>, vector<8x2x1xf32>
    %cst = arith.constant 1.000000e+00 : f32
    %5 = vector.broadcast %cst : f32 to vector<8x2x1xf32>
    %6 = arith.subf %5, %3 : vector<8x2x1xf32>
    %cst_6 = arith.constant 1.000000e+00 : f32
    %7 = vector.broadcast %cst_6 : f32 to vector<8x2x1xf32>
    %8 = arith.subf %7, %4 : vector<8x2x1xf32>
    %c0_7 = arith.constant 0 : index
    %c0_8 = arith.constant 0 : index
    %9 = vector.load %arg10[%c0_7, %c0_8] : memref<2x128xf32, #tpu.memory_space<vmem>>, vector<2x128xf32>
    %c0_9 = arith.constant 0 : index
    %c0_10 = arith.constant 0 : index
    %10 = vector.load %arg11[%c0_9, %c0_10] : memref<2x128xf32, #tpu.memory_space<vmem>>, vector<2x128xf32>
    %c0_11 = arith.constant 0 : index
    %c0_12 = arith.constant 0 : index
    %11 = vector.load %arg12[%c0_11, %c0_12] : memref<2x128xf32, #tpu.memory_space<vmem>>, vector<2x128xf32>
    %c0_13 = arith.constant 0 : index
    %c0_14 = arith.constant 0 : index
    %12 = vector.load %arg13[%c0_13, %c0_14] : memref<2x128xf32, #tpu.memory_space<vmem>>, vector<2x128xf32>
    %c0_15 = arith.constant 0 : index
    %c0_16 = arith.constant 0 : index
    %c0_17 = arith.constant 0 : index
    %13 = vector.load %arg1[%c0_15, %c0_16, %c0_17] : memref<8x2x128xbf16, #tpu.memory_space<vmem>>, vector<1x2x128xbf16>
    %14 = vector.shape_cast %13 : vector<1x2x128xbf16> to vector<2x128xbf16>
    %c0_18 = arith.constant 0 : index
    %c0_19 = arith.constant 0 : index
    %c0_20 = arith.constant 0 : index
    %15 = vector.load %arg5[%c0_18, %c0_19, %c0_20] : memref<2x128x512xbf16, #tpu.memory_space<vmem>>, vector<1x128x512xbf16>
    %16 = vector.shape_cast %15 : vector<1x128x512xbf16> to vector<128x512xbf16>
    %cst_21 = arith.constant dense<0.000000e+00> : vector<2x512xf32>
    %17 = tpu.matmul %14, %16, %cst_21 {dimension_numbers = #tpu.dot_dimension_numbers<[1], [0], [0], [1], [0, 0, 1, 1], [], []>} : vector<2x128xbf16>, vector<128x512xbf16>, vector<2x512xf32> -> vector<2x512xf32>
    %c7 = arith.constant 7 : index
    %c0_22 = arith.constant 0 : index
    %c0_23 = arith.constant 0 : index
    %18 = vector.load %arg2[%c7, %c0_22, %c0_23] : memref<8x2x128xbf16, #tpu.memory_space<vmem>>, vector<1x2x128xbf16>
    %19 = vector.shape_cast %18 : vector<1x2x128xbf16> to vector<2x128xbf16>
    %c1 = arith.constant 1 : index
    %c0_24 = arith.constant 0 : index
    %c0_25 = arith.constant 0 : index
    %20 = vector.load %arg5[%c1, %c0_24, %c0_25] : memref<2x128x512xbf16, #tpu.memory_space<vmem>>, vector<1x128x512xbf16>
    %21 = vector.shape_cast %20 : vector<1x128x512xbf16> to vector<128x512xbf16>
    %cst_26 = arith.constant dense<0.000000e+00> : vector<2x512xf32>
    %22 = tpu.matmul %19, %21, %cst_26 {dimension_numbers = #tpu.dot_dimension_numbers<[1], [0], [0], [1], [0, 0, 1, 1], [], []>} : vector<2x128xbf16>, vector<128x512xbf16>, vector<2x512xf32> -> vector<2x512xf32>
    %23 = arith.truncf %9 : vector<2x128xf32> to vector<2x128xbf16>
    %c0_27 = arith.constant 0 : index
    %c0_28 = arith.constant 0 : index
    %c0_29 = arith.constant 0 : index
    %24 = vector.load %arg6[%c0_27, %c0_28, %c0_29] : memref<2x128x512xbf16, #tpu.memory_space<vmem>>, vector<1x128x512xbf16>
    %25 = vector.shape_cast %24 : vector<1x128x512xbf16> to vector<128x512xbf16>
    %cst_30 = arith.constant dense<0.000000e+00> : vector<2x512xf32>
    %26 = tpu.matmul %23, %25, %cst_30 {dimension_numbers = #tpu.dot_dimension_numbers<[1], [0], [0], [1], [0, 0, 1, 1], [], []>} : vector<2x128xbf16>, vector<128x512xbf16>, vector<2x512xf32> -> vector<2x512xf32>
    %27 = arith.truncf %10 : vector<2x128xf32> to vector<2x128xbf16>
    %c1_31 = arith.constant 1 : index
    %c0_32 = arith.constant 0 : index
    %c0_33 = arith.constant 0 : index
    %28 = vector.load %arg6[%c1_31, %c0_32, %c0_33] : memref<2x128x512xbf16, #tpu.memory_space<vmem>>, vector<1x128x512xbf16>
    %29 = vector.shape_cast %28 : vector<1x128x512xbf16> to vector<128x512xbf16>
    %cst_34 = arith.constant dense<0.000000e+00> : vector<2x512xf32>
    %30 = tpu.matmul %27, %29, %cst_34 {dimension_numbers = #tpu.dot_dimension_numbers<[1], [0], [0], [1], [0, 0, 1, 1], [], []>} : vector<2x128xbf16>, vector<128x512xbf16>, vector<2x512xf32> -> vector<2x512xf32>
    %31 = arith.addf %17, %26 : vector<2x512xf32>
    %c0_35 = arith.constant 0 : index
    %c0_36 = arith.constant 0 : index
    %c0_37 = arith.constant 0 : index
    %32 = vector.load %arg7[%c0_35, %c0_36, %c0_37] : memref<2x1x512xf32, #tpu.memory_space<vmem>>, vector<1x1x512xf32>
    %33 = vector.shape_cast %32 : vector<1x1x512xf32> to vector<1x512xf32>
    %34 = vector.broadcast %33 : vector<1x512xf32> to vector<2x512xf32>
    %35 = arith.addf %31, %34 : vector<2x512xf32>
    %36 = vector.extract_strided_slice %35 {offsets = [0, 0], sizes = [2, 128], strides = [1, 1]} : vector<2x512xf32> to vector<2x128xf32>
    %37 = arith.negf %36 : vector<2x128xf32>
    %38 = math.exp %37 : vector<2x128xf32>
    %cst_38 = arith.constant 1.000000e+00 : f32
    %39 = vector.broadcast %cst_38 : f32 to vector<2x128xf32>
    %40 = arith.addf %39, %38 : vector<2x128xf32>
    %41 = arith.divf %39, %40 : vector<2x128xf32>
    %42 = vector.extract_strided_slice %35 {offsets = [0, 128], sizes = [2, 128], strides = [1, 1]} : vector<2x512xf32> to vector<2x128xf32>
    %43 = arith.negf %42 : vector<2x128xf32>
    %44 = math.exp %43 : vector<2x128xf32>
    %cst_39 = arith.constant 1.000000e+00 : f32
    %45 = vector.broadcast %cst_39 : f32 to vector<2x128xf32>
    %46 = arith.addf %45, %44 : vector<2x128xf32>
    %47 = arith.divf %45, %46 : vector<2x128xf32>
    %48 = vector.extract_strided_slice %35 {offsets = [0, 256], sizes = [2, 128], strides = [1, 1]} : vector<2x512xf32> to vector<2x128xf32>
    %49 = math.tanh %48 : vector<2x128xf32>
    %50 = vector.extract_strided_slice %35 {offsets = [0, 384], sizes = [2, 128], strides = [1, 1]} : vector<2x512xf32> to vector<2x128xf32>
    %51 = arith.negf %50 : vector<2x128xf32>
    %52 = math.exp %51 : vector<2x128xf32>
    %cst_40 = arith.constant 1.000000e+00 : f32
    %53 = vector.broadcast %cst_40 : f32 to vector<2x128xf32>
    %54 = arith.addf %53, %52 : vector<2x128xf32>
    %55 = arith.divf %53, %54 : vector<2x128xf32>
    %56 = arith.mulf %47, %11 : vector<2x128xf32>
    %57 = arith.mulf %41, %49 : vector<2x128xf32>
    %58 = arith.addf %56, %57 : vector<2x128xf32>
    %59 = math.tanh %58 : vector<2x128xf32>
    %60 = arith.mulf %55, %59 : vector<2x128xf32>
    %61 = arith.addf %22, %30 : vector<2x512xf32>
    %c1_41 = arith.constant 1 : index
    %c0_42 = arith.constant 0 : index
    %c0_43 = arith.constant 0 : index
    %62 = vector.load %arg7[%c1_41, %c0_42, %c0_43] : memref<2x1x512xf32, #tpu.memory_space<vmem>>, vector<1x1x512xf32>
    %63 = vector.shape_cast %62 : vector<1x1x512xf32> to vector<1x512xf32>
    %64 = vector.broadcast %63 : vector<1x512xf32> to vector<2x512xf32>
    %65 = arith.addf %61, %64 : vector<2x512xf32>
    %66 = vector.extract_strided_slice %65 {offsets = [0, 0], sizes = [2, 128], strides = [1, 1]} : vector<2x512xf32> to vector<2x128xf32>
    %67 = arith.negf %66 : vector<2x128xf32>
    %68 = math.exp %67 : vector<2x128xf32>
    %cst_44 = arith.constant 1.000000e+00 : f32
    %69 = vector.broadcast %cst_44 : f32 to vector<2x128xf32>
    %70 = arith.addf %69, %68 : vector<2x128xf32>
    %71 = arith.divf %69, %70 : vector<2x128xf32>
    %72 = vector.extract_strided_slice %65 {offsets = [0, 128], sizes = [2, 128], strides = [1, 1]} : vector<2x512xf32> to vector<2x128xf32>
    %73 = arith.negf %72 : vector<2x128xf32>
    %74 = math.exp %73 : vector<2x128xf32>
    %cst_45 = arith.constant 1.000000e+00 : f32
    %75 = vector.broadcast %cst_45 : f32 to vector<2x128xf32>
    %76 = arith.addf %75, %74 : vector<2x128xf32>
    %77 = arith.divf %75, %76 : vector<2x128xf32>
    %78 = vector.extract_strided_slice %65 {offsets = [0, 256], sizes = [2, 128], strides = [1, 1]} : vector<2x512xf32> to vector<2x128xf32>
    %79 = math.tanh %78 : vector<2x128xf32>
    %80 = vector.extract_strided_slice %65 {offsets = [0, 384], sizes = [2, 128], strides = [1, 1]} : vector<2x512xf32> to vector<2x128xf32>
    %81 = arith.negf %80 : vector<2x128xf32>
    %82 = math.exp %81 : vector<2x128xf32>
    %cst_46 = arith.constant 1.000000e+00 : f32
    %83 = vector.broadcast %cst_46 : f32 to vector<2x128xf32>
    %84 = arith.addf %83, %82 : vector<2x128xf32>
    %85 = arith.divf %83, %84 : vector<2x128xf32>
    %86 = arith.mulf %77, %12 : vector<2x128xf32>
    %87 = arith.mulf %71, %79 : vector<2x128xf32>
    %88 = arith.addf %86, %87 : vector<2x128xf32>
    %89 = math.tanh %88 : vector<2x128xf32>
    %90 = arith.mulf %85, %89 : vector<2x128xf32>
    %91 = vector.extract_strided_slice %3 {offsets = [0, 0, 0], sizes = [1, 2, 1], strides = [1, 1, 1]} : vector<8x2x1xf32> to vector<1x2x1xf32>
    %92 = vector.shape_cast %91 : vector<1x2x1xf32> to vector<2x1xf32>
    %93 = vector.extract_strided_slice %6 {offsets = [0, 0, 0], sizes = [1, 2, 1], strides = [1, 1, 1]} : vector<8x2x1xf32> to vector<1x2x1xf32>
    %94 = vector.shape_cast %93 : vector<1x2x1xf32> to vector<2x1xf32>
    %95 = vector.extract_strided_slice %4 {offsets = [7, 0, 0], sizes = [1, 2, 1], strides = [1, 1, 1]} : vector<8x2x1xf32> to vector<1x2x1xf32>
    %96 = vector.shape_cast %95 : vector<1x2x1xf32> to vector<2x1xf32>
    %97 = vector.extract_strided_slice %8 {offsets = [7, 0, 0], sizes = [1, 2, 1], strides = [1, 1, 1]} : vector<8x2x1xf32> to vector<1x2x1xf32>
    %98 = vector.shape_cast %97 : vector<1x2x1xf32> to vector<2x1xf32>
    %99 = vector.broadcast %92 : vector<2x1xf32> to vector<2x128xf32>
    %100 = arith.mulf %99, %60 : vector<2x128xf32>
    %101 = vector.broadcast %96 : vector<2x1xf32> to vector<2x128xf32>
    %102 = arith.mulf %101, %90 : vector<2x128xf32>
    %103 = arith.truncf %100 : vector<2x128xf32> to vector<2x128xbf16>
    %c0_47 = arith.constant 0 : index
    %c0_48 = arith.constant 0 : index
    %c0_49 = arith.constant 0 : index
    %104 = vector.load %arg8[%c0_47, %c0_48, %c0_49] : memref<8x2x128xbf16, #tpu.memory_space<vmem>>, vector<1x2x128xbf16>
    %105 = vector.shape_cast %104 : vector<1x2x128xbf16> to vector<2x128xbf16>
    %106 = vector.shape_cast %103 : vector<2x128xbf16> to vector<1x2x128xbf16>
    tpu.vector_store %arg8[%c0_47, %c0_48, %c0_49], %106 {strides = array<i32>} : memref<8x2x128xbf16, #tpu.memory_space<vmem>>, vector<1x2x128xbf16>,
    %107 = arith.truncf %102 : vector<2x128xf32> to vector<2x128xbf16>
    %c7_50 = arith.constant 7 : index
    %c0_51 = arith.constant 0 : index
    %c0_52 = arith.constant 0 : index
    %108 = vector.load %arg9[%c7_50, %c0_51, %c0_52] : memref<8x2x128xbf16, #tpu.memory_space<vmem>>, vector<1x2x128xbf16>
    %109 = vector.shape_cast %108 : vector<1x2x128xbf16> to vector<2x128xbf16>
    %110 = vector.shape_cast %107 : vector<2x128xbf16> to vector<1x2x128xbf16>
    tpu.vector_store %arg9[%c7_50, %c0_51, %c0_52], %110 {strides = array<i32>} : memref<8x2x128xbf16, #tpu.memory_space<vmem>>, vector<1x2x128xbf16>,
    %111 = vector.broadcast %94 : vector<2x1xf32> to vector<2x128xf32>
    %112 = arith.mulf %111, %9 : vector<2x128xf32>
    %113 = arith.addf %100, %112 : vector<2x128xf32>
    %114 = vector.broadcast %98 : vector<2x1xf32> to vector<2x128xf32>
    %115 = arith.mulf %114, %10 : vector<2x128xf32>
    %116 = arith.addf %102, %115 : vector<2x128xf32>
    %117 = vector.broadcast %92 : vector<2x1xf32> to vector<2x128xf32>
    %118 = arith.mulf %117, %58 : vector<2x128xf32>
    %119 = vector.broadcast %94 : vector<2x1xf32> to vector<2x128xf32>
    %120 = arith.mulf %119, %11 : vector<2x128xf32>
    %121 = arith.addf %118, %120 : vector<2x128xf32>
    %122 = vector.broadcast %96 : vector<2x1xf32> to vector<2x128xf32>
    %123 = arith.mulf %122, %88 : vector<2x128xf32>
    %124 = vector.broadcast %98 : vector<2x1xf32> to vector<2x128xf32>
    %125 = arith.mulf %124, %12 : vector<2x128xf32>
    %126 = arith.addf %123, %125 : vector<2x128xf32>
    %c1_53 = arith.constant 1 : index
    %c0_54 = arith.constant 0 : index
    %c0_55 = arith.constant 0 : index
    %127 = vector.load %arg1[%c1_53, %c0_54, %c0_55] : memref<8x2x128xbf16, #tpu.memory_space<vmem>>, vector<1x2x128xbf16>
    %128 = vector.shape_cast %127 : vector<1x2x128xbf16> to vector<2x128xbf16>
    %c0_56 = arith.constant 0 : index
    %c0_57 = arith.constant 0 : index
    %c0_58 = arith.constant 0 : index
    %129 = vector.load %arg5[%c0_56, %c0_57, %c0_58] : memref<2x128x512xbf16, #tpu.memory_space<vmem>>, vector<1x128x512xbf16>
    %130 = vector.shape_cast %129 : vector<1x128x512xbf16> to vector<128x512xbf16>
    %cst_59 = arith.constant dense<0.000000e+00> : vector<2x512xf32>
    %131 = tpu.matmul %128, %130, %cst_59 {dimension_numbers = #tpu.dot_dimension_numbers<[1], [0], [0], [1], [0, 0, 1, 1], [], []>} : vector<2x128xbf16>, vector<128x512xbf16>, vector<2x512xf32> -> vector<2x512xf32>
    %c6 = arith.constant 6 : index
    %c0_60 = arith.constant 0 : index
    %c0_61 = arith.constant 0 : index
    %132 = vector.load %arg2[%c6, %c0_60, %c0_61] : memref<8x2x128xbf16, #tpu.memory_space<vmem>>, vector<1x2x128xbf16>
    %133 = vector.shape_cast %132 : vector<1x2x128xbf16> to vector<2x128xbf16>
    %c1_62 = arith.constant 1 : index
    %c0_63 = arith.constant 0 : index
    %c0_64 = arith.constant 0 : index
    %134 = vector.load %arg5[%c1_62, %c0_63, %c0_64] : memref<2x128x512xbf16, #tpu.memory_space<vmem>>, vector<1x128x512xbf16>
    %135 = vector.shape_cast %134 : vector<1x128x512xbf16> to vector<128x512xbf16>
    %cst_65 = arith.constant dense<0.000000e+00> : vector<2x512xf32>
    %136 = tpu.matmul %133, %135, %cst_65 {dimension_numbers = #tpu.dot_dimension_numbers<[1], [0], [0], [1], [0, 0, 1, 1], [], []>} : vector<2x128xbf16>, vector<128x512xbf16>, vector<2x512xf32> -> vector<2x512xf32>
    %137 = arith.truncf %113 : vector<2x128xf32> to vector<2x128xbf16>
    %c0_66 = arith.constant 0 : index
    %c0_67 = arith.constant 0 : index
    %c0_68 = arith.constant 0 : index
    %138 = vector.load %arg6[%c0_66, %c0_67, %c0_68] : memref<2x128x512xbf16, #tpu.memory_space<vmem>>, vector<1x128x512xbf16>
    %139 = vector.shape_cast %138 : vector<1x128x512xbf16> to vector<128x512xbf16>
    %cst_69 = arith.constant dense<0.000000e+00> : vector<2x512xf32>
    %140 = tpu.matmul %137, %139, %cst_69 {dimension_numbers = #tpu.dot_dimension_numbers<[1], [0], [0], [1], [0, 0, 1, 1], [], []>} : vector<2x128xbf16>, vector<128x512xbf16>, vector<2x512xf32> -> vector<2x512xf32>
    %141 = arith.truncf %116 : vector<2x128xf32> to vector<2x128xbf16>
    %c1_70 = arith.constant 1 : index
    %c0_71 = arith.constant 0 : index
    %c0_72 = arith.constant 0 : index
    %142 = vector.load %arg6[%c1_70, %c0_71, %c0_72] : memref<2x128x512xbf16, #tpu.memory_space<vmem>>, vector<1x128x512xbf16>
    %143 = vector.shape_cast %142 : vector<1x128x512xbf16> to vector<128x512xbf16>
    %cst_73 = arith.constant dense<0.000000e+00> : vector<2x512xf32>
    %144 = tpu.matmul %141, %143, %cst_73 {dimension_numbers = #tpu.dot_dimension_numbers<[1], [0], [0], [1], [0, 0, 1, 1], [], []>} : vector<2x128xbf16>, vector<128x512xbf16>, vector<2x512xf32> -> vector<2x512xf32>
    %145 = arith.addf %131, %140 : vector<2x512xf32>
    %c0_74 = arith.constant 0 : index
    %c0_75 = arith.constant 0 : index
    %c0_76 = arith.constant 0 : index
    %146 = vector.load %arg7[%c0_74, %c0_75, %c0_76] : memref<2x1x512xf32, #tpu.memory_space<vmem>>, vector<1x1x512xf32>
    %147 = vector.shape_cast %146 : vector<1x1x512xf32> to vector<1x512xf32>
    %148 = vector.broadcast %147 : vector<1x512xf32> to vector<2x512xf32>
    %149 = arith.addf %145, %148 : vector<2x512xf32>
    %150 = vector.extract_strided_slice %149 {offsets = [0, 0], sizes = [2, 128], strides = [1, 1]} : vector<2x512xf32> to vector<2x128xf32>
    %151 = arith.negf %150 : vector<2x128xf32>
    %152 = math.exp %151 : vector<2x128xf32>
    %cst_77 = arith.constant 1.000000e+00 : f32
    %153 = vector.broadcast %cst_77 : f32 to vector<2x128xf32>
    %154 = arith.addf %153, %152 : vector<2x128xf32>
    %155 = arith.divf %153, %154 : vector<2x128xf32>
    %156 = vector.extract_strided_slice %149 {offsets = [0, 128], sizes = [2, 128], strides = [1, 1]} : vector<2x512xf32> to vector<2x128xf32>
    %157 = arith.negf %156 : vector<2x128xf32>
    %158 = math.exp %157 : vector<2x128xf32>
    %cst_78 = arith.constant 1.000000e+00 : f32
    %159 = vector.broadcast %cst_78 : f32 to vector<2x128xf32>
    %160 = arith.addf %159, %158 : vector<2x128xf32>
    %161 = arith.divf %159, %160 : vector<2x128xf32>
    %162 = vector.extract_strided_slice %149 {offsets = [0, 256], sizes = [2, 128], strides = [1, 1]} : vector<2x512xf32> to vector<2x128xf32>
    %163 = math.tanh %162 : vector<2x128xf32>
    %164 = vector.extract_strided_slice %149 {offsets = [0, 384], sizes = [2, 128], strides = [1, 1]} : vector<2x512xf32> to vector<2x128xf32>
    %165 = arith.negf %164 : vector<2x128xf32>
    %166 = math.exp %165 : vector<2x128xf32>
    %cst_79 = arith.constant 1.000000e+00 : f32
    %167 = vector.broadcast %cst_79 : f32 to vector<2x128xf32>
    %168 = arith.addf %167, %166 : vector<2x128xf32>
    %169 = arith.divf %167, %168 : vector<2x128xf32>
    %170 = arith.mulf %161, %121 : vector<2x128xf32>
    %171 = arith.mulf %155, %163 : vector<2x128xf32>
    %172 = arith.addf %170, %171 : vector<2x128xf32>
    %173 = math.tanh %172 : vector<2x128xf32>
    %174 = arith.mulf %169, %173 : vector<2x128xf32>
    %175 = arith.addf %136, %144 : vector<2x512xf32>
    %c1_80 = arith.constant 1 : index
    %c0_81 = arith.constant 0 : index
    %c0_82 = arith.constant 0 : index
    %176 = vector.load %arg7[%c1_80, %c0_81, %c0_82] : memref<2x1x512xf32, #tpu.memory_space<vmem>>, vector<1x1x512xf32>
    %177 = vector.shape_cast %176 : vector<1x1x512xf32> to vector<1x512xf32>
    %178 = vector.broadcast %177 : vector<1x512xf32> to vector<2x512xf32>
    %179 = arith.addf %175, %178 : vector<2x512xf32>
    %180 = vector.extract_strided_slice %179 {offsets = [0, 0], sizes = [2, 128], strides = [1, 1]} : vector<2x512xf32> to vector<2x128xf32>
    %181 = arith.negf %180 : vector<2x128xf32>
    %182 = math.exp %181 : vector<2x128xf32>
    %cst_83 = arith.constant 1.000000e+00 : f32
    %183 = vector.broadcast %cst_83 : f32 to vector<2x128xf32>
    %184 = arith.addf %183, %182 : vector<2x128xf32>
    %185 = arith.divf %183, %184 : vector<2x128xf32>
    %186 = vector.extract_strided_slice %179 {offsets = [0, 128], sizes = [2, 128], strides = [1, 1]} : vector<2x512xf32> to vector<2x128xf32>
    %187 = arith.negf %186 : vector<2x128xf32>
    %188 = math.exp %187 : vector<2x128xf32>
    %cst_84 = arith.constant 1.000000e+00 : f32
    %189 = vector.broadcast %cst_84 : f32 to vector<2x128xf32>
    %190 = arith.addf %189, %188 : vector<2x128xf32>
    %191 = arith.divf %189, %190 : vector<2x128xf32>
    %192 = vector.extract_strided_slice %179 {offsets = [0, 256], sizes = [2, 128], strides = [1, 1]} : vector<2x512xf32> to vector<2x128xf32>
    %193 = math.tanh %192 : vector<2x128xf32>
    %194 = vector.extract_strided_slice %179 {offsets = [0, 384], sizes = [2, 128], strides = [1, 1]} : vector<2x512xf32> to vector<2x128xf32>
    %195 = arith.negf %194 : vector<2x128xf32>
    %196 = math.exp %195 : vector<2x128xf32>
    %cst_85 = arith.constant 1.000000e+00 : f32
    %197 = vector.broadcast %cst_85 : f32 to vector<2x128xf32>
    %198 = arith.addf %197, %196 : vector<2x128xf32>
    %199 = arith.divf %197, %198 : vector<2x128xf32>
    %200 = arith.mulf %191, %126 : vector<2x128xf32>
    %201 = arith.mulf %185, %193 : vector<2x128xf32>
    %202 = arith.addf %200, %201 : vector<2x128xf32>
    %203 = math.tanh %202 : vector<2x128xf32>
    %204 = arith.mulf %199, %203 : vector<2x128xf32>
    %205 = vector.extract_strided_slice %3 {offsets = [1, 0, 0], sizes = [1, 2, 1], strides = [1, 1, 1]} : vector<8x2x1xf32> to vector<1x2x1xf32>
    %206 = vector.shape_cast %205 : vector<1x2x1xf32> to vector<2x1xf32>
    %207 = vector.extract_strided_slice %6 {offsets = [1, 0, 0], sizes = [1, 2, 1], strides = [1, 1, 1]} : vector<8x2x1xf32> to vector<1x2x1xf32>
    %208 = vector.shape_cast %207 : vector<1x2x1xf32> to vector<2x1xf32>
    %209 = vector.extract_strided_slice %4 {offsets = [6, 0, 0], sizes = [1, 2, 1], strides = [1, 1, 1]} : vector<8x2x1xf32> to vector<1x2x1xf32>
    %210 = vector.shape_cast %209 : vector<1x2x1xf32> to vector<2x1xf32>
    %211 = vector.extract_strided_slice %8 {offsets = [6, 0, 0], sizes = [1, 2, 1], strides = [1, 1, 1]} : vector<8x2x1xf32> to vector<1x2x1xf32>
    %212 = vector.shape_cast %211 : vector<1x2x1xf32> to vector<2x1xf32>
    %213 = vector.broadcast %206 : vector<2x1xf32> to vector<2x128xf32>
    %214 = arith.mulf %213, %174 : vector<2x128xf32>
    %215 = vector.broadcast %210 : vector<2x1xf32> to vector<2x128xf32>
    %216 = arith.mulf %215, %204 : vector<2x128xf32>
    %217 = arith.truncf %214 : vector<2x128xf32> to vector<2x128xbf16>
    %c1_86 = arith.constant 1 : index
    %c0_87 = arith.constant 0 : index
    %c0_88 = arith.constant 0 : index
    %218 = vector.load %arg8[%c1_86, %c0_87, %c0_88] : memref<8x2x128xbf16, #tpu.memory_space<vmem>>, vector<1x2x128xbf16>
    %219 = vector.shape_cast %218 : vector<1x2x128xbf16> to vector<2x128xbf16>
    %220 = vector.shape_cast %217 : vector<2x128xbf16> to vector<1x2x128xbf16>
    tpu.vector_store %arg8[%c1_86, %c0_87, %c0_88], %220 {strides = array<i32>} : memref<8x2x128xbf16, #tpu.memory_space<vmem>>, vector<1x2x128xbf16>,
    %221 = arith.truncf %216 : vector<2x128xf32> to vector<2x128xbf16>
    %c6_89 = arith.constant 6 : index
    %c0_90 = arith.constant 0 : index
    %c0_91 = arith.constant 0 : index
    %222 = vector.load %arg9[%c6_89, %c0_90, %c0_91] : memref<8x2x128xbf16, #tpu.memory_space<vmem>>, vector<1x2x128xbf16>
    %223 = vector.shape_cast %222 : vector<1x2x128xbf16> to vector<2x128xbf16>
    %224 = vector.shape_cast %221 : vector<2x128xbf16> to vector<1x2x128xbf16>
    tpu.vector_store %arg9[%c6_89, %c0_90, %c0_91], %224 {strides = array<i32>} : memref<8x2x128xbf16, #tpu.memory_space<vmem>>, vector<1x2x128xbf16>,
    %225 = vector.broadcast %208 : vector<2x1xf32> to vector<2x128xf32>
    %226 = arith.mulf %225, %113 : vector<2x128xf32>
    %227 = arith.addf %214, %226 : vector<2x128xf32>
    %228 = vector.broadcast %212 : vector<2x1xf32> to vector<2x128xf32>
    %229 = arith.mulf %228, %116 : vector<2x128xf32>
    %230 = arith.addf %216, %229 : vector<2x128xf32>
    %231 = vector.broadcast %206 : vector<2x1xf32> to vector<2x128xf32>
    %232 = arith.mulf %231, %172 : vector<2x128xf32>
    %233 = vector.broadcast %208 : vector<2x1xf32> to vector<2x128xf32>
    %234 = arith.mulf %233, %121 : vector<2x128xf32>
    %235 = arith.addf %232, %234 : vector<2x128xf32>
    %236 = vector.broadcast %210 : vector<2x1xf32> to vector<2x128xf32>
    %237 = arith.mulf %236, %202 : vector<2x128xf32>
    %238 = vector.broadcast %212 : vector<2x1xf32> to vector<2x128xf32>
    %239 = arith.mulf %238, %126 : vector<2x128xf32>
    %240 = arith.addf %237, %239 : vector<2x128xf32>
    %c2 = arith.constant 2 : index
    %c0_92 = arith.constant 0 : index
    %c0_93 = arith.constant 0 : index
    %241 = vector.load %arg1[%c2, %c0_92, %c0_93] : memref<8x2x128xbf16, #tpu.memory_space<vmem>>, vector<1x2x128xbf16>
    %242 = vector.shape_cast %241 : vector<1x2x128xbf16> to vector<2x128xbf16>
    %c0_94 = arith.constant 0 : index
    %c0_95 = arith.constant 0 : index
    %c0_96 = arith.constant 0 : index
    %243 = vector.load %arg5[%c0_94, %c0_95, %c0_96] : memref<2x128x512xbf16, #tpu.memory_space<vmem>>, vector<1x128x512xbf16>
    %244 = vector.shape_cast %243 : vector<1x128x512xbf16> to vector<128x512xbf16>
    %cst_97 = arith.constant dense<0.000000e+00> : vector<2x512xf32>
    %245 = tpu.matmul %242, %244, %cst_97 {dimension_numbers = #tpu.dot_dimension_numbers<[1], [0], [0], [1], [0, 0, 1, 1], [], []>} : vector<2x128xbf16>, vector<128x512xbf16>, vector<2x512xf32> -> vector<2x512xf32>
    %c5 = arith.constant 5 : index
    %c0_98 = arith.constant 0 : index
    %c0_99 = arith.constant 0 : index
    %246 = vector.load %arg2[%c5, %c0_98, %c0_99] : memref<8x2x128xbf16, #tpu.memory_space<vmem>>, vector<1x2x128xbf16>
    %247 = vector.shape_cast %246 : vector<1x2x128xbf16> to vector<2x128xbf16>
    %c1_100 = arith.constant 1 : index
    %c0_101 = arith.constant 0 : index
    %c0_102 = arith.constant 0 : index
    %248 = vector.load %arg5[%c1_100, %c0_101, %c0_102] : memref<2x128x512xbf16, #tpu.memory_space<vmem>>, vector<1x128x512xbf16>
    %249 = vector.shape_cast %248 : vector<1x128x512xbf16> to vector<128x512xbf16>
    %cst_103 = arith.constant dense<0.000000e+00> : vector<2x512xf32>
    %250 = tpu.matmul %247, %249, %cst_103 {dimension_numbers = #tpu.dot_dimension_numbers<[1], [0], [0], [1], [0, 0, 1, 1], [], []>} : vector<2x128xbf16>, vector<128x512xbf16>, vector<2x512xf32> -> vector<2x512xf32>
    %251 = arith.truncf %227 : vector<2x128xf32> to vector<2x128xbf16>
    %c0_104 = arith.constant 0 : index
    %c0_105 = arith.constant 0 : index
    %c0_106 = arith.constant 0 : index
    %252 = vector.load %arg6[%c0_104, %c0_105, %c0_106] : memref<2x128x512xbf16, #tpu.memory_space<vmem>>, vector<1x128x512xbf16>
    %253 = vector.shape_cast %252 : vector<1x128x512xbf16> to vector<128x512xbf16>
    %cst_107 = arith.constant dense<0.000000e+00> : vector<2x512xf32>
    %254 = tpu.matmul %251, %253, %cst_107 {dimension_numbers = #tpu.dot_dimension_numbers<[1], [0], [0], [1], [0, 0, 1, 1], [], []>} : vector<2x128xbf16>, vector<128x512xbf16>, vector<2x512xf32> -> vector<2x512xf32>
    %255 = arith.truncf %230 : vector<2x128xf32> to vector<2x128xbf16>
    %c1_108 = arith.constant 1 : index
    %c0_109 = arith.constant 0 : index
    %c0_110 = arith.constant 0 : index
    %256 = vector.load %arg6[%c1_108, %c0_109, %c0_110] : memref<2x128x512xbf16, #tpu.memory_space<vmem>>, vector<1x128x512xbf16>
    %257 = vector.shape_cast %256 : vector<1x128x512xbf16> to vector<128x512xbf16>
    %cst_111 = arith.constant dense<0.000000e+00> : vector<2x512xf32>
    %258 = tpu.matmul %255, %257, %cst_111 {dimension_numbers = #tpu.dot_dimension_numbers<[1], [0], [0], [1], [0, 0, 1, 1], [], []>} : vector<2x128xbf16>, vector<128x512xbf16>, vector<2x512xf32> -> vector<2x512xf32>
    %259 = arith.addf %245, %254 : vector<2x512xf32>
    %c0_112 = arith.constant 0 : index
    %c0_113 = arith.constant 0 : index
    %c0_114 = arith.constant 0 : index
    %260 = vector.load %arg7[%c0_112, %c0_113, %c0_114] : memref<2x1x512xf32, #tpu.memory_space<vmem>>, vector<1x1x512xf32>
    %261 = vector.shape_cast %260 : vector<1x1x512xf32> to vector<1x512xf32>
    %262 = vector.broadcast %261 : vector<1x512xf32> to vector<2x512xf32>
    %263 = arith.addf %259, %262 : vector<2x512xf32>
    %264 = vector.extract_strided_slice %263 {offsets = [0, 0], sizes = [2, 128], strides = [1, 1]} : vector<2x512xf32> to vector<2x128xf32>
    %265 = arith.negf %264 : vector<2x128xf32>
    %266 = math.exp %265 : vector<2x128xf32>
    %cst_115 = arith.constant 1.000000e+00 : f32
    %267 = vector.broadcast %cst_115 : f32 to vector<2x128xf32>
    %268 = arith.addf %267, %266 : vector<2x128xf32>
    %269 = arith.divf %267, %268 : vector<2x128xf32>
    %270 = vector.extract_strided_slice %263 {offsets = [0, 128], sizes = [2, 128], strides = [1, 1]} : vector<2x512xf32> to vector<2x128xf32>
    %271 = arith.negf %270 : vector<2x128xf32>
    %272 = math.exp %271 : vector<2x128xf32>
    %cst_116 = arith.constant 1.000000e+00 : f32
    %273 = vector.broadcast %cst_116 : f32 to vector<2x128xf32>
    %274 = arith.addf %273, %272 : vector<2x128xf32>
    %275 = arith.divf %273, %274 : vector<2x128xf32>
    %276 = vector.extract_strided_slice %263 {offsets = [0, 256], sizes = [2, 128], strides = [1, 1]} : vector<2x512xf32> to vector<2x128xf32>
    %277 = math.tanh %276 : vector<2x128xf32>
    %278 = vector.extract_strided_slice %263 {offsets = [0, 384], sizes = [2, 128], strides = [1, 1]} : vector<2x512xf32> to vector<2x128xf32>
    %279 = arith.negf %278 : vector<2x128xf32>
    %280 = math.exp %279 : vector<2x128xf32>
    %cst_117 = arith.constant 1.000000e+00 : f32
    %281 = vector.broadcast %cst_117 : f32 to vector<2x128xf32>
    %282 = arith.addf %281, %280 : vector<2x128xf32>
    %283 = arith.divf %281, %282 : vector<2x128xf32>
    %284 = arith.mulf %275, %235 : vector<2x128xf32>
    %285 = arith.mulf %269, %277 : vector<2x128xf32>
    %286 = arith.addf %284, %285 : vector<2x128xf32>
    %287 = math.tanh %286 : vector<2x128xf32>
    %288 = arith.mulf %283, %287 : vector<2x128xf32>
    %289 = arith.addf %250, %258 : vector<2x512xf32>
    %c1_118 = arith.constant 1 : index
    %c0_119 = arith.constant 0 : index
    %c0_120 = arith.constant 0 : index
    %290 = vector.load %arg7[%c1_118, %c0_119, %c0_120] : memref<2x1x512xf32, #tpu.memory_space<vmem>>, vector<1x1x512xf32>
    %291 = vector.shape_cast %290 : vector<1x1x512xf32> to vector<1x512xf32>
    %292 = vector.broadcast %291 : vector<1x512xf32> to vector<2x512xf32>
    %293 = arith.addf %289, %292 : vector<2x512xf32>
    %294 = vector.extract_strided_slice %293 {offsets = [0, 0], sizes = [2, 128], strides = [1, 1]} : vector<2x512xf32> to vector<2x128xf32>
    %295 = arith.negf %294 : vector<2x128xf32>
    %296 = math.exp %295 : vector<2x128xf32>
    %cst_121 = arith.constant 1.000000e+00 : f32
    %297 = vector.broadcast %cst_121 : f32 to vector<2x128xf32>
    %298 = arith.addf %297, %296 : vector<2x128xf32>
    %299 = arith.divf %297, %298 : vector<2x128xf32>
    %300 = vector.extract_strided_slice %293 {offsets = [0, 128], sizes = [2, 128], strides = [1, 1]} : vector<2x512xf32> to vector<2x128xf32>
    %301 = arith.negf %300 : vector<2x128xf32>
    %302 = math.exp %301 : vector<2x128xf32>
    %cst_122 = arith.constant 1.000000e+00 : f32
    %303 = vector.broadcast %cst_122 : f32 to vector<2x128xf32>
    %304 = arith.addf %303, %302 : vector<2x128xf32>
    %305 = arith.divf %303, %304 : vector<2x128xf32>
    %306 = vector.extract_strided_slice %293 {offsets = [0, 256], sizes = [2, 128], strides = [1, 1]} : vector<2x512xf32> to vector<2x128xf32>
    %307 = math.tanh %306 : vector<2x128xf32>
    %308 = vector.extract_strided_slice %293 {offsets = [0, 384], sizes = [2, 128], strides = [1, 1]} : vector<2x512xf32> to vector<2x128xf32>
    %309 = arith.negf %308 : vector<2x128xf32>
    %310 = math.exp %309 : vector<2x128xf32>
    %cst_123 = arith.constant 1.000000e+00 : f32
    %311 = vector.broadcast %cst_123 : f32 to vector<2x128xf32>
    %312 = arith.addf %311, %310 : vector<2x128xf32>
    %313 = arith.divf %311, %312 : vector<2x128xf32>
    %314 = arith.mulf %305, %240 : vector<2x128xf32>
    %315 = arith.mulf %299, %307 : vector<2x128xf32>
    %316 = arith.addf %314, %315 : vector<2x128xf32>
    %317 = math.tanh %316 : vector<2x128xf32>
    %318 = arith.mulf %313, %317 : vector<2x128xf32>
    %319 = vector.extract_strided_slice %3 {offsets = [2, 0, 0], sizes = [1, 2, 1], strides = [1, 1, 1]} : vector<8x2x1xf32> to vector<1x2x1xf32>
    %320 = vector.shape_cast %319 : vector<1x2x1xf32> to vector<2x1xf32>
    %321 = vector.extract_strided_slice %6 {offsets = [2, 0, 0], sizes = [1, 2, 1], strides = [1, 1, 1]} : vector<8x2x1xf32> to vector<1x2x1xf32>
    %322 = vector.shape_cast %321 : vector<1x2x1xf32> to vector<2x1xf32>
    %323 = vector.extract_strided_slice %4 {offsets = [5, 0, 0], sizes = [1, 2, 1], strides = [1, 1, 1]} : vector<8x2x1xf32> to vector<1x2x1xf32>
    %324 = vector.shape_cast %323 : vector<1x2x1xf32> to vector<2x1xf32>
    %325 = vector.extract_strided_slice %8 {offsets = [5, 0, 0], sizes = [1, 2, 1], strides = [1, 1, 1]} : vector<8x2x1xf32> to vector<1x2x1xf32>
    %326 = vector.shape_cast %325 : vector<1x2x1xf32> to vector<2x1xf32>
    %327 = vector.broadcast %320 : vector<2x1xf32> to vector<2x128xf32>
    %328 = arith.mulf %327, %288 : vector<2x128xf32>
    %329 = vector.broadcast %324 : vector<2x1xf32> to vector<2x128xf32>
    %330 = arith.mulf %329, %318 : vector<2x128xf32>
    %331 = arith.truncf %328 : vector<2x128xf32> to vector<2x128xbf16>
    %c2_124 = arith.constant 2 : index
    %c0_125 = arith.constant 0 : index
    %c0_126 = arith.constant 0 : index
    %332 = vector.load %arg8[%c2_124, %c0_125, %c0_126] : memref<8x2x128xbf16, #tpu.memory_space<vmem>>, vector<1x2x128xbf16>
    %333 = vector.shape_cast %332 : vector<1x2x128xbf16> to vector<2x128xbf16>
    %334 = vector.shape_cast %331 : vector<2x128xbf16> to vector<1x2x128xbf16>
    tpu.vector_store %arg8[%c2_124, %c0_125, %c0_126], %334 {strides = array<i32>} : memref<8x2x128xbf16, #tpu.memory_space<vmem>>, vector<1x2x128xbf16>,
    %335 = arith.truncf %330 : vector<2x128xf32> to vector<2x128xbf16>
    %c5_127 = arith.constant 5 : index
    %c0_128 = arith.constant 0 : index
    %c0_129 = arith.constant 0 : index
    %336 = vector.load %arg9[%c5_127, %c0_128, %c0_129] : memref<8x2x128xbf16, #tpu.memory_space<vmem>>, vector<1x2x128xbf16>
    %337 = vector.shape_cast %336 : vector<1x2x128xbf16> to vector<2x128xbf16>
    %338 = vector.shape_cast %335 : vector<2x128xbf16> to vector<1x2x128xbf16>
    tpu.vector_store %arg9[%c5_127, %c0_128, %c0_129], %338 {strides = array<i32>} : memref<8x2x128xbf16, #tpu.memory_space<vmem>>, vector<1x2x128xbf16>,
    %339 = vector.broadcast %322 : vector<2x1xf32> to vector<2x128xf32>
    %340 = arith.mulf %339, %227 : vector<2x128xf32>
    %341 = arith.addf %328, %340 : vector<2x128xf32>
    %342 = vector.broadcast %326 : vector<2x1xf32> to vector<2x128xf32>
    %343 = arith.mulf %342, %230 : vector<2x128xf32>
    %344 = arith.addf %330, %343 : vector<2x128xf32>
    %345 = vector.broadcast %320 : vector<2x1xf32> to vector<2x128xf32>
    %346 = arith.mulf %345, %286 : vector<2x128xf32>
    %347 = vector.broadcast %322 : vector<2x1xf32> to vector<2x128xf32>
    %348 = arith.mulf %347, %235 : vector<2x128xf32>
    %349 = arith.addf %346, %348 : vector<2x128xf32>
    %350 = vector.broadcast %324 : vector<2x1xf32> to vector<2x128xf32>
    %351 = arith.mulf %350, %316 : vector<2x128xf32>
    %352 = vector.broadcast %326 : vector<2x1xf32> to vector<2x128xf32>
    %353 = arith.mulf %352, %240 : vector<2x128xf32>
    %354 = arith.addf %351, %353 : vector<2x128xf32>
    %c3 = arith.constant 3 : index
    %c0_130 = arith.constant 0 : index
    %c0_131 = arith.constant 0 : index
    %355 = vector.load %arg1[%c3, %c0_130, %c0_131] : memref<8x2x128xbf16, #tpu.memory_space<vmem>>, vector<1x2x128xbf16>
    %356 = vector.shape_cast %355 : vector<1x2x128xbf16> to vector<2x128xbf16>
    %c0_132 = arith.constant 0 : index
    %c0_133 = arith.constant 0 : index
    %c0_134 = arith.constant 0 : index
    %357 = vector.load %arg5[%c0_132, %c0_133, %c0_134] : memref<2x128x512xbf16, #tpu.memory_space<vmem>>, vector<1x128x512xbf16>
    %358 = vector.shape_cast %357 : vector<1x128x512xbf16> to vector<128x512xbf16>
    %cst_135 = arith.constant dense<0.000000e+00> : vector<2x512xf32>
    %359 = tpu.matmul %356, %358, %cst_135 {dimension_numbers = #tpu.dot_dimension_numbers<[1], [0], [0], [1], [0, 0, 1, 1], [], []>} : vector<2x128xbf16>, vector<128x512xbf16>, vector<2x512xf32> -> vector<2x512xf32>
    %c4 = arith.constant 4 : index
    %c0_136 = arith.constant 0 : index
    %c0_137 = arith.constant 0 : index
    %360 = vector.load %arg2[%c4, %c0_136, %c0_137] : memref<8x2x128xbf16, #tpu.memory_space<vmem>>, vector<1x2x128xbf16>
    %361 = vector.shape_cast %360 : vector<1x2x128xbf16> to vector<2x128xbf16>
    %c1_138 = arith.constant 1 : index
    %c0_139 = arith.constant 0 : index
    %c0_140 = arith.constant 0 : index
    %362 = vector.load %arg5[%c1_138, %c0_139, %c0_140] : memref<2x128x512xbf16, #tpu.memory_space<vmem>>, vector<1x128x512xbf16>
    %363 = vector.shape_cast %362 : vector<1x128x512xbf16> to vector<128x512xbf16>
    %cst_141 = arith.constant dense<0.000000e+00> : vector<2x512xf32>
    %364 = tpu.matmul %361, %363, %cst_141 {dimension_numbers = #tpu.dot_dimension_numbers<[1], [0], [0], [1], [0, 0, 1, 1], [], []>} : vector<2x128xbf16>, vector<128x512xbf16>, vector<2x512xf32> -> vector<2x512xf32>
    %365 = arith.truncf %341 : vector<2x128xf32> to vector<2x128xbf16>
    %c0_142 = arith.constant 0 : index
    %c0_143 = arith.constant 0 : index
    %c0_144 = arith.constant 0 : index
    %366 = vector.load %arg6[%c0_142, %c0_143, %c0_144] : memref<2x128x512xbf16, #tpu.memory_space<vmem>>, vector<1x128x512xbf16>
    %367 = vector.shape_cast %366 : vector<1x128x512xbf16> to vector<128x512xbf16>
    %cst_145 = arith.constant dense<0.000000e+00> : vector<2x512xf32>
    %368 = tpu.matmul %365, %367, %cst_145 {dimension_numbers = #tpu.dot_dimension_numbers<[1], [0], [0], [1], [0, 0, 1, 1], [], []>} : vector<2x128xbf16>, vector<128x512xbf16>, vector<2x512xf32> -> vector<2x512xf32>
    %369 = arith.truncf %344 : vector<2x128xf32> to vector<2x128xbf16>
    %c1_146 = arith.constant 1 : index
    %c0_147 = arith.constant 0 : index
    %c0_148 = arith.constant 0 : index
    %370 = vector.load %arg6[%c1_146, %c0_147, %c0_148] : memref<2x128x512xbf16, #tpu.memory_space<vmem>>, vector<1x128x512xbf16>
    %371 = vector.shape_cast %370 : vector<1x128x512xbf16> to vector<128x512xbf16>
    %cst_149 = arith.constant dense<0.000000e+00> : vector<2x512xf32>
    %372 = tpu.matmul %369, %371, %cst_149 {dimension_numbers = #tpu.dot_dimension_numbers<[1], [0], [0], [1], [0, 0, 1, 1], [], []>} : vector<2x128xbf16>, vector<128x512xbf16>, vector<2x512xf32> -> vector<2x512xf32>
    %373 = arith.addf %359, %368 : vector<2x512xf32>
    %c0_150 = arith.constant 0 : index
    %c0_151 = arith.constant 0 : index
    %c0_152 = arith.constant 0 : index
    %374 = vector.load %arg7[%c0_150, %c0_151, %c0_152] : memref<2x1x512xf32, #tpu.memory_space<vmem>>, vector<1x1x512xf32>
    %375 = vector.shape_cast %374 : vector<1x1x512xf32> to vector<1x512xf32>
    %376 = vector.broadcast %375 : vector<1x512xf32> to vector<2x512xf32>
    %377 = arith.addf %373, %376 : vector<2x512xf32>
    %378 = vector.extract_strided_slice %377 {offsets = [0, 0], sizes = [2, 128], strides = [1, 1]} : vector<2x512xf32> to vector<2x128xf32>
    %379 = arith.negf %378 : vector<2x128xf32>
    %380 = math.exp %379 : vector<2x128xf32>
    %cst_153 = arith.constant 1.000000e+00 : f32
    %381 = vector.broadcast %cst_153 : f32 to vector<2x128xf32>
    %382 = arith.addf %381, %380 : vector<2x128xf32>
    %383 = arith.divf %381, %382 : vector<2x128xf32>
    %384 = vector.extract_strided_slice %377 {offsets = [0, 128], sizes = [2, 128], strides = [1, 1]} : vector<2x512xf32> to vector<2x128xf32>
    %385 = arith.negf %384 : vector<2x128xf32>
    %386 = math.exp %385 : vector<2x128xf32>
    %cst_154 = arith.constant 1.000000e+00 : f32
    %387 = vector.broadcast %cst_154 : f32 to vector<2x128xf32>
    %388 = arith.addf %387, %386 : vector<2x128xf32>
    %389 = arith.divf %387, %388 : vector<2x128xf32>
    %390 = vector.extract_strided_slice %377 {offsets = [0, 256], sizes = [2, 128], strides = [1, 1]} : vector<2x512xf32> to vector<2x128xf32>
    %391 = math.tanh %390 : vector<2x128xf32>
    %392 = vector.extract_strided_slice %377 {offsets = [0, 384], sizes = [2, 128], strides = [1, 1]} : vector<2x512xf32> to vector<2x128xf32>
    %393 = arith.negf %392 : vector<2x128xf32>
    %394 = math.exp %393 : vector<2x128xf32>
    %cst_155 = arith.constant 1.000000e+00 : f32
    %395 = vector.broadcast %cst_155 : f32 to vector<2x128xf32>
    %396 = arith.addf %395, %394 : vector<2x128xf32>
    %397 = arith.divf %395, %396 : vector<2x128xf32>
    %398 = arith.mulf %389, %349 : vector<2x128xf32>
    %399 = arith.mulf %383, %391 : vector<2x128xf32>
    %400 = arith.addf %398, %399 : vector<2x128xf32>
    %401 = math.tanh %400 : vector<2x128xf32>
    %402 = arith.mulf %397, %401 : vector<2x128xf32>
    %403 = arith.addf %364, %372 : vector<2x512xf32>
    %c1_156 = arith.constant 1 : index
    %c0_157 = arith.constant 0 : index
    %c0_158 = arith.constant 0 : index
    %404 = vector.load %arg7[%c1_156, %c0_157, %c0_158] : memref<2x1x512xf32, #tpu.memory_space<vmem>>, vector<1x1x512xf32>
    %405 = vector.shape_cast %404 : vector<1x1x512xf32> to vector<1x512xf32>
    %406 = vector.broadcast %405 : vector<1x512xf32> to vector<2x512xf32>
    %407 = arith.addf %403, %406 : vector<2x512xf32>
    %408 = vector.extract_strided_slice %407 {offsets = [0, 0], sizes = [2, 128], strides = [1, 1]} : vector<2x512xf32> to vector<2x128xf32>
    %409 = arith.negf %408 : vector<2x128xf32>
    %410 = math.exp %409 : vector<2x128xf32>
    %cst_159 = arith.constant 1.000000e+00 : f32
    %411 = vector.broadcast %cst_159 : f32 to vector<2x128xf32>
    %412 = arith.addf %411, %410 : vector<2x128xf32>
    %413 = arith.divf %411, %412 : vector<2x128xf32>
    %414 = vector.extract_strided_slice %407 {offsets = [0, 128], sizes = [2, 128], strides = [1, 1]} : vector<2x512xf32> to vector<2x128xf32>
    %415 = arith.negf %414 : vector<2x128xf32>
    %416 = math.exp %415 : vector<2x128xf32>
    %cst_160 = arith.constant 1.000000e+00 : f32
    %417 = vector.broadcast %cst_160 : f32 to vector<2x128xf32>
    %418 = arith.addf %417, %416 : vector<2x128xf32>
    %419 = arith.divf %417, %418 : vector<2x128xf32>
    %420 = vector.extract_strided_slice %407 {offsets = [0, 256], sizes = [2, 128], strides = [1, 1]} : vector<2x512xf32> to vector<2x128xf32>
    %421 = math.tanh %420 : vector<2x128xf32>
    %422 = vector.extract_strided_slice %407 {offsets = [0, 384], sizes = [2, 128], strides = [1, 1]} : vector<2x512xf32> to vector<2x128xf32>
    %423 = arith.negf %422 : vector<2x128xf32>
    %424 = math.exp %423 : vector<2x128xf32>
    %cst_161 = arith.constant 1.000000e+00 : f32
    %425 = vector.broadcast %cst_161 : f32 to vector<2x128xf32>
    %426 = arith.addf %425, %424 : vector<2x128xf32>
    %427 = arith.divf %425, %426 : vector<2x128xf32>
    %428 = arith.mulf %419, %354 : vector<2x128xf32>
    %429 = arith.mulf %413, %421 : vector<2x128xf32>
    %430 = arith.addf %428, %429 : vector<2x128xf32>
    %431 = math.tanh %430 : vector<2x128xf32>
    %432 = arith.mulf %427, %431 : vector<2x128xf32>
    %433 = vector.extract_strided_slice %3 {offsets = [3, 0, 0], sizes = [1, 2, 1], strides = [1, 1, 1]} : vector<8x2x1xf32> to vector<1x2x1xf32>
    %434 = vector.shape_cast %433 : vector<1x2x1xf32> to vector<2x1xf32>
    %435 = vector.extract_strided_slice %6 {offsets = [3, 0, 0], sizes = [1, 2, 1], strides = [1, 1, 1]} : vector<8x2x1xf32> to vector<1x2x1xf32>
    %436 = vector.shape_cast %435 : vector<1x2x1xf32> to vector<2x1xf32>
    %437 = vector.extract_strided_slice %4 {offsets = [4, 0, 0], sizes = [1, 2, 1], strides = [1, 1, 1]} : vector<8x2x1xf32> to vector<1x2x1xf32>
    %438 = vector.shape_cast %437 : vector<1x2x1xf32> to vector<2x1xf32>
    %439 = vector.extract_strided_slice %8 {offsets = [4, 0, 0], sizes = [1, 2, 1], strides = [1, 1, 1]} : vector<8x2x1xf32> to vector<1x2x1xf32>
    %440 = vector.shape_cast %439 : vector<1x2x1xf32> to vector<2x1xf32>
    %441 = vector.broadcast %434 : vector<2x1xf32> to vector<2x128xf32>
    %442 = arith.mulf %441, %402 : vector<2x128xf32>
    %443 = vector.broadcast %438 : vector<2x1xf32> to vector<2x128xf32>
    %444 = arith.mulf %443, %432 : vector<2x128xf32>
    %445 = arith.truncf %442 : vector<2x128xf32> to vector<2x128xbf16>
    %c3_162 = arith.constant 3 : index
    %c0_163 = arith.constant 0 : index
    %c0_164 = arith.constant 0 : index
    %446 = vector.load %arg8[%c3_162, %c0_163, %c0_164] : memref<8x2x128xbf16, #tpu.memory_space<vmem>>, vector<1x2x128xbf16>
    %447 = vector.shape_cast %446 : vector<1x2x128xbf16> to vector<2x128xbf16>
    %448 = vector.shape_cast %445 : vector<2x128xbf16> to vector<1x2x128xbf16>
    tpu.vector_store %arg8[%c3_162, %c0_163, %c0_164], %448 {strides = array<i32>} : memref<8x2x128xbf16, #tpu.memory_space<vmem>>, vector<1x2x128xbf16>,
    %449 = arith.truncf %444 : vector<2x128xf32> to vector<2x128xbf16>
    %c4_165 = arith.constant 4 : index
    %c0_166 = arith.constant 0 : index
    %c0_167 = arith.constant 0 : index
    %450 = vector.load %arg9[%c4_165, %c0_166, %c0_167] : memref<8x2x128xbf16, #tpu.memory_space<vmem>>, vector<1x2x128xbf16>
    %451 = vector.shape_cast %450 : vector<1x2x128xbf16> to vector<2x128xbf16>
    %452 = vector.shape_cast %449 : vector<2x128xbf16> to vector<1x2x128xbf16>
    tpu.vector_store %arg9[%c4_165, %c0_166, %c0_167], %452 {strides = array<i32>} : memref<8x2x128xbf16, #tpu.memory_space<vmem>>, vector<1x2x128xbf16>,
    %453 = vector.broadcast %436 : vector<2x1xf32> to vector<2x128xf32>
    %454 = arith.mulf %453, %341 : vector<2x128xf32>
    %455 = arith.addf %442, %454 : vector<2x128xf32>
    %456 = vector.broadcast %440 : vector<2x1xf32> to vector<2x128xf32>
    %457 = arith.mulf %456, %344 : vector<2x128xf32>
    %458 = arith.addf %444, %457 : vector<2x128xf32>
    %459 = vector.broadcast %434 : vector<2x1xf32> to vector<2x128xf32>
    %460 = arith.mulf %459, %400 : vector<2x128xf32>
    %461 = vector.broadcast %436 : vector<2x1xf32> to vector<2x128xf32>
    %462 = arith.mulf %461, %349 : vector<2x128xf32>
    %463 = arith.addf %460, %462 : vector<2x128xf32>
    %464 = vector.broadcast %438 : vector<2x1xf32> to vector<2x128xf32>
    %465 = arith.mulf %464, %430 : vector<2x128xf32>
    %466 = vector.broadcast %440 : vector<2x1xf32> to vector<2x128xf32>
    %467 = arith.mulf %466, %354 : vector<2x128xf32>
    %468 = arith.addf %465, %467 : vector<2x128xf32>
    %c4_168 = arith.constant 4 : index
    %c0_169 = arith.constant 0 : index
    %c0_170 = arith.constant 0 : index
    %469 = vector.load %arg1[%c4_168, %c0_169, %c0_170] : memref<8x2x128xbf16, #tpu.memory_space<vmem>>, vector<1x2x128xbf16>
    %470 = vector.shape_cast %469 : vector<1x2x128xbf16> to vector<2x128xbf16>
    %c0_171 = arith.constant 0 : index
    %c0_172 = arith.constant 0 : index
    %c0_173 = arith.constant 0 : index
    %471 = vector.load %arg5[%c0_171, %c0_172, %c0_173] : memref<2x128x512xbf16, #tpu.memory_space<vmem>>, vector<1x128x512xbf16>
    %472 = vector.shape_cast %471 : vector<1x128x512xbf16> to vector<128x512xbf16>
    %cst_174 = arith.constant dense<0.000000e+00> : vector<2x512xf32>
    %473 = tpu.matmul %470, %472, %cst_174 {dimension_numbers = #tpu.dot_dimension_numbers<[1], [0], [0], [1], [0, 0, 1, 1], [], []>} : vector<2x128xbf16>, vector<128x512xbf16>, vector<2x512xf32> -> vector<2x512xf32>
    %c3_175 = arith.constant 3 : index
    %c0_176 = arith.constant 0 : index
    %c0_177 = arith.constant 0 : index
    %474 = vector.load %arg2[%c3_175, %c0_176, %c0_177] : memref<8x2x128xbf16, #tpu.memory_space<vmem>>, vector<1x2x128xbf16>
    %475 = vector.shape_cast %474 : vector<1x2x128xbf16> to vector<2x128xbf16>
    %c1_178 = arith.constant 1 : index
    %c0_179 = arith.constant 0 : index
    %c0_180 = arith.constant 0 : index
    %476 = vector.load %arg5[%c1_178, %c0_179, %c0_180] : memref<2x128x512xbf16, #tpu.memory_space<vmem>>, vector<1x128x512xbf16>
    %477 = vector.shape_cast %476 : vector<1x128x512xbf16> to vector<128x512xbf16>
    %cst_181 = arith.constant dense<0.000000e+00> : vector<2x512xf32>
    %478 = tpu.matmul %475, %477, %cst_181 {dimension_numbers = #tpu.dot_dimension_numbers<[1], [0], [0], [1], [0, 0, 1, 1], [], []>} : vector<2x128xbf16>, vector<128x512xbf16>, vector<2x512xf32> -> vector<2x512xf32>
    %479 = arith.truncf %455 : vector<2x128xf32> to vector<2x128xbf16>
    %c0_182 = arith.constant 0 : index
    %c0_183 = arith.constant 0 : index
    %c0_184 = arith.constant 0 : index
    %480 = vector.load %arg6[%c0_182, %c0_183, %c0_184] : memref<2x128x512xbf16, #tpu.memory_space<vmem>>, vector<1x128x512xbf16>
    %481 = vector.shape_cast %480 : vector<1x128x512xbf16> to vector<128x512xbf16>
    %cst_185 = arith.constant dense<0.000000e+00> : vector<2x512xf32>
    %482 = tpu.matmul %479, %481, %cst_185 {dimension_numbers = #tpu.dot_dimension_numbers<[1], [0], [0], [1], [0, 0, 1, 1], [], []>} : vector<2x128xbf16>, vector<128x512xbf16>, vector<2x512xf32> -> vector<2x512xf32>
    %483 = arith.truncf %458 : vector<2x128xf32> to vector<2x128xbf16>
    %c1_186 = arith.constant 1 : index
    %c0_187 = arith.constant 0 : index
    %c0_188 = arith.constant 0 : index
    %484 = vector.load %arg6[%c1_186, %c0_187, %c0_188] : memref<2x128x512xbf16, #tpu.memory_space<vmem>>, vector<1x128x512xbf16>
    %485 = vector.shape_cast %484 : vector<1x128x512xbf16> to vector<128x512xbf16>
    %cst_189 = arith.constant dense<0.000000e+00> : vector<2x512xf32>
    %486 = tpu.matmul %483, %485, %cst_189 {dimension_numbers = #tpu.dot_dimension_numbers<[1], [0], [0], [1], [0, 0, 1, 1], [], []>} : vector<2x128xbf16>, vector<128x512xbf16>, vector<2x512xf32> -> vector<2x512xf32>
    %487 = arith.addf %473, %482 : vector<2x512xf32>
    %c0_190 = arith.constant 0 : index
    %c0_191 = arith.constant 0 : index
    %c0_192 = arith.constant 0 : index
    %488 = vector.load %arg7[%c0_190, %c0_191, %c0_192] : memref<2x1x512xf32, #tpu.memory_space<vmem>>, vector<1x1x512xf32>
    %489 = vector.shape_cast %488 : vector<1x1x512xf32> to vector<1x512xf32>
    %490 = vector.broadcast %489 : vector<1x512xf32> to vector<2x512xf32>
    %491 = arith.addf %487, %490 : vector<2x512xf32>
    %492 = vector.extract_strided_slice %491 {offsets = [0, 0], sizes = [2, 128], strides = [1, 1]} : vector<2x512xf32> to vector<2x128xf32>
    %493 = arith.negf %492 : vector<2x128xf32>
    %494 = math.exp %493 : vector<2x128xf32>
    %cst_193 = arith.constant 1.000000e+00 : f32
    %495 = vector.broadcast %cst_193 : f32 to vector<2x128xf32>
    %496 = arith.addf %495, %494 : vector<2x128xf32>
    %497 = arith.divf %495, %496 : vector<2x128xf32>
    %498 = vector.extract_strided_slice %491 {offsets = [0, 128], sizes = [2, 128], strides = [1, 1]} : vector<2x512xf32> to vector<2x128xf32>
    %499 = arith.negf %498 : vector<2x128xf32>
    %500 = math.exp %499 : vector<2x128xf32>
    %cst_194 = arith.constant 1.000000e+00 : f32
    %501 = vector.broadcast %cst_194 : f32 to vector<2x128xf32>
    %502 = arith.addf %501, %500 : vector<2x128xf32>
    %503 = arith.divf %501, %502 : vector<2x128xf32>
    %504 = vector.extract_strided_slice %491 {offsets = [0, 256], sizes = [2, 128], strides = [1, 1]} : vector<2x512xf32> to vector<2x128xf32>
    %505 = math.tanh %504 : vector<2x128xf32>
    %506 = vector.extract_strided_slice %491 {offsets = [0, 384], sizes = [2, 128], strides = [1, 1]} : vector<2x512xf32> to vector<2x128xf32>
    %507 = arith.negf %506 : vector<2x128xf32>
    %508 = math.exp %507 : vector<2x128xf32>
    %cst_195 = arith.constant 1.000000e+00 : f32
    %509 = vector.broadcast %cst_195 : f32 to vector<2x128xf32>
    %510 = arith.addf %509, %508 : vector<2x128xf32>
    %511 = arith.divf %509, %510 : vector<2x128xf32>
    %512 = arith.mulf %503, %463 : vector<2x128xf32>
    %513 = arith.mulf %497, %505 : vector<2x128xf32>
    %514 = arith.addf %512, %513 : vector<2x128xf32>
    %515 = math.tanh %514 : vector<2x128xf32>
    %516 = arith.mulf %511, %515 : vector<2x128xf32>
    %517 = arith.addf %478, %486 : vector<2x512xf32>
    %c1_196 = arith.constant 1 : index
    %c0_197 = arith.constant 0 : index
    %c0_198 = arith.constant 0 : index
    %518 = vector.load %arg7[%c1_196, %c0_197, %c0_198] : memref<2x1x512xf32, #tpu.memory_space<vmem>>, vector<1x1x512xf32>
    %519 = vector.shape_cast %518 : vector<1x1x512xf32> to vector<1x512xf32>
    %520 = vector.broadcast %519 : vector<1x512xf32> to vector<2x512xf32>
    %521 = arith.addf %517, %520 : vector<2x512xf32>
    %522 = vector.extract_strided_slice %521 {offsets = [0, 0], sizes = [2, 128], strides = [1, 1]} : vector<2x512xf32> to vector<2x128xf32>
    %523 = arith.negf %522 : vector<2x128xf32>
    %524 = math.exp %523 : vector<2x128xf32>
    %cst_199 = arith.constant 1.000000e+00 : f32
    %525 = vector.broadcast %cst_199 : f32 to vector<2x128xf32>
    %526 = arith.addf %525, %524 : vector<2x128xf32>
    %527 = arith.divf %525, %526 : vector<2x128xf32>
    %528 = vector.extract_strided_slice %521 {offsets = [0, 128], sizes = [2, 128], strides = [1, 1]} : vector<2x512xf32> to vector<2x128xf32>
    %529 = arith.negf %528 : vector<2x128xf32>
    %530 = math.exp %529 : vector<2x128xf32>
    %cst_200 = arith.constant 1.000000e+00 : f32
    %531 = vector.broadcast %cst_200 : f32 to vector<2x128xf32>
    %532 = arith.addf %531, %530 : vector<2x128xf32>
    %533 = arith.divf %531, %532 : vector<2x128xf32>
    %534 = vector.extract_strided_slice %521 {offsets = [0, 256], sizes = [2, 128], strides = [1, 1]} : vector<2x512xf32> to vector<2x128xf32>
    %535 = math.tanh %534 : vector<2x128xf32>
    %536 = vector.extract_strided_slice %521 {offsets = [0, 384], sizes = [2, 128], strides = [1, 1]} : vector<2x512xf32> to vector<2x128xf32>
    %537 = arith.negf %536 : vector<2x128xf32>
    %538 = math.exp %537 : vector<2x128xf32>
    %cst_201 = arith.constant 1.000000e+00 : f32
    %539 = vector.broadcast %cst_201 : f32 to vector<2x128xf32>
    %540 = arith.addf %539, %538 : vector<2x128xf32>
    %541 = arith.divf %539, %540 : vector<2x128xf32>
    %542 = arith.mulf %533, %468 : vector<2x128xf32>
    %543 = arith.mulf %527, %535 : vector<2x128xf32>
    %544 = arith.addf %542, %543 : vector<2x128xf32>
    %545 = math.tanh %544 : vector<2x128xf32>
    %546 = arith.mulf %541, %545 : vector<2x128xf32>
    %547 = vector.extract_strided_slice %3 {offsets = [4, 0, 0], sizes = [1, 2, 1], strides = [1, 1, 1]} : vector<8x2x1xf32> to vector<1x2x1xf32>
    %548 = vector.shape_cast %547 : vector<1x2x1xf32> to vector<2x1xf32>
    %549 = vector.extract_strided_slice %6 {offsets = [4, 0, 0], sizes = [1, 2, 1], strides = [1, 1, 1]} : vector<8x2x1xf32> to vector<1x2x1xf32>
    %550 = vector.shape_cast %549 : vector<1x2x1xf32> to vector<2x1xf32>
    %551 = vector.extract_strided_slice %4 {offsets = [3, 0, 0], sizes = [1, 2, 1], strides = [1, 1, 1]} : vector<8x2x1xf32> to vector<1x2x1xf32>
    %552 = vector.shape_cast %551 : vector<1x2x1xf32> to vector<2x1xf32>
    %553 = vector.extract_strided_slice %8 {offsets = [3, 0, 0], sizes = [1, 2, 1], strides = [1, 1, 1]} : vector<8x2x1xf32> to vector<1x2x1xf32>
    %554 = vector.shape_cast %553 : vector<1x2x1xf32> to vector<2x1xf32>
    %555 = vector.broadcast %548 : vector<2x1xf32> to vector<2x128xf32>
    %556 = arith.mulf %555, %516 : vector<2x128xf32>
    %557 = vector.broadcast %552 : vector<2x1xf32> to vector<2x128xf32>
    %558 = arith.mulf %557, %546 : vector<2x128xf32>
    %559 = arith.truncf %556 : vector<2x128xf32> to vector<2x128xbf16>
    %c4_202 = arith.constant 4 : index
    %c0_203 = arith.constant 0 : index
    %c0_204 = arith.constant 0 : index
    %560 = vector.load %arg8[%c4_202, %c0_203, %c0_204] : memref<8x2x128xbf16, #tpu.memory_space<vmem>>, vector<1x2x128xbf16>
    %561 = vector.shape_cast %560 : vector<1x2x128xbf16> to vector<2x128xbf16>
    %562 = vector.shape_cast %559 : vector<2x128xbf16> to vector<1x2x128xbf16>
    tpu.vector_store %arg8[%c4_202, %c0_203, %c0_204], %562 {strides = array<i32>} : memref<8x2x128xbf16, #tpu.memory_space<vmem>>, vector<1x2x128xbf16>,
    %563 = arith.truncf %558 : vector<2x128xf32> to vector<2x128xbf16>
    %c3_205 = arith.constant 3 : index
    %c0_206 = arith.constant 0 : index
    %c0_207 = arith.constant 0 : index
    %564 = vector.load %arg9[%c3_205, %c0_206, %c0_207] : memref<8x2x128xbf16, #tpu.memory_space<vmem>>, vector<1x2x128xbf16>
    %565 = vector.shape_cast %564 : vector<1x2x128xbf16> to vector<2x128xbf16>
    %566 = vector.shape_cast %563 : vector<2x128xbf16> to vector<1x2x128xbf16>
    tpu.vector_store %arg9[%c3_205, %c0_206, %c0_207], %566 {strides = array<i32>} : memref<8x2x128xbf16, #tpu.memory_space<vmem>>, vector<1x2x128xbf16>,
    %567 = vector.broadcast %550 : vector<2x1xf32> to vector<2x128xf32>
    %568 = arith.mulf %567, %455 : vector<2x128xf32>
    %569 = arith.addf %556, %568 : vector<2x128xf32>
    %570 = vector.broadcast %554 : vector<2x1xf32> to vector<2x128xf32>
    %571 = arith.mulf %570, %458 : vector<2x128xf32>
    %572 = arith.addf %558, %571 : vector<2x128xf32>
    %573 = vector.broadcast %548 : vector<2x1xf32> to vector<2x128xf32>
    %574 = arith.mulf %573, %514 : vector<2x128xf32>
    %575 = vector.broadcast %550 : vector<2x1xf32> to vector<2x128xf32>
    %576 = arith.mulf %575, %463 : vector<2x128xf32>
    %577 = arith.addf %574, %576 : vector<2x128xf32>
    %578 = vector.broadcast %552 : vector<2x1xf32> to vector<2x128xf32>
    %579 = arith.mulf %578, %544 : vector<2x128xf32>
    %580 = vector.broadcast %554 : vector<2x1xf32> to vector<2x128xf32>
    %581 = arith.mulf %580, %468 : vector<2x128xf32>
    %582 = arith.addf %579, %581 : vector<2x128xf32>
    %c5_208 = arith.constant 5 : index
    %c0_209 = arith.constant 0 : index
    %c0_210 = arith.constant 0 : index
    %583 = vector.load %arg1[%c5_208, %c0_209, %c0_210] : memref<8x2x128xbf16, #tpu.memory_space<vmem>>, vector<1x2x128xbf16>
    %584 = vector.shape_cast %583 : vector<1x2x128xbf16> to vector<2x128xbf16>
    %c0_211 = arith.constant 0 : index
    %c0_212 = arith.constant 0 : index
    %c0_213 = arith.constant 0 : index
    %585 = vector.load %arg5[%c0_211, %c0_212, %c0_213] : memref<2x128x512xbf16, #tpu.memory_space<vmem>>, vector<1x128x512xbf16>
    %586 = vector.shape_cast %585 : vector<1x128x512xbf16> to vector<128x512xbf16>
    %cst_214 = arith.constant dense<0.000000e+00> : vector<2x512xf32>
    %587 = tpu.matmul %584, %586, %cst_214 {dimension_numbers = #tpu.dot_dimension_numbers<[1], [0], [0], [1], [0, 0, 1, 1], [], []>} : vector<2x128xbf16>, vector<128x512xbf16>, vector<2x512xf32> -> vector<2x512xf32>
    %c2_215 = arith.constant 2 : index
    %c0_216 = arith.constant 0 : index
    %c0_217 = arith.constant 0 : index
    %588 = vector.load %arg2[%c2_215, %c0_216, %c0_217] : memref<8x2x128xbf16, #tpu.memory_space<vmem>>, vector<1x2x128xbf16>
    %589 = vector.shape_cast %588 : vector<1x2x128xbf16> to vector<2x128xbf16>
    %c1_218 = arith.constant 1 : index
    %c0_219 = arith.constant 0 : index
    %c0_220 = arith.constant 0 : index
    %590 = vector.load %arg5[%c1_218, %c0_219, %c0_220] : memref<2x128x512xbf16, #tpu.memory_space<vmem>>, vector<1x128x512xbf16>
    %591 = vector.shape_cast %590 : vector<1x128x512xbf16> to vector<128x512xbf16>
    %cst_221 = arith.constant dense<0.000000e+00> : vector<2x512xf32>
    %592 = tpu.matmul %589, %591, %cst_221 {dimension_numbers = #tpu.dot_dimension_numbers<[1], [0], [0], [1], [0, 0, 1, 1], [], []>} : vector<2x128xbf16>, vector<128x512xbf16>, vector<2x512xf32> -> vector<2x512xf32>
    %593 = arith.truncf %569 : vector<2x128xf32> to vector<2x128xbf16>
    %c0_222 = arith.constant 0 : index
    %c0_223 = arith.constant 0 : index
    %c0_224 = arith.constant 0 : index
    %594 = vector.load %arg6[%c0_222, %c0_223, %c0_224] : memref<2x128x512xbf16, #tpu.memory_space<vmem>>, vector<1x128x512xbf16>
    %595 = vector.shape_cast %594 : vector<1x128x512xbf16> to vector<128x512xbf16>
    %cst_225 = arith.constant dense<0.000000e+00> : vector<2x512xf32>
    %596 = tpu.matmul %593, %595, %cst_225 {dimension_numbers = #tpu.dot_dimension_numbers<[1], [0], [0], [1], [0, 0, 1, 1], [], []>} : vector<2x128xbf16>, vector<128x512xbf16>, vector<2x512xf32> -> vector<2x512xf32>
    %597 = arith.truncf %572 : vector<2x128xf32> to vector<2x128xbf16>
    %c1_226 = arith.constant 1 : index
    %c0_227 = arith.constant 0 : index
    %c0_228 = arith.constant 0 : index
    %598 = vector.load %arg6[%c1_226, %c0_227, %c0_228] : memref<2x128x512xbf16, #tpu.memory_space<vmem>>, vector<1x128x512xbf16>
    %599 = vector.shape_cast %598 : vector<1x128x512xbf16> to vector<128x512xbf16>
    %cst_229 = arith.constant dense<0.000000e+00> : vector<2x512xf32>
    %600 = tpu.matmul %597, %599, %cst_229 {dimension_numbers = #tpu.dot_dimension_numbers<[1], [0], [0], [1], [0, 0, 1, 1], [], []>} : vector<2x128xbf16>, vector<128x512xbf16>, vector<2x512xf32> -> vector<2x512xf32>
    %601 = arith.addf %587, %596 : vector<2x512xf32>
    %c0_230 = arith.constant 0 : index
    %c0_231 = arith.constant 0 : index
    %c0_232 = arith.constant 0 : index
    %602 = vector.load %arg7[%c0_230, %c0_231, %c0_232] : memref<2x1x512xf32, #tpu.memory_space<vmem>>, vector<1x1x512xf32>
    %603 = vector.shape_cast %602 : vector<1x1x512xf32> to vector<1x512xf32>
    %604 = vector.broadcast %603 : vector<1x512xf32> to vector<2x512xf32>
    %605 = arith.addf %601, %604 : vector<2x512xf32>
    %606 = vector.extract_strided_slice %605 {offsets = [0, 0], sizes = [2, 128], strides = [1, 1]} : vector<2x512xf32> to vector<2x128xf32>
    %607 = arith.negf %606 : vector<2x128xf32>
    %608 = math.exp %607 : vector<2x128xf32>
    %cst_233 = arith.constant 1.000000e+00 : f32
    %609 = vector.broadcast %cst_233 : f32 to vector<2x128xf32>
    %610 = arith.addf %609, %608 : vector<2x128xf32>
    %611 = arith.divf %609, %610 : vector<2x128xf32>
    %612 = vector.extract_strided_slice %605 {offsets = [0, 128], sizes = [2, 128], strides = [1, 1]} : vector<2x512xf32> to vector<2x128xf32>
    %613 = arith.negf %612 : vector<2x128xf32>
    %614 = math.exp %613 : vector<2x128xf32>
    %cst_234 = arith.constant 1.000000e+00 : f32
    %615 = vector.broadcast %cst_234 : f32 to vector<2x128xf32>
    %616 = arith.addf %615, %614 : vector<2x128xf32>
    %617 = arith.divf %615, %616 : vector<2x128xf32>
    %618 = vector.extract_strided_slice %605 {offsets = [0, 256], sizes = [2, 128], strides = [1, 1]} : vector<2x512xf32> to vector<2x128xf32>
    %619 = math.tanh %618 : vector<2x128xf32>
    %620 = vector.extract_strided_slice %605 {offsets = [0, 384], sizes = [2, 128], strides = [1, 1]} : vector<2x512xf32> to vector<2x128xf32>
    %621 = arith.negf %620 : vector<2x128xf32>
    %622 = math.exp %621 : vector<2x128xf32>
    %cst_235 = arith.constant 1.000000e+00 : f32
    %623 = vector.broadcast %cst_235 : f32 to vector<2x128xf32>
    %624 = arith.addf %623, %622 : vector<2x128xf32>
    %625 = arith.divf %623, %624 : vector<2x128xf32>
    %626 = arith.mulf %617, %577 : vector<2x128xf32>
    %627 = arith.mulf %611, %619 : vector<2x128xf32>
    %628 = arith.addf %626, %627 : vector<2x128xf32>
    %629 = math.tanh %628 : vector<2x128xf32>
    %630 = arith.mulf %625, %629 : vector<2x128xf32>
    %631 = arith.addf %592, %600 : vector<2x512xf32>
    %c1_236 = arith.constant 1 : index
    %c0_237 = arith.constant 0 : index
    %c0_238 = arith.constant 0 : index
    %632 = vector.load %arg7[%c1_236, %c0_237, %c0_238] : memref<2x1x512xf32, #tpu.memory_space<vmem>>, vector<1x1x512xf32>
    %633 = vector.shape_cast %632 : vector<1x1x512xf32> to vector<1x512xf32>
    %634 = vector.broadcast %633 : vector<1x512xf32> to vector<2x512xf32>
    %635 = arith.addf %631, %634 : vector<2x512xf32>
    %636 = vector.extract_strided_slice %635 {offsets = [0, 0], sizes = [2, 128], strides = [1, 1]} : vector<2x512xf32> to vector<2x128xf32>
    %637 = arith.negf %636 : vector<2x128xf32>
    %638 = math.exp %637 : vector<2x128xf32>
    %cst_239 = arith.constant 1.000000e+00 : f32
    %639 = vector.broadcast %cst_239 : f32 to vector<2x128xf32>
    %640 = arith.addf %639, %638 : vector<2x128xf32>
    %641 = arith.divf %639, %640 : vector<2x128xf32>
    %642 = vector.extract_strided_slice %635 {offsets = [0, 128], sizes = [2, 128], strides = [1, 1]} : vector<2x512xf32> to vector<2x128xf32>
    %643 = arith.negf %642 : vector<2x128xf32>
    %644 = math.exp %643 : vector<2x128xf32>
    %cst_240 = arith.constant 1.000000e+00 : f32
    %645 = vector.broadcast %cst_240 : f32 to vector<2x128xf32>
    %646 = arith.addf %645, %644 : vector<2x128xf32>
    %647 = arith.divf %645, %646 : vector<2x128xf32>
    %648 = vector.extract_strided_slice %635 {offsets = [0, 256], sizes = [2, 128], strides = [1, 1]} : vector<2x512xf32> to vector<2x128xf32>
    %649 = math.tanh %648 : vector<2x128xf32>
    %650 = vector.extract_strided_slice %635 {offsets = [0, 384], sizes = [2, 128], strides = [1, 1]} : vector<2x512xf32> to vector<2x128xf32>
    %651 = arith.negf %650 : vector<2x128xf32>
    %652 = math.exp %651 : vector<2x128xf32>
    %cst_241 = arith.constant 1.000000e+00 : f32
    %653 = vector.broadcast %cst_241 : f32 to vector<2x128xf32>
    %654 = arith.addf %653, %652 : vector<2x128xf32>
    %655 = arith.divf %653, %654 : vector<2x128xf32>
    %656 = arith.mulf %647, %582 : vector<2x128xf32>
    %657 = arith.mulf %641, %649 : vector<2x128xf32>
    %658 = arith.addf %656, %657 : vector<2x128xf32>
    %659 = math.tanh %658 : vector<2x128xf32>
    %660 = arith.mulf %655, %659 : vector<2x128xf32>
    %661 = vector.extract_strided_slice %3 {offsets = [5, 0, 0], sizes = [1, 2, 1], strides = [1, 1, 1]} : vector<8x2x1xf32> to vector<1x2x1xf32>
    %662 = vector.shape_cast %661 : vector<1x2x1xf32> to vector<2x1xf32>
    %663 = vector.extract_strided_slice %6 {offsets = [5, 0, 0], sizes = [1, 2, 1], strides = [1, 1, 1]} : vector<8x2x1xf32> to vector<1x2x1xf32>
    %664 = vector.shape_cast %663 : vector<1x2x1xf32> to vector<2x1xf32>
    %665 = vector.extract_strided_slice %4 {offsets = [2, 0, 0], sizes = [1, 2, 1], strides = [1, 1, 1]} : vector<8x2x1xf32> to vector<1x2x1xf32>
    %666 = vector.shape_cast %665 : vector<1x2x1xf32> to vector<2x1xf32>
    %667 = vector.extract_strided_slice %8 {offsets = [2, 0, 0], sizes = [1, 2, 1], strides = [1, 1, 1]} : vector<8x2x1xf32> to vector<1x2x1xf32>
    %668 = vector.shape_cast %667 : vector<1x2x1xf32> to vector<2x1xf32>
    %669 = vector.broadcast %662 : vector<2x1xf32> to vector<2x128xf32>
    %670 = arith.mulf %669, %630 : vector<2x128xf32>
    %671 = vector.broadcast %666 : vector<2x1xf32> to vector<2x128xf32>
    %672 = arith.mulf %671, %660 : vector<2x128xf32>
    %673 = arith.truncf %670 : vector<2x128xf32> to vector<2x128xbf16>
    %c5_242 = arith.constant 5 : index
    %c0_243 = arith.constant 0 : index
    %c0_244 = arith.constant 0 : index
    %674 = vector.load %arg8[%c5_242, %c0_243, %c0_244] : memref<8x2x128xbf16, #tpu.memory_space<vmem>>, vector<1x2x128xbf16>
    %675 = vector.shape_cast %674 : vector<1x2x128xbf16> to vector<2x128xbf16>
    %676 = vector.shape_cast %673 : vector<2x128xbf16> to vector<1x2x128xbf16>
    tpu.vector_store %arg8[%c5_242, %c0_243, %c0_244], %676 {strides = array<i32>} : memref<8x2x128xbf16, #tpu.memory_space<vmem>>, vector<1x2x128xbf16>,
    %677 = arith.truncf %672 : vector<2x128xf32> to vector<2x128xbf16>
    %c2_245 = arith.constant 2 : index
    %c0_246 = arith.constant 0 : index
    %c0_247 = arith.constant 0 : index
    %678 = vector.load %arg9[%c2_245, %c0_246, %c0_247] : memref<8x2x128xbf16, #tpu.memory_space<vmem>>, vector<1x2x128xbf16>
    %679 = vector.shape_cast %678 : vector<1x2x128xbf16> to vector<2x128xbf16>
    %680 = vector.shape_cast %677 : vector<2x128xbf16> to vector<1x2x128xbf16>
    tpu.vector_store %arg9[%c2_245, %c0_246, %c0_247], %680 {strides = array<i32>} : memref<8x2x128xbf16, #tpu.memory_space<vmem>>, vector<1x2x128xbf16>,
    %681 = vector.broadcast %664 : vector<2x1xf32> to vector<2x128xf32>
    %682 = arith.mulf %681, %569 : vector<2x128xf32>
    %683 = arith.addf %670, %682 : vector<2x128xf32>
    %684 = vector.broadcast %668 : vector<2x1xf32> to vector<2x128xf32>
    %685 = arith.mulf %684, %572 : vector<2x128xf32>
    %686 = arith.addf %672, %685 : vector<2x128xf32>
    %687 = vector.broadcast %662 : vector<2x1xf32> to vector<2x128xf32>
    %688 = arith.mulf %687, %628 : vector<2x128xf32>
    %689 = vector.broadcast %664 : vector<2x1xf32> to vector<2x128xf32>
    %690 = arith.mulf %689, %577 : vector<2x128xf32>
    %691 = arith.addf %688, %690 : vector<2x128xf32>
    %692 = vector.broadcast %666 : vector<2x1xf32> to vector<2x128xf32>
    %693 = arith.mulf %692, %658 : vector<2x128xf32>
    %694 = vector.broadcast %668 : vector<2x1xf32> to vector<2x128xf32>
    %695 = arith.mulf %694, %582 : vector<2x128xf32>
    %696 = arith.addf %693, %695 : vector<2x128xf32>
    %c6_248 = arith.constant 6 : index
    %c0_249 = arith.constant 0 : index
    %c0_250 = arith.constant 0 : index
    %697 = vector.load %arg1[%c6_248, %c0_249, %c0_250] : memref<8x2x128xbf16, #tpu.memory_space<vmem>>, vector<1x2x128xbf16>
    %698 = vector.shape_cast %697 : vector<1x2x128xbf16> to vector<2x128xbf16>
    %c0_251 = arith.constant 0 : index
    %c0_252 = arith.constant 0 : index
    %c0_253 = arith.constant 0 : index
    %699 = vector.load %arg5[%c0_251, %c0_252, %c0_253] : memref<2x128x512xbf16, #tpu.memory_space<vmem>>, vector<1x128x512xbf16>
    %700 = vector.shape_cast %699 : vector<1x128x512xbf16> to vector<128x512xbf16>
    %cst_254 = arith.constant dense<0.000000e+00> : vector<2x512xf32>
    %701 = tpu.matmul %698, %700, %cst_254 {dimension_numbers = #tpu.dot_dimension_numbers<[1], [0], [0], [1], [0, 0, 1, 1], [], []>} : vector<2x128xbf16>, vector<128x512xbf16>, vector<2x512xf32> -> vector<2x512xf32>
    %c1_255 = arith.constant 1 : index
    %c0_256 = arith.constant 0 : index
    %c0_257 = arith.constant 0 : index
    %702 = vector.load %arg2[%c1_255, %c0_256, %c0_257] : memref<8x2x128xbf16, #tpu.memory_space<vmem>>, vector<1x2x128xbf16>
    %703 = vector.shape_cast %702 : vector<1x2x128xbf16> to vector<2x128xbf16>
    %c1_258 = arith.constant 1 : index
    %c0_259 = arith.constant 0 : index
    %c0_260 = arith.constant 0 : index
    %704 = vector.load %arg5[%c1_258, %c0_259, %c0_260] : memref<2x128x512xbf16, #tpu.memory_space<vmem>>, vector<1x128x512xbf16>
    %705 = vector.shape_cast %704 : vector<1x128x512xbf16> to vector<128x512xbf16>
    %cst_261 = arith.constant dense<0.000000e+00> : vector<2x512xf32>
    %706 = tpu.matmul %703, %705, %cst_261 {dimension_numbers = #tpu.dot_dimension_numbers<[1], [0], [0], [1], [0, 0, 1, 1], [], []>} : vector<2x128xbf16>, vector<128x512xbf16>, vector<2x512xf32> -> vector<2x512xf32>
    %707 = arith.truncf %683 : vector<2x128xf32> to vector<2x128xbf16>
    %c0_262 = arith.constant 0 : index
    %c0_263 = arith.constant 0 : index
    %c0_264 = arith.constant 0 : index
    %708 = vector.load %arg6[%c0_262, %c0_263, %c0_264] : memref<2x128x512xbf16, #tpu.memory_space<vmem>>, vector<1x128x512xbf16>
    %709 = vector.shape_cast %708 : vector<1x128x512xbf16> to vector<128x512xbf16>
    %cst_265 = arith.constant dense<0.000000e+00> : vector<2x512xf32>
    %710 = tpu.matmul %707, %709, %cst_265 {dimension_numbers = #tpu.dot_dimension_numbers<[1], [0], [0], [1], [0, 0, 1, 1], [], []>} : vector<2x128xbf16>, vector<128x512xbf16>, vector<2x512xf32> -> vector<2x512xf32>
    %711 = arith.truncf %686 : vector<2x128xf32> to vector<2x128xbf16>
    %c1_266 = arith.constant 1 : index
    %c0_267 = arith.constant 0 : index
    %c0_268 = arith.constant 0 : index
    %712 = vector.load %arg6[%c1_266, %c0_267, %c0_268] : memref<2x128x512xbf16, #tpu.memory_space<vmem>>, vector<1x128x512xbf16>
    %713 = vector.shape_cast %712 : vector<1x128x512xbf16> to vector<128x512xbf16>
    %cst_269 = arith.constant dense<0.000000e+00> : vector<2x512xf32>
    %714 = tpu.matmul %711, %713, %cst_269 {dimension_numbers = #tpu.dot_dimension_numbers<[1], [0], [0], [1], [0, 0, 1, 1], [], []>} : vector<2x128xbf16>, vector<128x512xbf16>, vector<2x512xf32> -> vector<2x512xf32>
    %715 = arith.addf %701, %710 : vector<2x512xf32>
    %c0_270 = arith.constant 0 : index
    %c0_271 = arith.constant 0 : index
    %c0_272 = arith.constant 0 : index
    %716 = vector.load %arg7[%c0_270, %c0_271, %c0_272] : memref<2x1x512xf32, #tpu.memory_space<vmem>>, vector<1x1x512xf32>
    %717 = vector.shape_cast %716 : vector<1x1x512xf32> to vector<1x512xf32>
    %718 = vector.broadcast %717 : vector<1x512xf32> to vector<2x512xf32>
    %719 = arith.addf %715, %718 : vector<2x512xf32>
    %720 = vector.extract_strided_slice %719 {offsets = [0, 0], sizes = [2, 128], strides = [1, 1]} : vector<2x512xf32> to vector<2x128xf32>
    %721 = arith.negf %720 : vector<2x128xf32>
    %722 = math.exp %721 : vector<2x128xf32>
    %cst_273 = arith.constant 1.000000e+00 : f32
    %723 = vector.broadcast %cst_273 : f32 to vector<2x128xf32>
    %724 = arith.addf %723, %722 : vector<2x128xf32>
    %725 = arith.divf %723, %724 : vector<2x128xf32>
    %726 = vector.extract_strided_slice %719 {offsets = [0, 128], sizes = [2, 128], strides = [1, 1]} : vector<2x512xf32> to vector<2x128xf32>
    %727 = arith.negf %726 : vector<2x128xf32>
    %728 = math.exp %727 : vector<2x128xf32>
    %cst_274 = arith.constant 1.000000e+00 : f32
    %729 = vector.broadcast %cst_274 : f32 to vector<2x128xf32>
    %730 = arith.addf %729, %728 : vector<2x128xf32>
    %731 = arith.divf %729, %730 : vector<2x128xf32>
    %732 = vector.extract_strided_slice %719 {offsets = [0, 256], sizes = [2, 128], strides = [1, 1]} : vector<2x512xf32> to vector<2x128xf32>
    %733 = math.tanh %732 : vector<2x128xf32>
    %734 = vector.extract_strided_slice %719 {offsets = [0, 384], sizes = [2, 128], strides = [1, 1]} : vector<2x512xf32> to vector<2x128xf32>
    %735 = arith.negf %734 : vector<2x128xf32>
    %736 = math.exp %735 : vector<2x128xf32>
    %cst_275 = arith.constant 1.000000e+00 : f32
    %737 = vector.broadcast %cst_275 : f32 to vector<2x128xf32>
    %738 = arith.addf %737, %736 : vector<2x128xf32>
    %739 = arith.divf %737, %738 : vector<2x128xf32>
    %740 = arith.mulf %731, %691 : vector<2x128xf32>
    %741 = arith.mulf %725, %733 : vector<2x128xf32>
    %742 = arith.addf %740, %741 : vector<2x128xf32>
    %743 = math.tanh %742 : vector<2x128xf32>
    %744 = arith.mulf %739, %743 : vector<2x128xf32>
    %745 = arith.addf %706, %714 : vector<2x512xf32>
    %c1_276 = arith.constant 1 : index
    %c0_277 = arith.constant 0 : index
    %c0_278 = arith.constant 0 : index
    %746 = vector.load %arg7[%c1_276, %c0_277, %c0_278] : memref<2x1x512xf32, #tpu.memory_space<vmem>>, vector<1x1x512xf32>
    %747 = vector.shape_cast %746 : vector<1x1x512xf32> to vector<1x512xf32>
    %748 = vector.broadcast %747 : vector<1x512xf32> to vector<2x512xf32>
    %749 = arith.addf %745, %748 : vector<2x512xf32>
    %750 = vector.extract_strided_slice %749 {offsets = [0, 0], sizes = [2, 128], strides = [1, 1]} : vector<2x512xf32> to vector<2x128xf32>
    %751 = arith.negf %750 : vector<2x128xf32>
    %752 = math.exp %751 : vector<2x128xf32>
    %cst_279 = arith.constant 1.000000e+00 : f32
    %753 = vector.broadcast %cst_279 : f32 to vector<2x128xf32>
    %754 = arith.addf %753, %752 : vector<2x128xf32>
    %755 = arith.divf %753, %754 : vector<2x128xf32>
    %756 = vector.extract_strided_slice %749 {offsets = [0, 128], sizes = [2, 128], strides = [1, 1]} : vector<2x512xf32> to vector<2x128xf32>
    %757 = arith.negf %756 : vector<2x128xf32>
    %758 = math.exp %757 : vector<2x128xf32>
    %cst_280 = arith.constant 1.000000e+00 : f32
    %759 = vector.broadcast %cst_280 : f32 to vector<2x128xf32>
    %760 = arith.addf %759, %758 : vector<2x128xf32>
    %761 = arith.divf %759, %760 : vector<2x128xf32>
    %762 = vector.extract_strided_slice %749 {offsets = [0, 256], sizes = [2, 128], strides = [1, 1]} : vector<2x512xf32> to vector<2x128xf32>
    %763 = math.tanh %762 : vector<2x128xf32>
    %764 = vector.extract_strided_slice %749 {offsets = [0, 384], sizes = [2, 128], strides = [1, 1]} : vector<2x512xf32> to vector<2x128xf32>
    %765 = arith.negf %764 : vector<2x128xf32>
    %766 = math.exp %765 : vector<2x128xf32>
    %cst_281 = arith.constant 1.000000e+00 : f32
    %767 = vector.broadcast %cst_281 : f32 to vector<2x128xf32>
    %768 = arith.addf %767, %766 : vector<2x128xf32>
    %769 = arith.divf %767, %768 : vector<2x128xf32>
    %770 = arith.mulf %761, %696 : vector<2x128xf32>
    %771 = arith.mulf %755, %763 : vector<2x128xf32>
    %772 = arith.addf %770, %771 : vector<2x128xf32>
    %773 = math.tanh %772 : vector<2x128xf32>
    %774 = arith.mulf %769, %773 : vector<2x128xf32>
    %775 = vector.extract_strided_slice %3 {offsets = [6, 0, 0], sizes = [1, 2, 1], strides = [1, 1, 1]} : vector<8x2x1xf32> to vector<1x2x1xf32>
    %776 = vector.shape_cast %775 : vector<1x2x1xf32> to vector<2x1xf32>
    %777 = vector.extract_strided_slice %6 {offsets = [6, 0, 0], sizes = [1, 2, 1], strides = [1, 1, 1]} : vector<8x2x1xf32> to vector<1x2x1xf32>
    %778 = vector.shape_cast %777 : vector<1x2x1xf32> to vector<2x1xf32>
    %779 = vector.extract_strided_slice %4 {offsets = [1, 0, 0], sizes = [1, 2, 1], strides = [1, 1, 1]} : vector<8x2x1xf32> to vector<1x2x1xf32>
    %780 = vector.shape_cast %779 : vector<1x2x1xf32> to vector<2x1xf32>
    %781 = vector.extract_strided_slice %8 {offsets = [1, 0, 0], sizes = [1, 2, 1], strides = [1, 1, 1]} : vector<8x2x1xf32> to vector<1x2x1xf32>
    %782 = vector.shape_cast %781 : vector<1x2x1xf32> to vector<2x1xf32>
    %783 = vector.broadcast %776 : vector<2x1xf32> to vector<2x128xf32>
    %784 = arith.mulf %783, %744 : vector<2x128xf32>
    %785 = vector.broadcast %780 : vector<2x1xf32> to vector<2x128xf32>
    %786 = arith.mulf %785, %774 : vector<2x128xf32>
    %787 = arith.truncf %784 : vector<2x128xf32> to vector<2x128xbf16>
    %c6_282 = arith.constant 6 : index
    %c0_283 = arith.constant 0 : index
    %c0_284 = arith.constant 0 : index
    %788 = vector.load %arg8[%c6_282, %c0_283, %c0_284] : memref<8x2x128xbf16, #tpu.memory_space<vmem>>, vector<1x2x128xbf16>
    %789 = vector.shape_cast %788 : vector<1x2x128xbf16> to vector<2x128xbf16>
    %790 = vector.shape_cast %787 : vector<2x128xbf16> to vector<1x2x128xbf16>
    tpu.vector_store %arg8[%c6_282, %c0_283, %c0_284], %790 {strides = array<i32>} : memref<8x2x128xbf16, #tpu.memory_space<vmem>>, vector<1x2x128xbf16>,
    %791 = arith.truncf %786 : vector<2x128xf32> to vector<2x128xbf16>
    %c1_285 = arith.constant 1 : index
    %c0_286 = arith.constant 0 : index
    %c0_287 = arith.constant 0 : index
    %792 = vector.load %arg9[%c1_285, %c0_286, %c0_287] : memref<8x2x128xbf16, #tpu.memory_space<vmem>>, vector<1x2x128xbf16>
    %793 = vector.shape_cast %792 : vector<1x2x128xbf16> to vector<2x128xbf16>
    %794 = vector.shape_cast %791 : vector<2x128xbf16> to vector<1x2x128xbf16>
    tpu.vector_store %arg9[%c1_285, %c0_286, %c0_287], %794 {strides = array<i32>} : memref<8x2x128xbf16, #tpu.memory_space<vmem>>, vector<1x2x128xbf16>,
    %795 = vector.broadcast %778 : vector<2x1xf32> to vector<2x128xf32>
    %796 = arith.mulf %795, %683 : vector<2x128xf32>
    %797 = arith.addf %784, %796 : vector<2x128xf32>
    %798 = vector.broadcast %782 : vector<2x1xf32> to vector<2x128xf32>
    %799 = arith.mulf %798, %686 : vector<2x128xf32>
    %800 = arith.addf %786, %799 : vector<2x128xf32>
    %801 = vector.broadcast %776 : vector<2x1xf32> to vector<2x128xf32>
    %802 = arith.mulf %801, %742 : vector<2x128xf32>
    %803 = vector.broadcast %778 : vector<2x1xf32> to vector<2x128xf32>
    %804 = arith.mulf %803, %691 : vector<2x128xf32>
    %805 = arith.addf %802, %804 : vector<2x128xf32>
    %806 = vector.broadcast %780 : vector<2x1xf32> to vector<2x128xf32>
    %807 = arith.mulf %806, %772 : vector<2x128xf32>
    %808 = vector.broadcast %782 : vector<2x1xf32> to vector<2x128xf32>
    %809 = arith.mulf %808, %696 : vector<2x128xf32>
    %810 = arith.addf %807, %809 : vector<2x128xf32>
    %c7_288 = arith.constant 7 : index
    %c0_289 = arith.constant 0 : index
    %c0_290 = arith.constant 0 : index
    %811 = vector.load %arg1[%c7_288, %c0_289, %c0_290] : memref<8x2x128xbf16, #tpu.memory_space<vmem>>, vector<1x2x128xbf16>
    %812 = vector.shape_cast %811 : vector<1x2x128xbf16> to vector<2x128xbf16>
    %c0_291 = arith.constant 0 : index
    %c0_292 = arith.constant 0 : index
    %c0_293 = arith.constant 0 : index
    %813 = vector.load %arg5[%c0_291, %c0_292, %c0_293] : memref<2x128x512xbf16, #tpu.memory_space<vmem>>, vector<1x128x512xbf16>
    %814 = vector.shape_cast %813 : vector<1x128x512xbf16> to vector<128x512xbf16>
    %cst_294 = arith.constant dense<0.000000e+00> : vector<2x512xf32>
    %815 = tpu.matmul %812, %814, %cst_294 {dimension_numbers = #tpu.dot_dimension_numbers<[1], [0], [0], [1], [0, 0, 1, 1], [], []>} : vector<2x128xbf16>, vector<128x512xbf16>, vector<2x512xf32> -> vector<2x512xf32>
    %c0_295 = arith.constant 0 : index
    %c0_296 = arith.constant 0 : index
    %c0_297 = arith.constant 0 : index
    %816 = vector.load %arg2[%c0_295, %c0_296, %c0_297] : memref<8x2x128xbf16, #tpu.memory_space<vmem>>, vector<1x2x128xbf16>
    %817 = vector.shape_cast %816 : vector<1x2x128xbf16> to vector<2x128xbf16>
    %c1_298 = arith.constant 1 : index
    %c0_299 = arith.constant 0 : index
    %c0_300 = arith.constant 0 : index
    %818 = vector.load %arg5[%c1_298, %c0_299, %c0_300] : memref<2x128x512xbf16, #tpu.memory_space<vmem>>, vector<1x128x512xbf16>
    %819 = vector.shape_cast %818 : vector<1x128x512xbf16> to vector<128x512xbf16>
    %cst_301 = arith.constant dense<0.000000e+00> : vector<2x512xf32>
    %820 = tpu.matmul %817, %819, %cst_301 {dimension_numbers = #tpu.dot_dimension_numbers<[1], [0], [0], [1], [0, 0, 1, 1], [], []>} : vector<2x128xbf16>, vector<128x512xbf16>, vector<2x512xf32> -> vector<2x512xf32>
    %821 = arith.truncf %797 : vector<2x128xf32> to vector<2x128xbf16>
    %c0_302 = arith.constant 0 : index
    %c0_303 = arith.constant 0 : index
    %c0_304 = arith.constant 0 : index
    %822 = vector.load %arg6[%c0_302, %c0_303, %c0_304] : memref<2x128x512xbf16, #tpu.memory_space<vmem>>, vector<1x128x512xbf16>
    %823 = vector.shape_cast %822 : vector<1x128x512xbf16> to vector<128x512xbf16>
    %cst_305 = arith.constant dense<0.000000e+00> : vector<2x512xf32>
    %824 = tpu.matmul %821, %823, %cst_305 {dimension_numbers = #tpu.dot_dimension_numbers<[1], [0], [0], [1], [0, 0, 1, 1], [], []>} : vector<2x128xbf16>, vector<128x512xbf16>, vector<2x512xf32> -> vector<2x512xf32>
    %825 = arith.truncf %800 : vector<2x128xf32> to vector<2x128xbf16>
    %c1_306 = arith.constant 1 : index
    %c0_307 = arith.constant 0 : index
    %c0_308 = arith.constant 0 : index
    %826 = vector.load %arg6[%c1_306, %c0_307, %c0_308] : memref<2x128x512xbf16, #tpu.memory_space<vmem>>, vector<1x128x512xbf16>
    %827 = vector.shape_cast %826 : vector<1x128x512xbf16> to vector<128x512xbf16>
    %cst_309 = arith.constant dense<0.000000e+00> : vector<2x512xf32>
    %828 = tpu.matmul %825, %827, %cst_309 {dimension_numbers = #tpu.dot_dimension_numbers<[1], [0], [0], [1], [0, 0, 1, 1], [], []>} : vector<2x128xbf16>, vector<128x512xbf16>, vector<2x512xf32> -> vector<2x512xf32>
    %829 = arith.addf %815, %824 : vector<2x512xf32>
    %c0_310 = arith.constant 0 : index
    %c0_311 = arith.constant 0 : index
    %c0_312 = arith.constant 0 : index
    %830 = vector.load %arg7[%c0_310, %c0_311, %c0_312] : memref<2x1x512xf32, #tpu.memory_space<vmem>>, vector<1x1x512xf32>
    %831 = vector.shape_cast %830 : vector<1x1x512xf32> to vector<1x512xf32>
    %832 = vector.broadcast %831 : vector<1x512xf32> to vector<2x512xf32>
    %833 = arith.addf %829, %832 : vector<2x512xf32>
    %834 = vector.extract_strided_slice %833 {offsets = [0, 0], sizes = [2, 128], strides = [1, 1]} : vector<2x512xf32> to vector<2x128xf32>
    %835 = arith.negf %834 : vector<2x128xf32>
    %836 = math.exp %835 : vector<2x128xf32>
    %cst_313 = arith.constant 1.000000e+00 : f32
    %837 = vector.broadcast %cst_313 : f32 to vector<2x128xf32>
    %838 = arith.addf %837, %836 : vector<2x128xf32>
    %839 = arith.divf %837, %838 : vector<2x128xf32>
    %840 = vector.extract_strided_slice %833 {offsets = [0, 128], sizes = [2, 128], strides = [1, 1]} : vector<2x512xf32> to vector<2x128xf32>
    %841 = arith.negf %840 : vector<2x128xf32>
    %842 = math.exp %841 : vector<2x128xf32>
    %cst_314 = arith.constant 1.000000e+00 : f32
    %843 = vector.broadcast %cst_314 : f32 to vector<2x128xf32>
    %844 = arith.addf %843, %842 : vector<2x128xf32>
    %845 = arith.divf %843, %844 : vector<2x128xf32>
    %846 = vector.extract_strided_slice %833 {offsets = [0, 256], sizes = [2, 128], strides = [1, 1]} : vector<2x512xf32> to vector<2x128xf32>
    %847 = math.tanh %846 : vector<2x128xf32>
    %848 = vector.extract_strided_slice %833 {offsets = [0, 384], sizes = [2, 128], strides = [1, 1]} : vector<2x512xf32> to vector<2x128xf32>
    %849 = arith.negf %848 : vector<2x128xf32>
    %850 = math.exp %849 : vector<2x128xf32>
    %cst_315 = arith.constant 1.000000e+00 : f32
    %851 = vector.broadcast %cst_315 : f32 to vector<2x128xf32>
    %852 = arith.addf %851, %850 : vector<2x128xf32>
    %853 = arith.divf %851, %852 : vector<2x128xf32>
    %854 = arith.mulf %845, %805 : vector<2x128xf32>
    %855 = arith.mulf %839, %847 : vector<2x128xf32>
    %856 = arith.addf %854, %855 : vector<2x128xf32>
    %857 = math.tanh %856 : vector<2x128xf32>
    %858 = arith.mulf %853, %857 : vector<2x128xf32>
    %859 = arith.addf %820, %828 : vector<2x512xf32>
    %c1_316 = arith.constant 1 : index
    %c0_317 = arith.constant 0 : index
    %c0_318 = arith.constant 0 : index
    %860 = vector.load %arg7[%c1_316, %c0_317, %c0_318] : memref<2x1x512xf32, #tpu.memory_space<vmem>>, vector<1x1x512xf32>
    %861 = vector.shape_cast %860 : vector<1x1x512xf32> to vector<1x512xf32>
    %862 = vector.broadcast %861 : vector<1x512xf32> to vector<2x512xf32>
    %863 = arith.addf %859, %862 : vector<2x512xf32>
    %864 = vector.extract_strided_slice %863 {offsets = [0, 0], sizes = [2, 128], strides = [1, 1]} : vector<2x512xf32> to vector<2x128xf32>
    %865 = arith.negf %864 : vector<2x128xf32>
    %866 = math.exp %865 : vector<2x128xf32>
    %cst_319 = arith.constant 1.000000e+00 : f32
    %867 = vector.broadcast %cst_319 : f32 to vector<2x128xf32>
    %868 = arith.addf %867, %866 : vector<2x128xf32>
    %869 = arith.divf %867, %868 : vector<2x128xf32>
    %870 = vector.extract_strided_slice %863 {offsets = [0, 128], sizes = [2, 128], strides = [1, 1]} : vector<2x512xf32> to vector<2x128xf32>
    %871 = arith.negf %870 : vector<2x128xf32>
    %872 = math.exp %871 : vector<2x128xf32>
    %cst_320 = arith.constant 1.000000e+00 : f32
    %873 = vector.broadcast %cst_320 : f32 to vector<2x128xf32>
    %874 = arith.addf %873, %872 : vector<2x128xf32>
    %875 = arith.divf %873, %874 : vector<2x128xf32>
    %876 = vector.extract_strided_slice %863 {offsets = [0, 256], sizes = [2, 128], strides = [1, 1]} : vector<2x512xf32> to vector<2x128xf32>
    %877 = math.tanh %876 : vector<2x128xf32>
    %878 = vector.extract_strided_slice %863 {offsets = [0, 384], sizes = [2, 128], strides = [1, 1]} : vector<2x512xf32> to vector<2x128xf32>
    %879 = arith.negf %878 : vector<2x128xf32>
    %880 = math.exp %879 : vector<2x128xf32>
    %cst_321 = arith.constant 1.000000e+00 : f32
    %881 = vector.broadcast %cst_321 : f32 to vector<2x128xf32>
    %882 = arith.addf %881, %880 : vector<2x128xf32>
    %883 = arith.divf %881, %882 : vector<2x128xf32>
    %884 = arith.mulf %875, %810 : vector<2x128xf32>
    %885 = arith.mulf %869, %877 : vector<2x128xf32>
    %886 = arith.addf %884, %885 : vector<2x128xf32>
    %887 = math.tanh %886 : vector<2x128xf32>
    %888 = arith.mulf %883, %887 : vector<2x128xf32>
    %889 = vector.extract_strided_slice %3 {offsets = [7, 0, 0], sizes = [1, 2, 1], strides = [1, 1, 1]} : vector<8x2x1xf32> to vector<1x2x1xf32>
    %890 = vector.shape_cast %889 : vector<1x2x1xf32> to vector<2x1xf32>
    %891 = vector.extract_strided_slice %6 {offsets = [7, 0, 0], sizes = [1, 2, 1], strides = [1, 1, 1]} : vector<8x2x1xf32> to vector<1x2x1xf32>
    %892 = vector.shape_cast %891 : vector<1x2x1xf32> to vector<2x1xf32>
    %893 = vector.extract_strided_slice %4 {offsets = [0, 0, 0], sizes = [1, 2, 1], strides = [1, 1, 1]} : vector<8x2x1xf32> to vector<1x2x1xf32>
    %894 = vector.shape_cast %893 : vector<1x2x1xf32> to vector<2x1xf32>
    %895 = vector.extract_strided_slice %8 {offsets = [0, 0, 0], sizes = [1, 2, 1], strides = [1, 1, 1]} : vector<8x2x1xf32> to vector<1x2x1xf32>
    %896 = vector.shape_cast %895 : vector<1x2x1xf32> to vector<2x1xf32>
    %897 = vector.broadcast %890 : vector<2x1xf32> to vector<2x128xf32>
    %898 = arith.mulf %897, %858 : vector<2x128xf32>
    %899 = vector.broadcast %894 : vector<2x1xf32> to vector<2x128xf32>
    %900 = arith.mulf %899, %888 : vector<2x128xf32>
    %901 = arith.truncf %898 : vector<2x128xf32> to vector<2x128xbf16>
    %c7_322 = arith.constant 7 : index
    %c0_323 = arith.constant 0 : index
    %c0_324 = arith.constant 0 : index
    %902 = vector.load %arg8[%c7_322, %c0_323, %c0_324] : memref<8x2x128xbf16, #tpu.memory_space<vmem>>, vector<1x2x128xbf16>
    %903 = vector.shape_cast %902 : vector<1x2x128xbf16> to vector<2x128xbf16>
    %904 = vector.shape_cast %901 : vector<2x128xbf16> to vector<1x2x128xbf16>
    tpu.vector_store %arg8[%c7_322, %c0_323, %c0_324], %904 {strides = array<i32>} : memref<8x2x128xbf16, #tpu.memory_space<vmem>>, vector<1x2x128xbf16>,
    %905 = arith.truncf %900 : vector<2x128xf32> to vector<2x128xbf16>
    %c0_325 = arith.constant 0 : index
    %c0_326 = arith.constant 0 : index
    %c0_327 = arith.constant 0 : index
    %906 = vector.load %arg9[%c0_325, %c0_326, %c0_327] : memref<8x2x128xbf16, #tpu.memory_space<vmem>>, vector<1x2x128xbf16>
    %907 = vector.shape_cast %906 : vector<1x2x128xbf16> to vector<2x128xbf16>
    %908 = vector.shape_cast %905 : vector<2x128xbf16> to vector<1x2x128xbf16>
    tpu.vector_store %arg9[%c0_325, %c0_326, %c0_327], %908 {strides = array<i32>} : memref<8x2x128xbf16, #tpu.memory_space<vmem>>, vector<1x2x128xbf16>,
    %909 = vector.broadcast %892 : vector<2x1xf32> to vector<2x128xf32>
    %910 = arith.mulf %909, %797 : vector<2x128xf32>
    %911 = arith.addf %898, %910 : vector<2x128xf32>
    %912 = vector.broadcast %896 : vector<2x1xf32> to vector<2x128xf32>
    %913 = arith.mulf %912, %800 : vector<2x128xf32>
    %914 = arith.addf %900, %913 : vector<2x128xf32>
    %915 = vector.broadcast %890 : vector<2x1xf32> to vector<2x128xf32>
    %916 = arith.mulf %915, %856 : vector<2x128xf32>
    %917 = vector.broadcast %892 : vector<2x1xf32> to vector<2x128xf32>
    %918 = arith.mulf %917, %805 : vector<2x128xf32>
    %919 = arith.addf %916, %918 : vector<2x128xf32>
    %920 = vector.broadcast %894 : vector<2x1xf32> to vector<2x128xf32>
    %921 = arith.mulf %920, %886 : vector<2x128xf32>
    %922 = vector.broadcast %896 : vector<2x1xf32> to vector<2x128xf32>
    %923 = arith.mulf %922, %810 : vector<2x128xf32>
    %924 = arith.addf %921, %923 : vector<2x128xf32>
    %c0_328 = arith.constant 0 : index
    %c0_329 = arith.constant 0 : index
    %925 = vector.load %arg10[%c0_328, %c0_329] : memref<2x128xf32, #tpu.memory_space<vmem>>, vector<2x128xf32>
    tpu.vector_store %arg10[%c0_328, %c0_329], %911 {strides = array<i32>} : memref<2x128xf32, #tpu.memory_space<vmem>>, vector<2x128xf32>,
    %c0_330 = arith.constant 0 : index
    %c0_331 = arith.constant 0 : index
    %926 = vector.load %arg11[%c0_330, %c0_331] : memref<2x128xf32, #tpu.memory_space<vmem>>, vector<2x128xf32>
    tpu.vector_store %arg11[%c0_330, %c0_331], %914 {strides = array<i32>} : memref<2x128xf32, #tpu.memory_space<vmem>>, vector<2x128xf32>,
    %c0_332 = arith.constant 0 : index
    %c0_333 = arith.constant 0 : index
    %927 = vector.load %arg12[%c0_332, %c0_333] : memref<2x128xf32, #tpu.memory_space<vmem>>, vector<2x128xf32>
    tpu.vector_store %arg12[%c0_332, %c0_333], %919 {strides = array<i32>} : memref<2x128xf32, #tpu.memory_space<vmem>>, vector<2x128xf32>,
    %c0_334 = arith.constant 0 : index
    %c0_335 = arith.constant 0 : index
    %928 = vector.load %arg13[%c0_334, %c0_335] : memref<2x128xf32, #tpu.memory_space<vmem>>, vector<2x128xf32>
    tpu.vector_store %arg13[%c0_334, %c0_335], %924 {strides = array<i32>} : memref<2x128xf32, #tpu.memory_space<vmem>>, vector<2x128xf32>,
    return
  }
  func.func @transform_0(%arg0: i32) -> (i32, i32, i32) {
    %c0_i32 = arith.constant 0 : i32
    %c0_i32_0 = arith.constant 0 : i32
    %c0_i32_1 = arith.constant 0 : i32
    return %arg0, %c0_i32, %c0_i32_0 : i32, i32, i32
  }
  func.func @transform_1(%arg0: i32) -> (i32, i32, i32) {
    %c0_i32 = arith.constant 0 : i32
    %0 = arith.subi %c0_i32, %arg0 : i32
    %c0_i32_0 = arith.constant 0 : i32
    %c0_i32_1 = arith.constant 0 : i32
    %c0_i32_2 = arith.constant 0 : i32
    return %0, %c0_i32_0, %c0_i32_1 : i32, i32, i32
  }
  func.func @transform_2(%arg0: i32) -> (i32, i32, i32) {
    %c0_i32 = arith.constant 0 : i32
    %c0_i32_0 = arith.constant 0 : i32
    %c0_i32_1 = arith.constant 0 : i32
    return %arg0, %c0_i32, %c0_i32_0 : i32, i32, i32
  }
  func.func @transform_3(%arg0: i32) -> (i32, i32, i32) {
    %c0_i32 = arith.constant 0 : i32
    %0 = arith.subi %c0_i32, %arg0 : i32
    %c0_i32_0 = arith.constant 0 : i32
    %c0_i32_1 = arith.constant 0 : i32
    %c0_i32_2 = arith.constant 0 : i32
    return %0, %c0_i32_0, %c0_i32_1 : i32, i32, i32
  }
  func.func @transform_4(%arg0: i32) -> (i32, i32, i32) {
    %c0_i32 = arith.constant 0 : i32
    %c0_i32_0 = arith.constant 0 : i32
    %c0_i32_1 = arith.constant 0 : i32
    %c0_i32_2 = arith.constant 0 : i32
    return %c0_i32, %c0_i32_0, %c0_i32_1 : i32, i32, i32
  }
  func.func @transform_5(%arg0: i32) -> (i32, i32, i32) {
    %c0_i32 = arith.constant 0 : i32
    %c0_i32_0 = arith.constant 0 : i32
    %c0_i32_1 = arith.constant 0 : i32
    %c0_i32_2 = arith.constant 0 : i32
    return %c0_i32, %c0_i32_0, %c0_i32_1 : i32, i32, i32
  }
  func.func @transform_6(%arg0: i32) -> (i32, i32, i32) {
    %c0_i32 = arith.constant 0 : i32
    %c0_i32_0 = arith.constant 0 : i32
    %c0_i32_1 = arith.constant 0 : i32
    %c0_i32_2 = arith.constant 0 : i32
    return %c0_i32, %c0_i32_0, %c0_i32_1 : i32, i32, i32
  }
  func.func @transform_7(%arg0: i32) -> (i32, i32, i32) {
    %c0_i32 = arith.constant 0 : i32
    %c0_i32_0 = arith.constant 0 : i32
    %c0_i32_1 = arith.constant 0 : i32
    return %arg0, %c0_i32, %c0_i32_0 : i32, i32, i32
  }
  func.func @transform_8(%arg0: i32) -> (i32, i32, i32) {
    %c0_i32 = arith.constant 0 : i32
    %0 = arith.subi %c0_i32, %arg0 : i32
    %c0_i32_0 = arith.constant 0 : i32
    %c0_i32_1 = arith.constant 0 : i32
    %c0_i32_2 = arith.constant 0 : i32
    return %0, %c0_i32_0, %c0_i32_1 : i32, i32, i32
  }
}

</mosaic_0001>

<llo_original>
// kernel: tpu_custom_call.1
$region0: #{tpu_custom_call.1}
  #allocation0 [shape = 'u32[]', space=smem, size = 0x4, offset = 0x4, fixed_abs, tag = 'smem constant byte address 0x4 - core index']
  #allocation1 [shape = 'u32[144,128]{1,0:T(1,128)}', space=vmem, size = 0x12000, scoped, tag = 'internal scratch']
  #allocation2 [shape = 'f32[2,128]{1,0:T(2,128)}', space=vmem, size = 0x400, scoped, tag = 'scratch operand']
  #allocation3 [shape = 'f32[2,128]{1,0:T(2,128)}', space=vmem, size = 0x400, scoped, tag = 'scratch operand']
  #allocation4 [shape = 'f32[2,128]{1,0:T(2,128)}', space=vmem, size = 0x400, scoped, tag = 'scratch operand']
  #allocation5 [shape = 'f32[2,128]{1,0:T(2,128)}', space=vmem, size = 0x400, scoped, tag = 'scratch operand']
  %s0 = inlined_call_operand.vmem [shape: bf16[8,2,128], index: 0, kind: input, shape index: {}]
  %s1 = inlined_call_operand.vmem [shape: bf16[8,2,128], index: 1, kind: input, shape index: {}]
  %s2 = inlined_call_operand.vmem [shape: f32[8,2,1], index: 2, kind: input, shape index: {}]
  %s3 = inlined_call_operand.vmem [shape: f32[8,2,1], index: 3, kind: input, shape index: {}]
  %s4 = inlined_call_operand.hbm [shape: bf16[2,128,512], index: 4, kind: input, shape index: {}]
  %s5 = inlined_call_operand.hbm [shape: bf16[2,128,512], index: 5, kind: input, shape index: {}]
  %s6 = inlined_call_operand.vmem [shape: f32[2,1,512], index: 6, kind: input, shape index: {}]
  %s7 = inlined_call_operand.hbm [shape: bf16[8,2,128], index: 7, kind: output, shape index: {0}]
  %s8 = inlined_call_operand.hbm [shape: bf16[8,2,128], index: 8, kind: output, shape index: {1}]
  %9 = xla_tuple %s7, %s8
  %s10 = sld [smem:[#allocation0]]
  $region58: #{tpu_custom_call.1} parent=0
    _
  %s12 = ssub.s32 1, %s10
  %s13 = scalar_select 0, %s12, %s10
  $region1: #{tpu_custom_call.1} parent=0
    #allocation6 [shape = 'u8[262144]{0}', space=vmem, size = 0x40000, scoped, tag = 'input window, operand 4, single buffered']
    #allocation7 [shape = 's32[1]{0}', space=sflag, size = 0x4, scoped, tag = 'scoped memory for tpu_custom_call.1']
    #allocation8 [shape = 's32[1]{0}', space=sflag, size = 0x4, scoped, tag = 'scoped memory for tpu_custom_call.1']
    #allocation9 [shape = 'u8[262144]{0}', space=vmem, size = 0x40000, scoped, tag = 'input window, operand 5, single buffered']
    #allocation10 [shape = 's32[1]{0}', space=sflag, size = 0x4, scoped, tag = 'scoped memory for tpu_custom_call.1']
    #allocation11 [shape = 'u8[4096]{0}', space=vmem, size = 0x1000, scoped, tag = 'output window, operand 0, single buffered']
    #allocation12 [shape = 'u8[4096]{0}', space=vmem, size = 0x1000, scoped, tag = 'output window, operand 1, single buffered']
    #allocation13 [shape = 's32[1]{0}', space=sflag, size = 0x4, scoped, tag = 'scoped memory for tpu_custom_call.1']
    %14 = vsyncpa [#allocation7], 0
    %15 = vsyncpa [#allocation10], 0
    %16 = vsyncpa [#allocation8], 0
    %17 = vsyncpa [#allocation13], 0
    // Predicated region
    $region2: #{tpu_custom_call.1} parent=1 // pred_check
      _
    $region3: #{tpu_custom_call.1} parent=1 // pred_check_branch
      %19 = sbr.rel (0) target = $region5
    $region4: #{tpu_custom_call.1} parent=1 // pred_region
      _
    $region5: #{tpu_custom_call.1} parent=1 // pred_fallthru
      _
    // Predicated region
    $region6: #{tpu_custom_call.1} parent=1 // pred_check
      _
    $region7: #{tpu_custom_call.1} parent=1 // pred_check_branch
      %21 = sbr.rel (0) target = $region9
    $region8: #{tpu_custom_call.1} parent=1 // pred_region
      %s22 = ssub.s32 0, 0
      %s23 = smul.u32 8, %s22
      %p24 = scmp.lt.s32.totalorder %s23, 7
      %s25 = scalar_select %p24, %s23, 7
      %s26 = scalar_lea.vmem %s1, %s25
      %s27 = ssub.s32 0, 0
      %s28 = smul.u32 8, %s27
    $region9: #{tpu_custom_call.1} parent=1 // pred_fallthru
      _
    // Predicated region
    $region10: #{tpu_custom_call.1} parent=1 // pred_check
      _
    $region11: #{tpu_custom_call.1} parent=1 // pred_check_branch
      %30 = sbr.rel (0) target = $region13
    $region12: #{tpu_custom_call.1} parent=1 // pred_region
      _
    $region13: #{tpu_custom_call.1} parent=1 // pred_fallthru
      _
    // Predicated region
    $region14: #{tpu_custom_call.1} parent=1 // pred_check
      _
    $region15: #{tpu_custom_call.1} parent=1 // pred_check_branch
      %32 = sbr.rel (0) target = $region17
    $region16: #{tpu_custom_call.1} parent=1 // pred_region
      %s33 = ssub.s32 0, 0
      %s34 = smul.u32 8, %s33
      %p35 = scmp.lt.s32.totalorder %s34, 7
      %s36 = scalar_select %p35, %s34, 7
      %s37 = smul.addr %s36, 2
      %s38 = scalar_lea.vmem %s3, %s37
      %s39 = ssub.s32 0, 0
      %s40 = smul.u32 8, %s39
    $region17: #{tpu_custom_call.1} parent=1 // pred_fallthru
      _
    // Predicated region
    $region18: #{tpu_custom_call.1} parent=1 // pred_check
      _
    $region19: #{tpu_custom_call.1} parent=1 // pred_check_branch
      %42 = sbr.rel (0) target = $region21
    $region20: #{tpu_custom_call.1} parent=1 // pred_region
      %s44 = ssub.s32 8192, 8192
      %45 = vsyncadd [#allocation7], %s44
      %s46 = sshll.u32 [#allocation6], 4
      %s47 = int_to_ptr.vmem [resolvable:$true] %s46
      %52 = dma.hbm_to_vmem [thread:$0]  %s4, 8192, %s47, [#allocation7], 256, 256, 16
    $region21: #{tpu_custom_call.1} parent=1 // pred_fallthru
      _
    // Predicated region
    $region22: #{tpu_custom_call.1} parent=1 // pred_check
      _
    $region23: #{tpu_custom_call.1} parent=1 // pred_check_branch
      %54 = sbr.rel (0) target = $region25
    $region24: #{tpu_custom_call.1} parent=1 // pred_region
      %s56 = ssub.s32 8192, 8192
      %57 = vsyncadd [#allocation10], %s56
      %s58 = sshll.u32 [#allocation9], 4
      %s59 = int_to_ptr.vmem [resolvable:$true] %s58
      %64 = dma.hbm_to_vmem [thread:$0]  %s5, 8192, %s59, [#allocation10], 256, 256, 16
    $region25: #{tpu_custom_call.1} parent=1 // pred_fallthru
      _
    // Predicated region
    $region26: #{tpu_custom_call.1} parent=1 // pred_check
      _
    $region27: #{tpu_custom_call.1} parent=1 // pred_check_branch
      %66 = sbr.rel (0) target = $region29
    $region28: #{tpu_custom_call.1} parent=1 // pred_region
      _
    $region29: #{tpu_custom_call.1} parent=1 // pred_fallthru
      _
    // Predicated region
    $region30: #{tpu_custom_call.1} parent=1 // pred_check
      _
    $region31: #{tpu_custom_call.1} parent=1 // pred_check_branch
      %68 = sbr.rel (0) target = $region33
    $region32: #{tpu_custom_call.1} parent=1 // pred_region
      %69 = dma.done [#allocation7], 8192
    $region33: #{tpu_custom_call.1} parent=1 // pred_fallthru
      _
    // Predicated region
    $region34: #{tpu_custom_call.1} parent=1 // pred_check
      _
    $region35: #{tpu_custom_call.1} parent=1 // pred_check_branch
      %71 = sbr.rel (0) target = $region37
    $region36: #{tpu_custom_call.1} parent=1 // pred_region
      %72 = dma.done [#allocation10], 8192
    $region37: #{tpu_custom_call.1} parent=1 // pred_fallthru
      _
    %s73 = ssub.s32 0, 0
    %s74 = smul.u32 8, %s73
    %p75 = scmp.lt.s32.totalorder %s74, 7
    %s76 = scalar_select %p75, %s74, 7
    %s77 = scalar_lea.vmem %s1, %s76
    %s78 = ssub.s32 0, 0
    %s79 = smul.u32 8, %s78
    %p80 = scmp.lt.s32.totalorder %s79, 7
    %s81 = scalar_select %p80, %s79, 7
    %s82 = smul.addr %s81, 2
    %s83 = scalar_lea.vmem %s3, %s82
    %s84 = ssub.s32 0, 0
    %s85 = smul.u32 8, %s84
    %p86 = scmp.lt.s32.totalorder %s85, 7
    %s87 = scalar_select %p86, %s85, 7
    %s88 = scalar_lea.vmem %s1, %s87
    %s89 = ssub.s32 0, 0
    %s90 = smul.u32 8, %s89
    %s91 = ssub.s32 0, 0
    %s92 = smul.u32 8, %s91
    %p93 = scmp.lt.s32.totalorder %s92, 7
    %s94 = scalar_select %p93, %s92, 7
    %s95 = smul.addr %s94, 2
    %s96 = scalar_lea.vmem %s3, %s95
    %s97 = ssub.s32 0, 0
    %s98 = smul.u32 8, %s97
    %s99 = ssub.s32 0, 0
    %s100 = smul.u32 8, %s99
    %p102 = scmp.eq.s32.totalorder 0, 0
    // Predicated region
    $region38: #{tpu_custom_call.1} parent=1 // pred_check
      %p103 = pneg %p102
    $region39: #{tpu_custom_call.1} parent=1 // pred_check_branch
      %105 = sbr.rel (%p103) target = $region41
    $region40: #{tpu_custom_call.1} parent=1 // pred_region
      %106 = vst [vmem:[#allocation2] sm:$0x3] 0.0
      %107 = vst [vmem:[#allocation3] sm:$0x3] 0.0
      %108 = vst [vmem:[#allocation4] sm:$0x3] 0.0
      %109 = vst [vmem:[#allocation5] sm:$0x3] 0.0
    $region41: #{tpu_custom_call.1} parent=1 // pred_fallthru
      _
    %v110 = vld [vmem:[%s2] sm:$0x3]
    %v111 = vld [vmem:[%s2 + $0x2] sm:$0x3]
    %v112 = vld [vmem:[%s2 + $0x4] sm:$0x3]
    %v113 = vld [vmem:[%s2 + $0x6] sm:$0x3]
    %v114 = vld [vmem:[%s2 + $0x8] sm:$0x3]
    %v115 = vld [vmem:[%s2 + $0xa] sm:$0x3]
    %v116 = vld [vmem:[%s2 + $0xc] sm:$0x3]
    %v117 = vld [vmem:[%s2 + $0xe] sm:$0x3]
    %v118 = vld [vmem:[%s96] sm:$0x3]
    %v119 = vld [vmem:[%s96 + $0x2] sm:$0x3]
    %v120 = vld [vmem:[%s96 + $0x4] sm:$0x3]
    %v121 = vld [vmem:[%s96 + $0x6] sm:$0x3]
    %v122 = vld [vmem:[%s96 + $0x8] sm:$0x3]
    %v123 = vld [vmem:[%s96 + $0xa] sm:$0x3]
    %v124 = vld [vmem:[%s96 + $0xc] sm:$0x3]
    %v125 = vld [vmem:[%s96 + $0xe] sm:$0x3]
    %v126 = vsub.f32 1.0, %v110
    %v127 = vsub.f32 1.0, %v111
    %v128 = vsub.f32 1.0, %v112
    %v129 = vsub.f32 1.0, %v113
    %v130 = vsub.f32 1.0, %v114
    %v131 = vsub.f32 1.0, %v115
    %v132 = vsub.f32 1.0, %v116
    %v133 = vsub.f32 1.0, %v117
    %v134 = vsub.f32 1.0, %v118
    %v135 = vsub.f32 1.0, %v119
    %v136 = vsub.f32 1.0, %v120
    %v137 = vsub.f32 1.0, %v121
    %v138 = vsub.f32 1.0, %v122
    %v139 = vsub.f32 1.0, %v123
    %v140 = vsub.f32 1.0, %v124
    %v141 = vsub.f32 1.0, %v125
    %v142 = vld [vmem:[#allocation2] sm:$0x3]
    %v143 = vld [vmem:[#allocation3] sm:$0x3]
    %v144 = vld [vmem:[#allocation4] sm:$0x3]
    %v145 = vld [vmem:[#allocation5] sm:$0x3]
    %v146 = vld [vmem:[%s0] sm:$0x1]
    %v147 = vld [vmem:[#allocation6] sm:$0xff]
    %v148 = vld [vmem:[#allocation6 + $0x8] sm:$0xff]
    %v149 = vld [vmem:[#allocation6 + $0x10] sm:$0xff]
    %v150 = vld [vmem:[#allocation6 + $0x18] sm:$0xff]
    %v151 = vld [vmem:[#allocation6 + $0x20] sm:$0xff]
    %v152 = vld [vmem:[#allocation6 + $0x28] sm:$0xff]
    %v153 = vld [vmem:[#allocation6 + $0x30] sm:$0xff]
    %v154 = vld [vmem:[#allocation6 + $0x38] sm:$0xff]
    %v155 = vld [vmem:[#allocation6 + $0x40] sm:$0xff]
    %v156 = vld [vmem:[#allocation6 + $0x48] sm:$0xff]
    %v157 = vld [vmem:[#allocation6 + $0x50] sm:$0xff]
    %v158 = vld [vmem:[#allocation6 + $0x58] sm:$0xff]
    %v159 = vld [vmem:[#allocation6 + $0x60] sm:$0xff]
    %v160 = vld [vmem:[#allocation6 + $0x68] sm:$0xff]
    %v161 = vld [vmem:[#allocation6 + $0x70] sm:$0xff]
    %v162 = vld [vmem:[#allocation6 + $0x78] sm:$0xff]
    %v163 = vld [vmem:[#allocation6 + $0x80] sm:$0xff]
    %v164 = vld [vmem:[#allocation6 + $0x88] sm:$0xff]
    %v165 = vld [vmem:[#allocation6 + $0x90] sm:$0xff]
    %v166 = vld [vmem:[#allocation6 + $0x98] sm:$0xff]
    %v167 = vld [vmem:[#allocation6 + $0xa0] sm:$0xff]
    %v168 = vld [vmem:[#allocation6 + $0xa8] sm:$0xff]
    %v169 = vld [vmem:[#allocation6 + $0xb0] sm:$0xff]
    %v170 = vld [vmem:[#allocation6 + $0xb8] sm:$0xff]
    %v171 = vld [vmem:[#allocation6 + $0xc0] sm:$0xff]
    %v172 = vld [vmem:[#allocation6 + $0xc8] sm:$0xff]
    %v173 = vld [vmem:[#allocation6 + $0xd0] sm:$0xff]
    %v174 = vld [vmem:[#allocation6 + $0xd8] sm:$0xff]
    %v175 = vld [vmem:[#allocation6 + $0xe0] sm:$0xff]
    %v176 = vld [vmem:[#allocation6 + $0xe8] sm:$0xff]
    %v177 = vld [vmem:[#allocation6 + $0xf0] sm:$0xff]
    %v178 = vld [vmem:[#allocation6 + $0xf8] sm:$0xff]
    %s179 = scalar_lea.vmem %s88, 7
    %v180 = vld [vmem:[%s179] sm:$0x1]
    %s181 = scalar_lea.vmem [#allocation6], 256
    %v182 = vld [vmem:[%s181] sm:$0xff]
    %v183 = vld [vmem:[%s181 + $0x8] sm:$0xff]
    %v184 = vld [vmem:[%s181 + $0x10] sm:$0xff]
    %v185 = vld [vmem:[%s181 + $0x18] sm:$0xff]
    %v186 = vld [vmem:[%s181 + $0x20] sm:$0xff]
    %v187 = vld [vmem:[%s181 + $0x28] sm:$0xff]
    %v188 = vld [vmem:[%s181 + $0x30] sm:$0xff]
    %v189 = vld [vmem:[%s181 + $0x38] sm:$0xff]
    %v190 = vld [vmem:[%s181 + $0x40] sm:$0xff]
    %v191 = vld [vmem:[%s181 + $0x48] sm:$0xff]
    %v192 = vld [vmem:[%s181 + $0x50] sm:$0xff]
    %v193 = vld [vmem:[%s181 + $0x58] sm:$0xff]
    %v194 = vld [vmem:[%s181 + $0x60] sm:$0xff]
    %v195 = vld [vmem:[%s181 + $0x68] sm:$0xff]
    %v196 = vld [vmem:[%s181 + $0x70] sm:$0xff]
    %v197 = vld [vmem:[%s181 + $0x78] sm:$0xff]
    %v198 = vld [vmem:[%s181 + $0x80] sm:$0xff]
    %v199 = vld [vmem:[%s181 + $0x88] sm:$0xff]
    %v200 = vld [vmem:[%s181 + $0x90] sm:$0xff]
    %v201 = vld [vmem:[%s181 + $0x98] sm:$0xff]
    %v202 = vld [vmem:[%s181 + $0xa0] sm:$0xff]
    %v203 = vld [vmem:[%s181 + $0xa8] sm:$0xff]
    %v204 = vld [vmem:[%s181 + $0xb0] sm:$0xff]
    %v205 = vld [vmem:[%s181 + $0xb8] sm:$0xff]
    %v206 = vld [vmem:[%s181 + $0xc0] sm:$0xff]
    %v207 = vld [vmem:[%s181 + $0xc8] sm:$0xff]
    %v208 = vld [vmem:[%s181 + $0xd0] sm:$0xff]
    %v209 = vld [vmem:[%s181 + $0xd8] sm:$0xff]
    %v210 = vld [vmem:[%s181 + $0xe0] sm:$0xff]
    %v211 = vld [vmem:[%s181 + $0xe8] sm:$0xff]
    %v212 = vld [vmem:[%s181 + $0xf0] sm:$0xff]
    %v213 = vld [vmem:[%s181 + $0xf8] sm:$0xff]
    %v214 = vpack.c.bf16 %v142, %v142
    %v215 = vld [vmem:[#allocation9] sm:$0xff]
    %v216 = vld [vmem:[#allocation9 + $0x8] sm:$0xff]
    %v217 = vld [vmem:[#allocation9 + $0x10] sm:$0xff]
    %v218 = vld [vmem:[#allocation9 + $0x18] sm:$0xff]
    %v219 = vld [vmem:[#allocation9 + $0x20] sm:$0xff]
    %v220 = vld [vmem:[#allocation9 + $0x28] sm:$0xff]
    %v221 = vld [vmem:[#allocation9 + $0x30] sm:$0xff]
    %v222 = vld [vmem:[#allocation9 + $0x38] sm:$0xff]
    %v223 = vld [vmem:[#allocation9 + $0x40] sm:$0xff]
    %v224 = vld [vmem:[#allocation9 + $0x48] sm:$0xff]
    %v225 = vld [vmem:[#allocation9 + $0x50] sm:$0xff]
    %v226 = vld [vmem:[#allocation9 + $0x58] sm:$0xff]
    %v227 = vld [vmem:[#allocation9 + $0x60] sm:$0xff]
    %v228 = vld [vmem:[#allocation9 + $0x68] sm:$0xff]
    %v229 = vld [vmem:[#allocation9 + $0x70] sm:$0xff]
    %v230 = vld [vmem:[#allocation9 + $0x78] sm:$0xff]
    %v231 = vld [vmem:[#allocation9 + $0x80] sm:$0xff]
    %v232 = vld [vmem:[#allocation9 + $0x88] sm:$0xff]
    %v233 = vld [vmem:[#allocation9 + $0x90] sm:$0xff]
    %v234 = vld [vmem:[#allocation9 + $0x98] sm:$0xff]
    %v235 = vld [vmem:[#allocation9 + $0xa0] sm:$0xff]
    %v236 = vld [vmem:[#allocation9 + $0xa8] sm:$0xff]
    %v237 = vld [vmem:[#allocation9 + $0xb0] sm:$0xff]
    %v238 = vld [vmem:[#allocation9 + $0xb8] sm:$0xff]
    %v239 = vld [vmem:[#allocation9 + $0xc0] sm:$0xff]
    %v240 = vld [vmem:[#allocation9 + $0xc8] sm:$0xff]
    %v241 = vld [vmem:[#allocation9 + $0xd0] sm:$0xff]
    %v242 = vld [vmem:[#allocation9 + $0xd8] sm:$0xff]
    %v243 = vld [vmem:[#allocation9 + $0xe0] sm:$0xff]
    %v244 = vld [vmem:[#allocation9 + $0xe8] sm:$0xff]
    %v245 = vld [vmem:[#allocation9 + $0xf0] sm:$0xff]
    %v246 = vld [vmem:[#allocation9 + $0xf8] sm:$0xff]
    %v279 = vunpack.c.l.b16 %v215
    %v280 = vunpack.c.h.b16 %v215
    %v281 = vunpack.c.l.b16 %v216
    %v282 = vunpack.c.h.b16 %v216
    %v283 = vunpack.c.l.b16 %v217
    %v284 = vunpack.c.h.b16 %v217
    %v285 = vunpack.c.l.b16 %v218
    %v286 = vunpack.c.h.b16 %v218
    %v287 = vunpack.c.l.b16 %v219
    %v288 = vunpack.c.h.b16 %v219
    %v289 = vunpack.c.l.b16 %v220
    %v290 = vunpack.c.h.b16 %v220
    %v291 = vunpack.c.l.b16 %v221
    %v292 = vunpack.c.h.b16 %v221
    %v293 = vunpack.c.l.b16 %v222
    %v294 = vunpack.c.h.b16 %v222
    %v295 = vunpack.c.l.b16 %v223
    %v296 = vunpack.c.h.b16 %v223
    %v297 = vunpack.c.l.b16 %v224
    %v298 = vunpack.c.h.b16 %v224
    %v299 = vunpack.c.l.b16 %v225
    %v300 = vunpack.c.h.b16 %v225
    %v301 = vunpack.c.l.b16 %v226
    %v302 = vunpack.c.h.b16 %v226
    %v303 = vunpack.c.l.b16 %v227
    %v304 = vunpack.c.h.b16 %v227
    %v305 = vunpack.c.l.b16 %v228
    %v306 = vunpack.c.h.b16 %v228
    %v307 = vunpack.c.l.b16 %v229
    %v308 = vunpack.c.h.b16 %v229
    %v309 = vunpack.c.l.b16 %v230
    %v310 = vunpack.c.h.b16 %v230
    %v311 = vunpack.c.l.b16 %v231
    %v312 = vunpack.c.h.b16 %v231
    %v313 = vunpack.c.l.b16 %v232
    %v314 = vunpack.c.h.b16 %v232
    %v315 = vunpack.c.l.b16 %v233
    %v316 = vunpack.c.h.b16 %v233
    %v317 = vunpack.c.l.b16 %v234
    %v318 = vunpack.c.h.b16 %v234
    %v319 = vunpack.c.l.b16 %v235
    %v320 = vunpack.c.h.b16 %v235
    %v321 = vunpack.c.l.b16 %v236
    %v322 = vunpack.c.h.b16 %v236
    %v323 = vunpack.c.l.b16 %v237
    %v324 = vunpack.c.h.b16 %v237
    %v325 = vunpack.c.l.b16 %v238
    %v326 = vunpack.c.h.b16 %v238
    %v327 = vunpack.c.l.b16 %v239
    %v328 = vunpack.c.h.b16 %v239
    %v329 = vunpack.c.l.b16 %v240
    %v330 = vunpack.c.h.b16 %v240
    %v331 = vunpack.c.l.b16 %v241
    %v332 = vunpack.c.h.b16 %v241
    %v333 = vunpack.c.l.b16 %v242
    %v334 = vunpack.c.h.b16 %v242
    %v335 = vunpack.c.l.b16 %v243
    %v336 = vunpack.c.h.b16 %v243
    %v337 = vunpack.c.l.b16 %v244
    %v338 = vunpack.c.h.b16 %v244
    %v339 = vunpack.c.l.b16 %v245
    %v340 = vunpack.c.h.b16 %v245
    %v341 = vunpack.c.l.b16 %v246
    %v342 = vunpack.c.h.b16 %v246
    %v343 = vpack.c.b16 %v283, %v279
    %v344 = vpack.c.b16 %v284, %v280
    %v345 = vpack.c.b16 %v285, %v281
    %v346 = vpack.c.b16 %v286, %v282
    %v347 = vpack.c.b16 %v291, %v287
    %v348 = vpack.c.b16 %v292, %v288
    %v349 = vpack.c.b16 %v293, %v289
    %v350 = vpack.c.b16 %v294, %v290
    %v351 = vpack.c.b16 %v299, %v295
    %v352 = vpack.c.b16 %v300, %v296
    %v353 = vpack.c.b16 %v301, %v297
    %v354 = vpack.c.b16 %v302, %v298
    %v355 = vpack.c.b16 %v307, %v303
    %v356 = vpack.c.b16 %v308, %v304
    %v357 = vpack.c.b16 %v309, %v305
    %v358 = vpack.c.b16 %v310, %v306
    %v359 = vpack.c.b16 %v315, %v311
    %v360 = vpack.c.b16 %v316, %v312
    %v361 = vpack.c.b16 %v317, %v313
    %v362 = vpack.c.b16 %v318, %v314
    %v363 = vpack.c.b16 %v323, %v319
    %v364 = vpack.c.b16 %v324, %v320
    %v365 = vpack.c.b16 %v325, %v321
    %v366 = vpack.c.b16 %v326, %v322
    %v367 = vpack.c.b16 %v331, %v327
    %v368 = vpack.c.b16 %v332, %v328
    %v369 = vpack.c.b16 %v333, %v329
    %v370 = vpack.c.b16 %v334, %v330
    %v371 = vpack.c.b16 %v339, %v335
    %v372 = vpack.c.b16 %v340, %v336
    %v373 = vpack.c.b16 %v341, %v337
    %v374 = vpack.c.b16 %v342, %v338
    %407 = vmatprep.subr.bf16.mxu0 %v344
    %408 = vmatpush1.bf16.msra.mxu0 %v343
    %409 = vmatprep.subr.bf16.mxu0 %v348
    %410 = vmatpush1.bf16.msra.mxu0 %v347
    %411 = vmatprep.subr.bf16.mxu0 %v352
    %412 = vmatpush1.bf16.msra.mxu0 %v351
    %413 = vmatprep.subr.bf16.mxu0 %v356
    %414 = vmatpush1.bf16.msra.mxu0 %v355
    %415 = vmatprep.subr.bf16.mxu0 %v360
    %416 = vmatpush1.bf16.msra.mxu0 %v359
    %417 = vmatprep.subr.bf16.mxu0 %v364
    %418 = vmatpush1.bf16.msra.mxu0 %v363
    %419 = vmatprep.subr.bf16.mxu0 %v368
    %420 = vmatpush1.bf16.msra.mxu0 %v367
    %421 = vmatprep.subr.bf16.mxu0 %v372
    %422 = vmatpush1.bf16.msra.mxu0 %v371
    %423 = vmatprep.subr.bf16.mxu0 0
    %424 = vmatpush1.bf16.msra.mxu0 0
    %425 = vmatprep.subr.bf16.mxu0 0
    %426 = vmatpush1.bf16.msra.mxu0 0
    %427 = vmatprep.subr.bf16.mxu0 0
    %428 = vmatpush1.bf16.msra.mxu0 0
    %429 = vmatprep.subr.bf16.mxu0 0
    %430 = vmatpush1.bf16.msra.mxu0 0
    %431 = vmatprep.subr.bf16.mxu0 0
    %432 = vmatpush1.bf16.msra.mxu0 0
    %433 = vmatprep.subr.bf16.mxu0 0
    %434 = vmatpush1.bf16.msra.mxu0 0
    %435 = vmatprep.subr.bf16.mxu0 0
    %436 = vmatpush1.bf16.msra.mxu0 0
    %437 = vmatprep.subr.bf16.mxu0 0
    %438 = vmatpush1.bf16.msra.mxu0 0
    %439 = vmatprep.mubr.bf16.mxu0 0
    %440 = vmatmul.mubr.bf16.gmra.mrb[0].mxu0 %v214
    %v441 = vpop.f32.mrb[0].mxu0
    %v442 = vadd.f32 0.0, %v441
    %v443 = vpop.f32.mrb[0].mxu0
    %v444 = vadd.f32 0.0, %v443
    %v445 = vpop.f32.mrb[0].mxu0
    %v446 = vpop.f32.mrb[0].mxu0
    %447 = vdwg.mxu0
    %448 = vmatprep.subr.bf16.mxu0 %v346
    %449 = vmatpush1.bf16.msra.mxu0 %v345
    %450 = vmatprep.subr.bf16.mxu0 %v350
    %451 = vmatpush1.bf16.msra.mxu0 %v349
    %452 = vmatprep.subr.bf16.mxu0 %v354
    %453 = vmatpush1.bf16.msra.mxu0 %v353
    %454 = vmatprep.subr.bf16.mxu0 %v358
    %455 = vmatpush1.bf16.msra.mxu0 %v357
    %456 = vmatprep.subr.bf16.mxu0 %v362
    %457 = vmatpush1.bf16.msra.mxu0 %v361
    %458 = vmatprep.subr.bf16.mxu0 %v366
    %459 = vmatpush1.bf16.msra.mxu0 %v365
    %460 = vmatprep.subr.bf16.mxu0 %v370
    %461 = vmatpush1.bf16.msra.mxu0 %v369
    %462 = vmatprep.subr.bf16.mxu0 %v374
    %463 = vmatpush1.bf16.msra.mxu0 %v373
    %464 = vmatprep.subr.bf16.mxu0 0
    %465 = vmatpush1.bf16.msra.mxu0 0
    %466 = vmatprep.subr.bf16.mxu0 0
    %467 = vmatpush1.bf16.msra.mxu0 0
    %468 = vmatprep.subr.bf16.mxu0 0
    %469 = vmatpush1.bf16.msra.mxu0 0
    %470 = vmatprep.subr.bf16.mxu0 0
    %471 = vmatpush1.bf16.msra.mxu0 0
    %472 = vmatprep.subr.bf16.mxu0 0
    %473 = vmatpush1.bf16.msra.mxu0 0
    %474 = vmatprep.subr.bf16.mxu0 0
    %475 = vmatpush1.bf16.msra.mxu0 0
    %476 = vmatprep.subr.bf16.mxu0 0
    %477 = vmatpush1.bf16.msra.mxu0 0
    %478 = vmatprep.subr.bf16.mxu0 0
    %479 = vmatpush1.bf16.msra.mxu0 0
    %480 = vmatprep.mubr.bf16.mxu0 0
    %481 = vmatmul.mubr.bf16.gmra.mrb[0].mxu0 %v214
    %v482 = vpop.f32.mrb[0].mxu0
    %v483 = vadd.f32 0.0, %v482
    %v484 = vpop.f32.mrb[0].mxu0
    %v485 = vadd.f32 0.0, %v484
    %v486 = vpop.f32.mrb[0].mxu0
    %v487 = vpop.f32.mrb[0].mxu0
    %488 = vdwg.mxu0
    %v489 = vpack.c.bf16 %v143, %v143
    %s490 = scalar_lea.vmem [#allocation9], 256
    %v491 = vld [vmem:[%s490] sm:$0xff]
    %v492 = vld [vmem:[%s490 + $0x8] sm:$0xff]
    %v493 = vld [vmem:[%s490 + $0x10] sm:$0xff]
    %v494 = vld [vmem:[%s490 + $0x18] sm:$0xff]
    %v495 = vld [vmem:[%s490 + $0x20] sm:$0xff]
    %v496 = vld [vmem:[%s490 + $0x28] sm:$0xff]
    %v497 = vld [vmem:[%s490 + $0x30] sm:$0xff]
    %v498 = vld [vmem:[%s490 + $0x38] sm:$0xff]
    %v499 = vld [vmem:[%s490 + $0x40] sm:$0xff]
    %v500 = vld [vmem:[%s490 + $0x48] sm:$0xff]
    %v501 = vld [vmem:[%s490 + $0x50] sm:$0xff]
    %v502 = vld [vmem:[%s490 + $0x58] sm:$0xff]
    %v503 = vld [vmem:[%s490 + $0x60] sm:$0xff]
    %v504 = vld [vmem:[%s490 + $0x68] sm:$0xff]
    %v505 = vld [vmem:[%s490 + $0x70] sm:$0xff]
    %v506 = vld [vmem:[%s490 + $0x78] sm:$0xff]
    %v507 = vld [vmem:[%s490 + $0x80] sm:$0xff]
    %v508 = vld [vmem:[%s490 + $0x88] sm:$0xff]
    %v509 = vld [vmem:[%s490 + $0x90] sm:$0xff]
    %v510 = vld [vmem:[%s490 + $0x98] sm:$0xff]
    %v511 = vld [vmem:[%s490 + $0xa0] sm:$0xff]
    %v512 = vld [vmem:[%s490 + $0xa8] sm:$0xff]
    %v513 = vld [vmem:[%s490 + $0xb0] sm:$0xff]
    %v514 = vld [vmem:[%s490 + $0xb8] sm:$0xff]
    %v515 = vld [vmem:[%s490 + $0xc0] sm:$0xff]
    %v516 = vld [vmem:[%s490 + $0xc8] sm:$0xff]
    %v517 = vld [vmem:[%s490 + $0xd0] sm:$0xff]
    %v518 = vld [vmem:[%s490 + $0xd8] sm:$0xff]
    %v519 = vld [vmem:[%s490 + $0xe0] sm:$0xff]
    %v520 = vld [vmem:[%s490 + $0xe8] sm:$0xff]
    %v521 = vld [vmem:[%s490 + $0xf0] sm:$0xff]
    %v522 = vld [vmem:[%s490 + $0xf8] sm:$0xff]
    %v555 = vunpack.c.l.b16 %v491
    %v556 = vunpack.c.h.b16 %v491
    %v557 = vunpack.c.l.b16 %v492
    %v558 = vunpack.c.h.b16 %v492
    %v559 = vunpack.c.l.b16 %v493
    %v560 = vunpack.c.h.b16 %v493
    %v561 = vunpack.c.l.b16 %v494
    %v562 = vunpack.c.h.b16 %v494
    %v563 = vunpack.c.l.b16 %v495
    %v564 = vunpack.c.h.b16 %v495
    %v565 = vunpack.c.l.b16 %v496
    %v566 = vunpack.c.h.b16 %v496
    %v567 = vunpack.c.l.b16 %v497
    %v568 = vunpack.c.h.b16 %v497
    %v569 = vunpack.c.l.b16 %v498
    %v570 = vunpack.c.h.b16 %v498
    %v571 = vunpack.c.l.b16 %v499
    %v572 = vunpack.c.h.b16 %v499
    %v573 = vunpack.c.l.b16 %v500
    %v574 = vunpack.c.h.b16 %v500
    %v575 = vunpack.c.l.b16 %v501
    %v576 = vunpack.c.h.b16 %v501
    %v577 = vunpack.c.l.b16 %v502
    %v578 = vunpack.c.h.b16 %v502
    %v579 = vunpack.c.l.b16 %v503
    %v580 = vunpack.c.h.b16 %v503
    %v581 = vunpack.c.l.b16 %v504
    %v582 = vunpack.c.h.b16 %v504
    %v583 = vunpack.c.l.b16 %v505
    %v584 = vunpack.c.h.b16 %v505
    %v585 = vunpack.c.l.b16 %v506
    %v586 = vunpack.c.h.b16 %v506
    %v587 = vunpack.c.l.b16 %v507
    %v588 = vunpack.c.h.b16 %v507
    %v589 = vunpack.c.l.b16 %v508
    %v590 = vunpack.c.h.b16 %v508
    %v591 = vunpack.c.l.b16 %v509
    %v592 = vunpack.c.h.b16 %v509
    %v593 = vunpack.c.l.b16 %v510
    %v594 = vunpack.c.h.b16 %v510
    %v595 = vunpack.c.l.b16 %v511
    %v596 = vunpack.c.h.b16 %v511
    %v597 = vunpack.c.l.b16 %v512
    %v598 = vunpack.c.h.b16 %v512
    %v599 = vunpack.c.l.b16 %v513
    %v600 = vunpack.c.h.b16 %v513
    %v601 = vunpack.c.l.b16 %v514
    %v602 = vunpack.c.h.b16 %v514
    %v603 = vunpack.c.l.b16 %v515
    %v604 = vunpack.c.h.b16 %v515
    %v605 = vunpack.c.l.b16 %v516
    %v606 = vunpack.c.h.b16 %v516
    %v607 = vunpack.c.l.b16 %v517
    %v608 = vunpack.c.h.b16 %v517
    %v609 = vunpack.c.l.b16 %v518
    %v610 = vunpack.c.h.b16 %v518
    %v611 = vunpack.c.l.b16 %v519
    %v612 = vunpack.c.h.b16 %v519
    %v613 = vunpack.c.l.b16 %v520
    %v614 = vunpack.c.h.b16 %v520
    %v615 = vunpack.c.l.b16 %v521
    %v616 = vunpack.c.h.b16 %v521
    %v617 = vunpack.c.l.b16 %v522
    %v618 = vunpack.c.h.b16 %v522
    %v619 = vpack.c.b16 %v559, %v555
    %v620 = vpack.c.b16 %v560, %v556
    %v621 = vpack.c.b16 %v561, %v557
    %v622 = vpack.c.b16 %v562, %v558
    %v623 = vpack.c.b16 %v567, %v563
    %v624 = vpack.c.b16 %v568, %v564
    %v625 = vpack.c.b16 %v569, %v565
    %v626 = vpack.c.b16 %v570, %v566
    %v627 = vpack.c.b16 %v575, %v571
    %v628 = vpack.c.b16 %v576, %v572
    %v629 = vpack.c.b16 %v577, %v573
    %v630 = vpack.c.b16 %v578, %v574
    %v631 = vpack.c.b16 %v583, %v579
    %v632 = vpack.c.b16 %v584, %v580
    %v633 = vpack.c.b16 %v585, %v581
    %v634 = vpack.c.b16 %v586, %v582
    %v635 = vpack.c.b16 %v591, %v587
    %v636 = vpack.c.b16 %v592, %v588
    %v637 = vpack.c.b16 %v593, %v589
    %v638 = vpack.c.b16 %v594, %v590
    %v639 = vpack.c.b16 %v599, %v595
    %v640 = vpack.c.b16 %v600, %v596
    %v641 = vpack.c.b16 %v601, %v597
    %v642 = vpack.c.b16 %v602, %v598
    %v643 = vpack.c.b16 %v607, %v603
    %v644 = vpack.c.b16 %v608, %v604
    %v645 = vpack.c.b16 %v609, %v605
    %v646 = vpack.c.b16 %v610, %v606
    %v647 = vpack.c.b16 %v615, %v611
    %v648 = vpack.c.b16 %v616, %v612
    %v649 = vpack.c.b16 %v617, %v613
    %v650 = vpack.c.b16 %v618, %v614
    %683 = vmatprep.subr.bf16.mxu0 %v620
    %684 = vmatpush1.bf16.msra.mxu0 %v619
    %685 = vmatprep.subr.bf16.mxu0 %v624
    %686 = vmatpush1.bf16.msra.mxu0 %v623
    %687 = vmatprep.subr.bf16.mxu0 %v628
    %688 = vmatpush1.bf16.msra.mxu0 %v627
    %689 = vmatprep.subr.bf16.mxu0 %v632
    %690 = vmatpush1.bf16.msra.mxu0 %v631
    %691 = vmatprep.subr.bf16.mxu0 %v636
    %692 = vmatpush1.bf16.msra.mxu0 %v635
    %693 = vmatprep.subr.bf16.mxu0 %v640
    %694 = vmatpush1.bf16.msra.mxu0 %v639
    %695 = vmatprep.subr.bf16.mxu0 %v644
    %696 = vmatpush1.bf16.msra.mxu0 %v643
    %697 = vmatprep.subr.bf16.mxu0 %v648
    %698 = vmatpush1.bf16.msra.mxu0 %v647
    %699 = vmatprep.subr.bf16.mxu0 0
    %700 = vmatpush1.bf16.msra.mxu0 0
    %701 = vmatprep.subr.bf16.mxu0 0
    %702 = vmatpush1.bf16.msra.mxu0 0
    %703 = vmatprep.subr.bf16.mxu0 0
    %704 = vmatpush1.bf16.msra.mxu0 0
    %705 = vmatprep.subr.bf16.mxu0 0
    %706 = vmatpush1.bf16.msra.mxu0 0
    %707 = vmatprep.subr.bf16.mxu0 0
    %708 = vmatpush1.bf16.msra.mxu0 0
    %709 = vmatprep.subr.bf16.mxu0 0
    %710 = vmatpush1.bf16.msra.mxu0 0
    %711 = vmatprep.subr.bf16.mxu0 0
    %712 = vmatpush1.bf16.msra.mxu0 0
    %713 = vmatprep.subr.bf16.mxu0 0
    %714 = vmatpush1.bf16.msra.mxu0 0
    %715 = vmatprep.mubr.bf16.mxu0 0
    %716 = vmatmul.mubr.bf16.gmra.mrb[0].mxu0 %v489
    %v717 = vpop.f32.mrb[0].mxu0
    %v718 = vadd.f32 0.0, %v717
    %v719 = vpop.f32.mrb[0].mxu0
    %v720 = vadd.f32 0.0, %v719
    %v721 = vpop.f32.mrb[0].mxu0
    %v722 = vpop.f32.mrb[0].mxu0
    %723 = vdwg.mxu0
    %724 = vmatprep.subr.bf16.mxu0 %v622
    %725 = vmatpush1.bf16.msra.mxu0 %v621
    %726 = vmatprep.subr.bf16.mxu0 %v626
    %727 = vmatpush1.bf16.msra.mxu0 %v625
    %728 = vmatprep.subr.bf16.mxu0 %v630
    %729 = vmatpush1.bf16.msra.mxu0 %v629
    %730 = vmatprep.subr.bf16.mxu0 %v634
    %731 = vmatpush1.bf16.msra.mxu0 %v633
    %732 = vmatprep.subr.bf16.mxu0 %v638
    %733 = vmatpush1.bf16.msra.mxu0 %v637
    %734 = vmatprep.subr.bf16.mxu0 %v642
    %735 = vmatpush1.bf16.msra.mxu0 %v641
    %736 = vmatprep.subr.bf16.mxu0 %v646
    %737 = vmatpush1.bf16.msra.mxu0 %v645
    %738 = vmatprep.subr.bf16.mxu0 %v650
    %739 = vmatpush1.bf16.msra.mxu0 %v649
    %740 = vmatprep.subr.bf16.mxu0 0
    %741 = vmatpush1.bf16.msra.mxu0 0
    %742 = vmatprep.subr.bf16.mxu0 0
    %743 = vmatpush1.bf16.msra.mxu0 0
    %744 = vmatprep.subr.bf16.mxu0 0
    %745 = vmatpush1.bf16.msra.mxu0 0
    %746 = vmatprep.subr.bf16.mxu0 0
    %747 = vmatpush1.bf16.msra.mxu0 0
    %748 = vmatprep.subr.bf16.mxu0 0
    %749 = vmatpush1.bf16.msra.mxu0 0
    %750 = vmatprep.subr.bf16.mxu0 0
    %751 = vmatpush1.bf16.msra.mxu0 0
    %752 = vmatprep.subr.bf16.mxu0 0
    %753 = vmatpush1.bf16.msra.mxu0 0
    %754 = vmatprep.subr.bf16.mxu0 0
    %755 = vmatpush1.bf16.msra.mxu0 0
    %756 = vmatprep.mubr.bf16.mxu0 0
    %757 = vmatmul.mubr.bf16.gmra.mrb[0].mxu0 %v489
    %v758 = vpop.f32.mrb[0].mxu0
    %v759 = vadd.f32 0.0, %v758
    %v760 = vpop.f32.mrb[0].mxu0
    %v761 = vadd.f32 0.0, %v760
    %v762 = vpop.f32.mrb[0].mxu0
    %v763 = vpop.f32.mrb[0].mxu0
    %764 = vdwg.mxu0
    %v797 = vunpack.c.l.b16 %v147
    %v798 = vunpack.c.h.b16 %v147
    %v799 = vunpack.c.l.b16 %v148
    %v800 = vunpack.c.h.b16 %v148
    %v801 = vunpack.c.l.b16 %v149
    %v802 = vunpack.c.h.b16 %v149
    %v803 = vunpack.c.l.b16 %v150
    %v804 = vunpack.c.h.b16 %v150
    %v805 = vunpack.c.l.b16 %v151
    %v806 = vunpack.c.h.b16 %v151
    %v807 = vunpack.c.l.b16 %v152
    %v808 = vunpack.c.h.b16 %v152
    %v809 = vunpack.c.l.b16 %v153
    %v810 = vunpack.c.h.b16 %v153
    %v811 = vunpack.c.l.b16 %v154
    %v812 = vunpack.c.h.b16 %v154
    %v813 = vunpack.c.l.b16 %v155
    %v814 = vunpack.c.h.b16 %v155
    %v815 = vunpack.c.l.b16 %v156
    %v816 = vunpack.c.h.b16 %v156
    %v817 = vunpack.c.l.b16 %v157
    %v818 = vunpack.c.h.b16 %v157
    %v819 = vunpack.c.l.b16 %v158
    %v820 = vunpack.c.h.b16 %v158
    %v821 = vunpack.c.l.b16 %v159
    %v822 = vunpack.c.h.b16 %v159
    %v823 = vunpack.c.l.b16 %v160
    %v824 = vunpack.c.h.b16 %v160
    %v825 = vunpack.c.l.b16 %v161
    %v826 = vunpack.c.h.b16 %v161
    %v827 = vunpack.c.l.b16 %v162
    %v828 = vunpack.c.h.b16 %v162
    %v829 = vunpack.c.l.b16 %v163
    %v830 = vunpack.c.h.b16 %v163
    %v831 = vunpack.c.l.b16 %v164
    %v832 = vunpack.c.h.b16 %v164
    %v833 = vunpack.c.l.b16 %v165
    %v834 = vunpack.c.h.b16 %v165
    %v835 = vunpack.c.l.b16 %v166
    %v836 = vunpack.c.h.b16 %v166
    %v837 = vunpack.c.l.b16 %v167
    %v838 = vunpack.c.h.b16 %v167
    %v839 = vunpack.c.l.b16 %v168
    %v840 = vunpack.c.h.b16 %v168
    %v841 = vunpack.c.l.b16 %v169
    %v842 = vunpack.c.h.b16 %v169
    %v843 = vunpack.c.l.b16 %v170
    %v844 = vunpack.c.h.b16 %v170
    %v845 = vunpack.c.l.b16 %v171
    %v846 = vunpack.c.h.b16 %v171
    %v847 = vunpack.c.l.b16 %v172
    %v848 = vunpack.c.h.b16 %v172
    %v849 = vunpack.c.l.b16 %v173
    %v850 = vunpack.c.h.b16 %v173
    %v851 = vunpack.c.l.b16 %v174
    %v852 = vunpack.c.h.b16 %v174
    %v853 = vunpack.c.l.b16 %v175
    %v854 = vunpack.c.h.b16 %v175
    %v855 = vunpack.c.l.b16 %v176
    %v856 = vunpack.c.h.b16 %v176
    %v857 = vunpack.c.l.b16 %v177
    %v858 = vunpack.c.h.b16 %v177
    %v859 = vunpack.c.l.b16 %v178
    %v860 = vunpack.c.h.b16 %v178
    %v861 = vpack.c.b16 %v801, %v797
    %v862 = vpack.c.b16 %v802, %v798
    %v863 = vpack.c.b16 %v803, %v799
    %v864 = vpack.c.b16 %v804, %v800
    %v865 = vpack.c.b16 %v809, %v805
    %v866 = vpack.c.b16 %v810, %v806
    %v867 = vpack.c.b16 %v811, %v807
    %v868 = vpack.c.b16 %v812, %v808
    %v869 = vpack.c.b16 %v817, %v813
    %v870 = vpack.c.b16 %v818, %v814
    %v871 = vpack.c.b16 %v819, %v815
    %v872 = vpack.c.b16 %v820, %v816
    %v873 = vpack.c.b16 %v825, %v821
    %v874 = vpack.c.b16 %v826, %v822
    %v875 = vpack.c.b16 %v827, %v823
    %v876 = vpack.c.b16 %v828, %v824
    %v877 = vpack.c.b16 %v833, %v829
    %v878 = vpack.c.b16 %v834, %v830
    %v879 = vpack.c.b16 %v835, %v831
    %v880 = vpack.c.b16 %v836, %v832
    %v881 = vpack.c.b16 %v841, %v837
    %v882 = vpack.c.b16 %v842, %v838
    %v883 = vpack.c.b16 %v843, %v839
    %v884 = vpack.c.b16 %v844, %v840
    %v885 = vpack.c.b16 %v849, %v845
    %v886 = vpack.c.b16 %v850, %v846
    %v887 = vpack.c.b16 %v851, %v847
    %v888 = vpack.c.b16 %v852, %v848
    %v889 = vpack.c.b16 %v857, %v853
    %v890 = vpack.c.b16 %v858, %v854
    %v891 = vpack.c.b16 %v859, %v855
    %v892 = vpack.c.b16 %v860, %v856
    %925 = vmatprep.subr.bf16.mxu0 %v862
    %926 = vmatpush1.bf16.msra.mxu0 %v861
    %927 = vmatprep.subr.bf16.mxu0 %v866
    %928 = vmatpush1.bf16.msra.mxu0 %v865
    %929 = vmatprep.subr.bf16.mxu0 %v870
    %930 = vmatpush1.bf16.msra.mxu0 %v869
    %931 = vmatprep.subr.bf16.mxu0 %v874
    %932 = vmatpush1.bf16.msra.mxu0 %v873
    %933 = vmatprep.subr.bf16.mxu0 %v878
    %934 = vmatpush1.bf16.msra.mxu0 %v877
    %935 = vmatprep.subr.bf16.mxu0 %v882
    %936 = vmatpush1.bf16.msra.mxu0 %v881
    %937 = vmatprep.subr.bf16.mxu0 %v886
    %938 = vmatpush1.bf16.msra.mxu0 %v885
    %939 = vmatprep.subr.bf16.mxu0 %v890
    %940 = vmatpush1.bf16.msra.mxu0 %v889
    %941 = vmatprep.subr.bf16.mxu0 0
    %942 = vmatpush1.bf16.msra.mxu0 0
    %943 = vmatprep.subr.bf16.mxu0 0
    %944 = vmatpush1.bf16.msra.mxu0 0
    %945 = vmatprep.subr.bf16.mxu0 0
    %946 = vmatpush1.bf16.msra.mxu0 0
    %947 = vmatprep.subr.bf16.mxu0 0
    %948 = vmatpush1.bf16.msra.mxu0 0
    %949 = vmatprep.subr.bf16.mxu0 0
    %950 = vmatpush1.bf16.msra.mxu0 0
    %951 = vmatprep.subr.bf16.mxu0 0
    %952 = vmatpush1.bf16.msra.mxu0 0
    %953 = vmatprep.subr.bf16.mxu0 0
    %954 = vmatpush1.bf16.msra.mxu0 0
    %955 = vmatprep.subr.bf16.mxu0 0
    %956 = vmatpush1.bf16.msra.mxu0 0
    %957 = vmatprep.mubr.bf16.mxu0 0
    %958 = vmatmul.mubr.bf16.gmra.mrb[0].mxu0 %v146
    %v959 = vpop.f32.mrb[0].mxu0
    %v960 = vadd.f32 %v442, %v959
    %v961 = vpop.f32.mrb[0].mxu0
    %v962 = vadd.f32 %v444, %v961
    %v963 = vpop.f32.mrb[0].mxu0
    %v964 = vpop.f32.mrb[0].mxu0
    %965 = vdwg.mxu0
    %966 = vmatprep.subr.bf16.mxu0 %v864
    %967 = vmatpush1.bf16.msra.mxu0 %v863
    %968 = vmatprep.subr.bf16.mxu0 %v868
    %969 = vmatpush1.bf16.msra.mxu0 %v867
    %970 = vmatprep.subr.bf16.mxu0 %v872
    %971 = vmatpush1.bf16.msra.mxu0 %v871
    %972 = vmatprep.subr.bf16.mxu0 %v876
    %973 = vmatpush1.bf16.msra.mxu0 %v875
    %974 = vmatprep.subr.bf16.mxu0 %v880
    %975 = vmatpush1.bf16.msra.mxu0 %v879
    %976 = vmatprep.subr.bf16.mxu0 %v884
    %977 = vmatpush1.bf16.msra.mxu0 %v883
    %978 = vmatprep.subr.bf16.mxu0 %v888
    %979 = vmatpush1.bf16.msra.mxu0 %v887
    %980 = vmatprep.subr.bf16.mxu0 %v892
    %981 = vmatpush1.bf16.msra.mxu0 %v891
    %982 = vmatprep.subr.bf16.mxu0 0
    %983 = vmatpush1.bf16.msra.mxu0 0
    %984 = vmatprep.subr.bf16.mxu0 0
    %985 = vmatpush1.bf16.msra.mxu0 0
    %986 = vmatprep.subr.bf16.mxu0 0
    %987 = vmatpush1.bf16.msra.mxu0 0
    %988 = vmatprep.subr.bf16.mxu0 0
    %989 = vmatpush1.bf16.msra.mxu0 0
    %990 = vmatprep.subr.bf16.mxu0 0
    %991 = vmatpush1.bf16.msra.mxu0 0
    %992 = vmatprep.subr.bf16.mxu0 0
    %993 = vmatpush1.bf16.msra.mxu0 0
    %994 = vmatprep.subr.bf16.mxu0 0
    %995 = vmatpush1.bf16.msra.mxu0 0
    %996 = vmatprep.subr.bf16.mxu0 0
    %997 = vmatpush1.bf16.msra.mxu0 0
    %998 = vmatprep.mubr.bf16.mxu0 0
    %999 = vmatmul.mubr.bf16.gmra.mrb[0].mxu0 %v146
    %v1000 = vpop.f32.mrb[0].mxu0
    %v1001 = vadd.f32 %v483, %v1000
    %v1002 = vpop.f32.mrb[0].mxu0
    %v1003 = vadd.f32 %v485, %v1002
    %v1004 = vpop.f32.mrb[0].mxu0
    %v1005 = vpop.f32.mrb[0].mxu0
    %1006 = vdwg.mxu0
    %v1007 = vld [vmem:[%s6] sm:$0xf]
    %v1009 = vlaneseq
    %v1010 = vshrl.u32 %v1009, 7
    %v1011 = vsub.s32 0, %v1010
    %v1012 = vrot.slane %v1007, %v1011
    %v1013 = vlaneseq
    %v1014 = vshrl.u32 %v1013, 7
    %v1015 = vsub.s32 1, %v1014
    %v1016 = vrot.slane %v1007, %v1015
    %v1017 = vlaneseq
    %v1018 = vshrl.u32 %v1017, 7
    %v1019 = vsub.s32 2, %v1018
    %v1020 = vrot.slane %v1007, %v1019
    %v1021 = vlaneseq
    %v1022 = vshrl.u32 %v1021, 7
    %v1023 = vsub.s32 3, %v1022
    %v1024 = vrot.slane %v1007, %v1023
    %v1029 = vadd.f32 %v960, %v1012
    %v1030 = vadd.f32 %v962, %v1016
    %v1031 = vadd.f32 %v1001, %v1020
    %v1032 = vadd.f32 %v1003, %v1024
    %v1033 = vxor.u32 %v1029, 2147483648
    %v1034 = vmul.f32 %v1033, 1.442695
    %v1035 = vpow.pop %v1034
    %v1036 = vadd.f32 %v1035, 1.0
    %v1037 = vrcp.pop %v1036
    %v1038 = vmul.f32 1.0, %v1037
    %v1039 = vxor.u32 %v1030, 2147483648
    %v1040 = vmul.f32 %v1039, 1.442695
    %v1041 = vpow.pop %v1040
    %v1042 = vadd.f32 %v1041, 1.0
    %v1043 = vrcp.pop %v1042
    %v1044 = vmul.f32 1.0, %v1043
    %v1045 = vtanh.pop %v1031
    %v1046 = vxor.u32 %v1032, 2147483648
    %v1047 = vmul.f32 %v1046, 1.442695
    %v1048 = vpow.pop %v1047
    %v1049 = vadd.f32 %v1048, 1.0
    %v1050 = vrcp.pop %v1049
    %v1051 = vmul.f32 1.0, %v1050
    %v1052 = vmul.f32 %v1044, %v144
    %v1053 = vmul.f32 %v1038, %v1045
    %v1054 = vadd.f32 %v1052, %v1053
    %v1055 = vtanh.pop %v1054
    %v1056 = vmul.f32 %v1051, %v1055
    %v1089 = vunpack.c.l.b16 %v182
    %v1090 = vunpack.c.h.b16 %v182
    %v1091 = vunpack.c.l.b16 %v183
    %v1092 = vunpack.c.h.b16 %v183
    %v1093 = vunpack.c.l.b16 %v184
    %v1094 = vunpack.c.h.b16 %v184
    %v1095 = vunpack.c.l.b16 %v185
    %v1096 = vunpack.c.h.b16 %v185
    %v1097 = vunpack.c.l.b16 %v186
    %v1098 = vunpack.c.h.b16 %v186
    %v1099 = vunpack.c.l.b16 %v187
    %v1100 = vunpack.c.h.b16 %v187
    %v1101 = vunpack.c.l.b16 %v188
    %v1102 = vunpack.c.h.b16 %v188
    %v1103 = vunpack.c.l.b16 %v189
    %v1104 = vunpack.c.h.b16 %v189
    %v1105 = vunpack.c.l.b16 %v190
    %v1106 = vunpack.c.h.b16 %v190
    %v1107 = vunpack.c.l.b16 %v191
    %v1108 = vunpack.c.h.b16 %v191
    %v1109 = vunpack.c.l.b16 %v192
    %v1110 = vunpack.c.h.b16 %v192
    %v1111 = vunpack.c.l.b16 %v193
    %v1112 = vunpack.c.h.b16 %v193
    %v1113 = vunpack.c.l.b16 %v194
    %v1114 = vunpack.c.h.b16 %v194
    %v1115 = vunpack.c.l.b16 %v195
    %v1116 = vunpack.c.h.b16 %v195
    %v1117 = vunpack.c.l.b16 %v196
    %v1118 = vunpack.c.h.b16 %v196
    %v1119 = vunpack.c.l.b16 %v197
    %v1120 = vunpack.c.h.b16 %v197
    %v1121 = vunpack.c.l.b16 %v198
    %v1122 = vunpack.c.h.b16 %v198
    %v1123 = vunpack.c.l.b16 %v199
    %v1124 = vunpack.c.h.b16 %v199
    %v1125 = vunpack.c.l.b16 %v200
    %v1126 = vunpack.c.h.b16 %v200
    %v1127 = vunpack.c.l.b16 %v201
    %v1128 = vunpack.c.h.b16 %v201
    %v1129 = vunpack.c.l.b16 %v202
    %v1130 = vunpack.c.h.b16 %v202
    %v1131 = vunpack.c.l.b16 %v203
    %v1132 = vunpack.c.h.b16 %v203
    %v1133 = vunpack.c.l.b16 %v204
    %v1134 = vunpack.c.h.b16 %v204
    %v1135 = vunpack.c.l.b16 %v205
    %v1136 = vunpack.c.h.b16 %v205
    %v1137 = vunpack.c.l.b16 %v206
    %v1138 = vunpack.c.h.b16 %v206
    %v1139 = vunpack.c.l.b16 %v207
    %v1140 = vunpack.c.h.b16 %v207
    %v1141 = vunpack.c.l.b16 %v208
    %v1142 = vunpack.c.h.b16 %v208
    %v1143 = vunpack.c.l.b16 %v209
    %v1144 = vunpack.c.h.b16 %v209
    %v1145 = vunpack.c.l.b16 %v210
    %v1146 = vunpack.c.h.b16 %v210
    %v1147 = vunpack.c.l.b16 %v211
    %v1148 = vunpack.c.h.b16 %v211
    %v1149 = vunpack.c.l.b16 %v212
    %v1150 = vunpack.c.h.b16 %v212
    %v1151 = vunpack.c.l.b16 %v213
    %v1152 = vunpack.c.h.b16 %v213
    %v1153 = vpack.c.b16 %v1093, %v1089
    %v1154 = vpack.c.b16 %v1094, %v1090
    %v1155 = vpack.c.b16 %v1095, %v1091
    %v1156 = vpack.c.b16 %v1096, %v1092
    %v1157 = vpack.c.b16 %v1101, %v1097
    %v1158 = vpack.c.b16 %v1102, %v1098
    %v1159 = vpack.c.b16 %v1103, %v1099
    %v1160 = vpack.c.b16 %v1104, %v1100
    %v1161 = vpack.c.b16 %v1109, %v1105
    %v1162 = vpack.c.b16 %v1110, %v1106
    %v1163 = vpack.c.b16 %v1111, %v1107
    %v1164 = vpack.c.b16 %v1112, %v1108
    %v1165 = vpack.c.b16 %v1117, %v1113
    %v1166 = vpack.c.b16 %v1118, %v1114
    %v1167 = vpack.c.b16 %v1119, %v1115
    %v1168 = vpack.c.b16 %v1120, %v1116
    %v1169 = vpack.c.b16 %v1125, %v1121
    %v1170 = vpack.c.b16 %v1126, %v1122
    %v1171 = vpack.c.b16 %v1127, %v1123
    %v1172 = vpack.c.b16 %v1128, %v1124
    %v1173 = vpack.c.b16 %v1133, %v1129
    %v1174 = vpack.c.b16 %v1134, %v1130
    %v1175 = vpack.c.b16 %v1135, %v1131
    %v1176 = vpack.c.b16 %v1136, %v1132
    %v1177 = vpack.c.b16 %v1141, %v1137
    %v1178 = vpack.c.b16 %v1142, %v1138
    %v1179 = vpack.c.b16 %v1143, %v1139
    %v1180 = vpack.c.b16 %v1144, %v1140
    %v1181 = vpack.c.b16 %v1149, %v1145
    %v1182 = vpack.c.b16 %v1150, %v1146
    %v1183 = vpack.c.b16 %v1151, %v1147
    %v1184 = vpack.c.b16 %v1152, %v1148
    %1217 = vmatprep.subr.bf16.mxu0 %v1154
    %1218 = vmatpush1.bf16.msra.mxu0 %v1153
    %1219 = vmatprep.subr.bf16.mxu0 %v1158
    %1220 = vmatpush1.bf16.msra.mxu0 %v1157
    %1221 = vmatprep.subr.bf16.mxu0 %v1162
    %1222 = vmatpush1.bf16.msra.mxu0 %v1161
    %1223 = vmatprep.subr.bf16.mxu0 %v1166
    %1224 = vmatpush1.bf16.msra.mxu0 %v1165
    %1225 = vmatprep.subr.bf16.mxu0 %v1170
    %1226 = vmatpush1.bf16.msra.mxu0 %v1169
    %1227 = vmatprep.subr.bf16.mxu0 %v1174
    %1228 = vmatpush1.bf16.msra.mxu0 %v1173
    %1229 = vmatprep.subr.bf16.mxu0 %v1178
    %1230 = vmatpush1.bf16.msra.mxu0 %v1177
    %1231 = vmatprep.subr.bf16.mxu0 %v1182
    %1232 = vmatpush1.bf16.msra.mxu0 %v1181
    %1233 = vmatprep.subr.bf16.mxu0 0
    %1234 = vmatpush1.bf16.msra.mxu0 0
    %1235 = vmatprep.subr.bf16.mxu0 0
    %1236 = vmatpush1.bf16.msra.mxu0 0
    %1237 = vmatprep.subr.bf16.mxu0 0
    %1238 = vmatpush1.bf16.msra.mxu0 0
    %1239 = vmatprep.subr.bf16.mxu0 0
    %1240 = vmatpush1.bf16.msra.mxu0 0
    %1241 = vmatprep.subr.bf16.mxu0 0
    %1242 = vmatpush1.bf16.msra.mxu0 0
    %1243 = vmatprep.subr.bf16.mxu0 0
    %1244 = vmatpush1.bf16.msra.mxu0 0
    %1245 = vmatprep.subr.bf16.mxu0 0
    %1246 = vmatpush1.bf16.msra.mxu0 0
    %1247 = vmatprep.subr.bf16.mxu0 0
    %1248 = vmatpush1.bf16.msra.mxu0 0
    %1249 = vmatprep.mubr.bf16.mxu0 0
    %1250 = vmatmul.mubr.bf16.gmra.mrb[0].mxu0 %v180
    %v1251 = vpop.f32.mrb[0].mxu0
    %v1252 = vadd.f32 %v718, %v1251
    %v1253 = vpop.f32.mrb[0].mxu0
    %v1254 = vadd.f32 %v720, %v1253
    %v1255 = vpop.f32.mrb[0].mxu0
    %v1256 = vpop.f32.mrb[0].mxu0
    %1257 = vdwg.mxu0
    %1258 = vmatprep.subr.bf16.mxu0 %v1156
    %1259 = vmatpush1.bf16.msra.mxu0 %v1155
    %1260 = vmatprep.subr.bf16.mxu0 %v1160
    %1261 = vmatpush1.bf16.msra.mxu0 %v1159
    %1262 = vmatprep.subr.bf16.mxu0 %v1164
    %1263 = vmatpush1.bf16.msra.mxu0 %v1163
    %1264 = vmatprep.subr.bf16.mxu0 %v1168
    %1265 = vmatpush1.bf16.msra.mxu0 %v1167
    %1266 = vmatprep.subr.bf16.mxu0 %v1172
    %1267 = vmatpush1.bf16.msra.mxu0 %v1171
    %1268 = vmatprep.subr.bf16.mxu0 %v1176
    %1269 = vmatpush1.bf16.msra.mxu0 %v1175
    %1270 = vmatprep.subr.bf16.mxu0 %v1180
    %1271 = vmatpush1.bf16.msra.mxu0 %v1179
    %1272 = vmatprep.subr.bf16.mxu0 %v1184
    %1273 = vmatpush1.bf16.msra.mxu0 %v1183
    %1274 = vmatprep.subr.bf16.mxu0 0
    %1275 = vmatpush1.bf16.msra.mxu0 0
    %1276 = vmatprep.subr.bf16.mxu0 0
    %1277 = vmatpush1.bf16.msra.mxu0 0
    %1278 = vmatprep.subr.bf16.mxu0 0
    %1279 = vmatpush1.bf16.msra.mxu0 0
    %1280 = vmatprep.subr.bf16.mxu0 0
    %1281 = vmatpush1.bf16.msra.mxu0 0
    %1282 = vmatprep.subr.bf16.mxu0 0
    %1283 = vmatpush1.bf16.msra.mxu0 0
    %1284 = vmatprep.subr.bf16.mxu0 0
    %1285 = vmatpush1.bf16.msra.mxu0 0
    %1286 = vmatprep.subr.bf16.mxu0 0
    %1287 = vmatpush1.bf16.msra.mxu0 0
    %1288 = vmatprep.subr.bf16.mxu0 0
    %1289 = vmatpush1.bf16.msra.mxu0 0
    %1290 = vmatprep.mubr.bf16.mxu0 0
    %1291 = vmatmul.mubr.bf16.gmra.mrb[0].mxu0 %v180
    %v1292 = vpop.f32.mrb[0].mxu0
    %v1293 = vadd.f32 %v759, %v1292
    %v1294 = vpop.f32.mrb[0].mxu0
    %v1295 = vadd.f32 %v761, %v1294
    %v1296 = vpop.f32.mrb[0].mxu0
    %v1297 = vpop.f32.mrb[0].mxu0
    %1298 = vdwg.mxu0
    %s1299 = scalar_lea.vmem %s6, 4
    %v1300 = vld [vmem:[%s1299] sm:$0xf]
    %v1302 = vlaneseq
    %v1303 = vshrl.u32 %v1302, 7
    %v1304 = vsub.s32 0, %v1303
    %v1305 = vrot.slane %v1300, %v1304
    %v1306 = vlaneseq
    %v1307 = vshrl.u32 %v1306, 7
    %v1308 = vsub.s32 1, %v1307
    %v1309 = vrot.slane %v1300, %v1308
    %v1310 = vlaneseq
    %v1311 = vshrl.u32 %v1310, 7
    %v1312 = vsub.s32 2, %v1311
    %v1313 = vrot.slane %v1300, %v1312
    %v1314 = vlaneseq
    %v1315 = vshrl.u32 %v1314, 7
    %v1316 = vsub.s32 3, %v1315
    %v1317 = vrot.slane %v1300, %v1316
    %v1322 = vadd.f32 %v1252, %v1305
    %v1323 = vadd.f32 %v1254, %v1309
    %v1324 = vadd.f32 %v1293, %v1313
    %v1325 = vadd.f32 %v1295, %v1317
    %v1326 = vxor.u32 %v1322, 2147483648
    %v1327 = vmul.f32 %v1326, 1.442695
    %v1328 = vpow.pop %v1327
    %v1329 = vadd.f32 %v1328, 1.0
    %v1330 = vrcp.pop %v1329
    %v1331 = vmul.f32 1.0, %v1330
    %v1332 = vxor.u32 %v1323, 2147483648
    %v1333 = vmul.f32 %v1332, 1.442695
    %v1334 = vpow.pop %v1333
    %v1335 = vadd.f32 %v1334, 1.0
    %v1336 = vrcp.pop %v1335
    %v1337 = vmul.f32 1.0, %v1336
    %v1338 = vtanh.pop %v1324
    %v1339 = vxor.u32 %v1325, 2147483648
    %v1340 = vmul.f32 %v1339, 1.442695
    %v1341 = vpow.pop %v1340
    %v1342 = vadd.f32 %v1341, 1.0
    %v1343 = vrcp.pop %v1342
    %v1344 = vmul.f32 1.0, %v1343
    %v1345 = vmul.f32 %v1337, %v145
    %v1346 = vmul.f32 %v1331, %v1338
    %v1347 = vadd.f32 %v1345, %v1346
    %v1348 = vtanh.pop %v1347
    %v1349 = vmul.f32 %v1344, %v1348
    %1351 = vset.pattern.permute.xlu0 0
    %1352 = vperm.xlu0 %1351, %v110
    %v1353 = vpop.permute.xlu0 %1352
    %v1355 = vmul.f32 %v1353, %v1056
    %1357 = vset.pattern.permute.xlu0 0
    %1358 = vperm.xlu0 %1357, %v125
    %v1359 = vpop.permute.xlu0 %1358
    %v1361 = vmul.f32 %v1359, %v1349
    %v1362 = vpack.c.bf16 %v1355, %v1355
    %1363 = vst [vmem:[#allocation11] sm:$0x1] %v1362
    %v1364 = vpack.c.bf16 %v1361, %v1361
    %s1365 = scalar_lea.vmem [#allocation12], 7
    %1366 = vst [vmem:[%s1365] sm:$0x1] %v1364
    %1368 = vset.pattern.permute.xlu0 0
    %1369 = vperm.xlu0 %1368, %v126
    %v1370 = vpop.permute.xlu0 %1369
    %v1372 = vmul.f32 %v1370, %v142
    %v1373 = vadd.f32 %v1355, %v1372
    %1375 = vset.pattern.permute.xlu0 0
    %1376 = vperm.xlu0 %1375, %v141
    %v1377 = vpop.permute.xlu0 %1376
    %v1379 = vmul.f32 %v1377, %v143
    %v1380 = vadd.f32 %v1361, %v1379
    %v1381 = vmul.f32 %v1353, %v1054
    %v1382 = vmul.f32 %v1370, %v144
    %v1383 = vadd.f32 %v1381, %v1382
    %v1384 = vmul.f32 %v1359, %v1347
    %v1385 = vmul.f32 %v1377, %v145
    %v1386 = vadd.f32 %v1384, %v1385
    %s1387 = scalar_lea.vmem %s0, 1
    %v1388 = vld [vmem:[%s1387] sm:$0x1]
    %v1389 = vld [vmem:[#allocation6] sm:$0xff]
    %v1390 = vld [vmem:[#allocation6 + $0x8] sm:$0xff]
    %v1391 = vld [vmem:[#allocation6 + $0x10] sm:$0xff]
    %v1392 = vld [vmem:[#allocation6 + $0x18] sm:$0xff]
    %v1393 = vld [vmem:[#allocation6 + $0x20] sm:$0xff]
    %v1394 = vld [vmem:[#allocation6 + $0x28] sm:$0xff]
    %v1395 = vld [vmem:[#allocation6 + $0x30] sm:$0xff]
    %v1396 = vld [vmem:[#allocation6 + $0x38] sm:$0xff]
    %v1397 = vld [vmem:[#allocation6 + $0x40] sm:$0xff]
    %v1398 = vld [vmem:[#allocation6 + $0x48] sm:$0xff]
    %v1399 = vld [vmem:[#allocation6 + $0x50] sm:$0xff]
    %v1400 = vld [vmem:[#allocation6 + $0x58] sm:$0xff]
    %v1401 = vld [vmem:[#allocation6 + $0x60] sm:$0xff]
    %v1402 = vld [vmem:[#allocation6 + $0x68] sm:$0xff]
    %v1403 = vld [vmem:[#allocation6 + $0x70] sm:$0xff]
    %v1404 = vld [vmem:[#allocation6 + $0x78] sm:$0xff]
    %v1405 = vld [vmem:[#allocation6 + $0x80] sm:$0xff]
    %v1406 = vld [vmem:[#allocation6 + $0x88] sm:$0xff]
    %v1407 = vld [vmem:[#allocation6 + $0x90] sm:$0xff]
    %v1408 = vld [vmem:[#allocation6 + $0x98] sm:$0xff]
    %v1409 = vld [vmem:[#allocation6 + $0xa0] sm:$0xff]
    %v1410 = vld [vmem:[#allocation6 + $0xa8] sm:$0xff]
    %v1411 = vld [vmem:[#allocation6 + $0xb0] sm:$0xff]
    %v1412 = vld [vmem:[#allocation6 + $0xb8] sm:$0xff]
    %v1413 = vld [vmem:[#allocation6 + $0xc0] sm:$0xff]
    %v1414 = vld [vmem:[#allocation6 + $0xc8] sm:$0xff]
    %v1415 = vld [vmem:[#allocation6 + $0xd0] sm:$0xff]
    %v1416 = vld [vmem:[#allocation6 + $0xd8] sm:$0xff]
    %v1417 = vld [vmem:[#allocation6 + $0xe0] sm:$0xff]
    %v1418 = vld [vmem:[#allocation6 + $0xe8] sm:$0xff]
    %v1419 = vld [vmem:[#allocation6 + $0xf0] sm:$0xff]
    %v1420 = vld [vmem:[#allocation6 + $0xf8] sm:$0xff]
    %s1421 = scalar_lea.vmem %s88, 6
    %v1422 = vld [vmem:[%s1421] sm:$0x1]
    %v1423 = vld [vmem:[%s181] sm:$0xff]
    %v1424 = vld [vmem:[%s181 + $0x8] sm:$0xff]
    %v1425 = vld [vmem:[%s181 + $0x10] sm:$0xff]
    %v1426 = vld [vmem:[%s181 + $0x18] sm:$0xff]
    %v1427 = vld [vmem:[%s181 + $0x20] sm:$0xff]
    %v1428 = vld [vmem:[%s181 + $0x28] sm:$0xff]
    %v1429 = vld [vmem:[%s181 + $0x30] sm:$0xff]
    %v1430 = vld [vmem:[%s181 + $0x38] sm:$0xff]
    %v1431 = vld [vmem:[%s181 + $0x40] sm:$0xff]
    %v1432 = vld [vmem:[%s181 + $0x48] sm:$0xff]
    %v1433 = vld [vmem:[%s181 + $0x50] sm:$0xff]
    %v1434 = vld [vmem:[%s181 + $0x58] sm:$0xff]
    %v1435 = vld [vmem:[%s181 + $0x60] sm:$0xff]
    %v1436 = vld [vmem:[%s181 + $0x68] sm:$0xff]
    %v1437 = vld [vmem:[%s181 + $0x70] sm:$0xff]
    %v1438 = vld [vmem:[%s181 + $0x78] sm:$0xff]
    %v1439 = vld [vmem:[%s181 + $0x80] sm:$0xff]
    %v1440 = vld [vmem:[%s181 + $0x88] sm:$0xff]
    %v1441 = vld [vmem:[%s181 + $0x90] sm:$0xff]
    %v1442 = vld [vmem:[%s181 + $0x98] sm:$0xff]
    %v1443 = vld [vmem:[%s181 + $0xa0] sm:$0xff]
    %v1444 = vld [vmem:[%s181 + $0xa8] sm:$0xff]
    %v1445 = vld [vmem:[%s181 + $0xb0] sm:$0xff]
    %v1446 = vld [vmem:[%s181 + $0xb8] sm:$0xff]
    %v1447 = vld [vmem:[%s181 + $0xc0] sm:$0xff]
    %v1448 = vld [vmem:[%s181 + $0xc8] sm:$0xff]
    %v1449 = vld [vmem:[%s181 + $0xd0] sm:$0xff]
    %v1450 = vld [vmem:[%s181 + $0xd8] sm:$0xff]
    %v1451 = vld [vmem:[%s181 + $0xe0] sm:$0xff]
    %v1452 = vld [vmem:[%s181 + $0xe8] sm:$0xff]
    %v1453 = vld [vmem:[%s181 + $0xf0] sm:$0xff]
    %v1454 = vld [vmem:[%s181 + $0xf8] sm:$0xff]
    %v1455 = vpack.c.bf16 %v1373, %v1373
    %v1456 = vld [vmem:[#allocation9] sm:$0xff]
    %v1457 = vld [vmem:[#allocation9 + $0x8] sm:$0xff]
    %v1458 = vld [vmem:[#allocation9 + $0x10] sm:$0xff]
    %v1459 = vld [vmem:[#allocation9 + $0x18] sm:$0xff]
    %v1460 = vld [vmem:[#allocation9 + $0x20] sm:$0xff]
    %v1461 = vld [vmem:[#allocation9 + $0x28] sm:$0xff]
    %v1462 = vld [vmem:[#allocation9 + $0x30] sm:$0xff]
    %v1463 = vld [vmem:[#allocation9 + $0x38] sm:$0xff]
    %v1464 = vld [vmem:[#allocation9 + $0x40] sm:$0xff]
    %v1465 = vld [vmem:[#allocation9 + $0x48] sm:$0xff]
    %v1466 = vld [vmem:[#allocation9 + $0x50] sm:$0xff]
    %v1467 = vld [vmem:[#allocation9 + $0x58] sm:$0xff]
    %v1468 = vld [vmem:[#allocation9 + $0x60] sm:$0xff]
    %v1469 = vld [vmem:[#allocation9 + $0x68] sm:$0xff]
    %v1470 = vld [vmem:[#allocation9 + $0x70] sm:$0xff]
    %v1471 = vld [vmem:[#allocation9 + $0x78] sm:$0xff]
    %v1472 = vld [vmem:[#allocation9 + $0x80] sm:$0xff]
    %v1473 = vld [vmem:[#allocation9 + $0x88] sm:$0xff]
    %v1474 = vld [vmem:[#allocation9 + $0x90] sm:$0xff]
    %v1475 = vld [vmem:[#allocation9 + $0x98] sm:$0xff]
    %v1476 = vld [vmem:[#allocation9 + $0xa0] sm:$0xff]
    %v1477 = vld [vmem:[#allocation9 + $0xa8] sm:$0xff]
    %v1478 = vld [vmem:[#allocation9 + $0xb0] sm:$0xff]
    %v1479 = vld [vmem:[#allocation9 + $0xb8] sm:$0xff]
    %v1480 = vld [vmem:[#allocation9 + $0xc0] sm:$0xff]
    %v1481 = vld [vmem:[#allocation9 + $0xc8] sm:$0xff]
    %v1482 = vld [vmem:[#allocation9 + $0xd0] sm:$0xff]
    %v1483 = vld [vmem:[#allocation9 + $0xd8] sm:$0xff]
    %v1484 = vld [vmem:[#allocation9 + $0xe0] sm:$0xff]
    %v1485 = vld [vmem:[#allocation9 + $0xe8] sm:$0xff]
    %v1486 = vld [vmem:[#allocation9 + $0xf0] sm:$0xff]
    %v1487 = vld [vmem:[#allocation9 + $0xf8] sm:$0xff]
    %v1520 = vunpack.c.l.b16 %v1456
    %v1521 = vunpack.c.h.b16 %v1456
    %v1522 = vunpack.c.l.b16 %v1457
    %v1523 = vunpack.c.h.b16 %v1457
    %v1524 = vunpack.c.l.b16 %v1458
    %v1525 = vunpack.c.h.b16 %v1458
    %v1526 = vunpack.c.l.b16 %v1459
    %v1527 = vunpack.c.h.b16 %v1459
    %v1528 = vunpack.c.l.b16 %v1460
    %v1529 = vunpack.c.h.b16 %v1460
    %v1530 = vunpack.c.l.b16 %v1461
    %v1531 = vunpack.c.h.b16 %v1461
    %v1532 = vunpack.c.l.b16 %v1462
    %v1533 = vunpack.c.h.b16 %v1462
    %v1534 = vunpack.c.l.b16 %v1463
    %v1535 = vunpack.c.h.b16 %v1463
    %v1536 = vunpack.c.l.b16 %v1464
    %v1537 = vunpack.c.h.b16 %v1464
    %v1538 = vunpack.c.l.b16 %v1465
    %v1539 = vunpack.c.h.b16 %v1465
    %v1540 = vunpack.c.l.b16 %v1466
    %v1541 = vunpack.c.h.b16 %v1466
    %v1542 = vunpack.c.l.b16 %v1467
    %v1543 = vunpack.c.h.b16 %v1467
    %v1544 = vunpack.c.l.b16 %v1468
    %v1545 = vunpack.c.h.b16 %v1468
    %v1546 = vunpack.c.l.b16 %v1469
    %v1547 = vunpack.c.h.b16 %v1469
    %v1548 = vunpack.c.l.b16 %v1470
    %v1549 = vunpack.c.h.b16 %v1470
    %v1550 = vunpack.c.l.b16 %v1471
    %v1551 = vunpack.c.h.b16 %v1471
    %v1552 = vunpack.c.l.b16 %v1472
    %v1553 = vunpack.c.h.b16 %v1472
    %v1554 = vunpack.c.l.b16 %v1473
    %v1555 = vunpack.c.h.b16 %v1473
    %v1556 = vunpack.c.l.b16 %v1474
    %v1557 = vunpack.c.h.b16 %v1474
    %v1558 = vunpack.c.l.b16 %v1475
    %v1559 = vunpack.c.h.b16 %v1475
    %v1560 = vunpack.c.l.b16 %v1476
    %v1561 = vunpack.c.h.b16 %v1476
    %v1562 = vunpack.c.l.b16 %v1477
    %v1563 = vunpack.c.h.b16 %v1477
    %v1564 = vunpack.c.l.b16 %v1478
    %v1565 = vunpack.c.h.b16 %v1478
    %v1566 = vunpack.c.l.b16 %v1479
    %v1567 = vunpack.c.h.b16 %v1479
    %v1568 = vunpack.c.l.b16 %v1480
    %v1569 = vunpack.c.h.b16 %v1480
    %v1570 = vunpack.c.l.b16 %v1481
    %v1571 = vunpack.c.h.b16 %v1481
    %v1572 = vunpack.c.l.b16 %v1482
    %v1573 = vunpack.c.h.b16 %v1482
    %v1574 = vunpack.c.l.b16 %v1483
    %v1575 = vunpack.c.h.b16 %v1483
    %v1576 = vunpack.c.l.b16 %v1484
    %v1577 = vunpack.c.h.b16 %v1484
    %v1578 = vunpack.c.l.b16 %v1485
    %v1579 = vunpack.c.h.b16 %v1485
    %v1580 = vunpack.c.l.b16 %v1486
    %v1581 = vunpack.c.h.b16 %v1486
    %v1582 = vunpack.c.l.b16 %v1487
    %v1583 = vunpack.c.h.b16 %v1487
    %v1584 = vpack.c.b16 %v1524, %v1520
    %v1585 = vpack.c.b16 %v1525, %v1521
    %v1586 = vpack.c.b16 %v1526, %v1522
    %v1587 = vpack.c.b16 %v1527, %v1523
    %v1588 = vpack.c.b16 %v1532, %v1528
    %v1589 = vpack.c.b16 %v1533, %v1529
    %v1590 = vpack.c.b16 %v1534, %v1530
    %v1591 = vpack.c.b16 %v1535, %v1531
    %v1592 = vpack.c.b16 %v1540, %v1536
    %v1593 = vpack.c.b16 %v1541, %v1537
    %v1594 = vpack.c.b16 %v1542, %v1538
    %v1595 = vpack.c.b16 %v1543, %v1539
    %v1596 = vpack.c.b16 %v1548, %v1544
    %v1597 = vpack.c.b16 %v1549, %v1545
    %v1598 = vpack.c.b16 %v1550, %v1546
    %v1599 = vpack.c.b16 %v1551, %v1547
    %v1600 = vpack.c.b16 %v1556, %v1552
    %v1601 = vpack.c.b16 %v1557, %v1553
    %v1602 = vpack.c.b16 %v1558, %v1554
    %v1603 = vpack.c.b16 %v1559, %v1555
    %v1604 = vpack.c.b16 %v1564, %v1560
    %v1605 = vpack.c.b16 %v1565, %v1561
    %v1606 = vpack.c.b16 %v1566, %v1562
    %v1607 = vpack.c.b16 %v1567, %v1563
    %v1608 = vpack.c.b16 %v1572, %v1568
    %v1609 = vpack.c.b16 %v1573, %v1569
    %v1610 = vpack.c.b16 %v1574, %v1570
    %v1611 = vpack.c.b16 %v1575, %v1571
    %v1612 = vpack.c.b16 %v1580, %v1576
    %v1613 = vpack.c.b16 %v1581, %v1577
    %v1614 = vpack.c.b16 %v1582, %v1578
    %v1615 = vpack.c.b16 %v1583, %v1579
    %1648 = vmatprep.subr.bf16.mxu0 %v1585
    %1649 = vmatpush1.bf16.msra.mxu0 %v1584
    %1650 = vmatprep.subr.bf16.mxu0 %v1589
    %1651 = vmatpush1.bf16.msra.mxu0 %v1588
    %1652 = vmatprep.subr.bf16.mxu0 %v1593
    %1653 = vmatpush1.bf16.msra.mxu0 %v1592
    %1654 = vmatprep.subr.bf16.mxu0 %v1597
    %1655 = vmatpush1.bf16.msra.mxu0 %v1596
    %1656 = vmatprep.subr.bf16.mxu0 %v1601
    %1657 = vmatpush1.bf16.msra.mxu0 %v1600
    %1658 = vmatprep.subr.bf16.mxu0 %v1605
    %1659 = vmatpush1.bf16.msra.mxu0 %v1604
    %1660 = vmatprep.subr.bf16.mxu0 %v1609
    %1661 = vmatpush1.bf16.msra.mxu0 %v1608
    %1662 = vmatprep.subr.bf16.mxu0 %v1613
    %1663 = vmatpush1.bf16.msra.mxu0 %v1612
    %1664 = vmatprep.subr.bf16.mxu0 0
    %1665 = vmatpush1.bf16.msra.mxu0 0
    %1666 = vmatprep.subr.bf16.mxu0 0
    %1667 = vmatpush1.bf16.msra.mxu0 0
    %1668 = vmatprep.subr.bf16.mxu0 0
    %1669 = vmatpush1.bf16.msra.mxu0 0
    %1670 = vmatprep.subr.bf16.mxu0 0
    %1671 = vmatpush1.bf16.msra.mxu0 0
    %1672 = vmatprep.subr.bf16.mxu0 0
    %1673 = vmatpush1.bf16.msra.mxu0 0
    %1674 = vmatprep.subr.bf16.mxu0 0
    %1675 = vmatpush1.bf16.msra.mxu0 0
    %1676 = vmatprep.subr.bf16.mxu0 0
    %1677 = vmatpush1.bf16.msra.mxu0 0
    %1678 = vmatprep.subr.bf16.mxu0 0
    %1679 = vmatpush1.bf16.msra.mxu0 0
    %1680 = vmatprep.mubr.bf16.mxu0 0
    %1681 = vmatmul.mubr.bf16.gmra.mrb[0].mxu0 %v1455
    %v1682 = vpop.f32.mrb[0].mxu0
    %v1683 = vadd.f32 0.0, %v1682
    %v1684 = vpop.f32.mrb[0].mxu0
    %v1685 = vadd.f32 0.0, %v1684
    %v1686 = vpop.f32.mrb[0].mxu0
    %v1687 = vpop.f32.mrb[0].mxu0
    %1688 = vdwg.mxu0
    %1689 = vmatprep.subr.bf16.mxu0 %v1587
    %1690 = vmatpush1.bf16.msra.mxu0 %v1586
    %1691 = vmatprep.subr.bf16.mxu0 %v1591
    %1692 = vmatpush1.bf16.msra.mxu0 %v1590
    %1693 = vmatprep.subr.bf16.mxu0 %v1595
    %1694 = vmatpush1.bf16.msra.mxu0 %v1594
    %1695 = vmatprep.subr.bf16.mxu0 %v1599
    %1696 = vmatpush1.bf16.msra.mxu0 %v1598
    %1697 = vmatprep.subr.bf16.mxu0 %v1603
    %1698 = vmatpush1.bf16.msra.mxu0 %v1602
    %1699 = vmatprep.subr.bf16.mxu0 %v1607
    %1700 = vmatpush1.bf16.msra.mxu0 %v1606
    %1701 = vmatprep.subr.bf16.mxu0 %v1611
    %1702 = vmatpush1.bf16.msra.mxu0 %v1610
    %1703 = vmatprep.subr.bf16.mxu0 %v1615
    %1704 = vmatpush1.bf16.msra.mxu0 %v1614
    %1705 = vmatprep.subr.bf16.mxu0 0
    %1706 = vmatpush1.bf16.msra.mxu0 0
    %1707 = vmatprep.subr.bf16.mxu0 0
    %1708 = vmatpush1.bf16.msra.mxu0 0
    %1709 = vmatprep.subr.bf16.mxu0 0
    %1710 = vmatpush1.bf16.msra.mxu0 0
    %1711 = vmatprep.subr.bf16.mxu0 0
    %1712 = vmatpush1.bf16.msra.mxu0 0
    %1713 = vmatprep.subr.bf16.mxu0 0
    %1714 = vmatpush1.bf16.msra.mxu0 0
    %1715 = vmatprep.subr.bf16.mxu0 0
    %1716 = vmatpush1.bf16.msra.mxu0 0
    %1717 = vmatprep.subr.bf16.mxu0 0
    %1718 = vmatpush1.bf16.msra.mxu0 0
    %1719 = vmatprep.subr.bf16.mxu0 0
    %1720 = vmatpush1.bf16.msra.mxu0 0
    %1721 = vmatprep.mubr.bf16.mxu0 0
    %1722 = vmatmul.mubr.bf16.gmra.mrb[0].mxu0 %v1455
    %v1723 = vpop.f32.mrb[0].mxu0
    %v1724 = vadd.f32 0.0, %v1723
    %v1725 = vpop.f32.mrb[0].mxu0
    %v1726 = vadd.f32 0.0, %v1725
    %v1727 = vpop.f32.mrb[0].mxu0
    %v1728 = vpop.f32.mrb[0].mxu0
    %1729 = vdwg.mxu0
    %v1730 = vpack.c.bf16 %v1380, %v1380
    %v1731 = vld [vmem:[%s490] sm:$0xff]
    %v1732 = vld [vmem:[%s490 + $0x8] sm:$0xff]
    %v1733 = vld [vmem:[%s490 + $0x10] sm:$0xff]
    %v1734 = vld [vmem:[%s490 + $0x18] sm:$0xff]
    %v1735 = vld [vmem:[%s490 + $0x20] sm:$0xff]
    %v1736 = vld [vmem:[%s490 + $0x28] sm:$0xff]
    %v1737 = vld [vmem:[%s490 + $0x30] sm:$0xff]
    %v1738 = vld [vmem:[%s490 + $0x38] sm:$0xff]
    %v1739 = vld [vmem:[%s490 + $0x40] sm:$0xff]
    %v1740 = vld [vmem:[%s490 + $0x48] sm:$0xff]
    %v1741 = vld [vmem:[%s490 + $0x50] sm:$0xff]
    %v1742 = vld [vmem:[%s490 + $0x58] sm:$0xff]
    %v1743 = vld [vmem:[%s490 + $0x60] sm:$0xff]
    %v1744 = vld [vmem:[%s490 + $0x68] sm:$0xff]
    %v1745 = vld [vmem:[%s490 + $0x70] sm:$0xff]
    %v1746 = vld [vmem:[%s490 + $0x78] sm:$0xff]
    %v1747 = vld [vmem:[%s490 + $0x80] sm:$0xff]
    %v1748 = vld [vmem:[%s490 + $0x88] sm:$0xff]
    %v1749 = vld [vmem:[%s490 + $0x90] sm:$0xff]
    %v1750 = vld [vmem:[%s490 + $0x98] sm:$0xff]
    %v1751 = vld [vmem:[%s490 + $0xa0] sm:$0xff]
    %v1752 = vld [vmem:[%s490 + $0xa8] sm:$0xff]
    %v1753 = vld [vmem:[%s490 + $0xb0] sm:$0xff]
    %v1754 = vld [vmem:[%s490 + $0xb8] sm:$0xff]
    %v1755 = vld [vmem:[%s490 + $0xc0] sm:$0xff]
    %v1756 = vld [vmem:[%s490 + $0xc8] sm:$0xff]
    %v1757 = vld [vmem:[%s490 + $0xd0] sm:$0xff]
    %v1758 = vld [vmem:[%s490 + $0xd8] sm:$0xff]
    %v1759 = vld [vmem:[%s490 + $0xe0] sm:$0xff]
    %v1760 = vld [vmem:[%s490 + $0xe8] sm:$0xff]
    %v1761 = vld [vmem:[%s490 + $0xf0] sm:$0xff]
    %v1762 = vld [vmem:[%s490 + $0xf8] sm:$0xff]
    %v1795 = vunpack.c.l.b16 %v1731
    %v1796 = vunpack.c.h.b16 %v1731
    %v1797 = vunpack.c.l.b16 %v1732
    %v1798 = vunpack.c.h.b16 %v1732
    %v1799 = vunpack.c.l.b16 %v1733
    %v1800 = vunpack.c.h.b16 %v1733
    %v1801 = vunpack.c.l.b16 %v1734
    %v1802 = vunpack.c.h.b16 %v1734
    %v1803 = vunpack.c.l.b16 %v1735
    %v1804 = vunpack.c.h.b16 %v1735
    %v1805 = vunpack.c.l.b16 %v1736
    %v1806 = vunpack.c.h.b16 %v1736
    %v1807 = vunpack.c.l.b16 %v1737
    %v1808 = vunpack.c.h.b16 %v1737
    %v1809 = vunpack.c.l.b16 %v1738
    %v1810 = vunpack.c.h.b16 %v1738
    %v1811 = vunpack.c.l.b16 %v1739
    %v1812 = vunpack.c.h.b16 %v1739
    %v1813 = vunpack.c.l.b16 %v1740
    %v1814 = vunpack.c.h.b16 %v1740
    %v1815 = vunpack.c.l.b16 %v1741
    %v1816 = vunpack.c.h.b16 %v1741
    %v1817 = vunpack.c.l.b16 %v1742
    %v1818 = vunpack.c.h.b16 %v1742
    %v1819 = vunpack.c.l.b16 %v1743
    %v1820 = vunpack.c.h.b16 %v1743
    %v1821 = vunpack.c.l.b16 %v1744
    %v1822 = vunpack.c.h.b16 %v1744
    %v1823 = vunpack.c.l.b16 %v1745
    %v1824 = vunpack.c.h.b16 %v1745
    %v1825 = vunpack.c.l.b16 %v1746
    %v1826 = vunpack.c.h.b16 %v1746
    %v1827 = vunpack.c.l.b16 %v1747
    %v1828 = vunpack.c.h.b16 %v1747
    %v1829 = vunpack.c.l.b16 %v1748
    %v1830 = vunpack.c.h.b16 %v1748
    %v1831 = vunpack.c.l.b16 %v1749
    %v1832 = vunpack.c.h.b16 %v1749
    %v1833 = vunpack.c.l.b16 %v1750
    %v1834 = vunpack.c.h.b16 %v1750
    %v1835 = vunpack.c.l.b16 %v1751
    %v1836 = vunpack.c.h.b16 %v1751
    %v1837 = vunpack.c.l.b16 %v1752
    %v1838 = vunpack.c.h.b16 %v1752
    %v1839 = vunpack.c.l.b16 %v1753
    %v1840 = vunpack.c.h.b16 %v1753
    %v1841 = vunpack.c.l.b16 %v1754
    %v1842 = vunpack.c.h.b16 %v1754
    %v1843 = vunpack.c.l.b16 %v1755
    %v1844 = vunpack.c.h.b16 %v1755
    %v1845 = vunpack.c.l.b16 %v1756
    %v1846 = vunpack.c.h.b16 %v1756
    %v1847 = vunpack.c.l.b16 %v1757
    %v1848 = vunpack.c.h.b16 %v1757
    %v1849 = vunpack.c.l.b16 %v1758
    %v1850 = vunpack.c.h.b16 %v1758
    %v1851 = vunpack.c.l.b16 %v1759
    %v1852 = vunpack.c.h.b16 %v1759
    %v1853 = vunpack.c.l.b16 %v1760
    %v1854 = vunpack.c.h.b16 %v1760
    %v1855 = vunpack.c.l.b16 %v1761
    %v1856 = vunpack.c.h.b16 %v1761
    %v1857 = vunpack.c.l.b16 %v1762
    %v1858 = vunpack.c.h.b16 %v1762
    %v1859 = vpack.c.b16 %v1799, %v1795
    %v1860 = vpack.c.b16 %v1800, %v1796
    %v1861 = vpack.c.b16 %v1801, %v1797
    %v1862 = vpack.c.b16 %v1802, %v1798
    %v1863 = vpack.c.b16 %v1807, %v1803
    %v1864 = vpack.c.b16 %v1808, %v1804
    %v1865 = vpack.c.b16 %v1809, %v1805
    %v1866 = vpack.c.b16 %v1810, %v1806
    %v1867 = vpack.c.b16 %v1815, %v1811
    %v1868 = vpack.c.b16 %v1816, %v1812
    %v1869 = vpack.c.b16 %v1817, %v1813
    %v1870 = vpack.c.b16 %v1818, %v1814
    %v1871 = vpack.c.b16 %v1823, %v1819
    %v1872 = vpack.c.b16 %v1824, %v1820
    %v1873 = vpack.c.b16 %v1825, %v1821
    %v1874 = vpack.c.b16 %v1826, %v1822
    %v1875 = vpack.c.b16 %v1831, %v1827
    %v1876 = vpack.c.b16 %v1832, %v1828
    %v1877 = vpack.c.b16 %v1833, %v1829
    %v1878 = vpack.c.b16 %v1834, %v1830
    %v1879 = vpack.c.b16 %v1839, %v1835
    %v1880 = vpack.c.b16 %v1840, %v1836
    %v1881 = vpack.c.b16 %v1841, %v1837
    %v1882 = vpack.c.b16 %v1842, %v1838
    %v1883 = vpack.c.b16 %v1847, %v1843
    %v1884 = vpack.c.b16 %v1848, %v1844
    %v1885 = vpack.c.b16 %v1849, %v1845
    %v1886 = vpack.c.b16 %v1850, %v1846
    %v1887 = vpack.c.b16 %v1855, %v1851
    %v1888 = vpack.c.b16 %v1856, %v1852
    %v1889 = vpack.c.b16 %v1857, %v1853
    %v1890 = vpack.c.b16 %v1858, %v1854
    %1923 = vmatprep.subr.bf16.mxu0 %v1860
    %1924 = vmatpush1.bf16.msra.mxu0 %v1859
    %1925 = vmatprep.subr.bf16.mxu0 %v1864
    %1926 = vmatpush1.bf16.msra.mxu0 %v1863
    %1927 = vmatprep.subr.bf16.mxu0 %v1868
    %1928 = vmatpush1.bf16.msra.mxu0 %v1867
    %1929 = vmatprep.subr.bf16.mxu0 %v1872
    %1930 = vmatpush1.bf16.msra.mxu0 %v1871
    %1931 = vmatprep.subr.bf16.mxu0 %v1876
    %1932 = vmatpush1.bf16.msra.mxu0 %v1875
    %1933 = vmatprep.subr.bf16.mxu0 %v1880
    %1934 = vmatpush1.bf16.msra.mxu0 %v1879
    %1935 = vmatprep.subr.bf16.mxu0 %v1884
    %1936 = vmatpush1.bf16.msra.mxu0 %v1883
    %1937 = vmatprep.subr.bf16.mxu0 %v1888
    %1938 = vmatpush1.bf16.msra.mxu0 %v1887
    %1939 = vmatprep.subr.bf16.mxu0 0
    %1940 = vmatpush1.bf16.msra.mxu0 0
    %1941 = vmatprep.subr.bf16.mxu0 0
    %1942 = vmatpush1.bf16.msra.mxu0 0
    %1943 = vmatprep.subr.bf16.mxu0 0
    %1944 = vmatpush1.bf16.msra.mxu0 0
    %1945 = vmatprep.subr.bf16.mxu0 0
    %1946 = vmatpush1.bf16.msra.mxu0 0
    %1947 = vmatprep.subr.bf16.mxu0 0
    %1948 = vmatpush1.bf16.msra.mxu0 0
    %1949 = vmatprep.subr.bf16.mxu0 0
    %1950 = vmatpush1.bf16.msra.mxu0 0
    %1951 = vmatprep.subr.bf16.mxu0 0
    %1952 = vmatpush1.bf16.msra.mxu0 0
    %1953 = vmatprep.subr.bf16.mxu0 0
    %1954 = vmatpush1.bf16.msra.mxu0 0
    %1955 = vmatprep.mubr.bf16.mxu0 0
    %1956 = vmatmul.mubr.bf16.gmra.mrb[0].mxu0 %v1730
    %v1957 = vpop.f32.mrb[0].mxu0
    %v1958 = vadd.f32 0.0, %v1957
    %v1959 = vpop.f32.mrb[0].mxu0
    %v1960 = vadd.f32 0.0, %v1959
    %v1961 = vpop.f32.mrb[0].mxu0
    %v1962 = vpop.f32.mrb[0].mxu0
    %1963 = vdwg.mxu0
    %1964 = vmatprep.subr.bf16.mxu0 %v1862
    %1965 = vmatpush1.bf16.msra.mxu0 %v1861
    %1966 = vmatprep.subr.bf16.mxu0 %v1866
    %1967 = vmatpush1.bf16.msra.mxu0 %v1865
    %1968 = vmatprep.subr.bf16.mxu0 %v1870
    %1969 = vmatpush1.bf16.msra.mxu0 %v1869
    %1970 = vmatprep.subr.bf16.mxu0 %v1874
    %1971 = vmatpush1.bf16.msra.mxu0 %v1873
    %1972 = vmatprep.subr.bf16.mxu0 %v1878
    %1973 = vmatpush1.bf16.msra.mxu0 %v1877
    %1974 = vmatprep.subr.bf16.mxu0 %v1882
    %1975 = vmatpush1.bf16.msra.mxu0 %v1881
    %1976 = vmatprep.subr.bf16.mxu0 %v1886
    %1977 = vmatpush1.bf16.msra.mxu0 %v1885
    %1978 = vmatprep.subr.bf16.mxu0 %v1890
    %1979 = vmatpush1.bf16.msra.mxu0 %v1889
    %1980 = vmatprep.subr.bf16.mxu0 0
    %1981 = vmatpush1.bf16.msra.mxu0 0
    %1982 = vmatprep.subr.bf16.mxu0 0
    %1983 = vmatpush1.bf16.msra.mxu0 0
    %1984 = vmatprep.subr.bf16.mxu0 0
    %1985 = vmatpush1.bf16.msra.mxu0 0
    %1986 = vmatprep.subr.bf16.mxu0 0
    %1987 = vmatpush1.bf16.msra.mxu0 0
    %1988 = vmatprep.subr.bf16.mxu0 0
    %1989 = vmatpush1.bf16.msra.mxu0 0
    %1990 = vmatprep.subr.bf16.mxu0 0
    %1991 = vmatpush1.bf16.msra.mxu0 0
    %1992 = vmatprep.subr.bf16.mxu0 0
    %1993 = vmatpush1.bf16.msra.mxu0 0
    %1994 = vmatprep.subr.bf16.mxu0 0
    %1995 = vmatpush1.bf16.msra.mxu0 0
    %1996 = vmatprep.mubr.bf16.mxu0 0
    %1997 = vmatmul.mubr.bf16.gmra.mrb[0].mxu0 %v1730
    %v1998 = vpop.f32.mrb[0].mxu0
    %v1999 = vadd.f32 0.0, %v1998
    %v2000 = vpop.f32.mrb[0].mxu0
    %v2001 = vadd.f32 0.0, %v2000
    %v2002 = vpop.f32.mrb[0].mxu0
    %v2003 = vpop.f32.mrb[0].mxu0
    %2004 = vdwg.mxu0
    %v2037 = vunpack.c.l.b16 %v1389
    %v2038 = vunpack.c.h.b16 %v1389
    %v2039 = vunpack.c.l.b16 %v1390
    %v2040 = vunpack.c.h.b16 %v1390
    %v2041 = vunpack.c.l.b16 %v1391
    %v2042 = vunpack.c.h.b16 %v1391
    %v2043 = vunpack.c.l.b16 %v1392
    %v2044 = vunpack.c.h.b16 %v1392
    %v2045 = vunpack.c.l.b16 %v1393
    %v2046 = vunpack.c.h.b16 %v1393
    %v2047 = vunpack.c.l.b16 %v1394
    %v2048 = vunpack.c.h.b16 %v1394
    %v2049 = vunpack.c.l.b16 %v1395
    %v2050 = vunpack.c.h.b16 %v1395
    %v2051 = vunpack.c.l.b16 %v1396
    %v2052 = vunpack.c.h.b16 %v1396
    %v2053 = vunpack.c.l.b16 %v1397
    %v2054 = vunpack.c.h.b16 %v1397
    %v2055 = vunpack.c.l.b16 %v1398
    %v2056 = vunpack.c.h.b16 %v1398
    %v2057 = vunpack.c.l.b16 %v1399
    %v2058 = vunpack.c.h.b16 %v1399
    %v2059 = vunpack.c.l.b16 %v1400
    %v2060 = vunpack.c.h.b16 %v1400
    %v2061 = vunpack.c.l.b16 %v1401
    %v2062 = vunpack.c.h.b16 %v1401
    %v2063 = vunpack.c.l.b16 %v1402
    %v2064 = vunpack.c.h.b16 %v1402
    %v2065 = vunpack.c.l.b16 %v1403
    %v2066 = vunpack.c.h.b16 %v1403
    %v2067 = vunpack.c.l.b16 %v1404
    %v2068 = vunpack.c.h.b16 %v1404
    %v2069 = vunpack.c.l.b16 %v1405
    %v2070 = vunpack.c.h.b16 %v1405
    %v2071 = vunpack.c.l.b16 %v1406
    %v2072 = vunpack.c.h.b16 %v1406
    %v2073 = vunpack.c.l.b16 %v1407
    %v2074 = vunpack.c.h.b16 %v1407
    %v2075 = vunpack.c.l.b16 %v1408
    %v2076 = vunpack.c.h.b16 %v1408
    %v2077 = vunpack.c.l.b16 %v1409
    %v2078 = vunpack.c.h.b16 %v1409
    %v2079 = vunpack.c.l.b16 %v1410
    %v2080 = vunpack.c.h.b16 %v1410
    %v2081 = vunpack.c.l.b16 %v1411
    %v2082 = vunpack.c.h.b16 %v1411
    %v2083 = vunpack.c.l.b16 %v1412
    %v2084 = vunpack.c.h.b16 %v1412
    %v2085 = vunpack.c.l.b16 %v1413
    %v2086 = vunpack.c.h.b16 %v1413
    %v2087 = vunpack.c.l.b16 %v1414
    %v2088 = vunpack.c.h.b16 %v1414
    %v2089 = vunpack.c.l.b16 %v1415
    %v2090 = vunpack.c.h.b16 %v1415
    %v2091 = vunpack.c.l.b16 %v1416
    %v2092 = vunpack.c.h.b16 %v1416
    %v2093 = vunpack.c.l.b16 %v1417
    %v2094 = vunpack.c.h.b16 %v1417
    %v2095 = vunpack.c.l.b16 %v1418
    %v2096 = vunpack.c.h.b16 %v1418
    %v2097 = vunpack.c.l.b16 %v1419
    %v2098 = vunpack.c.h.b16 %v1419
    %v2099 = vunpack.c.l.b16 %v1420
    %v2100 = vunpack.c.h.b16 %v1420
    %v2101 = vpack.c.b16 %v2041, %v2037
    %v2102 = vpack.c.b16 %v2042, %v2038
    %v2103 = vpack.c.b16 %v2043, %v2039
    %v2104 = vpack.c.b16 %v2044, %v2040
    %v2105 = vpack.c.b16 %v2049, %v2045
    %v2106 = vpack.c.b16 %v2050, %v2046
    %v2107 = vpack.c.b16 %v2051, %v2047
    %v2108 = vpack.c.b16 %v2052, %v2048
    %v2109 = vpack.c.b16 %v2057, %v2053
    %v2110 = vpack.c.b16 %v2058, %v2054
    %v2111 = vpack.c.b16 %v2059, %v2055
    %v2112 = vpack.c.b16 %v2060, %v2056
    %v2113 = vpack.c.b16 %v2065, %v2061
    %v2114 = vpack.c.b16 %v2066, %v2062
    %v2115 = vpack.c.b16 %v2067, %v2063
    %v2116 = vpack.c.b16 %v2068, %v2064
    %v2117 = vpack.c.b16 %v2073, %v2069
    %v2118 = vpack.c.b16 %v2074, %v2070
    %v2119 = vpack.c.b16 %v2075, %v2071
    %v2120 = vpack.c.b16 %v2076, %v2072
    %v2121 = vpack.c.b16 %v2081, %v2077
    %v2122 = vpack.c.b16 %v2082, %v2078
    %v2123 = vpack.c.b16 %v2083, %v2079
    %v2124 = vpack.c.b16 %v2084, %v2080
    %v2125 = vpack.c.b16 %v2089, %v2085
    %v2126 = vpack.c.b16 %v2090, %v2086
    %v2127 = vpack.c.b16 %v2091, %v2087
    %v2128 = vpack.c.b16 %v2092, %v2088
    %v2129 = vpack.c.b16 %v2097, %v2093
    %v2130 = vpack.c.b16 %v2098, %v2094
    %v2131 = vpack.c.b16 %v2099, %v2095
    %v2132 = vpack.c.b16 %v2100, %v2096
    %2165 = vmatprep.subr.bf16.mxu0 %v2102
    %2166 = vmatpush1.bf16.msra.mxu0 %v2101
    %2167 = vmatprep.subr.bf16.mxu0 %v2106
    %2168 = vmatpush1.bf16.msra.mxu0 %v2105
    %2169 = vmatprep.subr.bf16.mxu0 %v2110
    %2170 = vmatpush1.bf16.msra.mxu0 %v2109
    %2171 = vmatprep.subr.bf16.mxu0 %v2114
    %2172 = vmatpush1.bf16.msra.mxu0 %v2113
    %2173 = vmatprep.subr.bf16.mxu0 %v2118
    %2174 = vmatpush1.bf16.msra.mxu0 %v2117
    %2175 = vmatprep.subr.bf16.mxu0 %v2122
    %2176 = vmatpush1.bf16.msra.mxu0 %v2121
    %2177 = vmatprep.subr.bf16.mxu0 %v2126
    %2178 = vmatpush1.bf16.msra.mxu0 %v2125
    %2179 = vmatprep.subr.bf16.mxu0 %v2130
    %2180 = vmatpush1.bf16.msra.mxu0 %v2129
    %2181 = vmatprep.subr.bf16.mxu0 0
    %2182 = vmatpush1.bf16.msra.mxu0 0
    %2183 = vmatprep.subr.bf16.mxu0 0
    %2184 = vmatpush1.bf16.msra.mxu0 0
    %2185 = vmatprep.subr.bf16.mxu0 0
    %2186 = vmatpush1.bf16.msra.mxu0 0
    %2187 = vmatprep.subr.bf16.mxu0 0
    %2188 = vmatpush1.bf16.msra.mxu0 0
    %2189 = vmatprep.subr.bf16.mxu0 0
    %2190 = vmatpush1.bf16.msra.mxu0 0
    %2191 = vmatprep.subr.bf16.mxu0 0
    %2192 = vmatpush1.bf16.msra.mxu0 0
    %2193 = vmatprep.subr.bf16.mxu0 0
    %2194 = vmatpush1.bf16.msra.mxu0 0
    %2195 = vmatprep.subr.bf16.mxu0 0
    %2196 = vmatpush1.bf16.msra.mxu0 0
    %2197 = vmatprep.mubr.bf16.mxu0 0
    %2198 = vmatmul.mubr.bf16.gmra.mrb[0].mxu0 %v1388
    %v2199 = vpop.f32.mrb[0].mxu0
    %v2200 = vadd.f32 %v1683, %v2199
    %v2201 = vpop.f32.mrb[0].mxu0
    %v2202 = vadd.f32 %v1685, %v2201
    %v2203 = vpop.f32.mrb[0].mxu0
    %v2204 = vpop.f32.mrb[0].mxu0
    %2205 = vdwg.mxu0
    %2206 = vmatprep.subr.bf16.mxu0 %v2104
    %2207 = vmatpush1.bf16.msra.mxu0 %v2103
    %2208 = vmatprep.subr.bf16.mxu0 %v2108
    %2209 = vmatpush1.bf16.msra.mxu0 %v2107
    %2210 = vmatprep.subr.bf16.mxu0 %v2112
    %2211 = vmatpush1.bf16.msra.mxu0 %v2111
    %2212 = vmatprep.subr.bf16.mxu0 %v2116
    %2213 = vmatpush1.bf16.msra.mxu0 %v2115
    %2214 = vmatprep.subr.bf16.mxu0 %v2120
    %2215 = vmatpush1.bf16.msra.mxu0 %v2119
    %2216 = vmatprep.subr.bf16.mxu0 %v2124
    %2217 = vmatpush1.bf16.msra.mxu0 %v2123
    %2218 = vmatprep.subr.bf16.mxu0 %v2128
    %2219 = vmatpush1.bf16.msra.mxu0 %v2127
    %2220 = vmatprep.subr.bf16.mxu0 %v2132
    %2221 = vmatpush1.bf16.msra.mxu0 %v2131
    %2222 = vmatprep.subr.bf16.mxu0 0
    %2223 = vmatpush1.bf16.msra.mxu0 0
    %2224 = vmatprep.subr.bf16.mxu0 0
    %2225 = vmatpush1.bf16.msra.mxu0 0
    %2226 = vmatprep.subr.bf16.mxu0 0
    %2227 = vmatpush1.bf16.msra.mxu0 0
    %2228 = vmatprep.subr.bf16.mxu0 0
    %2229 = vmatpush1.bf16.msra.mxu0 0
    %2230 = vmatprep.subr.bf16.mxu0 0
    %2231 = vmatpush1.bf16.msra.mxu0 0
    %2232 = vmatprep.subr.bf16.mxu0 0
    %2233 = vmatpush1.bf16.msra.mxu0 0
    %2234 = vmatprep.subr.bf16.mxu0 0
    %2235 = vmatpush1.bf16.msra.mxu0 0
    %2236 = vmatprep.subr.bf16.mxu0 0
    %2237 = vmatpush1.bf16.msra.mxu0 0
    %2238 = vmatprep.mubr.bf16.mxu0 0
    %2239 = vmatmul.mubr.bf16.gmra.mrb[0].mxu0 %v1388
    %v2240 = vpop.f32.mrb[0].mxu0
    %v2241 = vadd.f32 %v1724, %v2240
    %v2242 = vpop.f32.mrb[0].mxu0
    %v2243 = vadd.f32 %v1726, %v2242
    %v2244 = vpop.f32.mrb[0].mxu0
    %v2245 = vpop.f32.mrb[0].mxu0
    %2246 = vdwg.mxu0
    %v2247 = vld [vmem:[%s6] sm:$0xf]
    %v2249 = vlaneseq
    %v2250 = vshrl.u32 %v2249, 7
    %v2251 = vsub.s32 0, %v2250
    %v2252 = vrot.slane %v2247, %v2251
    %v2253 = vlaneseq
    %v2254 = vshrl.u32 %v2253, 7
    %v2255 = vsub.s32 1, %v2254
    %v2256 = vrot.slane %v2247, %v2255
    %v2257 = vlaneseq
    %v2258 = vshrl.u32 %v2257, 7
    %v2259 = vsub.s32 2, %v2258
    %v2260 = vrot.slane %v2247, %v2259
    %v2261 = vlaneseq
    %v2262 = vshrl.u32 %v2261, 7
    %v2263 = vsub.s32 3, %v2262
    %v2264 = vrot.slane %v2247, %v2263
    %v2269 = vadd.f32 %v2200, %v2252
    %v2270 = vadd.f32 %v2202, %v2256
    %v2271 = vadd.f32 %v2241, %v2260
    %v2272 = vadd.f32 %v2243, %v2264
    %v2273 = vxor.u32 %v2269, 2147483648
    %v2274 = vmul.f32 %v2273, 1.442695
    %v2275 = vpow.pop %v2274
    %v2276 = vadd.f32 %v2275, 1.0
    %v2277 = vrcp.pop %v2276
    %v2278 = vmul.f32 1.0, %v2277
    %v2279 = vxor.u32 %v2270, 2147483648
    %v2280 = vmul.f32 %v2279, 1.442695
    %v2281 = vpow.pop %v2280
    %v2282 = vadd.f32 %v2281, 1.0
    %v2283 = vrcp.pop %v2282
    %v2284 = vmul.f32 1.0, %v2283
    %v2285 = vtanh.pop %v2271
    %v2286 = vxor.u32 %v2272, 2147483648
    %v2287 = vmul.f32 %v2286, 1.442695
    %v2288 = vpow.pop %v2287
    %v2289 = vadd.f32 %v2288, 1.0
    %v2290 = vrcp.pop %v2289
    %v2291 = vmul.f32 1.0, %v2290
    %v2292 = vmul.f32 %v2284, %v1383
    %v2293 = vmul.f32 %v2278, %v2285
    %v2294 = vadd.f32 %v2292, %v2293
    %v2295 = vtanh.pop %v2294
    %v2296 = vmul.f32 %v2291, %v2295
    %v2329 = vunpack.c.l.b16 %v1423
    %v2330 = vunpack.c.h.b16 %v1423
    %v2331 = vunpack.c.l.b16 %v1424
    %v2332 = vunpack.c.h.b16 %v1424
    %v2333 = vunpack.c.l.b16 %v1425
    %v2334 = vunpack.c.h.b16 %v1425
    %v2335 = vunpack.c.l.b16 %v1426
    %v2336 = vunpack.c.h.b16 %v1426
    %v2337 = vunpack.c.l.b16 %v1427
    %v2338 = vunpack.c.h.b16 %v1427
    %v2339 = vunpack.c.l.b16 %v1428
    %v2340 = vunpack.c.h.b16 %v1428
    %v2341 = vunpack.c.l.b16 %v1429
    %v2342 = vunpack.c.h.b16 %v1429
    %v2343 = vunpack.c.l.b16 %v1430
    %v2344 = vunpack.c.h.b16 %v1430
    %v2345 = vunpack.c.l.b16 %v1431
    %v2346 = vunpack.c.h.b16 %v1431
    %v2347 = vunpack.c.l.b16 %v1432
    %v2348 = vunpack.c.h.b16 %v1432
    %v2349 = vunpack.c.l.b16 %v1433
    %v2350 = vunpack.c.h.b16 %v1433
    %v2351 = vunpack.c.l.b16 %v1434
    %v2352 = vunpack.c.h.b16 %v1434
    %v2353 = vunpack.c.l.b16 %v1435
    %v2354 = vunpack.c.h.b16 %v1435
    %v2355 = vunpack.c.l.b16 %v1436
    %v2356 = vunpack.c.h.b16 %v1436
    %v2357 = vunpack.c.l.b16 %v1437
    %v2358 = vunpack.c.h.b16 %v1437
    %v2359 = vunpack.c.l.b16 %v1438
    %v2360 = vunpack.c.h.b16 %v1438
    %v2361 = vunpack.c.l.b16 %v1439
    %v2362 = vunpack.c.h.b16 %v1439
    %v2363 = vunpack.c.l.b16 %v1440
    %v2364 = vunpack.c.h.b16 %v1440
    %v2365 = vunpack.c.l.b16 %v1441
    %v2366 = vunpack.c.h.b16 %v1441
    %v2367 = vunpack.c.l.b16 %v1442
    %v2368 = vunpack.c.h.b16 %v1442
    %v2369 = vunpack.c.l.b16 %v1443
    %v2370 = vunpack.c.h.b16 %v1443
    %v2371 = vunpack.c.l.b16 %v1444
    %v2372 = vunpack.c.h.b16 %v1444
    %v2373 = vunpack.c.l.b16 %v1445
    %v2374 = vunpack.c.h.b16 %v1445
    %v2375 = vunpack.c.l.b16 %v1446
    %v2376 = vunpack.c.h.b16 %v1446
    %v2377 = vunpack.c.l.b16 %v1447
    %v2378 = vunpack.c.h.b16 %v1447
    %v2379 = vunpack.c.l.b16 %v1448
    %v2380 = vunpack.c.h.b16 %v1448
    %v2381 = vunpack.c.l.b16 %v1449
    %v2382 = vunpack.c.h.b16 %v1449
    %v2383 = vunpack.c.l.b16 %v1450
    %v2384 = vunpack.c.h.b16 %v1450
    %v2385 = vunpack.c.l.b16 %v1451
    %v2386 = vunpack.c.h.b16 %v1451
    %v2387 = vunpack.c.l.b16 %v1452
    %v2388 = vunpack.c.h.b16 %v1452
    %v2389 = vunpack.c.l.b16 %v1453
    %v2390 = vunpack.c.h.b16 %v1453
    %v2391 = vunpack.c.l.b16 %v1454
    %v2392 = vunpack.c.h.b16 %v1454
    %v2393 = vpack.c.b16 %v2333, %v2329
    %v2394 = vpack.c.b16 %v2334, %v2330
    %v2395 = vpack.c.b16 %v2335, %v2331
    %v2396 = vpack.c.b16 %v2336, %v2332
    %v2397 = vpack.c.b16 %v2341, %v2337
    %v2398 = vpack.c.b16 %v2342, %v2338
    %v2399 = vpack.c.b16 %v2343, %v2339
    %v2400 = vpack.c.b16 %v2344, %v2340
    %v2401 = vpack.c.b16 %v2349, %v2345
    %v2402 = vpack.c.b16 %v2350, %v2346
    %v2403 = vpack.c.b16 %v2351, %v2347
    %v2404 = vpack.c.b16 %v2352, %v2348
    %v2405 = vpack.c.b16 %v2357, %v2353
    %v2406 = vpack.c.b16 %v2358, %v2354
    %v2407 = vpack.c.b16 %v2359, %v2355
    %v2408 = vpack.c.b16 %v2360, %v2356
    %v2409 = vpack.c.b16 %v2365, %v2361
    %v2410 = vpack.c.b16 %v2366, %v2362
    %v2411 = vpack.c.b16 %v2367, %v2363
    %v2412 = vpack.c.b16 %v2368, %v2364
    %v2413 = vpack.c.b16 %v2373, %v2369
    %v2414 = vpack.c.b16 %v2374, %v2370
    %v2415 = vpack.c.b16 %v2375, %v2371
    %v2416 = vpack.c.b16 %v2376, %v2372
    %v2417 = vpack.c.b16 %v2381, %v2377
    %v2418 = vpack.c.b16 %v2382, %v2378
    %v2419 = vpack.c.b16 %v2383, %v2379
    %v2420 = vpack.c.b16 %v2384, %v2380
    %v2421 = vpack.c.b16 %v2389, %v2385
    %v2422 = vpack.c.b16 %v2390, %v2386
    %v2423 = vpack.c.b16 %v2391, %v2387
    %v2424 = vpack.c.b16 %v2392, %v2388
    %2457 = vmatprep.subr.bf16.mxu0 %v2394
    %2458 = vmatpush1.bf16.msra.mxu0 %v2393
    %2459 = vmatprep.subr.bf16.mxu0 %v2398
    %2460 = vmatpush1.bf16.msra.mxu0 %v2397
    %2461 = vmatprep.subr.bf16.mxu0 %v2402
    %2462 = vmatpush1.bf16.msra.mxu0 %v2401
    %2463 = vmatprep.subr.bf16.mxu0 %v2406
    %2464 = vmatpush1.bf16.msra.mxu0 %v2405
    %2465 = vmatprep.subr.bf16.mxu0 %v2410
    %2466 = vmatpush1.bf16.msra.mxu0 %v2409
    %2467 = vmatprep.subr.bf16.mxu0 %v2414
    %2468 = vmatpush1.bf16.msra.mxu0 %v2413
    %2469 = vmatprep.subr.bf16.mxu0 %v2418
    %2470 = vmatpush1.bf16.msra.mxu0 %v2417
    %2471 = vmatprep.subr.bf16.mxu0 %v2422
    %2472 = vmatpush1.bf16.msra.mxu0 %v2421
    %2473 = vmatprep.subr.bf16.mxu0 0
    %2474 = vmatpush1.bf16.msra.mxu0 0
    %2475 = vmatprep.subr.bf16.mxu0 0
    %2476 = vmatpush1.bf16.msra.mxu0 0
    %2477 = vmatprep.subr.bf16.mxu0 0
    %2478 = vmatpush1.bf16.msra.mxu0 0
    %2479 = vmatprep.subr.bf16.mxu0 0
    %2480 = vmatpush1.bf16.msra.mxu0 0
    %2481 = vmatprep.subr.bf16.mxu0 0
    %2482 = vmatpush1.bf16.msra.mxu0 0
    %2483 = vmatprep.subr.bf16.mxu0 0
    %2484 = vmatpush1.bf16.msra.mxu0 0
    %2485 = vmatprep.subr.bf16.mxu0 0
    %2486 = vmatpush1.bf16.msra.mxu0 0
    %2487 = vmatprep.subr.bf16.mxu0 0
    %2488 = vmatpush1.bf16.msra.mxu0 0
    %2489 = vmatprep.mubr.bf16.mxu0 0
    %2490 = vmatmul.mubr.bf16.gmra.mrb[0].mxu0 %v1422
    %v2491 = vpop.f32.mrb[0].mxu0
    %v2492 = vadd.f32 %v1958, %v2491
    %v2493 = vpop.f32.mrb[0].mxu0
    %v2494 = vadd.f32 %v1960, %v2493
    %v2495 = vpop.f32.mrb[0].mxu0
    %v2496 = vpop.f32.mrb[0].mxu0
    %2497 = vdwg.mxu0
    %2498 = vmatprep.subr.bf16.mxu0 %v2396
    %2499 = vmatpush1.bf16.msra.mxu0 %v2395
    %2500 = vmatprep.subr.bf16.mxu0 %v2400
    %2501 = vmatpush1.bf16.msra.mxu0 %v2399
    %2502 = vmatprep.subr.bf16.mxu0 %v2404
    %2503 = vmatpush1.bf16.msra.mxu0 %v2403
    %2504 = vmatprep.subr.bf16.mxu0 %v2408
    %2505 = vmatpush1.bf16.msra.mxu0 %v2407
    %2506 = vmatprep.subr.bf16.mxu0 %v2412
    %2507 = vmatpush1.bf16.msra.mxu0 %v2411
    %2508 = vmatprep.subr.bf16.mxu0 %v2416
    %2509 = vmatpush1.bf16.msra.mxu0 %v2415
    %2510 = vmatprep.subr.bf16.mxu0 %v2420
    %2511 = vmatpush1.bf16.msra.mxu0 %v2419
    %2512 = vmatprep.subr.bf16.mxu0 %v2424
    %2513 = vmatpush1.bf16.msra.mxu0 %v2423
    %2514 = vmatprep.subr.bf16.mxu0 0
    %2515 = vmatpush1.bf16.msra.mxu0 0
    %2516 = vmatprep.subr.bf16.mxu0 0
    %2517 = vmatpush1.bf16.msra.mxu0 0
    %2518 = vmatprep.subr.bf16.mxu0 0
    %2519 = vmatpush1.bf16.msra.mxu0 0
    %2520 = vmatprep.subr.bf16.mxu0 0
    %2521 = vmatpush1.bf16.msra.mxu0 0
    %2522 = vmatprep.subr.bf16.mxu0 0
    %2523 = vmatpush1.bf16.msra.mxu0 0
    %2524 = vmatprep.subr.bf16.mxu0 0
    %2525 = vmatpush1.bf16.msra.mxu0 0
    %2526 = vmatprep.subr.bf16.mxu0 0
    %2527 = vmatpush1.bf16.msra.mxu0 0
    %2528 = vmatprep.subr.bf16.mxu0 0
    %2529 = vmatpush1.bf16.msra.mxu0 0
    %2530 = vmatprep.mubr.bf16.mxu0 0
    %2531 = vmatmul.mubr.bf16.gmra.mrb[0].mxu0 %v1422
    %v2532 = vpop.f32.mrb[0].mxu0
    %v2533 = vadd.f32 %v1999, %v2532
    %v2534 = vpop.f32.mrb[0].mxu0
    %v2535 = vadd.f32 %v2001, %v2534
    %v2536 = vpop.f32.mrb[0].mxu0
    %v2537 = vpop.f32.mrb[0].mxu0
    %2538 = vdwg.mxu0
    %v2539 = vld [vmem:[%s1299] sm:$0xf]
    %v2541 = vlaneseq
    %v2542 = vshrl.u32 %v2541, 7
    %v2543 = vsub.s32 0, %v2542
    %v2544 = vrot.slane %v2539, %v2543
    %v2545 = vlaneseq
    %v2546 = vshrl.u32 %v2545, 7
    %v2547 = vsub.s32 1, %v2546
    %v2548 = vrot.slane %v2539, %v2547
    %v2549 = vlaneseq
    %v2550 = vshrl.u32 %v2549, 7
    %v2551 = vsub.s32 2, %v2550
    %v2552 = vrot.slane %v2539, %v2551
    %v2553 = vlaneseq
    %v2554 = vshrl.u32 %v2553, 7
    %v2555 = vsub.s32 3, %v2554
    %v2556 = vrot.slane %v2539, %v2555
    %v2561 = vadd.f32 %v2492, %v2544
    %v2562 = vadd.f32 %v2494, %v2548
    %v2563 = vadd.f32 %v2533, %v2552
    %v2564 = vadd.f32 %v2535, %v2556
    %v2565 = vxor.u32 %v2561, 2147483648
    %v2566 = vmul.f32 %v2565, 1.442695
    %v2567 = vpow.pop %v2566
    %v2568 = vadd.f32 %v2567, 1.0
    %v2569 = vrcp.pop %v2568
    %v2570 = vmul.f32 1.0, %v2569
    %v2571 = vxor.u32 %v2562, 2147483648
    %v2572 = vmul.f32 %v2571, 1.442695
    %v2573 = vpow.pop %v2572
    %v2574 = vadd.f32 %v2573, 1.0
    %v2575 = vrcp.pop %v2574
    %v2576 = vmul.f32 1.0, %v2575
    %v2577 = vtanh.pop %v2563
    %v2578 = vxor.u32 %v2564, 2147483648
    %v2579 = vmul.f32 %v2578, 1.442695
    %v2580 = vpow.pop %v2579
    %v2581 = vadd.f32 %v2580, 1.0
    %v2582 = vrcp.pop %v2581
    %v2583 = vmul.f32 1.0, %v2582
    %v2584 = vmul.f32 %v2576, %v1386
    %v2585 = vmul.f32 %v2570, %v2577
    %v2586 = vadd.f32 %v2584, %v2585
    %v2587 = vtanh.pop %v2586
    %v2588 = vmul.f32 %v2583, %v2587
    %2590 = vset.pattern.permute.xlu0 0
    %2591 = vperm.xlu0 %2590, %v111
    %v2592 = vpop.permute.xlu0 %2591
    %v2594 = vmul.f32 %v2592, %v2296
    %2596 = vset.pattern.permute.xlu0 0
    %2597 = vperm.xlu0 %2596, %v124
    %v2598 = vpop.permute.xlu0 %2597
    %v2600 = vmul.f32 %v2598, %v2588
    %v2601 = vpack.c.bf16 %v2594, %v2594
    %s2602 = scalar_lea.vmem [#allocation11], 1
    %2603 = vst [vmem:[%s2602] sm:$0x1] %v2601
    %v2604 = vpack.c.bf16 %v2600, %v2600
    %s2605 = scalar_lea.vmem [#allocation12], 6
    %2606 = vst [vmem:[%s2605] sm:$0x1] %v2604
    %2608 = vset.pattern.permute.xlu0 0
    %2609 = vperm.xlu0 %2608, %v127
    %v2610 = vpop.permute.xlu0 %2609
    %v2612 = vmul.f32 %v2610, %v1373
    %v2613 = vadd.f32 %v2594, %v2612
    %2615 = vset.pattern.permute.xlu0 0
    %2616 = vperm.xlu0 %2615, %v140
    %v2617 = vpop.permute.xlu0 %2616
    %v2619 = vmul.f32 %v2617, %v1380
    %v2620 = vadd.f32 %v2600, %v2619
    %v2621 = vmul.f32 %v2592, %v2294
    %v2622 = vmul.f32 %v2610, %v1383
    %v2623 = vadd.f32 %v2621, %v2622
    %v2624 = vmul.f32 %v2598, %v2586
    %v2625 = vmul.f32 %v2617, %v1386
    %v2626 = vadd.f32 %v2624, %v2625
    %s2627 = scalar_lea.vmem %s0, 2
    %v2628 = vld [vmem:[%s2627] sm:$0x1]
    %v2629 = vld [vmem:[#allocation6] sm:$0xff]
    %v2630 = vld [vmem:[#allocation6 + $0x8] sm:$0xff]
    %v2631 = vld [vmem:[#allocation6 + $0x10] sm:$0xff]
    %v2632 = vld [vmem:[#allocation6 + $0x18] sm:$0xff]
    %v2633 = vld [vmem:[#allocation6 + $0x20] sm:$0xff]
    %v2634 = vld [vmem:[#allocation6 + $0x28] sm:$0xff]
    %v2635 = vld [vmem:[#allocation6 + $0x30] sm:$0xff]
    %v2636 = vld [vmem:[#allocation6 + $0x38] sm:$0xff]
    %v2637 = vld [vmem:[#allocation6 + $0x40] sm:$0xff]
    %v2638 = vld [vmem:[#allocation6 + $0x48] sm:$0xff]
    %v2639 = vld [vmem:[#allocation6 + $0x50] sm:$0xff]
    %v2640 = vld [vmem:[#allocation6 + $0x58] sm:$0xff]
    %v2641 = vld [vmem:[#allocation6 + $0x60] sm:$0xff]
    %v2642 = vld [vmem:[#allocation6 + $0x68] sm:$0xff]
    %v2643 = vld [vmem:[#allocation6 + $0x70] sm:$0xff]
    %v2644 = vld [vmem:[#allocation6 + $0x78] sm:$0xff]
    %v2645 = vld [vmem:[#allocation6 + $0x80] sm:$0xff]
    %v2646 = vld [vmem:[#allocation6 + $0x88] sm:$0xff]
    %v2647 = vld [vmem:[#allocation6 + $0x90] sm:$0xff]
    %v2648 = vld [vmem:[#allocation6 + $0x98] sm:$0xff]
    %v2649 = vld [vmem:[#allocation6 + $0xa0] sm:$0xff]
    %v2650 = vld [vmem:[#allocation6 + $0xa8] sm:$0xff]
    %v2651 = vld [vmem:[#allocation6 + $0xb0] sm:$0xff]
    %v2652 = vld [vmem:[#allocation6 + $0xb8] sm:$0xff]
    %v2653 = vld [vmem:[#allocation6 + $0xc0] sm:$0xff]
    %v2654 = vld [vmem:[#allocation6 + $0xc8] sm:$0xff]
    %v2655 = vld [vmem:[#allocation6 + $0xd0] sm:$0xff]
    %v2656 = vld [vmem:[#allocation6 + $0xd8] sm:$0xff]
    %v2657 = vld [vmem:[#allocation6 + $0xe0] sm:$0xff]
    %v2658 = vld [vmem:[#allocation6 + $0xe8] sm:$0xff]
    %v2659 = vld [vmem:[#allocation6 + $0xf0] sm:$0xff]
    %v2660 = vld [vmem:[#allocation6 + $0xf8] sm:$0xff]
    %s2661 = scalar_lea.vmem %s88, 5
    %v2662 = vld [vmem:[%s2661] sm:$0x1]
    %v2663 = vld [vmem:[%s181] sm:$0xff]
    %v2664 = vld [vmem:[%s181 + $0x8] sm:$0xff]
    %v2665 = vld [vmem:[%s181 + $0x10] sm:$0xff]
    %v2666 = vld [vmem:[%s181 + $0x18] sm:$0xff]
    %v2667 = vld [vmem:[%s181 + $0x20] sm:$0xff]
    %v2668 = vld [vmem:[%s181 + $0x28] sm:$0xff]
    %v2669 = vld [vmem:[%s181 + $0x30] sm:$0xff]
    %v2670 = vld [vmem:[%s181 + $0x38] sm:$0xff]
    %v2671 = vld [vmem:[%s181 + $0x40] sm:$0xff]
    %v2672 = vld [vmem:[%s181 + $0x48] sm:$0xff]
    %v2673 = vld [vmem:[%s181 + $0x50] sm:$0xff]
    %v2674 = vld [vmem:[%s181 + $0x58] sm:$0xff]
    %v2675 = vld [vmem:[%s181 + $0x60] sm:$0xff]
    %v2676 = vld [vmem:[%s181 + $0x68] sm:$0xff]
    %v2677 = vld [vmem:[%s181 + $0x70] sm:$0xff]
    %v2678 = vld [vmem:[%s181 + $0x78] sm:$0xff]
    %v2679 = vld [vmem:[%s181 + $0x80] sm:$0xff]
    %v2680 = vld [vmem:[%s181 + $0x88] sm:$0xff]
    %v2681 = vld [vmem:[%s181 + $0x90] sm:$0xff]
    %v2682 = vld [vmem:[%s181 + $0x98] sm:$0xff]
    %v2683 = vld [vmem:[%s181 + $0xa0] sm:$0xff]
    %v2684 = vld [vmem:[%s181 + $0xa8] sm:$0xff]
    %v2685 = vld [vmem:[%s181 + $0xb0] sm:$0xff]
    %v2686 = vld [vmem:[%s181 + $0xb8] sm:$0xff]
    %v2687 = vld [vmem:[%s181 + $0xc0] sm:$0xff]
    %v2688 = vld [vmem:[%s181 + $0xc8] sm:$0xff]
    %v2689 = vld [vmem:[%s181 + $0xd0] sm:$0xff]
    %v2690 = vld [vmem:[%s181 + $0xd8] sm:$0xff]
    %v2691 = vld [vmem:[%s181 + $0xe0] sm:$0xff]
    %v2692 = vld [vmem:[%s181 + $0xe8] sm:$0xff]
    %v2693 = vld [vmem:[%s181 + $0xf0] sm:$0xff]
    %v2694 = vld [vmem:[%s181 + $0xf8] sm:$0xff]
    %v2695 = vpack.c.bf16 %v2613, %v2613
    %v2696 = vld [vmem:[#allocation9] sm:$0xff]
    %v2697 = vld [vmem:[#allocation9 + $0x8] sm:$0xff]
    %v2698 = vld [vmem:[#allocation9 + $0x10] sm:$0xff]
    %v2699 = vld [vmem:[#allocation9 + $0x18] sm:$0xff]
    %v2700 = vld [vmem:[#allocation9 + $0x20] sm:$0xff]
    %v2701 = vld [vmem:[#allocation9 + $0x28] sm:$0xff]
    %v2702 = vld [vmem:[#allocation9 + $0x30] sm:$0xff]
    %v2703 = vld [vmem:[#allocation9 + $0x38] sm:$0xff]
    %v2704 = vld [vmem:[#allocation9 + $0x40] sm:$0xff]
    %v2705 = vld [vmem:[#allocation9 + $0x48] sm:$0xff]
    %v2706 = vld [vmem:[#allocation9 + $0x50] sm:$0xff]
    %v2707 = vld [vmem:[#allocation9 + $0x58] sm:$0xff]
    %v2708 = vld [vmem:[#allocation9 + $0x60] sm:$0xff]
    %v2709 = vld [vmem:[#allocation9 + $0x68] sm:$0xff]
    %v2710 = vld [vmem:[#allocation9 + $0x70] sm:$0xff]
    %v2711 = vld [vmem:[#allocation9 + $0x78] sm:$0xff]
    %v2712 = vld [vmem:[#allocation9 + $0x80] sm:$0xff]
    %v2713 = vld [vmem:[#allocation9 + $0x88] sm:$0xff]
    %v2714 = vld [vmem:[#allocation9 + $0x90] sm:$0xff]
    %v2715 = vld [vmem:[#allocation9 + $0x98] sm:$0xff]
    %v2716 = vld [vmem:[#allocation9 + $0xa0] sm:$0xff]
    %v2717 = vld [vmem:[#allocation9 + $0xa8] sm:$0xff]
    %v2718 = vld [vmem:[#allocation9 + $0xb0] sm:$0xff]
    %v2719 = vld [vmem:[#allocation9 + $0xb8] sm:$0xff]
    %v2720 = vld [vmem:[#allocation9 + $0xc0] sm:$0xff]
    %v2721 = vld [vmem:[#allocation9 + $0xc8] sm:$0xff]
    %v2722 = vld [vmem:[#allocation9 + $0xd0] sm:$0xff]
    %v2723 = vld [vmem:[#allocation9 + $0xd8] sm:$0xff]
    %v2724 = vld [vmem:[#allocation9 + $0xe0] sm:$0xff]
    %v2725 = vld [vmem:[#allocation9 + $0xe8] sm:$0xff]
    %v2726 = vld [vmem:[#allocation9 + $0xf0] sm:$0xff]
    %v2727 = vld [vmem:[#allocation9 + $0xf8] sm:$0xff]
    %v2760 = vunpack.c.l.b16 %v2696
    %v2761 = vunpack.c.h.b16 %v2696
    %v2762 = vunpack.c.l.b16 %v2697
    %v2763 = vunpack.c.h.b16 %v2697
    %v2764 = vunpack.c.l.b16 %v2698
    %v2765 = vunpack.c.h.b16 %v2698
    %v2766 = vunpack.c.l.b16 %v2699
    %v2767 = vunpack.c.h.b16 %v2699
    %v2768 = vunpack.c.l.b16 %v2700
    %v2769 = vunpack.c.h.b16 %v2700
    %v2770 = vunpack.c.l.b16 %v2701
    %v2771 = vunpack.c.h.b16 %v2701
    %v2772 = vunpack.c.l.b16 %v2702
    %v2773 = vunpack.c.h.b16 %v2702
    %v2774 = vunpack.c.l.b16 %v2703
    %v2775 = vunpack.c.h.b16 %v2703
    %v2776 = vunpack.c.l.b16 %v2704
    %v2777 = vunpack.c.h.b16 %v2704
    %v2778 = vunpack.c.l.b16 %v2705
    %v2779 = vunpack.c.h.b16 %v2705
    %v2780 = vunpack.c.l.b16 %v2706
    %v2781 = vunpack.c.h.b16 %v2706
    %v2782 = vunpack.c.l.b16 %v2707
    %v2783 = vunpack.c.h.b16 %v2707
    %v2784 = vunpack.c.l.b16 %v2708
    %v2785 = vunpack.c.h.b16 %v2708
    %v2786 = vunpack.c.l.b16 %v2709
    %v2787 = vunpack.c.h.b16 %v2709
    %v2788 = vunpack.c.l.b16 %v2710
    %v2789 = vunpack.c.h.b16 %v2710
    %v2790 = vunpack.c.l.b16 %v2711
    %v2791 = vunpack.c.h.b16 %v2711
    %v2792 = vunpack.c.l.b16 %v2712
    %v2793 = vunpack.c.h.b16 %v2712
    %v2794 = vunpack.c.l.b16 %v2713
    %v2795 = vunpack.c.h.b16 %v2713
    %v2796 = vunpack.c.l.b16 %v2714
    %v2797 = vunpack.c.h.b16 %v2714
    %v2798 = vunpack.c.l.b16 %v2715
    %v2799 = vunpack.c.h.b16 %v2715
    %v2800 = vunpack.c.l.b16 %v2716
    %v2801 = vunpack.c.h.b16 %v2716
    %v2802 = vunpack.c.l.b16 %v2717
    %v2803 = vunpack.c.h.b16 %v2717
    %v2804 = vunpack.c.l.b16 %v2718
    %v2805 = vunpack.c.h.b16 %v2718
    %v2806 = vunpack.c.l.b16 %v2719
    %v2807 = vunpack.c.h.b16 %v2719
    %v2808 = vunpack.c.l.b16 %v2720
    %v2809 = vunpack.c.h.b16 %v2720
    %v2810 = vunpack.c.l.b16 %v2721
    %v2811 = vunpack.c.h.b16 %v2721
    %v2812 = vunpack.c.l.b16 %v2722
    %v2813 = vunpack.c.h.b16 %v2722
    %v2814 = vunpack.c.l.b16 %v2723
    %v2815 = vunpack.c.h.b16 %v2723
    %v2816 = vunpack.c.l.b16 %v2724
    %v2817 = vunpack.c.h.b16 %v2724
    %v2818 = vunpack.c.l.b16 %v2725
    %v2819 = vunpack.c.h.b16 %v2725
    %v2820 = vunpack.c.l.b16 %v2726
    %v2821 = vunpack.c.h.b16 %v2726
    %v2822 = vunpack.c.l.b16 %v2727
    %v2823 = vunpack.c.h.b16 %v2727
    %v2824 = vpack.c.b16 %v2764, %v2760
    %v2825 = vpack.c.b16 %v2765, %v2761
    %v2826 = vpack.c.b16 %v2766, %v2762
    %v2827 = vpack.c.b16 %v2767, %v2763
    %v2828 = vpack.c.b16 %v2772, %v2768
    %v2829 = vpack.c.b16 %v2773, %v2769
    %v2830 = vpack.c.b16 %v2774, %v2770
    %v2831 = vpack.c.b16 %v2775, %v2771
    %v2832 = vpack.c.b16 %v2780, %v2776
    %v2833 = vpack.c.b16 %v2781, %v2777
    %v2834 = vpack.c.b16 %v2782, %v2778
    %v2835 = vpack.c.b16 %v2783, %v2779
    %v2836 = vpack.c.b16 %v2788, %v2784
    %v2837 = vpack.c.b16 %v2789, %v2785
    %v2838 = vpack.c.b16 %v2790, %v2786
    %v2839 = vpack.c.b16 %v2791, %v2787
    %v2840 = vpack.c.b16 %v2796, %v2792
    %v2841 = vpack.c.b16 %v2797, %v2793
    %v2842 = vpack.c.b16 %v2798, %v2794
    %v2843 = vpack.c.b16 %v2799, %v2795
    %v2844 = vpack.c.b16 %v2804, %v2800
    %v2845 = vpack.c.b16 %v2805, %v2801
    %v2846 = vpack.c.b16 %v2806, %v2802
    %v2847 = vpack.c.b16 %v2807, %v2803
    %v2848 = vpack.c.b16 %v2812, %v2808
    %v2849 = vpack.c.b16 %v2813, %v2809
    %v2850 = vpack.c.b16 %v2814, %v2810
    %v2851 = vpack.c.b16 %v2815, %v2811
    %v2852 = vpack.c.b16 %v2820, %v2816
    %v2853 = vpack.c.b16 %v2821, %v2817
    %v2854 = vpack.c.b16 %v2822, %v2818
    %v2855 = vpack.c.b16 %v2823, %v2819
    %2888 = vmatprep.subr.bf16.mxu0 %v2825
    %2889 = vmatpush1.bf16.msra.mxu0 %v2824
    %2890 = vmatprep.subr.bf16.mxu0 %v2829
    %2891 = vmatpush1.bf16.msra.mxu0 %v2828
    %2892 = vmatprep.subr.bf16.mxu0 %v2833
    %2893 = vmatpush1.bf16.msra.mxu0 %v2832
    %2894 = vmatprep.subr.bf16.mxu0 %v2837
    %2895 = vmatpush1.bf16.msra.mxu0 %v2836
    %2896 = vmatprep.subr.bf16.mxu0 %v2841
    %2897 = vmatpush1.bf16.msra.mxu0 %v2840
    %2898 = vmatprep.subr.bf16.mxu0 %v2845
    %2899 = vmatpush1.bf16.msra.mxu0 %v2844
    %2900 = vmatprep.subr.bf16.mxu0 %v2849
    %2901 = vmatpush1.bf16.msra.mxu0 %v2848
    %2902 = vmatprep.subr.bf16.mxu0 %v2853
    %2903 = vmatpush1.bf16.msra.mxu0 %v2852
    %2904 = vmatprep.subr.bf16.mxu0 0
    %2905 = vmatpush1.bf16.msra.mxu0 0
    %2906 = vmatprep.subr.bf16.mxu0 0
    %2907 = vmatpush1.bf16.msra.mxu0 0
    %2908 = vmatprep.subr.bf16.mxu0 0
    %2909 = vmatpush1.bf16.msra.mxu0 0
    %2910 = vmatprep.subr.bf16.mxu0 0
    %2911 = vmatpush1.bf16.msra.mxu0 0
    %2912 = vmatprep.subr.bf16.mxu0 0
    %2913 = vmatpush1.bf16.msra.mxu0 0
    %2914 = vmatprep.subr.bf16.mxu0 0
    %2915 = vmatpush1.bf16.msra.mxu0 0
    %2916 = vmatprep.subr.bf16.mxu0 0
    %2917 = vmatpush1.bf16.msra.mxu0 0
    %2918 = vmatprep.subr.bf16.mxu0 0
    %2919 = vmatpush1.bf16.msra.mxu0 0
    %2920 = vmatprep.mubr.bf16.mxu0 0
    %2921 = vmatmul.mubr.bf16.gmra.mrb[0].mxu0 %v2695
    %v2922 = vpop.f32.mrb[0].mxu0
    %v2923 = vadd.f32 0.0, %v2922
    %v2924 = vpop.f32.mrb[0].mxu0
    %v2925 = vadd.f32 0.0, %v2924
    %v2926 = vpop.f32.mrb[0].mxu0
    %v2927 = vpop.f32.mrb[0].mxu0
    %2928 = vdwg.mxu0
    %2929 = vmatprep.subr.bf16.mxu0 %v2827
    %2930 = vmatpush1.bf16.msra.mxu0 %v2826
    %2931 = vmatprep.subr.bf16.mxu0 %v2831
    %2932 = vmatpush1.bf16.msra.mxu0 %v2830
    %2933 = vmatprep.subr.bf16.mxu0 %v2835
    %2934 = vmatpush1.bf16.msra.mxu0 %v2834
    %2935 = vmatprep.subr.bf16.mxu0 %v2839
    %2936 = vmatpush1.bf16.msra.mxu0 %v2838
    %2937 = vmatprep.subr.bf16.mxu0 %v2843
    %2938 = vmatpush1.bf16.msra.mxu0 %v2842
    %2939 = vmatprep.subr.bf16.mxu0 %v2847
    %2940 = vmatpush1.bf16.msra.mxu0 %v2846
    %2941 = vmatprep.subr.bf16.mxu0 %v2851
    %2942 = vmatpush1.bf16.msra.mxu0 %v2850
    %2943 = vmatprep.subr.bf16.mxu0 %v2855
    %2944 = vmatpush1.bf16.msra.mxu0 %v2854
    %2945 = vmatprep.subr.bf16.mxu0 0
    %2946 = vmatpush1.bf16.msra.mxu0 0
    %2947 = vmatprep.subr.bf16.mxu0 0
    %2948 = vmatpush1.bf16.msra.mxu0 0
    %2949 = vmatprep.subr.bf16.mxu0 0
    %2950 = vmatpush1.bf16.msra.mxu0 0
    %2951 = vmatprep.subr.bf16.mxu0 0
    %2952 = vmatpush1.bf16.msra.mxu0 0
    %2953 = vmatprep.subr.bf16.mxu0 0
    %2954 = vmatpush1.bf16.msra.mxu0 0
    %2955 = vmatprep.subr.bf16.mxu0 0
    %2956 = vmatpush1.bf16.msra.mxu0 0
    %2957 = vmatprep.subr.bf16.mxu0 0
    %2958 = vmatpush1.bf16.msra.mxu0 0
    %2959 = vmatprep.subr.bf16.mxu0 0
    %2960 = vmatpush1.bf16.msra.mxu0 0
    %2961 = vmatprep.mubr.bf16.mxu0 0
    %2962 = vmatmul.mubr.bf16.gmra.mrb[0].mxu0 %v2695
    %v2963 = vpop.f32.mrb[0].mxu0
    %v2964 = vadd.f32 0.0, %v2963
    %v2965 = vpop.f32.mrb[0].mxu0
    %v2966 = vadd.f32 0.0, %v2965
    %v2967 = vpop.f32.mrb[0].mxu0
    %v2968 = vpop.f32.mrb[0].mxu0
    %2969 = vdwg.mxu0
    %v2970 = vpack.c.bf16 %v2620, %v2620
    %v2971 = vld [vmem:[%s490] sm:$0xff]
    %v2972 = vld [vmem:[%s490 + $0x8] sm:$0xff]
    %v2973 = vld [vmem:[%s490 + $0x10] sm:$0xff]
    %v2974 = vld [vmem:[%s490 + $0x18] sm:$0xff]
    %v2975 = vld [vmem:[%s490 + $0x20] sm:$0xff]
    %v2976 = vld [vmem:[%s490 + $0x28] sm:$0xff]
    %v2977 = vld [vmem:[%s490 + $0x30] sm:$0xff]
    %v2978 = vld [vmem:[%s490 + $0x38] sm:$0xff]
    %v2979 = vld [vmem:[%s490 + $0x40] sm:$0xff]
    %v2980 = vld [vmem:[%s490 + $0x48] sm:$0xff]
    %v2981 = vld [vmem:[%s490 + $0x50] sm:$0xff]
    %v2982 = vld [vmem:[%s490 + $0x58] sm:$0xff]
    %v2983 = vld [vmem:[%s490 + $0x60] sm:$0xff]
    %v2984 = vld [vmem:[%s490 + $0x68] sm:$0xff]
    %v2985 = vld [vmem:[%s490 + $0x70] sm:$0xff]
    %v2986 = vld [vmem:[%s490 + $0x78] sm:$0xff]
    %v2987 = vld [vmem:[%s490 + $0x80] sm:$0xff]
    %v2988 = vld [vmem:[%s490 + $0x88] sm:$0xff]
    %v2989 = vld [vmem:[%s490 + $0x90] sm:$0xff]
    %v2990 = vld [vmem:[%s490 + $0x98] sm:$0xff]
    %v2991 = vld [vmem:[%s490 + $0xa0] sm:$0xff]
    %v2992 = vld [vmem:[%s490 + $0xa8] sm:$0xff]
    %v2993 = vld [vmem:[%s490 + $0xb0] sm:$0xff]
    %v2994 = vld [vmem:[%s490 + $0xb8] sm:$0xff]
    %v2995 = vld [vmem:[%s490 + $0xc0] sm:$0xff]
    %v2996 = vld [vmem:[%s490 + $0xc8] sm:$0xff]
    %v2997 = vld [vmem:[%s490 + $0xd0] sm:$0xff]
    %v2998 = vld [vmem:[%s490 + $0xd8] sm:$0xff]
    %v2999 = vld [vmem:[%s490 + $0xe0] sm:$0xff]
    %v3000 = vld [vmem:[%s490 + $0xe8] sm:$0xff]
    %v3001 = vld [vmem:[%s490 + $0xf0] sm:$0xff]
    %v3002 = vld [vmem:[%s490 + $0xf8] sm:$0xff]
    %v3035 = vunpack.c.l.b16 %v2971
    %v3036 = vunpack.c.h.b16 %v2971
    %v3037 = vunpack.c.l.b16 %v2972
    %v3038 = vunpack.c.h.b16 %v2972
    %v3039 = vunpack.c.l.b16 %v2973
    %v3040 = vunpack.c.h.b16 %v2973
    %v3041 = vunpack.c.l.b16 %v2974
    %v3042 = vunpack.c.h.b16 %v2974
    %v3043 = vunpack.c.l.b16 %v2975
    %v3044 = vunpack.c.h.b16 %v2975
    %v3045 = vunpack.c.l.b16 %v2976
    %v3046 = vunpack.c.h.b16 %v2976
    %v3047 = vunpack.c.l.b16 %v2977
    %v3048 = vunpack.c.h.b16 %v2977
    %v3049 = vunpack.c.l.b16 %v2978
    %v3050 = vunpack.c.h.b16 %v2978
    %v3051 = vunpack.c.l.b16 %v2979
    %v3052 = vunpack.c.h.b16 %v2979
    %v3053 = vunpack.c.l.b16 %v2980
    %v3054 = vunpack.c.h.b16 %v2980
    %v3055 = vunpack.c.l.b16 %v2981
    %v3056 = vunpack.c.h.b16 %v2981
    %v3057 = vunpack.c.l.b16 %v2982
    %v3058 = vunpack.c.h.b16 %v2982
    %v3059 = vunpack.c.l.b16 %v2983
    %v3060 = vunpack.c.h.b16 %v2983
    %v3061 = vunpack.c.l.b16 %v2984
    %v3062 = vunpack.c.h.b16 %v2984
    %v3063 = vunpack.c.l.b16 %v2985
    %v3064 = vunpack.c.h.b16 %v2985
    %v3065 = vunpack.c.l.b16 %v2986
    %v3066 = vunpack.c.h.b16 %v2986
    %v3067 = vunpack.c.l.b16 %v2987
    %v3068 = vunpack.c.h.b16 %v2987
    %v3069 = vunpack.c.l.b16 %v2988
    %v3070 = vunpack.c.h.b16 %v2988
    %v3071 = vunpack.c.l.b16 %v2989
    %v3072 = vunpack.c.h.b16 %v2989
    %v3073 = vunpack.c.l.b16 %v2990
    %v3074 = vunpack.c.h.b16 %v2990
    %v3075 = vunpack.c.l.b16 %v2991
    %v3076 = vunpack.c.h.b16 %v2991
    %v3077 = vunpack.c.l.b16 %v2992
    %v3078 = vunpack.c.h.b16 %v2992
    %v3079 = vunpack.c.l.b16 %v2993
    %v3080 = vunpack.c.h.b16 %v2993
    %v3081 = vunpack.c.l.b16 %v2994
    %v3082 = vunpack.c.h.b16 %v2994
    %v3083 = vunpack.c.l.b16 %v2995
    %v3084 = vunpack.c.h.b16 %v2995
    %v3085 = vunpack.c.l.b16 %v2996
    %v3086 = vunpack.c.h.b16 %v2996
    %v3087 = vunpack.c.l.b16 %v2997
    %v3088 = vunpack.c.h.b16 %v2997
    %v3089 = vunpack.c.l.b16 %v2998
    %v3090 = vunpack.c.h.b16 %v2998
    %v3091 = vunpack.c.l.b16 %v2999
    %v3092 = vunpack.c.h.b16 %v2999
    %v3093 = vunpack.c.l.b16 %v3000
    %v3094 = vunpack.c.h.b16 %v3000
    %v3095 = vunpack.c.l.b16 %v3001
    %v3096 = vunpack.c.h.b16 %v3001
    %v3097 = vunpack.c.l.b16 %v3002
    %v3098 = vunpack.c.h.b16 %v3002
    %v3099 = vpack.c.b16 %v3039, %v3035
    %v3100 = vpack.c.b16 %v3040, %v3036
    %v3101 = vpack.c.b16 %v3041, %v3037
    %v3102 = vpack.c.b16 %v3042, %v3038
    %v3103 = vpack.c.b16 %v3047, %v3043
    %v3104 = vpack.c.b16 %v3048, %v3044
    %v3105 = vpack.c.b16 %v3049, %v3045
    %v3106 = vpack.c.b16 %v3050, %v3046
    %v3107 = vpack.c.b16 %v3055, %v3051
    %v3108 = vpack.c.b16 %v3056, %v3052
    %v3109 = vpack.c.b16 %v3057, %v3053
    %v3110 = vpack.c.b16 %v3058, %v3054
    %v3111 = vpack.c.b16 %v3063, %v3059
    %v3112 = vpack.c.b16 %v3064, %v3060
    %v3113 = vpack.c.b16 %v3065, %v3061
    %v3114 = vpack.c.b16 %v3066, %v3062
    %v3115 = vpack.c.b16 %v3071, %v3067
    %v3116 = vpack.c.b16 %v3072, %v3068
    %v3117 = vpack.c.b16 %v3073, %v3069
    %v3118 = vpack.c.b16 %v3074, %v3070
    %v3119 = vpack.c.b16 %v3079, %v3075
    %v3120 = vpack.c.b16 %v3080, %v3076
    %v3121 = vpack.c.b16 %v3081, %v3077
    %v3122 = vpack.c.b16 %v3082, %v3078
    %v3123 = vpack.c.b16 %v3087, %v3083
    %v3124 = vpack.c.b16 %v3088, %v3084
    %v3125 = vpack.c.b16 %v3089, %v3085
    %v3126 = vpack.c.b16 %v3090, %v3086
    %v3127 = vpack.c.b16 %v3095, %v3091
    %v3128 = vpack.c.b16 %v3096, %v3092
    %v3129 = vpack.c.b16 %v3097, %v3093
    %v3130 = vpack.c.b16 %v3098, %v3094
    %3163 = vmatprep.subr.bf16.mxu0 %v3100
    %3164 = vmatpush1.bf16.msra.mxu0 %v3099
    %3165 = vmatprep.subr.bf16.mxu0 %v3104
    %3166 = vmatpush1.bf16.msra.mxu0 %v3103
    %3167 = vmatprep.subr.bf16.mxu0 %v3108
    %3168 = vmatpush1.bf16.msra.mxu0 %v3107
    %3169 = vmatprep.subr.bf16.mxu0 %v3112
    %3170 = vmatpush1.bf16.msra.mxu0 %v3111
    %3171 = vmatprep.subr.bf16.mxu0 %v3116
    %3172 = vmatpush1.bf16.msra.mxu0 %v3115
    %3173 = vmatprep.subr.bf16.mxu0 %v3120
    %3174 = vmatpush1.bf16.msra.mxu0 %v3119
    %3175 = vmatprep.subr.bf16.mxu0 %v3124
    %3176 = vmatpush1.bf16.msra.mxu0 %v3123
    %3177 = vmatprep.subr.bf16.mxu0 %v3128
    %3178 = vmatpush1.bf16.msra.mxu0 %v3127
    %3179 = vmatprep.subr.bf16.mxu0 0
    %3180 = vmatpush1.bf16.msra.mxu0 0
    %3181 = vmatprep.subr.bf16.mxu0 0
    %3182 = vmatpush1.bf16.msra.mxu0 0
    %3183 = vmatprep.subr.bf16.mxu0 0
    %3184 = vmatpush1.bf16.msra.mxu0 0
    %3185 = vmatprep.subr.bf16.mxu0 0
    %3186 = vmatpush1.bf16.msra.mxu0 0
    %3187 = vmatprep.subr.bf16.mxu0 0
    %3188 = vmatpush1.bf16.msra.mxu0 0
    %3189 = vmatprep.subr.bf16.mxu0 0
    %3190 = vmatpush1.bf16.msra.mxu0 0
    %3191 = vmatprep.subr.bf16.mxu0 0
    %3192 = vmatpush1.bf16.msra.mxu0 0
    %3193 = vmatprep.subr.bf16.mxu0 0
    %3194 = vmatpush1.bf16.msra.mxu0 0
    %3195 = vmatprep.mubr.bf16.mxu0 0
    %3196 = vmatmul.mubr.bf16.gmra.mrb[0].mxu0 %v2970
    %v3197 = vpop.f32.mrb[0].mxu0
    %v3198 = vadd.f32 0.0, %v3197
    %v3199 = vpop.f32.mrb[0].mxu0
    %v3200 = vadd.f32 0.0, %v3199
    %v3201 = vpop.f32.mrb[0].mxu0
    %v3202 = vpop.f32.mrb[0].mxu0
    %3203 = vdwg.mxu0
    %3204 = vmatprep.subr.bf16.mxu0 %v3102
    %3205 = vmatpush1.bf16.msra.mxu0 %v3101
    %3206 = vmatprep.subr.bf16.mxu0 %v3106
    %3207 = vmatpush1.bf16.msra.mxu0 %v3105
    %3208 = vmatprep.subr.bf16.mxu0 %v3110
    %3209 = vmatpush1.bf16.msra.mxu0 %v3109
    %3210 = vmatprep.subr.bf16.mxu0 %v3114
    %3211 = vmatpush1.bf16.msra.mxu0 %v3113
    %3212 = vmatprep.subr.bf16.mxu0 %v3118
    %3213 = vmatpush1.bf16.msra.mxu0 %v3117
    %3214 = vmatprep.subr.bf16.mxu0 %v3122
    %3215 = vmatpush1.bf16.msra.mxu0 %v3121
    %3216 = vmatprep.subr.bf16.mxu0 %v3126
    %3217 = vmatpush1.bf16.msra.mxu0 %v3125
    %3218 = vmatprep.subr.bf16.mxu0 %v3130
    %3219 = vmatpush1.bf16.msra.mxu0 %v3129
    %3220 = vmatprep.subr.bf16.mxu0 0
    %3221 = vmatpush1.bf16.msra.mxu0 0
    %3222 = vmatprep.subr.bf16.mxu0 0
    %3223 = vmatpush1.bf16.msra.mxu0 0
    %3224 = vmatprep.subr.bf16.mxu0 0
    %3225 = vmatpush1.bf16.msra.mxu0 0
    %3226 = vmatprep.subr.bf16.mxu0 0
    %3227 = vmatpush1.bf16.msra.mxu0 0
    %3228 = vmatprep.subr.bf16.mxu0 0
    %3229 = vmatpush1.bf16.msra.mxu0 0
    %3230 = vmatprep.subr.bf16.mxu0 0
    %3231 = vmatpush1.bf16.msra.mxu0 0
    %3232 = vmatprep.subr.bf16.mxu0 0
    %3233 = vmatpush1.bf16.msra.mxu0 0
    %3234 = vmatprep.subr.bf16.mxu0 0
    %3235 = vmatpush1.bf16.msra.mxu0 0
    %3236 = vmatprep.mubr.bf16.mxu0 0
    %3237 = vmatmul.mubr.bf16.gmra.mrb[0].mxu0 %v2970
    %v3238 = vpop.f32.mrb[0].mxu0
    %v3239 = vadd.f32 0.0, %v3238
    %v3240 = vpop.f32.mrb[0].mxu0
    %v3241 = vadd.f32 0.0, %v3240
    %v3242 = vpop.f32.mrb[0].mxu0
    %v3243 = vpop.f32.mrb[0].mxu0
    %3244 = vdwg.mxu0
    %v3277 = vunpack.c.l.b16 %v2629
    %v3278 = vunpack.c.h.b16 %v2629
    %v3279 = vunpack.c.l.b16 %v2630
    %v3280 = vunpack.c.h.b16 %v2630
    %v3281 = vunpack.c.l.b16 %v2631
    %v3282 = vunpack.c.h.b16 %v2631
    %v3283 = vunpack.c.l.b16 %v2632
    %v3284 = vunpack.c.h.b16 %v2632
    %v3285 = vunpack.c.l.b16 %v2633
    %v3286 = vunpack.c.h.b16 %v2633
    %v3287 = vunpack.c.l.b16 %v2634
    %v3288 = vunpack.c.h.b16 %v2634
    %v3289 = vunpack.c.l.b16 %v2635
    %v3290 = vunpack.c.h.b16 %v2635
    %v3291 = vunpack.c.l.b16 %v2636
    %v3292 = vunpack.c.h.b16 %v2636
    %v3293 = vunpack.c.l.b16 %v2637
    %v3294 = vunpack.c.h.b16 %v2637
    %v3295 = vunpack.c.l.b16 %v2638
    %v3296 = vunpack.c.h.b16 %v2638
    %v3297 = vunpack.c.l.b16 %v2639
    %v3298 = vunpack.c.h.b16 %v2639
    %v3299 = vunpack.c.l.b16 %v2640
    %v3300 = vunpack.c.h.b16 %v2640
    %v3301 = vunpack.c.l.b16 %v2641
    %v3302 = vunpack.c.h.b16 %v2641
    %v3303 = vunpack.c.l.b16 %v2642
    %v3304 = vunpack.c.h.b16 %v2642
    %v3305 = vunpack.c.l.b16 %v2643
    %v3306 = vunpack.c.h.b16 %v2643
    %v3307 = vunpack.c.l.b16 %v2644
    %v3308 = vunpack.c.h.b16 %v2644
    %v3309 = vunpack.c.l.b16 %v2645
    %v3310 = vunpack.c.h.b16 %v2645
    %v3311 = vunpack.c.l.b16 %v2646
    %v3312 = vunpack.c.h.b16 %v2646
    %v3313 = vunpack.c.l.b16 %v2647
    %v3314 = vunpack.c.h.b16 %v2647
    %v3315 = vunpack.c.l.b16 %v2648
    %v3316 = vunpack.c.h.b16 %v2648
    %v3317 = vunpack.c.l.b16 %v2649
    %v3318 = vunpack.c.h.b16 %v2649
    %v3319 = vunpack.c.l.b16 %v2650
    %v3320 = vunpack.c.h.b16 %v2650
    %v3321 = vunpack.c.l.b16 %v2651
    %v3322 = vunpack.c.h.b16 %v2651
    %v3323 = vunpack.c.l.b16 %v2652
    %v3324 = vunpack.c.h.b16 %v2652
    %v3325 = vunpack.c.l.b16 %v2653
    %v3326 = vunpack.c.h.b16 %v2653
    %v3327 = vunpack.c.l.b16 %v2654
    %v3328 = vunpack.c.h.b16 %v2654
    %v3329 = vunpack.c.l.b16 %v2655
    %v3330 = vunpack.c.h.b16 %v2655
    %v3331 = vunpack.c.l.b16 %v2656
    %v3332 = vunpack.c.h.b16 %v2656
    %v3333 = vunpack.c.l.b16 %v2657
    %v3334 = vunpack.c.h.b16 %v2657
    %v3335 = vunpack.c.l.b16 %v2658
    %v3336 = vunpack.c.h.b16 %v2658
    %v3337 = vunpack.c.l.b16 %v2659
    %v3338 = vunpack.c.h.b16 %v2659
    %v3339 = vunpack.c.l.b16 %v2660
    %v3340 = vunpack.c.h.b16 %v2660
    %v3341 = vpack.c.b16 %v3281, %v3277
    %v3342 = vpack.c.b16 %v3282, %v3278
    %v3343 = vpack.c.b16 %v3283, %v3279
    %v3344 = vpack.c.b16 %v3284, %v3280
    %v3345 = vpack.c.b16 %v3289, %v3285
    %v3346 = vpack.c.b16 %v3290, %v3286
    %v3347 = vpack.c.b16 %v3291, %v3287
    %v3348 = vpack.c.b16 %v3292, %v3288
    %v3349 = vpack.c.b16 %v3297, %v3293
    %v3350 = vpack.c.b16 %v3298, %v3294
    %v3351 = vpack.c.b16 %v3299, %v3295
    %v3352 = vpack.c.b16 %v3300, %v3296
    %v3353 = vpack.c.b16 %v3305, %v3301
    %v3354 = vpack.c.b16 %v3306, %v3302
    %v3355 = vpack.c.b16 %v3307, %v3303
    %v3356 = vpack.c.b16 %v3308, %v3304
    %v3357 = vpack.c.b16 %v3313, %v3309
    %v3358 = vpack.c.b16 %v3314, %v3310
    %v3359 = vpack.c.b16 %v3315, %v3311
    %v3360 = vpack.c.b16 %v3316, %v3312
    %v3361 = vpack.c.b16 %v3321, %v3317
    %v3362 = vpack.c.b16 %v3322, %v3318
    %v3363 = vpack.c.b16 %v3323, %v3319
    %v3364 = vpack.c.b16 %v3324, %v3320
    %v3365 = vpack.c.b16 %v3329, %v3325
    %v3366 = vpack.c.b16 %v3330, %v3326
    %v3367 = vpack.c.b16 %v3331, %v3327
    %v3368 = vpack.c.b16 %v3332, %v3328
    %v3369 = vpack.c.b16 %v3337, %v3333
    %v3370 = vpack.c.b16 %v3338, %v3334
    %v3371 = vpack.c.b16 %v3339, %v3335
    %v3372 = vpack.c.b16 %v3340, %v3336
    %3405 = vmatprep.subr.bf16.mxu0 %v3342
    %3406 = vmatpush1.bf16.msra.mxu0 %v3341
    %3407 = vmatprep.subr.bf16.mxu0 %v3346
    %3408 = vmatpush1.bf16.msra.mxu0 %v3345
    %3409 = vmatprep.subr.bf16.mxu0 %v3350
    %3410 = vmatpush1.bf16.msra.mxu0 %v3349
    %3411 = vmatprep.subr.bf16.mxu0 %v3354
    %3412 = vmatpush1.bf16.msra.mxu0 %v3353
    %3413 = vmatprep.subr.bf16.mxu0 %v3358
    %3414 = vmatpush1.bf16.msra.mxu0 %v3357
    %3415 = vmatprep.subr.bf16.mxu0 %v3362
    %3416 = vmatpush1.bf16.msra.mxu0 %v3361
    %3417 = vmatprep.subr.bf16.mxu0 %v3366
    %3418 = vmatpush1.bf16.msra.mxu0 %v3365
    %3419 = vmatprep.subr.bf16.mxu0 %v3370
    %3420 = vmatpush1.bf16.msra.mxu0 %v3369
    %3421 = vmatprep.subr.bf16.mxu0 0
    %3422 = vmatpush1.bf16.msra.mxu0 0
    %3423 = vmatprep.subr.bf16.mxu0 0
    %3424 = vmatpush1.bf16.msra.mxu0 0
    %3425 = vmatprep.subr.bf16.mxu0 0
    %3426 = vmatpush1.bf16.msra.mxu0 0
    %3427 = vmatprep.subr.bf16.mxu0 0
    %3428 = vmatpush1.bf16.msra.mxu0 0
    %3429 = vmatprep.subr.bf16.mxu0 0
    %3430 = vmatpush1.bf16.msra.mxu0 0
    %3431 = vmatprep.subr.bf16.mxu0 0
    %3432 = vmatpush1.bf16.msra.mxu0 0
    %3433 = vmatprep.subr.bf16.mxu0 0
    %3434 = vmatpush1.bf16.msra.mxu0 0
    %3435 = vmatprep.subr.bf16.mxu0 0
    %3436 = vmatpush1.bf16.msra.mxu0 0
    %3437 = vmatprep.mubr.bf16.mxu0 0
    %3438 = vmatmul.mubr.bf16.gmra.mrb[0].mxu0 %v2628
    %v3439 = vpop.f32.mrb[0].mxu0
    %v3440 = vadd.f32 %v2923, %v3439
    %v3441 = vpop.f32.mrb[0].mxu0
    %v3442 = vadd.f32 %v2925, %v3441
    %v3443 = vpop.f32.mrb[0].mxu0
    %v3444 = vpop.f32.mrb[0].mxu0
    %3445 = vdwg.mxu0
    %3446 = vmatprep.subr.bf16.mxu0 %v3344
    %3447 = vmatpush1.bf16.msra.mxu0 %v3343
    %3448 = vmatprep.subr.bf16.mxu0 %v3348
    %3449 = vmatpush1.bf16.msra.mxu0 %v3347
    %3450 = vmatprep.subr.bf16.mxu0 %v3352
    %3451 = vmatpush1.bf16.msra.mxu0 %v3351
    %3452 = vmatprep.subr.bf16.mxu0 %v3356
    %3453 = vmatpush1.bf16.msra.mxu0 %v3355
    %3454 = vmatprep.subr.bf16.mxu0 %v3360
    %3455 = vmatpush1.bf16.msra.mxu0 %v3359
    %3456 = vmatprep.subr.bf16.mxu0 %v3364
    %3457 = vmatpush1.bf16.msra.mxu0 %v3363
    %3458 = vmatprep.subr.bf16.mxu0 %v3368
    %3459 = vmatpush1.bf16.msra.mxu0 %v3367
    %3460 = vmatprep.subr.bf16.mxu0 %v3372
    %3461 = vmatpush1.bf16.msra.mxu0 %v3371
    %3462 = vmatprep.subr.bf16.mxu0 0
    %3463 = vmatpush1.bf16.msra.mxu0 0
    %3464 = vmatprep.subr.bf16.mxu0 0
    %3465 = vmatpush1.bf16.msra.mxu0 0
    %3466 = vmatprep.subr.bf16.mxu0 0
    %3467 = vmatpush1.bf16.msra.mxu0 0
    %3468 = vmatprep.subr.bf16.mxu0 0
    %3469 = vmatpush1.bf16.msra.mxu0 0
    %3470 = vmatprep.subr.bf16.mxu0 0
    %3471 = vmatpush1.bf16.msra.mxu0 0
    %3472 = vmatprep.subr.bf16.mxu0 0
    %3473 = vmatpush1.bf16.msra.mxu0 0
    %3474 = vmatprep.subr.bf16.mxu0 0
    %3475 = vmatpush1.bf16.msra.mxu0 0
    %3476 = vmatprep.subr.bf16.mxu0 0
    %3477 = vmatpush1.bf16.msra.mxu0 0
    %3478 = vmatprep.mubr.bf16.mxu0 0
    %3479 = vmatmul.mubr.bf16.gmra.mrb[0].mxu0 %v2628
    %v3480 = vpop.f32.mrb[0].mxu0
    %v3481 = vadd.f32 %v2964, %v3480
    %v3482 = vpop.f32.mrb[0].mxu0
    %v3483 = vadd.f32 %v2966, %v3482
    %v3484 = vpop.f32.mrb[0].mxu0
    %v3485 = vpop.f32.mrb[0].mxu0
    %3486 = vdwg.mxu0
    %v3487 = vld [vmem:[%s6] sm:$0xf]
    %v3489 = vlaneseq
    %v3490 = vshrl.u32 %v3489, 7
    %v3491 = vsub.s32 0, %v3490
    %v3492 = vrot.slane %v3487, %v3491
    %v3493 = vlaneseq
    %v3494 = vshrl.u32 %v3493, 7
    %v3495 = vsub.s32 1, %v3494
    %v3496 = vrot.slane %v3487, %v3495
    %v3497 = vlaneseq
    %v3498 = vshrl.u32 %v3497, 7
    %v3499 = vsub.s32 2, %v3498
    %v3500 = vrot.slane %v3487, %v3499
    %v3501 = vlaneseq
    %v3502 = vshrl.u32 %v3501, 7
    %v3503 = vsub.s32 3, %v3502
    %v3504 = vrot.slane %v3487, %v3503
    %v3509 = vadd.f32 %v3440, %v3492
    %v3510 = vadd.f32 %v3442, %v3496
    %v3511 = vadd.f32 %v3481, %v3500
    %v3512 = vadd.f32 %v3483, %v3504
    %v3513 = vxor.u32 %v3509, 2147483648
    %v3514 = vmul.f32 %v3513, 1.442695
    %v3515 = vpow.pop %v3514
    %v3516 = vadd.f32 %v3515, 1.0
    %v3517 = vrcp.pop %v3516
    %v3518 = vmul.f32 1.0, %v3517
    %v3519 = vxor.u32 %v3510, 2147483648
    %v3520 = vmul.f32 %v3519, 1.442695
    %v3521 = vpow.pop %v3520
    %v3522 = vadd.f32 %v3521, 1.0
    %v3523 = vrcp.pop %v3522
    %v3524 = vmul.f32 1.0, %v3523
    %v3525 = vtanh.pop %v3511
    %v3526 = vxor.u32 %v3512, 2147483648
    %v3527 = vmul.f32 %v3526, 1.442695
    %v3528 = vpow.pop %v3527
    %v3529 = vadd.f32 %v3528, 1.0
    %v3530 = vrcp.pop %v3529
    %v3531 = vmul.f32 1.0, %v3530
    %v3532 = vmul.f32 %v3524, %v2623
    %v3533 = vmul.f32 %v3518, %v3525
    %v3534 = vadd.f32 %v3532, %v3533
    %v3535 = vtanh.pop %v3534
    %v3536 = vmul.f32 %v3531, %v3535
    %v3569 = vunpack.c.l.b16 %v2663
    %v3570 = vunpack.c.h.b16 %v2663
    %v3571 = vunpack.c.l.b16 %v2664
    %v3572 = vunpack.c.h.b16 %v2664
    %v3573 = vunpack.c.l.b16 %v2665
    %v3574 = vunpack.c.h.b16 %v2665
    %v3575 = vunpack.c.l.b16 %v2666
    %v3576 = vunpack.c.h.b16 %v2666
    %v3577 = vunpack.c.l.b16 %v2667
    %v3578 = vunpack.c.h.b16 %v2667
    %v3579 = vunpack.c.l.b16 %v2668
    %v3580 = vunpack.c.h.b16 %v2668
    %v3581 = vunpack.c.l.b16 %v2669
    %v3582 = vunpack.c.h.b16 %v2669
    %v3583 = vunpack.c.l.b16 %v2670
    %v3584 = vunpack.c.h.b16 %v2670
    %v3585 = vunpack.c.l.b16 %v2671
    %v3586 = vunpack.c.h.b16 %v2671
    %v3587 = vunpack.c.l.b16 %v2672
    %v3588 = vunpack.c.h.b16 %v2672
    %v3589 = vunpack.c.l.b16 %v2673
    %v3590 = vunpack.c.h.b16 %v2673
    %v3591 = vunpack.c.l.b16 %v2674
    %v3592 = vunpack.c.h.b16 %v2674
    %v3593 = vunpack.c.l.b16 %v2675
    %v3594 = vunpack.c.h.b16 %v2675
    %v3595 = vunpack.c.l.b16 %v2676
    %v3596 = vunpack.c.h.b16 %v2676
    %v3597 = vunpack.c.l.b16 %v2677
    %v3598 = vunpack.c.h.b16 %v2677
    %v3599 = vunpack.c.l.b16 %v2678
    %v3600 = vunpack.c.h.b16 %v2678
    %v3601 = vunpack.c.l.b16 %v2679
    %v3602 = vunpack.c.h.b16 %v2679
    %v3603 = vunpack.c.l.b16 %v2680
    %v3604 = vunpack.c.h.b16 %v2680
    %v3605 = vunpack.c.l.b16 %v2681
    %v3606 = vunpack.c.h.b16 %v2681
    %v3607 = vunpack.c.l.b16 %v2682
    %v3608 = vunpack.c.h.b16 %v2682
    %v3609 = vunpack.c.l.b16 %v2683
    %v3610 = vunpack.c.h.b16 %v2683
    %v3611 = vunpack.c.l.b16 %v2684
    %v3612 = vunpack.c.h.b16 %v2684
    %v3613 = vunpack.c.l.b16 %v2685
    %v3614 = vunpack.c.h.b16 %v2685
    %v3615 = vunpack.c.l.b16 %v2686
    %v3616 = vunpack.c.h.b16 %v2686
    %v3617 = vunpack.c.l.b16 %v2687
    %v3618 = vunpack.c.h.b16 %v2687
    %v3619 = vunpack.c.l.b16 %v2688
    %v3620 = vunpack.c.h.b16 %v2688
    %v3621 = vunpack.c.l.b16 %v2689
    %v3622 = vunpack.c.h.b16 %v2689
    %v3623 = vunpack.c.l.b16 %v2690
    %v3624 = vunpack.c.h.b16 %v2690
    %v3625 = vunpack.c.l.b16 %v2691
    %v3626 = vunpack.c.h.b16 %v2691
    %v3627 = vunpack.c.l.b16 %v2692
    %v3628 = vunpack.c.h.b16 %v2692
    %v3629 = vunpack.c.l.b16 %v2693
    %v3630 = vunpack.c.h.b16 %v2693
    %v3631 = vunpack.c.l.b16 %v2694
    %v3632 = vunpack.c.h.b16 %v2694
    %v3633 = vpack.c.b16 %v3573, %v3569
    %v3634 = vpack.c.b16 %v3574, %v3570
    %v3635 = vpack.c.b16 %v3575, %v3571
    %v3636 = vpack.c.b16 %v3576, %v3572
    %v3637 = vpack.c.b16 %v3581, %v3577
    %v3638 = vpack.c.b16 %v3582, %v3578
    %v3639 = vpack.c.b16 %v3583, %v3579
    %v3640 = vpack.c.b16 %v3584, %v3580
    %v3641 = vpack.c.b16 %v3589, %v3585
    %v3642 = vpack.c.b16 %v3590, %v3586
    %v3643 = vpack.c.b16 %v3591, %v3587
    %v3644 = vpack.c.b16 %v3592, %v3588
    %v3645 = vpack.c.b16 %v3597, %v3593
    %v3646 = vpack.c.b16 %v3598, %v3594
    %v3647 = vpack.c.b16 %v3599, %v3595
    %v3648 = vpack.c.b16 %v3600, %v3596
    %v3649 = vpack.c.b16 %v3605, %v3601
    %v3650 = vpack.c.b16 %v3606, %v3602
    %v3651 = vpack.c.b16 %v3607, %v3603
    %v3652 = vpack.c.b16 %v3608, %v3604
    %v3653 = vpack.c.b16 %v3613, %v3609
    %v3654 = vpack.c.b16 %v3614, %v3610
    %v3655 = vpack.c.b16 %v3615, %v3611
    %v3656 = vpack.c.b16 %v3616, %v3612
    %v3657 = vpack.c.b16 %v3621, %v3617
    %v3658 = vpack.c.b16 %v3622, %v3618
    %v3659 = vpack.c.b16 %v3623, %v3619
    %v3660 = vpack.c.b16 %v3624, %v3620
    %v3661 = vpack.c.b16 %v3629, %v3625
    %v3662 = vpack.c.b16 %v3630, %v3626
    %v3663 = vpack.c.b16 %v3631, %v3627
    %v3664 = vpack.c.b16 %v3632, %v3628
    %3697 = vmatprep.subr.bf16.mxu0 %v3634
    %3698 = vmatpush1.bf16.msra.mxu0 %v3633
    %3699 = vmatprep.subr.bf16.mxu0 %v3638
    %3700 = vmatpush1.bf16.msra.mxu0 %v3637
    %3701 = vmatprep.subr.bf16.mxu0 %v3642
    %3702 = vmatpush1.bf16.msra.mxu0 %v3641
    %3703 = vmatprep.subr.bf16.mxu0 %v3646
    %3704 = vmatpush1.bf16.msra.mxu0 %v3645
    %3705 = vmatprep.subr.bf16.mxu0 %v3650
    %3706 = vmatpush1.bf16.msra.mxu0 %v3649
    %3707 = vmatprep.subr.bf16.mxu0 %v3654
    %3708 = vmatpush1.bf16.msra.mxu0 %v3653
    %3709 = vmatprep.subr.bf16.mxu0 %v3658
    %3710 = vmatpush1.bf16.msra.mxu0 %v3657
    %3711 = vmatprep.subr.bf16.mxu0 %v3662
    %3712 = vmatpush1.bf16.msra.mxu0 %v3661
    %3713 = vmatprep.subr.bf16.mxu0 0
    %3714 = vmatpush1.bf16.msra.mxu0 0
    %3715 = vmatprep.subr.bf16.mxu0 0
    %3716 = vmatpush1.bf16.msra.mxu0 0
    %3717 = vmatprep.subr.bf16.mxu0 0
    %3718 = vmatpush1.bf16.msra.mxu0 0
    %3719 = vmatprep.subr.bf16.mxu0 0
    %3720 = vmatpush1.bf16.msra.mxu0 0
    %3721 = vmatprep.subr.bf16.mxu0 0
    %3722 = vmatpush1.bf16.msra.mxu0 0
    %3723 = vmatprep.subr.bf16.mxu0 0
    %3724 = vmatpush1.bf16.msra.mxu0 0
    %3725 = vmatprep.subr.bf16.mxu0 0
    %3726 = vmatpush1.bf16.msra.mxu0 0
    %3727 = vmatprep.subr.bf16.mxu0 0
    %3728 = vmatpush1.bf16.msra.mxu0 0
    %3729 = vmatprep.mubr.bf16.mxu0 0
    %3730 = vmatmul.mubr.bf16.gmra.mrb[0].mxu0 %v2662
    %v3731 = vpop.f32.mrb[0].mxu0
    %v3732 = vadd.f32 %v3198, %v3731
    %v3733 = vpop.f32.mrb[0].mxu0
    %v3734 = vadd.f32 %v3200, %v3733
    %v3735 = vpop.f32.mrb[0].mxu0
    %v3736 = vpop.f32.mrb[0].mxu0
    %3737 = vdwg.mxu0
    %3738 = vmatprep.subr.bf16.mxu0 %v3636
    %3739 = vmatpush1.bf16.msra.mxu0 %v3635
    %3740 = vmatprep.subr.bf16.mxu0 %v3640
    %3741 = vmatpush1.bf16.msra.mxu0 %v3639
    %3742 = vmatprep.subr.bf16.mxu0 %v3644
    %3743 = vmatpush1.bf16.msra.mxu0 %v3643
    %3744 = vmatprep.subr.bf16.mxu0 %v3648
    %3745 = vmatpush1.bf16.msra.mxu0 %v3647
    %3746 = vmatprep.subr.bf16.mxu0 %v3652
    %3747 = vmatpush1.bf16.msra.mxu0 %v3651
    %3748 = vmatprep.subr.bf16.mxu0 %v3656
    %3749 = vmatpush1.bf16.msra.mxu0 %v3655
    %3750 = vmatprep.subr.bf16.mxu0 %v3660
    %3751 = vmatpush1.bf16.msra.mxu0 %v3659
    %3752 = vmatprep.subr.bf16.mxu0 %v3664
    %3753 = vmatpush1.bf16.msra.mxu0 %v3663
    %3754 = vmatprep.subr.bf16.mxu0 0
    %3755 = vmatpush1.bf16.msra.mxu0 0
    %3756 = vmatprep.subr.bf16.mxu0 0
    %3757 = vmatpush1.bf16.msra.mxu0 0
    %3758 = vmatprep.subr.bf16.mxu0 0
    %3759 = vmatpush1.bf16.msra.mxu0 0
    %3760 = vmatprep.subr.bf16.mxu0 0
    %3761 = vmatpush1.bf16.msra.mxu0 0
    %3762 = vmatprep.subr.bf16.mxu0 0
    %3763 = vmatpush1.bf16.msra.mxu0 0
    %3764 = vmatprep.subr.bf16.mxu0 0
    %3765 = vmatpush1.bf16.msra.mxu0 0
    %3766 = vmatprep.subr.bf16.mxu0 0
    %3767 = vmatpush1.bf16.msra.mxu0 0
    %3768 = vmatprep.subr.bf16.mxu0 0
    %3769 = vmatpush1.bf16.msra.mxu0 0
    %3770 = vmatprep.mubr.bf16.mxu0 0
    %3771 = vmatmul.mubr.bf16.gmra.mrb[0].mxu0 %v2662
    %v3772 = vpop.f32.mrb[0].mxu0
    %v3773 = vadd.f32 %v3239, %v3772
    %v3774 = vpop.f32.mrb[0].mxu0
    %v3775 = vadd.f32 %v3241, %v3774
    %v3776 = vpop.f32.mrb[0].mxu0
    %v3777 = vpop.f32.mrb[0].mxu0
    %3778 = vdwg.mxu0
    %v3779 = vld [vmem:[%s1299] sm:$0xf]
    %v3781 = vlaneseq
    %v3782 = vshrl.u32 %v3781, 7
    %v3783 = vsub.s32 0, %v3782
    %v3784 = vrot.slane %v3779, %v3783
    %v3785 = vlaneseq
    %v3786 = vshrl.u32 %v3785, 7
    %v3787 = vsub.s32 1, %v3786
    %v3788 = vrot.slane %v3779, %v3787
    %v3789 = vlaneseq
    %v3790 = vshrl.u32 %v3789, 7
    %v3791 = vsub.s32 2, %v3790
    %v3792 = vrot.slane %v3779, %v3791
    %v3793 = vlaneseq
    %v3794 = vshrl.u32 %v3793, 7
    %v3795 = vsub.s32 3, %v3794
    %v3796 = vrot.slane %v3779, %v3795
    %v3801 = vadd.f32 %v3732, %v3784
    %v3802 = vadd.f32 %v3734, %v3788
    %v3803 = vadd.f32 %v3773, %v3792
    %v3804 = vadd.f32 %v3775, %v3796
    %v3805 = vxor.u32 %v3801, 2147483648
    %v3806 = vmul.f32 %v3805, 1.442695
    %v3807 = vpow.pop %v3806
    %v3808 = vadd.f32 %v3807, 1.0
    %v3809 = vrcp.pop %v3808
    %v3810 = vmul.f32 1.0, %v3809
    %v3811 = vxor.u32 %v3802, 2147483648
    %v3812 = vmul.f32 %v3811, 1.442695
    %v3813 = vpow.pop %v3812
    %v3814 = vadd.f32 %v3813, 1.0
    %v3815 = vrcp.pop %v3814
    %v3816 = vmul.f32 1.0, %v3815
    %v3817 = vtanh.pop %v3803
    %v3818 = vxor.u32 %v3804, 2147483648
    %v3819 = vmul.f32 %v3818, 1.442695
    %v3820 = vpow.pop %v3819
    %v3821 = vadd.f32 %v3820, 1.0
    %v3822 = vrcp.pop %v3821
    %v3823 = vmul.f32 1.0, %v3822
    %v3824 = vmul.f32 %v3816, %v2626
    %v3825 = vmul.f32 %v3810, %v3817
    %v3826 = vadd.f32 %v3824, %v3825
    %v3827 = vtanh.pop %v3826
    %v3828 = vmul.f32 %v3823, %v3827
    %3830 = vset.pattern.permute.xlu0 0
    %3831 = vperm.xlu0 %3830, %v112
    %v3832 = vpop.permute.xlu0 %3831
    %v3834 = vmul.f32 %v3832, %v3536
    %3836 = vset.pattern.permute.xlu0 0
    %3837 = vperm.xlu0 %3836, %v123
    %v3838 = vpop.permute.xlu0 %3837
    %v3840 = vmul.f32 %v3838, %v3828
    %v3841 = vpack.c.bf16 %v3834, %v3834
    %s3842 = scalar_lea.vmem [#allocation11], 2
    %3843 = vst [vmem:[%s3842] sm:$0x1] %v3841
    %v3844 = vpack.c.bf16 %v3840, %v3840
    %s3845 = scalar_lea.vmem [#allocation12], 5
    %3846 = vst [vmem:[%s3845] sm:$0x1] %v3844
    %3848 = vset.pattern.permute.xlu0 0
    %3849 = vperm.xlu0 %3848, %v128
    %v3850 = vpop.permute.xlu0 %3849
    %v3852 = vmul.f32 %v3850, %v2613
    %v3853 = vadd.f32 %v3834, %v3852
    %3855 = vset.pattern.permute.xlu0 0
    %3856 = vperm.xlu0 %3855, %v139
    %v3857 = vpop.permute.xlu0 %3856
    %v3859 = vmul.f32 %v3857, %v2620
    %v3860 = vadd.f32 %v3840, %v3859
    %v3861 = vmul.f32 %v3832, %v3534
    %v3862 = vmul.f32 %v3850, %v2623
    %v3863 = vadd.f32 %v3861, %v3862
    %v3864 = vmul.f32 %v3838, %v3826
    %v3865 = vmul.f32 %v3857, %v2626
    %v3866 = vadd.f32 %v3864, %v3865
    %s3867 = scalar_lea.vmem %s0, 3
    %v3868 = vld [vmem:[%s3867] sm:$0x1]
    %v3869 = vld [vmem:[#allocation6] sm:$0xff]
    %v3870 = vld [vmem:[#allocation6 + $0x8] sm:$0xff]
    %v3871 = vld [vmem:[#allocation6 + $0x10] sm:$0xff]
    %v3872 = vld [vmem:[#allocation6 + $0x18] sm:$0xff]
    %v3873 = vld [vmem:[#allocation6 + $0x20] sm:$0xff]
    %v3874 = vld [vmem:[#allocation6 + $0x28] sm:$0xff]
    %v3875 = vld [vmem:[#allocation6 + $0x30] sm:$0xff]
    %v3876 = vld [vmem:[#allocation6 + $0x38] sm:$0xff]
    %v3877 = vld [vmem:[#allocation6 + $0x40] sm:$0xff]
    %v3878 = vld [vmem:[#allocation6 + $0x48] sm:$0xff]
    %v3879 = vld [vmem:[#allocation6 + $0x50] sm:$0xff]
    %v3880 = vld [vmem:[#allocation6 + $0x58] sm:$0xff]
    %v3881 = vld [vmem:[#allocation6 + $0x60] sm:$0xff]
    %v3882 = vld [vmem:[#allocation6 + $0x68] sm:$0xff]
    %v3883 = vld [vmem:[#allocation6 + $0x70] sm:$0xff]
    %v3884 = vld [vmem:[#allocation6 + $0x78] sm:$0xff]
    %v3885 = vld [vmem:[#allocation6 + $0x80] sm:$0xff]
    %v3886 = vld [vmem:[#allocation6 + $0x88] sm:$0xff]
    %v3887 = vld [vmem:[#allocation6 + $0x90] sm:$0xff]
    %v3888 = vld [vmem:[#allocation6 + $0x98] sm:$0xff]
    %v3889 = vld [vmem:[#allocation6 + $0xa0] sm:$0xff]
    %v3890 = vld [vmem:[#allocation6 + $0xa8] sm:$0xff]
    %v3891 = vld [vmem:[#allocation6 + $0xb0] sm:$0xff]
    %v3892 = vld [vmem:[#allocation6 + $0xb8] sm:$0xff]
    %v3893 = vld [vmem:[#allocation6 + $0xc0] sm:$0xff]
    %v3894 = vld [vmem:[#allocation6 + $0xc8] sm:$0xff]
    %v3895 = vld [vmem:[#allocation6 + $0xd0] sm:$0xff]
    %v3896 = vld [vmem:[#allocation6 + $0xd8] sm:$0xff]
    %v3897 = vld [vmem:[#allocation6 + $0xe0] sm:$0xff]
    %v3898 = vld [vmem:[#allocation6 + $0xe8] sm:$0xff]
    %v3899 = vld [vmem:[#allocation6 + $0xf0] sm:$0xff]
    %v3900 = vld [vmem:[#allocation6 + $0xf8] sm:$0xff]
    %s3901 = scalar_lea.vmem %s88, 4
    %v3902 = vld [vmem:[%s3901] sm:$0x1]
    %v3903 = vld [vmem:[%s181] sm:$0xff]
    %v3904 = vld [vmem:[%s181 + $0x8] sm:$0xff]
    %v3905 = vld [vmem:[%s181 + $0x10] sm:$0xff]
    %v3906 = vld [vmem:[%s181 + $0x18] sm:$0xff]
    %v3907 = vld [vmem:[%s181 + $0x20] sm:$0xff]
    %v3908 = vld [vmem:[%s181 + $0x28] sm:$0xff]
    %v3909 = vld [vmem:[%s181 + $0x30] sm:$0xff]
    %v3910 = vld [vmem:[%s181 + $0x38] sm:$0xff]
    %v3911 = vld [vmem:[%s181 + $0x40] sm:$0xff]
    %v3912 = vld [vmem:[%s181 + $0x48] sm:$0xff]
    %v3913 = vld [vmem:[%s181 + $0x50] sm:$0xff]
    %v3914 = vld [vmem:[%s181 + $0x58] sm:$0xff]
    %v3915 = vld [vmem:[%s181 + $0x60] sm:$0xff]
    %v3916 = vld [vmem:[%s181 + $0x68] sm:$0xff]
    %v3917 = vld [vmem:[%s181 + $0x70] sm:$0xff]
    %v3918 = vld [vmem:[%s181 + $0x78] sm:$0xff]
    %v3919 = vld [vmem:[%s181 + $0x80] sm:$0xff]
    %v3920 = vld [vmem:[%s181 + $0x88] sm:$0xff]
    %v3921 = vld [vmem:[%s181 + $0x90] sm:$0xff]
    %v3922 = vld [vmem:[%s181 + $0x98] sm:$0xff]
    %v3923 = vld [vmem:[%s181 + $0xa0] sm:$0xff]
    %v3924 = vld [vmem:[%s181 + $0xa8] sm:$0xff]
    %v3925 = vld [vmem:[%s181 + $0xb0] sm:$0xff]
    %v3926 = vld [vmem:[%s181 + $0xb8] sm:$0xff]
    %v3927 = vld [vmem:[%s181 + $0xc0] sm:$0xff]
    %v3928 = vld [vmem:[%s181 + $0xc8] sm:$0xff]
    %v3929 = vld [vmem:[%s181 + $0xd0] sm:$0xff]
    %v3930 = vld [vmem:[%s181 + $0xd8] sm:$0xff]
    %v3931 = vld [vmem:[%s181 + $0xe0] sm:$0xff]
    %v3932 = vld [vmem:[%s181 + $0xe8] sm:$0xff]
    %v3933 = vld [vmem:[%s181 + $0xf0] sm:$0xff]
    %v3934 = vld [vmem:[%s181 + $0xf8] sm:$0xff]
    %v3935 = vpack.c.bf16 %v3853, %v3853
    %v3936 = vld [vmem:[#allocation9] sm:$0xff]
    %v3937 = vld [vmem:[#allocation9 + $0x8] sm:$0xff]
    %v3938 = vld [vmem:[#allocation9 + $0x10] sm:$0xff]
    %v3939 = vld [vmem:[#allocation9 + $0x18] sm:$0xff]
    %v3940 = vld [vmem:[#allocation9 + $0x20] sm:$0xff]
    %v3941 = vld [vmem:[#allocation9 + $0x28] sm:$0xff]
    %v3942 = vld [vmem:[#allocation9 + $0x30] sm:$0xff]
    %v3943 = vld [vmem:[#allocation9 + $0x38] sm:$0xff]
    %v3944 = vld [vmem:[#allocation9 + $0x40] sm:$0xff]
    %v3945 = vld [vmem:[#allocation9 + $0x48] sm:$0xff]
    %v3946 = vld [vmem:[#allocation9 + $0x50] sm:$0xff]
    %v3947 = vld [vmem:[#allocation9 + $0x58] sm:$0xff]
    %v3948 = vld [vmem:[#allocation9 + $0x60] sm:$0xff]
    %v3949 = vld [vmem:[#allocation9 + $0x68] sm:$0xff]
    %v3950 = vld [vmem:[#allocation9 + $0x70] sm:$0xff]
    %v3951 = vld [vmem:[#allocation9 + $0x78] sm:$0xff]
    %v3952 = vld [vmem:[#allocation9 + $0x80] sm:$0xff]
    %v3953 = vld [vmem:[#allocation9 + $0x88] sm:$0xff]
    %v3954 = vld [vmem:[#allocation9 + $0x90] sm:$0xff]
    %v3955 = vld [vmem:[#allocation9 + $0x98] sm:$0xff]
    %v3956 = vld [vmem:[#allocation9 + $0xa0] sm:$0xff]
    %v3957 = vld [vmem:[#allocation9 + $0xa8] sm:$0xff]
    %v3958 = vld [vmem:[#allocation9 + $0xb0] sm:$0xff]
    %v3959 = vld [vmem:[#allocation9 + $0xb8] sm:$0xff]
    %v3960 = vld [vmem:[#allocation9 + $0xc0] sm:$0xff]
    %v3961 = vld [vmem:[#allocation9 + $0xc8] sm:$0xff]
    %v3962 = vld [vmem:[#allocation9 + $0xd0] sm:$0xff]
    %v3963 = vld [vmem:[#allocation9 + $0xd8] sm:$0xff]
    %v3964 = vld [vmem:[#allocation9 + $0xe0] sm:$0xff]
    %v3965 = vld [vmem:[#allocation9 + $0xe8] sm:$0xff]
    %v3966 = vld [vmem:[#allocation9 + $0xf0] sm:$0xff]
    %v3967 = vld [vmem:[#allocation9 + $0xf8] sm:$0xff]
    %v4000 = vunpack.c.l.b16 %v3936
    %v4001 = vunpack.c.h.b16 %v3936
    %v4002 = vunpack.c.l.b16 %v3937
    %v4003 = vunpack.c.h.b16 %v3937
    %v4004 = vunpack.c.l.b16 %v3938
    %v4005 = vunpack.c.h.b16 %v3938
    %v4006 = vunpack.c.l.b16 %v3939
    %v4007 = vunpack.c.h.b16 %v3939
    %v4008 = vunpack.c.l.b16 %v3940
    %v4009 = vunpack.c.h.b16 %v3940
    %v4010 = vunpack.c.l.b16 %v3941
    %v4011 = vunpack.c.h.b16 %v3941
    %v4012 = vunpack.c.l.b16 %v3942
    %v4013 = vunpack.c.h.b16 %v3942
    %v4014 = vunpack.c.l.b16 %v3943
    %v4015 = vunpack.c.h.b16 %v3943
    %v4016 = vunpack.c.l.b16 %v3944
    %v4017 = vunpack.c.h.b16 %v3944
    %v4018 = vunpack.c.l.b16 %v3945
    %v4019 = vunpack.c.h.b16 %v3945
    %v4020 = vunpack.c.l.b16 %v3946
    %v4021 = vunpack.c.h.b16 %v3946
    %v4022 = vunpack.c.l.b16 %v3947
    %v4023 = vunpack.c.h.b16 %v3947
    %v4024 = vunpack.c.l.b16 %v3948
    %v4025 = vunpack.c.h.b16 %v3948
    %v4026 = vunpack.c.l.b16 %v3949
    %v4027 = vunpack.c.h.b16 %v3949
    %v4028 = vunpack.c.l.b16 %v3950
    %v4029 = vunpack.c.h.b16 %v3950
    %v4030 = vunpack.c.l.b16 %v3951
    %v4031 = vunpack.c.h.b16 %v3951
    %v4032 = vunpack.c.l.b16 %v3952
    %v4033 = vunpack.c.h.b16 %v3952
    %v4034 = vunpack.c.l.b16 %v3953
    %v4035 = vunpack.c.h.b16 %v3953
    %v4036 = vunpack.c.l.b16 %v3954
    %v4037 = vunpack.c.h.b16 %v3954
    %v4038 = vunpack.c.l.b16 %v3955
    %v4039 = vunpack.c.h.b16 %v3955
    %v4040 = vunpack.c.l.b16 %v3956
    %v4041 = vunpack.c.h.b16 %v3956
    %v4042 = vunpack.c.l.b16 %v3957
    %v4043 = vunpack.c.h.b16 %v3957
    %v4044 = vunpack.c.l.b16 %v3958
    %v4045 = vunpack.c.h.b16 %v3958
    %v4046 = vunpack.c.l.b16 %v3959
    %v4047 = vunpack.c.h.b16 %v3959
    %v4048 = vunpack.c.l.b16 %v3960
    %v4049 = vunpack.c.h.b16 %v3960
    %v4050 = vunpack.c.l.b16 %v3961
    %v4051 = vunpack.c.h.b16 %v3961
    %v4052 = vunpack.c.l.b16 %v3962
    %v4053 = vunpack.c.h.b16 %v3962
    %v4054 = vunpack.c.l.b16 %v3963
    %v4055 = vunpack.c.h.b16 %v3963
    %v4056 = vunpack.c.l.b16 %v3964
    %v4057 = vunpack.c.h.b16 %v3964
    %v4058 = vunpack.c.l.b16 %v3965
    %v4059 = vunpack.c.h.b16 %v3965
    %v4060 = vunpack.c.l.b16 %v3966
    %v4061 = vunpack.c.h.b16 %v3966
    %v4062 = vunpack.c.l.b16 %v3967
    %v4063 = vunpack.c.h.b16 %v3967
    %v4064 = vpack.c.b16 %v4004, %v4000
    %v4065 = vpack.c.b16 %v4005, %v4001
    %v4066 = vpack.c.b16 %v4006, %v4002
    %v4067 = vpack.c.b16 %v4007, %v4003
    %v4068 = vpack.c.b16 %v4012, %v4008
    %v4069 = vpack.c.b16 %v4013, %v4009
    %v4070 = vpack.c.b16 %v4014, %v4010
    %v4071 = vpack.c.b16 %v4015, %v4011
    %v4072 = vpack.c.b16 %v4020, %v4016
    %v4073 = vpack.c.b16 %v4021, %v4017
    %v4074 = vpack.c.b16 %v4022, %v4018
    %v4075 = vpack.c.b16 %v4023, %v4019
    %v4076 = vpack.c.b16 %v4028, %v4024
    %v4077 = vpack.c.b16 %v4029, %v4025
    %v4078 = vpack.c.b16 %v4030, %v4026
    %v4079 = vpack.c.b16 %v4031, %v4027
    %v4080 = vpack.c.b16 %v4036, %v4032
    %v4081 = vpack.c.b16 %v4037, %v4033
    %v4082 = vpack.c.b16 %v4038, %v4034
    %v4083 = vpack.c.b16 %v4039, %v4035
    %v4084 = vpack.c.b16 %v4044, %v4040
    %v4085 = vpack.c.b16 %v4045, %v4041
    %v4086 = vpack.c.b16 %v4046, %v4042
    %v4087 = vpack.c.b16 %v4047, %v4043
    %v4088 = vpack.c.b16 %v4052, %v4048
    %v4089 = vpack.c.b16 %v4053, %v4049
    %v4090 = vpack.c.b16 %v4054, %v4050
    %v4091 = vpack.c.b16 %v4055, %v4051
    %v4092 = vpack.c.b16 %v4060, %v4056
    %v4093 = vpack.c.b16 %v4061, %v4057
    %v4094 = vpack.c.b16 %v4062, %v4058
    %v4095 = vpack.c.b16 %v4063, %v4059
    %4128 = vmatprep.subr.bf16.mxu0 %v4065
    %4129 = vmatpush1.bf16.msra.mxu0 %v4064
    %4130 = vmatprep.subr.bf16.mxu0 %v4069
    %4131 = vmatpush1.bf16.msra.mxu0 %v4068
    %4132 = vmatprep.subr.bf16.mxu0 %v4073
    %4133 = vmatpush1.bf16.msra.mxu0 %v4072
    %4134 = vmatprep.subr.bf16.mxu0 %v4077
    %4135 = vmatpush1.bf16.msra.mxu0 %v4076
    %4136 = vmatprep.subr.bf16.mxu0 %v4081
    %4137 = vmatpush1.bf16.msra.mxu0 %v4080
    %4138 = vmatprep.subr.bf16.mxu0 %v4085
    %4139 = vmatpush1.bf16.msra.mxu0 %v4084
    %4140 = vmatprep.subr.bf16.mxu0 %v4089
    %4141 = vmatpush1.bf16.msra.mxu0 %v4088
    %4142 = vmatprep.subr.bf16.mxu0 %v4093
    %4143 = vmatpush1.bf16.msra.mxu0 %v4092
    %4144 = vmatprep.subr.bf16.mxu0 0
    %4145 = vmatpush1.bf16.msra.mxu0 0
    %4146 = vmatprep.subr.bf16.mxu0 0
    %4147 = vmatpush1.bf16.msra.mxu0 0
    %4148 = vmatprep.subr.bf16.mxu0 0
    %4149 = vmatpush1.bf16.msra.mxu0 0
    %4150 = vmatprep.subr.bf16.mxu0 0
    %4151 = vmatpush1.bf16.msra.mxu0 0
    %4152 = vmatprep.subr.bf16.mxu0 0
    %4153 = vmatpush1.bf16.msra.mxu0 0
    %4154 = vmatprep.subr.bf16.mxu0 0
    %4155 = vmatpush1.bf16.msra.mxu0 0
    %4156 = vmatprep.subr.bf16.mxu0 0
    %4157 = vmatpush1.bf16.msra.mxu0 0
    %4158 = vmatprep.subr.bf16.mxu0 0
    %4159 = vmatpush1.bf16.msra.mxu0 0
    %4160 = vmatprep.mubr.bf16.mxu0 0
    %4161 = vmatmul.mubr.bf16.gmra.mrb[0].mxu0 %v3935
    %v4162 = vpop.f32.mrb[0].mxu0
    %v4163 = vadd.f32 0.0, %v4162
    %v4164 = vpop.f32.mrb[0].mxu0
    %v4165 = vadd.f32 0.0, %v4164
    %v4166 = vpop.f32.mrb[0].mxu0
    %v4167 = vpop.f32.mrb[0].mxu0
    %4168 = vdwg.mxu0
    %4169 = vmatprep.subr.bf16.mxu0 %v4067
    %4170 = vmatpush1.bf16.msra.mxu0 %v4066
    %4171 = vmatprep.subr.bf16.mxu0 %v4071
    %4172 = vmatpush1.bf16.msra.mxu0 %v4070
    %4173 = vmatprep.subr.bf16.mxu0 %v4075
    %4174 = vmatpush1.bf16.msra.mxu0 %v4074
    %4175 = vmatprep.subr.bf16.mxu0 %v4079
    %4176 = vmatpush1.bf16.msra.mxu0 %v4078
    %4177 = vmatprep.subr.bf16.mxu0 %v4083
    %4178 = vmatpush1.bf16.msra.mxu0 %v4082
    %4179 = vmatprep.subr.bf16.mxu0 %v4087
    %4180 = vmatpush1.bf16.msra.mxu0 %v4086
    %4181 = vmatprep.subr.bf16.mxu0 %v4091
    %4182 = vmatpush1.bf16.msra.mxu0 %v4090
    %4183 = vmatprep.subr.bf16.mxu0 %v4095
    %4184 = vmatpush1.bf16.msra.mxu0 %v4094
    %4185 = vmatprep.subr.bf16.mxu0 0
    %4186 = vmatpush1.bf16.msra.mxu0 0
    %4187 = vmatprep.subr.bf16.mxu0 0
    %4188 = vmatpush1.bf16.msra.mxu0 0
    %4189 = vmatprep.subr.bf16.mxu0 0
    %4190 = vmatpush1.bf16.msra.mxu0 0
    %4191 = vmatprep.subr.bf16.mxu0 0
    %4192 = vmatpush1.bf16.msra.mxu0 0
    %4193 = vmatprep.subr.bf16.mxu0 0
    %4194 = vmatpush1.bf16.msra.mxu0 0
    %4195 = vmatprep.subr.bf16.mxu0 0
    %4196 = vmatpush1.bf16.msra.mxu0 0
    %4197 = vmatprep.subr.bf16.mxu0 0
    %4198 = vmatpush1.bf16.msra.mxu0 0
    %4199 = vmatprep.subr.bf16.mxu0 0
    %4200 = vmatpush1.bf16.msra.mxu0 0
    %4201 = vmatprep.mubr.bf16.mxu0 0
    %4202 = vmatmul.mubr.bf16.gmra.mrb[0].mxu0 %v3935
    %v4203 = vpop.f32.mrb[0].mxu0
    %v4204 = vadd.f32 0.0, %v4203
    %v4205 = vpop.f32.mrb[0].mxu0
    %v4206 = vadd.f32 0.0, %v4205
    %v4207 = vpop.f32.mrb[0].mxu0
    %v4208 = vpop.f32.mrb[0].mxu0
    %4209 = vdwg.mxu0
    %v4210 = vpack.c.bf16 %v3860, %v3860
    %v4211 = vld [vmem:[%s490] sm:$0xff]
    %v4212 = vld [vmem:[%s490 + $0x8] sm:$0xff]
    %v4213 = vld [vmem:[%s490 + $0x10] sm:$0xff]
    %v4214 = vld [vmem:[%s490 + $0x18] sm:$0xff]
    %v4215 = vld [vmem:[%s490 + $0x20] sm:$0xff]
    %v4216 = vld [vmem:[%s490 + $0x28] sm:$0xff]
    %v4217 = vld [vmem:[%s490 + $0x30] sm:$0xff]
    %v4218 = vld [vmem:[%s490 + $0x38] sm:$0xff]
    %v4219 = vld [vmem:[%s490 + $0x40] sm:$0xff]
    %v4220 = vld [vmem:[%s490 + $0x48] sm:$0xff]
    %v4221 = vld [vmem:[%s490 + $0x50] sm:$0xff]
    %v4222 = vld [vmem:[%s490 + $0x58] sm:$0xff]
    %v4223 = vld [vmem:[%s490 + $0x60] sm:$0xff]
    %v4224 = vld [vmem:[%s490 + $0x68] sm:$0xff]
    %v4225 = vld [vmem:[%s490 + $0x70] sm:$0xff]
    %v4226 = vld [vmem:[%s490 + $0x78] sm:$0xff]
    %v4227 = vld [vmem:[%s490 + $0x80] sm:$0xff]
    %v4228 = vld [vmem:[%s490 + $0x88] sm:$0xff]
    %v4229 = vld [vmem:[%s490 + $0x90] sm:$0xff]
    %v4230 = vld [vmem:[%s490 + $0x98] sm:$0xff]
    %v4231 = vld [vmem:[%s490 + $0xa0] sm:$0xff]
    %v4232 = vld [vmem:[%s490 + $0xa8] sm:$0xff]
    %v4233 = vld [vmem:[%s490 + $0xb0] sm:$0xff]
    %v4234 = vld [vmem:[%s490 + $0xb8] sm:$0xff]
    %v4235 = vld [vmem:[%s490 + $0xc0] sm:$0xff]
    %v4236 = vld [vmem:[%s490 + $0xc8] sm:$0xff]
    %v4237 = vld [vmem:[%s490 + $0xd0] sm:$0xff]
    %v4238 = vld [vmem:[%s490 + $0xd8] sm:$0xff]
    %v4239 = vld [vmem:[%s490 + $0xe0] sm:$0xff]
    %v4240 = vld [vmem:[%s490 + $0xe8] sm:$0xff]
    %v4241 = vld [vmem:[%s490 + $0xf0] sm:$0xff]
    %v4242 = vld [vmem:[%s490 + $0xf8] sm:$0xff]
    %v4275 = vunpack.c.l.b16 %v4211
    %v4276 = vunpack.c.h.b16 %v4211
    %v4277 = vunpack.c.l.b16 %v4212
    %v4278 = vunpack.c.h.b16 %v4212
    %v4279 = vunpack.c.l.b16 %v4213
    %v4280 = vunpack.c.h.b16 %v4213
    %v4281 = vunpack.c.l.b16 %v4214
    %v4282 = vunpack.c.h.b16 %v4214
    %v4283 = vunpack.c.l.b16 %v4215
    %v4284 = vunpack.c.h.b16 %v4215
    %v4285 = vunpack.c.l.b16 %v4216
    %v4286 = vunpack.c.h.b16 %v4216
    %v4287 = vunpack.c.l.b16 %v4217
    %v4288 = vunpack.c.h.b16 %v4217
    %v4289 = vunpack.c.l.b16 %v4218
    %v4290 = vunpack.c.h.b16 %v4218
    %v4291 = vunpack.c.l.b16 %v4219
    %v4292 = vunpack.c.h.b16 %v4219
    %v4293 = vunpack.c.l.b16 %v4220
    %v4294 = vunpack.c.h.b16 %v4220
    %v4295 = vunpack.c.l.b16 %v4221
    %v4296 = vunpack.c.h.b16 %v4221
    %v4297 = vunpack.c.l.b16 %v4222
    %v4298 = vunpack.c.h.b16 %v4222
    %v4299 = vunpack.c.l.b16 %v4223
    %v4300 = vunpack.c.h.b16 %v4223
    %v4301 = vunpack.c.l.b16 %v4224
    %v4302 = vunpack.c.h.b16 %v4224
    %v4303 = vunpack.c.l.b16 %v4225
    %v4304 = vunpack.c.h.b16 %v4225
    %v4305 = vunpack.c.l.b16 %v4226
    %v4306 = vunpack.c.h.b16 %v4226
    %v4307 = vunpack.c.l.b16 %v4227
    %v4308 = vunpack.c.h.b16 %v4227
    %v4309 = vunpack.c.l.b16 %v4228
    %v4310 = vunpack.c.h.b16 %v4228
    %v4311 = vunpack.c.l.b16 %v4229
    %v4312 = vunpack.c.h.b16 %v4229
    %v4313 = vunpack.c.l.b16 %v4230
    %v4314 = vunpack.c.h.b16 %v4230
    %v4315 = vunpack.c.l.b16 %v4231
    %v4316 = vunpack.c.h.b16 %v4231
    %v4317 = vunpack.c.l.b16 %v4232
    %v4318 = vunpack.c.h.b16 %v4232
    %v4319 = vunpack.c.l.b16 %v4233
    %v4320 = vunpack.c.h.b16 %v4233
    %v4321 = vunpack.c.l.b16 %v4234
    %v4322 = vunpack.c.h.b16 %v4234
    %v4323 = vunpack.c.l.b16 %v4235
    %v4324 = vunpack.c.h.b16 %v4235
    %v4325 = vunpack.c.l.b16 %v4236
    %v4326 = vunpack.c.h.b16 %v4236
    %v4327 = vunpack.c.l.b16 %v4237
    %v4328 = vunpack.c.h.b16 %v4237
    %v4329 = vunpack.c.l.b16 %v4238
    %v4330 = vunpack.c.h.b16 %v4238
    %v4331 = vunpack.c.l.b16 %v4239
    %v4332 = vunpack.c.h.b16 %v4239
    %v4333 = vunpack.c.l.b16 %v4240
    %v4334 = vunpack.c.h.b16 %v4240
    %v4335 = vunpack.c.l.b16 %v4241
    %v4336 = vunpack.c.h.b16 %v4241
    %v4337 = vunpack.c.l.b16 %v4242
    %v4338 = vunpack.c.h.b16 %v4242
    %v4339 = vpack.c.b16 %v4279, %v4275
    %v4340 = vpack.c.b16 %v4280, %v4276
    %v4341 = vpack.c.b16 %v4281, %v4277
    %v4342 = vpack.c.b16 %v4282, %v4278
    %v4343 = vpack.c.b16 %v4287, %v4283
    %v4344 = vpack.c.b16 %v4288, %v4284
    %v4345 = vpack.c.b16 %v4289, %v4285
    %v4346 = vpack.c.b16 %v4290, %v4286
    %v4347 = vpack.c.b16 %v4295, %v4291
    %v4348 = vpack.c.b16 %v4296, %v4292
    %v4349 = vpack.c.b16 %v4297, %v4293
    %v4350 = vpack.c.b16 %v4298, %v4294
    %v4351 = vpack.c.b16 %v4303, %v4299
    %v4352 = vpack.c.b16 %v4304, %v4300
    %v4353 = vpack.c.b16 %v4305, %v4301
    %v4354 = vpack.c.b16 %v4306, %v4302
    %v4355 = vpack.c.b16 %v4311, %v4307
    %v4356 = vpack.c.b16 %v4312, %v4308
    %v4357 = vpack.c.b16 %v4313, %v4309
    %v4358 = vpack.c.b16 %v4314, %v4310
    %v4359 = vpack.c.b16 %v4319, %v4315
    %v4360 = vpack.c.b16 %v4320, %v4316
    %v4361 = vpack.c.b16 %v4321, %v4317
    %v4362 = vpack.c.b16 %v4322, %v4318
    %v4363 = vpack.c.b16 %v4327, %v4323
    %v4364 = vpack.c.b16 %v4328, %v4324
    %v4365 = vpack.c.b16 %v4329, %v4325
    %v4366 = vpack.c.b16 %v4330, %v4326
    %v4367 = vpack.c.b16 %v4335, %v4331
    %v4368 = vpack.c.b16 %v4336, %v4332
    %v4369 = vpack.c.b16 %v4337, %v4333
    %v4370 = vpack.c.b16 %v4338, %v4334
    %4403 = vmatprep.subr.bf16.mxu0 %v4340
    %4404 = vmatpush1.bf16.msra.mxu0 %v4339
    %4405 = vmatprep.subr.bf16.mxu0 %v4344
    %4406 = vmatpush1.bf16.msra.mxu0 %v4343
    %4407 = vmatprep.subr.bf16.mxu0 %v4348
    %4408 = vmatpush1.bf16.msra.mxu0 %v4347
    %4409 = vmatprep.subr.bf16.mxu0 %v4352
    %4410 = vmatpush1.bf16.msra.mxu0 %v4351
    %4411 = vmatprep.subr.bf16.mxu0 %v4356
    %4412 = vmatpush1.bf16.msra.mxu0 %v4355
    %4413 = vmatprep.subr.bf16.mxu0 %v4360
    %4414 = vmatpush1.bf16.msra.mxu0 %v4359
    %4415 = vmatprep.subr.bf16.mxu0 %v4364
    %4416 = vmatpush1.bf16.msra.mxu0 %v4363
    %4417 = vmatprep.subr.bf16.mxu0 %v4368
    %4418 = vmatpush1.bf16.msra.mxu0 %v4367
    %4419 = vmatprep.subr.bf16.mxu0 0
    %4420 = vmatpush1.bf16.msra.mxu0 0
    %4421 = vmatprep.subr.bf16.mxu0 0
    %4422 = vmatpush1.bf16.msra.mxu0 0
    %4423 = vmatprep.subr.bf16.mxu0 0
    %4424 = vmatpush1.bf16.msra.mxu0 0
    %4425 = vmatprep.subr.bf16.mxu0 0
    %4426 = vmatpush1.bf16.msra.mxu0 0
    %4427 = vmatprep.subr.bf16.mxu0 0
    %4428 = vmatpush1.bf16.msra.mxu0 0
    %4429 = vmatprep.subr.bf16.mxu0 0
    %4430 = vmatpush1.bf16.msra.mxu0 0
    %4431 = vmatprep.subr.bf16.mxu0 0
    %4432 = vmatpush1.bf16.msra.mxu0 0
    %4433 = vmatprep.subr.bf16.mxu0 0
    %4434 = vmatpush1.bf16.msra.mxu0 0
    %4435 = vmatprep.mubr.bf16.mxu0 0
    %4436 = vmatmul.mubr.bf16.gmra.mrb[0].mxu0 %v4210
    %v4437 = vpop.f32.mrb[0].mxu0
    %v4438 = vadd.f32 0.0, %v4437
    %v4439 = vpop.f32.mrb[0].mxu0
    %v4440 = vadd.f32 0.0, %v4439
    %v4441 = vpop.f32.mrb[0].mxu0
    %v4442 = vpop.f32.mrb[0].mxu0
    %4443 = vdwg.mxu0
    %4444 = vmatprep.subr.bf16.mxu0 %v4342
    %4445 = vmatpush1.bf16.msra.mxu0 %v4341
    %4446 = vmatprep.subr.bf16.mxu0 %v4346
    %4447 = vmatpush1.bf16.msra.mxu0 %v4345
    %4448 = vmatprep.subr.bf16.mxu0 %v4350
    %4449 = vmatpush1.bf16.msra.mxu0 %v4349
    %4450 = vmatprep.subr.bf16.mxu0 %v4354
    %4451 = vmatpush1.bf16.msra.mxu0 %v4353
    %4452 = vmatprep.subr.bf16.mxu0 %v4358
    %4453 = vmatpush1.bf16.msra.mxu0 %v4357
    %4454 = vmatprep.subr.bf16.mxu0 %v4362
    %4455 = vmatpush1.bf16.msra.mxu0 %v4361
    %4456 = vmatprep.subr.bf16.mxu0 %v4366
    %4457 = vmatpush1.bf16.msra.mxu0 %v4365
    %4458 = vmatprep.subr.bf16.mxu0 %v4370
    %4459 = vmatpush1.bf16.msra.mxu0 %v4369
    %4460 = vmatprep.subr.bf16.mxu0 0
    %4461 = vmatpush1.bf16.msra.mxu0 0
    %4462 = vmatprep.subr.bf16.mxu0 0
    %4463 = vmatpush1.bf16.msra.mxu0 0
    %4464 = vmatprep.subr.bf16.mxu0 0
    %4465 = vmatpush1.bf16.msra.mxu0 0
    %4466 = vmatprep.subr.bf16.mxu0 0
    %4467 = vmatpush1.bf16.msra.mxu0 0
    %4468 = vmatprep.subr.bf16.mxu0 0
    %4469 = vmatpush1.bf16.msra.mxu0 0
    %4470 = vmatprep.subr.bf16.mxu0 0
    %4471 = vmatpush1.bf16.msra.mxu0 0
    %4472 = vmatprep.subr.bf16.mxu0 0
    %4473 = vmatpush1.bf16.msra.mxu0 0
    %4474 = vmatprep.subr.bf16.mxu0 0
    %4475 = vmatpush1.bf16.msra.mxu0 0
    %4476 = vmatprep.mubr.bf16.mxu0 0
    %4477 = vmatmul.mubr.bf16.gmra.mrb[0].mxu0 %v4210
    %v4478 = vpop.f32.mrb[0].mxu0
    %v4479 = vadd.f32 0.0, %v4478
    %v4480 = vpop.f32.mrb[0].mxu0
    %v4481 = vadd.f32 0.0, %v4480
    %v4482 = vpop.f32.mrb[0].mxu0
    %v4483 = vpop.f32.mrb[0].mxu0
    %4484 = vdwg.mxu0
    %v4517 = vunpack.c.l.b16 %v3869
    %v4518 = vunpack.c.h.b16 %v3869
    %v4519 = vunpack.c.l.b16 %v3870
    %v4520 = vunpack.c.h.b16 %v3870
    %v4521 = vunpack.c.l.b16 %v3871
    %v4522 = vunpack.c.h.b16 %v3871
    %v4523 = vunpack.c.l.b16 %v3872
    %v4524 = vunpack.c.h.b16 %v3872
    %v4525 = vunpack.c.l.b16 %v3873
    %v4526 = vunpack.c.h.b16 %v3873
    %v4527 = vunpack.c.l.b16 %v3874
    %v4528 = vunpack.c.h.b16 %v3874
    %v4529 = vunpack.c.l.b16 %v3875
    %v4530 = vunpack.c.h.b16 %v3875
    %v4531 = vunpack.c.l.b16 %v3876
    %v4532 = vunpack.c.h.b16 %v3876
    %v4533 = vunpack.c.l.b16 %v3877
    %v4534 = vunpack.c.h.b16 %v3877
    %v4535 = vunpack.c.l.b16 %v3878
    %v4536 = vunpack.c.h.b16 %v3878
    %v4537 = vunpack.c.l.b16 %v3879
    %v4538 = vunpack.c.h.b16 %v3879
    %v4539 = vunpack.c.l.b16 %v3880
    %v4540 = vunpack.c.h.b16 %v3880
    %v4541 = vunpack.c.l.b16 %v3881
    %v4542 = vunpack.c.h.b16 %v3881
    %v4543 = vunpack.c.l.b16 %v3882
    %v4544 = vunpack.c.h.b16 %v3882
    %v4545 = vunpack.c.l.b16 %v3883
    %v4546 = vunpack.c.h.b16 %v3883
    %v4547 = vunpack.c.l.b16 %v3884
    %v4548 = vunpack.c.h.b16 %v3884
    %v4549 = vunpack.c.l.b16 %v3885
    %v4550 = vunpack.c.h.b16 %v3885
    %v4551 = vunpack.c.l.b16 %v3886
    %v4552 = vunpack.c.h.b16 %v3886
    %v4553 = vunpack.c.l.b16 %v3887
    %v4554 = vunpack.c.h.b16 %v3887
    %v4555 = vunpack.c.l.b16 %v3888
    %v4556 = vunpack.c.h.b16 %v3888
    %v4557 = vunpack.c.l.b16 %v3889
    %v4558 = vunpack.c.h.b16 %v3889
    %v4559 = vunpack.c.l.b16 %v3890
    %v4560 = vunpack.c.h.b16 %v3890
    %v4561 = vunpack.c.l.b16 %v3891
    %v4562 = vunpack.c.h.b16 %v3891
    %v4563 = vunpack.c.l.b16 %v3892
    %v4564 = vunpack.c.h.b16 %v3892
    %v4565 = vunpack.c.l.b16 %v3893
    %v4566 = vunpack.c.h.b16 %v3893
    %v4567 = vunpack.c.l.b16 %v3894
    %v4568 = vunpack.c.h.b16 %v3894
    %v4569 = vunpack.c.l.b16 %v3895
    %v4570 = vunpack.c.h.b16 %v3895
    %v4571 = vunpack.c.l.b16 %v3896
    %v4572 = vunpack.c.h.b16 %v3896
    %v4573 = vunpack.c.l.b16 %v3897
    %v4574 = vunpack.c.h.b16 %v3897
    %v4575 = vunpack.c.l.b16 %v3898
    %v4576 = vunpack.c.h.b16 %v3898
    %v4577 = vunpack.c.l.b16 %v3899
    %v4578 = vunpack.c.h.b16 %v3899
    %v4579 = vunpack.c.l.b16 %v3900
    %v4580 = vunpack.c.h.b16 %v3900
    %v4581 = vpack.c.b16 %v4521, %v4517
    %v4582 = vpack.c.b16 %v4522, %v4518
    %v4583 = vpack.c.b16 %v4523, %v4519
    %v4584 = vpack.c.b16 %v4524, %v4520
    %v4585 = vpack.c.b16 %v4529, %v4525
    %v4586 = vpack.c.b16 %v4530, %v4526
    %v4587 = vpack.c.b16 %v4531, %v4527
    %v4588 = vpack.c.b16 %v4532, %v4528
    %v4589 = vpack.c.b16 %v4537, %v4533
    %v4590 = vpack.c.b16 %v4538, %v4534
    %v4591 = vpack.c.b16 %v4539, %v4535
    %v4592 = vpack.c.b16 %v4540, %v4536
    %v4593 = vpack.c.b16 %v4545, %v4541
    %v4594 = vpack.c.b16 %v4546, %v4542
    %v4595 = vpack.c.b16 %v4547, %v4543
    %v4596 = vpack.c.b16 %v4548, %v4544
    %v4597 = vpack.c.b16 %v4553, %v4549
    %v4598 = vpack.c.b16 %v4554, %v4550
    %v4599 = vpack.c.b16 %v4555, %v4551
    %v4600 = vpack.c.b16 %v4556, %v4552
    %v4601 = vpack.c.b16 %v4561, %v4557
    %v4602 = vpack.c.b16 %v4562, %v4558
    %v4603 = vpack.c.b16 %v4563, %v4559
    %v4604 = vpack.c.b16 %v4564, %v4560
    %v4605 = vpack.c.b16 %v4569, %v4565
    %v4606 = vpack.c.b16 %v4570, %v4566
    %v4607 = vpack.c.b16 %v4571, %v4567
    %v4608 = vpack.c.b16 %v4572, %v4568
    %v4609 = vpack.c.b16 %v4577, %v4573
    %v4610 = vpack.c.b16 %v4578, %v4574
    %v4611 = vpack.c.b16 %v4579, %v4575
    %v4612 = vpack.c.b16 %v4580, %v4576
    %4645 = vmatprep.subr.bf16.mxu0 %v4582
    %4646 = vmatpush1.bf16.msra.mxu0 %v4581
    %4647 = vmatprep.subr.bf16.mxu0 %v4586
    %4648 = vmatpush1.bf16.msra.mxu0 %v4585
    %4649 = vmatprep.subr.bf16.mxu0 %v4590
    %4650 = vmatpush1.bf16.msra.mxu0 %v4589
    %4651 = vmatprep.subr.bf16.mxu0 %v4594
    %4652 = vmatpush1.bf16.msra.mxu0 %v4593
    %4653 = vmatprep.subr.bf16.mxu0 %v4598
    %4654 = vmatpush1.bf16.msra.mxu0 %v4597
    %4655 = vmatprep.subr.bf16.mxu0 %v4602
    %4656 = vmatpush1.bf16.msra.mxu0 %v4601
    %4657 = vmatprep.subr.bf16.mxu0 %v4606
    %4658 = vmatpush1.bf16.msra.mxu0 %v4605
    %4659 = vmatprep.subr.bf16.mxu0 %v4610
    %4660 = vmatpush1.bf16.msra.mxu0 %v4609
    %4661 = vmatprep.subr.bf16.mxu0 0
    %4662 = vmatpush1.bf16.msra.mxu0 0
    %4663 = vmatprep.subr.bf16.mxu0 0
    %4664 = vmatpush1.bf16.msra.mxu0 0
    %4665 = vmatprep.subr.bf16.mxu0 0
    %4666 = vmatpush1.bf16.msra.mxu0 0
    %4667 = vmatprep.subr.bf16.mxu0 0
    %4668 = vmatpush1.bf16.msra.mxu0 0
    %4669 = vmatprep.subr.bf16.mxu0 0
    %4670 = vmatpush1.bf16.msra.mxu0 0
    %4671 = vmatprep.subr.bf16.mxu0 0
    %4672 = vmatpush1.bf16.msra.mxu0 0
    %4673 = vmatprep.subr.bf16.mxu0 0
    %4674 = vmatpush1.bf16.msra.mxu0 0
    %4675 = vmatprep.subr.bf16.mxu0 0
    %4676 = vmatpush1.bf16.msra.mxu0 0
    %4677 = vmatprep.mubr.bf16.mxu0 0
    %4678 = vmatmul.mubr.bf16.gmra.mrb[0].mxu0 %v3868
    %v4679 = vpop.f32.mrb[0].mxu0
    %v4680 = vadd.f32 %v4163, %v4679
    %v4681 = vpop.f32.mrb[0].mxu0
    %v4682 = vadd.f32 %v4165, %v4681
    %v4683 = vpop.f32.mrb[0].mxu0
    %v4684 = vpop.f32.mrb[0].mxu0
    %4685 = vdwg.mxu0
    %4686 = vmatprep.subr.bf16.mxu0 %v4584
    %4687 = vmatpush1.bf16.msra.mxu0 %v4583
    %4688 = vmatprep.subr.bf16.mxu0 %v4588
    %4689 = vmatpush1.bf16.msra.mxu0 %v4587
    %4690 = vmatprep.subr.bf16.mxu0 %v4592
    %4691 = vmatpush1.bf16.msra.mxu0 %v4591
    %4692 = vmatprep.subr.bf16.mxu0 %v4596
    %4693 = vmatpush1.bf16.msra.mxu0 %v4595
    %4694 = vmatprep.subr.bf16.mxu0 %v4600
    %4695 = vmatpush1.bf16.msra.mxu0 %v4599
    %4696 = vmatprep.subr.bf16.mxu0 %v4604
    %4697 = vmatpush1.bf16.msra.mxu0 %v4603
    %4698 = vmatprep.subr.bf16.mxu0 %v4608
    %4699 = vmatpush1.bf16.msra.mxu0 %v4607
    %4700 = vmatprep.subr.bf16.mxu0 %v4612
    %4701 = vmatpush1.bf16.msra.mxu0 %v4611
    %4702 = vmatprep.subr.bf16.mxu0 0
    %4703 = vmatpush1.bf16.msra.mxu0 0
    %4704 = vmatprep.subr.bf16.mxu0 0
    %4705 = vmatpush1.bf16.msra.mxu0 0
    %4706 = vmatprep.subr.bf16.mxu0 0
    %4707 = vmatpush1.bf16.msra.mxu0 0
    %4708 = vmatprep.subr.bf16.mxu0 0
    %4709 = vmatpush1.bf16.msra.mxu0 0
    %4710 = vmatprep.subr.bf16.mxu0 0
    %4711 = vmatpush1.bf16.msra.mxu0 0
    %4712 = vmatprep.subr.bf16.mxu0 0
    %4713 = vmatpush1.bf16.msra.mxu0 0
    %4714 = vmatprep.subr.bf16.mxu0 0
    %4715 = vmatpush1.bf16.msra.mxu0 0
    %4716 = vmatprep.subr.bf16.mxu0 0
    %4717 = vmatpush1.bf16.msra.mxu0 0
    %4718 = vmatprep.mubr.bf16.mxu0 0
    %4719 = vmatmul.mubr.bf16.gmra.mrb[0].mxu0 %v3868
    %v4720 = vpop.f32.mrb[0].mxu0
    %v4721 = vadd.f32 %v4204, %v4720
    %v4722 = vpop.f32.mrb[0].mxu0
    %v4723 = vadd.f32 %v4206, %v4722
    %v4724 = vpop.f32.mrb[0].mxu0
    %v4725 = vpop.f32.mrb[0].mxu0
    %4726 = vdwg.mxu0
    %v4727 = vld [vmem:[%s6] sm:$0xf]
    %v4729 = vlaneseq
    %v4730 = vshrl.u32 %v4729, 7
    %v4731 = vsub.s32 0, %v4730
    %v4732 = vrot.slane %v4727, %v4731
    %v4733 = vlaneseq
    %v4734 = vshrl.u32 %v4733, 7
    %v4735 = vsub.s32 1, %v4734
    %v4736 = vrot.slane %v4727, %v4735
    %v4737 = vlaneseq
    %v4738 = vshrl.u32 %v4737, 7
    %v4739 = vsub.s32 2, %v4738
    %v4740 = vrot.slane %v4727, %v4739
    %v4741 = vlaneseq
    %v4742 = vshrl.u32 %v4741, 7
    %v4743 = vsub.s32 3, %v4742
    %v4744 = vrot.slane %v4727, %v4743
    %v4749 = vadd.f32 %v4680, %v4732
    %v4750 = vadd.f32 %v4682, %v4736
    %v4751 = vadd.f32 %v4721, %v4740
    %v4752 = vadd.f32 %v4723, %v4744
    %v4753 = vxor.u32 %v4749, 2147483648
    %v4754 = vmul.f32 %v4753, 1.442695
    %v4755 = vpow.pop %v4754
    %v4756 = vadd.f32 %v4755, 1.0
    %v4757 = vrcp.pop %v4756
    %v4758 = vmul.f32 1.0, %v4757
    %v4759 = vxor.u32 %v4750, 2147483648
    %v4760 = vmul.f32 %v4759, 1.442695
    %v4761 = vpow.pop %v4760
    %v4762 = vadd.f32 %v4761, 1.0
    %v4763 = vrcp.pop %v4762
    %v4764 = vmul.f32 1.0, %v4763
    %v4765 = vtanh.pop %v4751
    %v4766 = vxor.u32 %v4752, 2147483648
    %v4767 = vmul.f32 %v4766, 1.442695
    %v4768 = vpow.pop %v4767
    %v4769 = vadd.f32 %v4768, 1.0
    %v4770 = vrcp.pop %v4769
    %v4771 = vmul.f32 1.0, %v4770
    %v4772 = vmul.f32 %v4764, %v3863
    %v4773 = vmul.f32 %v4758, %v4765
    %v4774 = vadd.f32 %v4772, %v4773
    %v4775 = vtanh.pop %v4774
    %v4776 = vmul.f32 %v4771, %v4775
    %v4809 = vunpack.c.l.b16 %v3903
    %v4810 = vunpack.c.h.b16 %v3903
    %v4811 = vunpack.c.l.b16 %v3904
    %v4812 = vunpack.c.h.b16 %v3904
    %v4813 = vunpack.c.l.b16 %v3905
    %v4814 = vunpack.c.h.b16 %v3905
    %v4815 = vunpack.c.l.b16 %v3906
    %v4816 = vunpack.c.h.b16 %v3906
    %v4817 = vunpack.c.l.b16 %v3907
    %v4818 = vunpack.c.h.b16 %v3907
    %v4819 = vunpack.c.l.b16 %v3908
    %v4820 = vunpack.c.h.b16 %v3908
    %v4821 = vunpack.c.l.b16 %v3909
    %v4822 = vunpack.c.h.b16 %v3909
    %v4823 = vunpack.c.l.b16 %v3910
    %v4824 = vunpack.c.h.b16 %v3910
    %v4825 = vunpack.c.l.b16 %v3911
    %v4826 = vunpack.c.h.b16 %v3911
    %v4827 = vunpack.c.l.b16 %v3912
    %v4828 = vunpack.c.h.b16 %v3912
    %v4829 = vunpack.c.l.b16 %v3913
    %v4830 = vunpack.c.h.b16 %v3913
    %v4831 = vunpack.c.l.b16 %v3914
    %v4832 = vunpack.c.h.b16 %v3914
    %v4833 = vunpack.c.l.b16 %v3915
    %v4834 = vunpack.c.h.b16 %v3915
    %v4835 = vunpack.c.l.b16 %v3916
    %v4836 = vunpack.c.h.b16 %v3916
    %v4837 = vunpack.c.l.b16 %v3917
    %v4838 = vunpack.c.h.b16 %v3917
    %v4839 = vunpack.c.l.b16 %v3918
    %v4840 = vunpack.c.h.b16 %v3918
    %v4841 = vunpack.c.l.b16 %v3919
    %v4842 = vunpack.c.h.b16 %v3919
    %v4843 = vunpack.c.l.b16 %v3920
    %v4844 = vunpack.c.h.b16 %v3920
    %v4845 = vunpack.c.l.b16 %v3921
    %v4846 = vunpack.c.h.b16 %v3921
    %v4847 = vunpack.c.l.b16 %v3922
    %v4848 = vunpack.c.h.b16 %v3922
    %v4849 = vunpack.c.l.b16 %v3923
    %v4850 = vunpack.c.h.b16 %v3923
    %v4851 = vunpack.c.l.b16 %v3924
    %v4852 = vunpack.c.h.b16 %v3924
    %v4853 = vunpack.c.l.b16 %v3925
    %v4854 = vunpack.c.h.b16 %v3925
    %v4855 = vunpack.c.l.b16 %v3926
    %v4856 = vunpack.c.h.b16 %v3926
    %v4857 = vunpack.c.l.b16 %v3927
    %v4858 = vunpack.c.h.b16 %v3927
    %v4859 = vunpack.c.l.b16 %v3928
    %v4860 = vunpack.c.h.b16 %v3928
    %v4861 = vunpack.c.l.b16 %v3929
    %v4862 = vunpack.c.h.b16 %v3929
    %v4863 = vunpack.c.l.b16 %v3930
    %v4864 = vunpack.c.h.b16 %v3930
    %v4865 = vunpack.c.l.b16 %v3931
    %v4866 = vunpack.c.h.b16 %v3931
    %v4867 = vunpack.c.l.b16 %v3932
    %v4868 = vunpack.c.h.b16 %v3932
    %v4869 = vunpack.c.l.b16 %v3933
    %v4870 = vunpack.c.h.b16 %v3933
    %v4871 = vunpack.c.l.b16 %v3934
    %v4872 = vunpack.c.h.b16 %v3934
    %v4873 = vpack.c.b16 %v4813, %v4809
    %v4874 = vpack.c.b16 %v4814, %v4810
    %v4875 = vpack.c.b16 %v4815, %v4811
    %v4876 = vpack.c.b16 %v4816, %v4812
    %v4877 = vpack.c.b16 %v4821, %v4817
    %v4878 = vpack.c.b16 %v4822, %v4818
    %v4879 = vpack.c.b16 %v4823, %v4819
    %v4880 = vpack.c.b16 %v4824, %v4820
    %v4881 = vpack.c.b16 %v4829, %v4825
    %v4882 = vpack.c.b16 %v4830, %v4826
    %v4883 = vpack.c.b16 %v4831, %v4827
    %v4884 = vpack.c.b16 %v4832, %v4828
    %v4885 = vpack.c.b16 %v4837, %v4833
    %v4886 = vpack.c.b16 %v4838, %v4834
    %v4887 = vpack.c.b16 %v4839, %v4835
    %v4888 = vpack.c.b16 %v4840, %v4836
    %v4889 = vpack.c.b16 %v4845, %v4841
    %v4890 = vpack.c.b16 %v4846, %v4842
    %v4891 = vpack.c.b16 %v4847, %v4843
    %v4892 = vpack.c.b16 %v4848, %v4844
    %v4893 = vpack.c.b16 %v4853, %v4849
    %v4894 = vpack.c.b16 %v4854, %v4850
    %v4895 = vpack.c.b16 %v4855, %v4851
    %v4896 = vpack.c.b16 %v4856, %v4852
    %v4897 = vpack.c.b16 %v4861, %v4857
    %v4898 = vpack.c.b16 %v4862, %v4858
    %v4899 = vpack.c.b16 %v4863, %v4859
    %v4900 = vpack.c.b16 %v4864, %v4860
    %v4901 = vpack.c.b16 %v4869, %v4865
    %v4902 = vpack.c.b16 %v4870, %v4866
    %v4903 = vpack.c.b16 %v4871, %v4867
    %v4904 = vpack.c.b16 %v4872, %v4868
    %4937 = vmatprep.subr.bf16.mxu0 %v4874
    %4938 = vmatpush1.bf16.msra.mxu0 %v4873
    %4939 = vmatprep.subr.bf16.mxu0 %v4878
    %4940 = vmatpush1.bf16.msra.mxu0 %v4877
    %4941 = vmatprep.subr.bf16.mxu0 %v4882
    %4942 = vmatpush1.bf16.msra.mxu0 %v4881
    %4943 = vmatprep.subr.bf16.mxu0 %v4886
    %4944 = vmatpush1.bf16.msra.mxu0 %v4885
    %4945 = vmatprep.subr.bf16.mxu0 %v4890
    %4946 = vmatpush1.bf16.msra.mxu0 %v4889
    %4947 = vmatprep.subr.bf16.mxu0 %v4894
    %4948 = vmatpush1.bf16.msra.mxu0 %v4893
    %4949 = vmatprep.subr.bf16.mxu0 %v4898
    %4950 = vmatpush1.bf16.msra.mxu0 %v4897
    %4951 = vmatprep.subr.bf16.mxu0 %v4902
    %4952 = vmatpush1.bf16.msra.mxu0 %v4901
    %4953 = vmatprep.subr.bf16.mxu0 0
    %4954 = vmatpush1.bf16.msra.mxu0 0
    %4955 = vmatprep.subr.bf16.mxu0 0
    %4956 = vmatpush1.bf16.msra.mxu0 0
    %4957 = vmatprep.subr.bf16.mxu0 0
    %4958 = vmatpush1.bf16.msra.mxu0 0
    %4959 = vmatprep.subr.bf16.mxu0 0
    %4960 = vmatpush1.bf16.msra.mxu0 0
    %4961 = vmatprep.subr.bf16.mxu0 0
    %4962 = vmatpush1.bf16.msra.mxu0 0
    %4963 = vmatprep.subr.bf16.mxu0 0
    %4964 = vmatpush1.bf16.msra.mxu0 0
    %4965 = vmatprep.subr.bf16.mxu0 0
    %4966 = vmatpush1.bf16.msra.mxu0 0
    %4967 = vmatprep.subr.bf16.mxu0 0
    %4968 = vmatpush1.bf16.msra.mxu0 0
    %4969 = vmatprep.mubr.bf16.mxu0 0
    %4970 = vmatmul.mubr.bf16.gmra.mrb[0].mxu0 %v3902
    %v4971 = vpop.f32.mrb[0].mxu0
    %v4972 = vadd.f32 %v4438, %v4971
    %v4973 = vpop.f32.mrb[0].mxu0
    %v4974 = vadd.f32 %v4440, %v4973
    %v4975 = vpop.f32.mrb[0].mxu0
    %v4976 = vpop.f32.mrb[0].mxu0
    %4977 = vdwg.mxu0
    %4978 = vmatprep.subr.bf16.mxu0 %v4876
    %4979 = vmatpush1.bf16.msra.mxu0 %v4875
    %4980 = vmatprep.subr.bf16.mxu0 %v4880
    %4981 = vmatpush1.bf16.msra.mxu0 %v4879
    %4982 = vmatprep.subr.bf16.mxu0 %v4884
    %4983 = vmatpush1.bf16.msra.mxu0 %v4883
    %4984 = vmatprep.subr.bf16.mxu0 %v4888
    %4985 = vmatpush1.bf16.msra.mxu0 %v4887
    %4986 = vmatprep.subr.bf16.mxu0 %v4892
    %4987 = vmatpush1.bf16.msra.mxu0 %v4891
    %4988 = vmatprep.subr.bf16.mxu0 %v4896
    %4989 = vmatpush1.bf16.msra.mxu0 %v4895
    %4990 = vmatprep.subr.bf16.mxu0 %v4900
    %4991 = vmatpush1.bf16.msra.mxu0 %v4899
    %4992 = vmatprep.subr.bf16.mxu0 %v4904
    %4993 = vmatpush1.bf16.msra.mxu0 %v4903
    %4994 = vmatprep.subr.bf16.mxu0 0
    %4995 = vmatpush1.bf16.msra.mxu0 0
    %4996 = vmatprep.subr.bf16.mxu0 0
    %4997 = vmatpush1.bf16.msra.mxu0 0
    %4998 = vmatprep.subr.bf16.mxu0 0
    %4999 = vmatpush1.bf16.msra.mxu0 0
    %5000 = vmatprep.subr.bf16.mxu0 0
    %5001 = vmatpush1.bf16.msra.mxu0 0
    %5002 = vmatprep.subr.bf16.mxu0 0
    %5003 = vmatpush1.bf16.msra.mxu0 0
    %5004 = vmatprep.subr.bf16.mxu0 0
    %5005 = vmatpush1.bf16.msra.mxu0 0
    %5006 = vmatprep.subr.bf16.mxu0 0
    %5007 = vmatpush1.bf16.msra.mxu0 0
    %5008 = vmatprep.subr.bf16.mxu0 0
    %5009 = vmatpush1.bf16.msra.mxu0 0
    %5010 = vmatprep.mubr.bf16.mxu0 0
    %5011 = vmatmul.mubr.bf16.gmra.mrb[0].mxu0 %v3902
    %v5012 = vpop.f32.mrb[0].mxu0
    %v5013 = vadd.f32 %v4479, %v5012
    %v5014 = vpop.f32.mrb[0].mxu0
    %v5015 = vadd.f32 %v4481, %v5014
    %v5016 = vpop.f32.mrb[0].mxu0
    %v5017 = vpop.f32.mrb[0].mxu0
    %5018 = vdwg.mxu0
    %v5019 = vld [vmem:[%s1299] sm:$0xf]
    %v5021 = vlaneseq
    %v5022 = vshrl.u32 %v5021, 7
    %v5023 = vsub.s32 0, %v5022
    %v5024 = vrot.slane %v5019, %v5023
    %v5025 = vlaneseq
    %v5026 = vshrl.u32 %v5025, 7
    %v5027 = vsub.s32 1, %v5026
    %v5028 = vrot.slane %v5019, %v5027
    %v5029 = vlaneseq
    %v5030 = vshrl.u32 %v5029, 7
    %v5031 = vsub.s32 2, %v5030
    %v5032 = vrot.slane %v5019, %v5031
    %v5033 = vlaneseq
    %v5034 = vshrl.u32 %v5033, 7
    %v5035 = vsub.s32 3, %v5034
    %v5036 = vrot.slane %v5019, %v5035
    %v5041 = vadd.f32 %v4972, %v5024
    %v5042 = vadd.f32 %v4974, %v5028
    %v5043 = vadd.f32 %v5013, %v5032
    %v5044 = vadd.f32 %v5015, %v5036
    %v5045 = vxor.u32 %v5041, 2147483648
    %v5046 = vmul.f32 %v5045, 1.442695
    %v5047 = vpow.pop %v5046
    %v5048 = vadd.f32 %v5047, 1.0
    %v5049 = vrcp.pop %v5048
    %v5050 = vmul.f32 1.0, %v5049
    %v5051 = vxor.u32 %v5042, 2147483648
    %v5052 = vmul.f32 %v5051, 1.442695
    %v5053 = vpow.pop %v5052
    %v5054 = vadd.f32 %v5053, 1.0
    %v5055 = vrcp.pop %v5054
    %v5056 = vmul.f32 1.0, %v5055
    %v5057 = vtanh.pop %v5043
    %v5058 = vxor.u32 %v5044, 2147483648
    %v5059 = vmul.f32 %v5058, 1.442695
    %v5060 = vpow.pop %v5059
    %v5061 = vadd.f32 %v5060, 1.0
    %v5062 = vrcp.pop %v5061
    %v5063 = vmul.f32 1.0, %v5062
    %v5064 = vmul.f32 %v5056, %v3866
    %v5065 = vmul.f32 %v5050, %v5057
    %v5066 = vadd.f32 %v5064, %v5065
    %v5067 = vtanh.pop %v5066
    %v5068 = vmul.f32 %v5063, %v5067
    %5070 = vset.pattern.permute.xlu0 0
    %5071 = vperm.xlu0 %5070, %v113
    %v5072 = vpop.permute.xlu0 %5071
    %v5074 = vmul.f32 %v5072, %v4776
    %5076 = vset.pattern.permute.xlu0 0
    %5077 = vperm.xlu0 %5076, %v122
    %v5078 = vpop.permute.xlu0 %5077
    %v5080 = vmul.f32 %v5078, %v5068
    %v5081 = vpack.c.bf16 %v5074, %v5074
    %s5082 = scalar_lea.vmem [#allocation11], 3
    %5083 = vst [vmem:[%s5082] sm:$0x1] %v5081
    %v5084 = vpack.c.bf16 %v5080, %v5080
    %s5085 = scalar_lea.vmem [#allocation12], 4
    %5086 = vst [vmem:[%s5085] sm:$0x1] %v5084
    %5088 = vset.pattern.permute.xlu0 0
    %5089 = vperm.xlu0 %5088, %v129
    %v5090 = vpop.permute.xlu0 %5089
    %v5092 = vmul.f32 %v5090, %v3853
    %v5093 = vadd.f32 %v5074, %v5092
    %5095 = vset.pattern.permute.xlu0 0
    %5096 = vperm.xlu0 %5095, %v138
    %v5097 = vpop.permute.xlu0 %5096
    %v5099 = vmul.f32 %v5097, %v3860
    %v5100 = vadd.f32 %v5080, %v5099
    %v5101 = vmul.f32 %v5072, %v4774
    %v5102 = vmul.f32 %v5090, %v3863
    %v5103 = vadd.f32 %v5101, %v5102
    %v5104 = vmul.f32 %v5078, %v5066
    %v5105 = vmul.f32 %v5097, %v3866
    %v5106 = vadd.f32 %v5104, %v5105
    %s5107 = scalar_lea.vmem %s0, 4
    %v5108 = vld [vmem:[%s5107] sm:$0x1]
    %v5109 = vld [vmem:[#allocation6] sm:$0xff]
    %v5110 = vld [vmem:[#allocation6 + $0x8] sm:$0xff]
    %v5111 = vld [vmem:[#allocation6 + $0x10] sm:$0xff]
    %v5112 = vld [vmem:[#allocation6 + $0x18] sm:$0xff]
    %v5113 = vld [vmem:[#allocation6 + $0x20] sm:$0xff]
    %v5114 = vld [vmem:[#allocation6 + $0x28] sm:$0xff]
    %v5115 = vld [vmem:[#allocation6 + $0x30] sm:$0xff]
    %v5116 = vld [vmem:[#allocation6 + $0x38] sm:$0xff]
    %v5117 = vld [vmem:[#allocation6 + $0x40] sm:$0xff]
    %v5118 = vld [vmem:[#allocation6 + $0x48] sm:$0xff]
    %v5119 = vld [vmem:[#allocation6 + $0x50] sm:$0xff]
    %v5120 = vld [vmem:[#allocation6 + $0x58] sm:$0xff]
    %v5121 = vld [vmem:[#allocation6 + $0x60] sm:$0xff]
    %v5122 = vld [vmem:[#allocation6 + $0x68] sm:$0xff]
    %v5123 = vld [vmem:[#allocation6 + $0x70] sm:$0xff]
    %v5124 = vld [vmem:[#allocation6 + $0x78] sm:$0xff]
    %v5125 = vld [vmem:[#allocation6 + $0x80] sm:$0xff]
    %v5126 = vld [vmem:[#allocation6 + $0x88] sm:$0xff]
    %v5127 = vld [vmem:[#allocation6 + $0x90] sm:$0xff]
    %v5128 = vld [vmem:[#allocation6 + $0x98] sm:$0xff]
    %v5129 = vld [vmem:[#allocation6 + $0xa0] sm:$0xff]
    %v5130 = vld [vmem:[#allocation6 + $0xa8] sm:$0xff]
    %v5131 = vld [vmem:[#allocation6 + $0xb0] sm:$0xff]
    %v5132 = vld [vmem:[#allocation6 + $0xb8] sm:$0xff]
    %v5133 = vld [vmem:[#allocation6 + $0xc0] sm:$0xff]
    %v5134 = vld [vmem:[#allocation6 + $0xc8] sm:$0xff]
    %v5135 = vld [vmem:[#allocation6 + $0xd0] sm:$0xff]
    %v5136 = vld [vmem:[#allocation6 + $0xd8] sm:$0xff]
    %v5137 = vld [vmem:[#allocation6 + $0xe0] sm:$0xff]
    %v5138 = vld [vmem:[#allocation6 + $0xe8] sm:$0xff]
    %v5139 = vld [vmem:[#allocation6 + $0xf0] sm:$0xff]
    %v5140 = vld [vmem:[#allocation6 + $0xf8] sm:$0xff]
    %s5141 = scalar_lea.vmem %s88, 3
    %v5142 = vld [vmem:[%s5141] sm:$0x1]
    %v5143 = vld [vmem:[%s181] sm:$0xff]
    %v5144 = vld [vmem:[%s181 + $0x8] sm:$0xff]
    %v5145 = vld [vmem:[%s181 + $0x10] sm:$0xff]
    %v5146 = vld [vmem:[%s181 + $0x18] sm:$0xff]
    %v5147 = vld [vmem:[%s181 + $0x20] sm:$0xff]
    %v5148 = vld [vmem:[%s181 + $0x28] sm:$0xff]
    %v5149 = vld [vmem:[%s181 + $0x30] sm:$0xff]
    %v5150 = vld [vmem:[%s181 + $0x38] sm:$0xff]
    %v5151 = vld [vmem:[%s181 + $0x40] sm:$0xff]
    %v5152 = vld [vmem:[%s181 + $0x48] sm:$0xff]
    %v5153 = vld [vmem:[%s181 + $0x50] sm:$0xff]
    %v5154 = vld [vmem:[%s181 + $0x58] sm:$0xff]
    %v5155 = vld [vmem:[%s181 + $0x60] sm:$0xff]
    %v5156 = vld [vmem:[%s181 + $0x68] sm:$0xff]
    %v5157 = vld [vmem:[%s181 + $0x70] sm:$0xff]
    %v5158 = vld [vmem:[%s181 + $0x78] sm:$0xff]
    %v5159 = vld [vmem:[%s181 + $0x80] sm:$0xff]
    %v5160 = vld [vmem:[%s181 + $0x88] sm:$0xff]
    %v5161 = vld [vmem:[%s181 + $0x90] sm:$0xff]
    %v5162 = vld [vmem:[%s181 + $0x98] sm:$0xff]
    %v5163 = vld [vmem:[%s181 + $0xa0] sm:$0xff]
    %v5164 = vld [vmem:[%s181 + $0xa8] sm:$0xff]
    %v5165 = vld [vmem:[%s181 + $0xb0] sm:$0xff]
    %v5166 = vld [vmem:[%s181 + $0xb8] sm:$0xff]
    %v5167 = vld [vmem:[%s181 + $0xc0] sm:$0xff]
    %v5168 = vld [vmem:[%s181 + $0xc8] sm:$0xff]
    %v5169 = vld [vmem:[%s181 + $0xd0] sm:$0xff]
    %v5170 = vld [vmem:[%s181 + $0xd8] sm:$0xff]
    %v5171 = vld [vmem:[%s181 + $0xe0] sm:$0xff]
    %v5172 = vld [vmem:[%s181 + $0xe8] sm:$0xff]
    %v5173 = vld [vmem:[%s181 + $0xf0] sm:$0xff]
    %v5174 = vld [vmem:[%s181 + $0xf8] sm:$0xff]
    %v5175 = vpack.c.bf16 %v5093, %v5093
    %v5176 = vld [vmem:[#allocation9] sm:$0xff]
    %v5177 = vld [vmem:[#allocation9 + $0x8] sm:$0xff]
    %v5178 = vld [vmem:[#allocation9 + $0x10] sm:$0xff]
    %v5179 = vld [vmem:[#allocation9 + $0x18] sm:$0xff]
    %v5180 = vld [vmem:[#allocation9 + $0x20] sm:$0xff]
    %v5181 = vld [vmem:[#allocation9 + $0x28] sm:$0xff]
    %v5182 = vld [vmem:[#allocation9 + $0x30] sm:$0xff]
    %v5183 = vld [vmem:[#allocation9 + $0x38] sm:$0xff]
    %v5184 = vld [vmem:[#allocation9 + $0x40] sm:$0xff]
    %v5185 = vld [vmem:[#allocation9 + $0x48] sm:$0xff]
    %v5186 = vld [vmem:[#allocation9 + $0x50] sm:$0xff]
    %v5187 = vld [vmem:[#allocation9 + $0x58] sm:$0xff]
    %v5188 = vld [vmem:[#allocation9 + $0x60] sm:$0xff]
    %v5189 = vld [vmem:[#allocation9 + $0x68] sm:$0xff]
    %v5190 = vld [vmem:[#allocation9 + $0x70] sm:$0xff]
    %v5191 = vld [vmem:[#allocation9 + $0x78] sm:$0xff]
    %v5192 = vld [vmem:[#allocation9 + $0x80] sm:$0xff]
    %v5193 = vld [vmem:[#allocation9 + $0x88] sm:$0xff]
    %v5194 = vld [vmem:[#allocation9 + $0x90] sm:$0xff]
    %v5195 = vld [vmem:[#allocation9 + $0x98] sm:$0xff]
    %v5196 = vld [vmem:[#allocation9 + $0xa0] sm:$0xff]
    %v5197 = vld [vmem:[#allocation9 + $0xa8] sm:$0xff]
    %v5198 = vld [vmem:[#allocation9 + $0xb0] sm:$0xff]
    %v5199 = vld [vmem:[#allocation9 + $0xb8] sm:$0xff]
    %v5200 = vld [vmem:[#allocation9 + $0xc0] sm:$0xff]
    %v5201 = vld [vmem:[#allocation9 + $0xc8] sm:$0xff]
    %v5202 = vld [vmem:[#allocation9 + $0xd0] sm:$0xff]
    %v5203 = vld [vmem:[#allocation9 + $0xd8] sm:$0xff]
    %v5204 = vld [vmem:[#allocation9 + $0xe0] sm:$0xff]
    %v5205 = vld [vmem:[#allocation9 + $0xe8] sm:$0xff]
    %v5206 = vld [vmem:[#allocation9 + $0xf0] sm:$0xff]
    %v5207 = vld [vmem:[#allocation9 + $0xf8] sm:$0xff]
    %v5240 = vunpack.c.l.b16 %v5176
    %v5241 = vunpack.c.h.b16 %v5176
    %v5242 = vunpack.c.l.b16 %v5177
    %v5243 = vunpack.c.h.b16 %v5177
    %v5244 = vunpack.c.l.b16 %v5178
    %v5245 = vunpack.c.h.b16 %v5178
    %v5246 = vunpack.c.l.b16 %v5179
    %v5247 = vunpack.c.h.b16 %v5179
    %v5248 = vunpack.c.l.b16 %v5180
    %v5249 = vunpack.c.h.b16 %v5180
    %v5250 = vunpack.c.l.b16 %v5181
    %v5251 = vunpack.c.h.b16 %v5181
    %v5252 = vunpack.c.l.b16 %v5182
    %v5253 = vunpack.c.h.b16 %v5182
    %v5254 = vunpack.c.l.b16 %v5183
    %v5255 = vunpack.c.h.b16 %v5183
    %v5256 = vunpack.c.l.b16 %v5184
    %v5257 = vunpack.c.h.b16 %v5184
    %v5258 = vunpack.c.l.b16 %v5185
    %v5259 = vunpack.c.h.b16 %v5185
    %v5260 = vunpack.c.l.b16 %v5186
    %v5261 = vunpack.c.h.b16 %v5186
    %v5262 = vunpack.c.l.b16 %v5187
    %v5263 = vunpack.c.h.b16 %v5187
    %v5264 = vunpack.c.l.b16 %v5188
    %v5265 = vunpack.c.h.b16 %v5188
    %v5266 = vunpack.c.l.b16 %v5189
    %v5267 = vunpack.c.h.b16 %v5189
    %v5268 = vunpack.c.l.b16 %v5190
    %v5269 = vunpack.c.h.b16 %v5190
    %v5270 = vunpack.c.l.b16 %v5191
    %v5271 = vunpack.c.h.b16 %v5191
    %v5272 = vunpack.c.l.b16 %v5192
    %v5273 = vunpack.c.h.b16 %v5192
    %v5274 = vunpack.c.l.b16 %v5193
    %v5275 = vunpack.c.h.b16 %v5193
    %v5276 = vunpack.c.l.b16 %v5194
    %v5277 = vunpack.c.h.b16 %v5194
    %v5278 = vunpack.c.l.b16 %v5195
    %v5279 = vunpack.c.h.b16 %v5195
    %v5280 = vunpack.c.l.b16 %v5196
    %v5281 = vunpack.c.h.b16 %v5196
    %v5282 = vunpack.c.l.b16 %v5197
    %v5283 = vunpack.c.h.b16 %v5197
    %v5284 = vunpack.c.l.b16 %v5198
    %v5285 = vunpack.c.h.b16 %v5198
    %v5286 = vunpack.c.l.b16 %v5199
    %v5287 = vunpack.c.h.b16 %v5199
    %v5288 = vunpack.c.l.b16 %v5200
    %v5289 = vunpack.c.h.b16 %v5200
    %v5290 = vunpack.c.l.b16 %v5201
    %v5291 = vunpack.c.h.b16 %v5201
    %v5292 = vunpack.c.l.b16 %v5202
    %v5293 = vunpack.c.h.b16 %v5202
    %v5294 = vunpack.c.l.b16 %v5203
    %v5295 = vunpack.c.h.b16 %v5203
    %v5296 = vunpack.c.l.b16 %v5204
    %v5297 = vunpack.c.h.b16 %v5204
    %v5298 = vunpack.c.l.b16 %v5205
    %v5299 = vunpack.c.h.b16 %v5205
    %v5300 = vunpack.c.l.b16 %v5206
    %v5301 = vunpack.c.h.b16 %v5206
    %v5302 = vunpack.c.l.b16 %v5207
    %v5303 = vunpack.c.h.b16 %v5207
    %v5304 = vpack.c.b16 %v5244, %v5240
    %v5305 = vpack.c.b16 %v5245, %v5241
    %v5306 = vpack.c.b16 %v5246, %v5242
    %v5307 = vpack.c.b16 %v5247, %v5243
    %v5308 = vpack.c.b16 %v5252, %v5248
    %v5309 = vpack.c.b16 %v5253, %v5249
    %v5310 = vpack.c.b16 %v5254, %v5250
    %v5311 = vpack.c.b16 %v5255, %v5251
    %v5312 = vpack.c.b16 %v5260, %v5256
    %v5313 = vpack.c.b16 %v5261, %v5257
    %v5314 = vpack.c.b16 %v5262, %v5258
    %v5315 = vpack.c.b16 %v5263, %v5259
    %v5316 = vpack.c.b16 %v5268, %v5264
    %v5317 = vpack.c.b16 %v5269, %v5265
    %v5318 = vpack.c.b16 %v5270, %v5266
    %v5319 = vpack.c.b16 %v5271, %v5267
    %v5320 = vpack.c.b16 %v5276, %v5272
    %v5321 = vpack.c.b16 %v5277, %v5273
    %v5322 = vpack.c.b16 %v5278, %v5274
    %v5323 = vpack.c.b16 %v5279, %v5275
    %v5324 = vpack.c.b16 %v5284, %v5280
    %v5325 = vpack.c.b16 %v5285, %v5281
    %v5326 = vpack.c.b16 %v5286, %v5282
    %v5327 = vpack.c.b16 %v5287, %v5283
    %v5328 = vpack.c.b16 %v5292, %v5288
    %v5329 = vpack.c.b16 %v5293, %v5289
    %v5330 = vpack.c.b16 %v5294, %v5290
    %v5331 = vpack.c.b16 %v5295, %v5291
    %v5332 = vpack.c.b16 %v5300, %v5296
    %v5333 = vpack.c.b16 %v5301, %v5297
    %v5334 = vpack.c.b16 %v5302, %v5298
    %v5335 = vpack.c.b16 %v5303, %v5299
    %5368 = vmatprep.subr.bf16.mxu0 %v5305
    %5369 = vmatpush1.bf16.msra.mxu0 %v5304
    %5370 = vmatprep.subr.bf16.mxu0 %v5309
    %5371 = vmatpush1.bf16.msra.mxu0 %v5308
    %5372 = vmatprep.subr.bf16.mxu0 %v5313
    %5373 = vmatpush1.bf16.msra.mxu0 %v5312
    %5374 = vmatprep.subr.bf16.mxu0 %v5317
    %5375 = vmatpush1.bf16.msra.mxu0 %v5316
    %5376 = vmatprep.subr.bf16.mxu0 %v5321
    %5377 = vmatpush1.bf16.msra.mxu0 %v5320
    %5378 = vmatprep.subr.bf16.mxu0 %v5325
    %5379 = vmatpush1.bf16.msra.mxu0 %v5324
    %5380 = vmatprep.subr.bf16.mxu0 %v5329
    %5381 = vmatpush1.bf16.msra.mxu0 %v5328
    %5382 = vmatprep.subr.bf16.mxu0 %v5333
    %5383 = vmatpush1.bf16.msra.mxu0 %v5332
    %5384 = vmatprep.subr.bf16.mxu0 0
    %5385 = vmatpush1.bf16.msra.mxu0 0
    %5386 = vmatprep.subr.bf16.mxu0 0
    %5387 = vmatpush1.bf16.msra.mxu0 0
    %5388 = vmatprep.subr.bf16.mxu0 0
    %5389 = vmatpush1.bf16.msra.mxu0 0
    %5390 = vmatprep.subr.bf16.mxu0 0
    %5391 = vmatpush1.bf16.msra.mxu0 0
    %5392 = vmatprep.subr.bf16.mxu0 0
    %5393 = vmatpush1.bf16.msra.mxu0 0
    %5394 = vmatprep.subr.bf16.mxu0 0
    %5395 = vmatpush1.bf16.msra.mxu0 0
    %5396 = vmatprep.subr.bf16.mxu0 0
    %5397 = vmatpush1.bf16.msra.mxu0 0
    %5398 = vmatprep.subr.bf16.mxu0 0
    %5399 = vmatpush1.bf16.msra.mxu0 0
    %5400 = vmatprep.mubr.bf16.mxu0 0
    %5401 = vmatmul.mubr.bf16.gmra.mrb[0].mxu0 %v5175
    %v5402 = vpop.f32.mrb[0].mxu0
    %v5403 = vadd.f32 0.0, %v5402
    %v5404 = vpop.f32.mrb[0].mxu0
    %v5405 = vadd.f32 0.0, %v5404
    %v5406 = vpop.f32.mrb[0].mxu0
    %v5407 = vpop.f32.mrb[0].mxu0
    %5408 = vdwg.mxu0
    %5409 = vmatprep.subr.bf16.mxu0 %v5307
    %5410 = vmatpush1.bf16.msra.mxu0 %v5306
    %5411 = vmatprep.subr.bf16.mxu0 %v5311
    %5412 = vmatpush1.bf16.msra.mxu0 %v5310
    %5413 = vmatprep.subr.bf16.mxu0 %v5315
    %5414 = vmatpush1.bf16.msra.mxu0 %v5314
    %5415 = vmatprep.subr.bf16.mxu0 %v5319
    %5416 = vmatpush1.bf16.msra.mxu0 %v5318
    %5417 = vmatprep.subr.bf16.mxu0 %v5323
    %5418 = vmatpush1.bf16.msra.mxu0 %v5322
    %5419 = vmatprep.subr.bf16.mxu0 %v5327
    %5420 = vmatpush1.bf16.msra.mxu0 %v5326
    %5421 = vmatprep.subr.bf16.mxu0 %v5331
    %5422 = vmatpush1.bf16.msra.mxu0 %v5330
    %5423 = vmatprep.subr.bf16.mxu0 %v5335
    %5424 = vmatpush1.bf16.msra.mxu0 %v5334
    %5425 = vmatprep.subr.bf16.mxu0 0
    %5426 = vmatpush1.bf16.msra.mxu0 0
    %5427 = vmatprep.subr.bf16.mxu0 0
    %5428 = vmatpush1.bf16.msra.mxu0 0
    %5429 = vmatprep.subr.bf16.mxu0 0
    %5430 = vmatpush1.bf16.msra.mxu0 0
    %5431 = vmatprep.subr.bf16.mxu0 0
    %5432 = vmatpush1.bf16.msra.mxu0 0
    %5433 = vmatprep.subr.bf16.mxu0 0
    %5434 = vmatpush1.bf16.msra.mxu0 0
    %5435 = vmatprep.subr.bf16.mxu0 0
    %5436 = vmatpush1.bf16.msra.mxu0 0
    %5437 = vmatprep.subr.bf16.mxu0 0
    %5438 = vmatpush1.bf16.msra.mxu0 0
    %5439 = vmatprep.subr.bf16.mxu0 0
    %5440 = vmatpush1.bf16.msra.mxu0 0
    %5441 = vmatprep.mubr.bf16.mxu0 0
    %5442 = vmatmul.mubr.bf16.gmra.mrb[0].mxu0 %v5175
    %v5443 = vpop.f32.mrb[0].mxu0
    %v5444 = vadd.f32 0.0, %v5443
    %v5445 = vpop.f32.mrb[0].mxu0
    %v5446 = vadd.f32 0.0, %v5445
    %v5447 = vpop.f32.mrb[0].mxu0
    %v5448 = vpop.f32.mrb[0].mxu0
    %5449 = vdwg.mxu0
    %v5450 = vpack.c.bf16 %v5100, %v5100
    %v5451 = vld [vmem:[%s490] sm:$0xff]
    %v5452 = vld [vmem:[%s490 + $0x8] sm:$0xff]
    %v5453 = vld [vmem:[%s490 + $0x10] sm:$0xff]
    %v5454 = vld [vmem:[%s490 + $0x18] sm:$0xff]
    %v5455 = vld [vmem:[%s490 + $0x20] sm:$0xff]
    %v5456 = vld [vmem:[%s490 + $0x28] sm:$0xff]
    %v5457 = vld [vmem:[%s490 + $0x30] sm:$0xff]
    %v5458 = vld [vmem:[%s490 + $0x38] sm:$0xff]
    %v5459 = vld [vmem:[%s490 + $0x40] sm:$0xff]
    %v5460 = vld [vmem:[%s490 + $0x48] sm:$0xff]
    %v5461 = vld [vmem:[%s490 + $0x50] sm:$0xff]
    %v5462 = vld [vmem:[%s490 + $0x58] sm:$0xff]
    %v5463 = vld [vmem:[%s490 + $0x60] sm:$0xff]
    %v5464 = vld [vmem:[%s490 + $0x68] sm:$0xff]
    %v5465 = vld [vmem:[%s490 + $0x70] sm:$0xff]
    %v5466 = vld [vmem:[%s490 + $0x78] sm:$0xff]
    %v5467 = vld [vmem:[%s490 + $0x80] sm:$0xff]
    %v5468 = vld [vmem:[%s490 + $0x88] sm:$0xff]
    %v5469 = vld [vmem:[%s490 + $0x90] sm:$0xff]
    %v5470 = vld [vmem:[%s490 + $0x98] sm:$0xff]
    %v5471 = vld [vmem:[%s490 + $0xa0] sm:$0xff]
    %v5472 = vld [vmem:[%s490 + $0xa8] sm:$0xff]
    %v5473 = vld [vmem:[%s490 + $0xb0] sm:$0xff]
    %v5474 = vld [vmem:[%s490 + $0xb8] sm:$0xff]
    %v5475 = vld [vmem:[%s490 + $0xc0] sm:$0xff]
    %v5476 = vld [vmem:[%s490 + $0xc8] sm:$0xff]
    %v5477 = vld [vmem:[%s490 + $0xd0] sm:$0xff]
    %v5478 = vld [vmem:[%s490 + $0xd8] sm:$0xff]
    %v5479 = vld [vmem:[%s490 + $0xe0] sm:$0xff]
    %v5480 = vld [vmem:[%s490 + $0xe8] sm:$0xff]
    %v5481 = vld [vmem:[%s490 + $0xf0] sm:$0xff]
    %v5482 = vld [vmem:[%s490 + $0xf8] sm:$0xff]
    %v5515 = vunpack.c.l.b16 %v5451
    %v5516 = vunpack.c.h.b16 %v5451
    %v5517 = vunpack.c.l.b16 %v5452
    %v5518 = vunpack.c.h.b16 %v5452
    %v5519 = vunpack.c.l.b16 %v5453
    %v5520 = vunpack.c.h.b16 %v5453
    %v5521 = vunpack.c.l.b16 %v5454
    %v5522 = vunpack.c.h.b16 %v5454
    %v5523 = vunpack.c.l.b16 %v5455
    %v5524 = vunpack.c.h.b16 %v5455
    %v5525 = vunpack.c.l.b16 %v5456
    %v5526 = vunpack.c.h.b16 %v5456
    %v5527 = vunpack.c.l.b16 %v5457
    %v5528 = vunpack.c.h.b16 %v5457
    %v5529 = vunpack.c.l.b16 %v5458
    %v5530 = vunpack.c.h.b16 %v5458
    %v5531 = vunpack.c.l.b16 %v5459
    %v5532 = vunpack.c.h.b16 %v5459
    %v5533 = vunpack.c.l.b16 %v5460
    %v5534 = vunpack.c.h.b16 %v5460
    %v5535 = vunpack.c.l.b16 %v5461
    %v5536 = vunpack.c.h.b16 %v5461
    %v5537 = vunpack.c.l.b16 %v5462
    %v5538 = vunpack.c.h.b16 %v5462
    %v5539 = vunpack.c.l.b16 %v5463
    %v5540 = vunpack.c.h.b16 %v5463
    %v5541 = vunpack.c.l.b16 %v5464
    %v5542 = vunpack.c.h.b16 %v5464
    %v5543 = vunpack.c.l.b16 %v5465
    %v5544 = vunpack.c.h.b16 %v5465
    %v5545 = vunpack.c.l.b16 %v5466
    %v5546 = vunpack.c.h.b16 %v5466
    %v5547 = vunpack.c.l.b16 %v5467
    %v5548 = vunpack.c.h.b16 %v5467
    %v5549 = vunpack.c.l.b16 %v5468
    %v5550 = vunpack.c.h.b16 %v5468
    %v5551 = vunpack.c.l.b16 %v5469
    %v5552 = vunpack.c.h.b16 %v5469
    %v5553 = vunpack.c.l.b16 %v5470
    %v5554 = vunpack.c.h.b16 %v5470
    %v5555 = vunpack.c.l.b16 %v5471
    %v5556 = vunpack.c.h.b16 %v5471
    %v5557 = vunpack.c.l.b16 %v5472
    %v5558 = vunpack.c.h.b16 %v5472
    %v5559 = vunpack.c.l.b16 %v5473
    %v5560 = vunpack.c.h.b16 %v5473
    %v5561 = vunpack.c.l.b16 %v5474
    %v5562 = vunpack.c.h.b16 %v5474
    %v5563 = vunpack.c.l.b16 %v5475
    %v5564 = vunpack.c.h.b16 %v5475
    %v5565 = vunpack.c.l.b16 %v5476
    %v5566 = vunpack.c.h.b16 %v5476
    %v5567 = vunpack.c.l.b16 %v5477
    %v5568 = vunpack.c.h.b16 %v5477
    %v5569 = vunpack.c.l.b16 %v5478
    %v5570 = vunpack.c.h.b16 %v5478
    %v5571 = vunpack.c.l.b16 %v5479
    %v5572 = vunpack.c.h.b16 %v5479
    %v5573 = vunpack.c.l.b16 %v5480
    %v5574 = vunpack.c.h.b16 %v5480
    %v5575 = vunpack.c.l.b16 %v5481
    %v5576 = vunpack.c.h.b16 %v5481
    %v5577 = vunpack.c.l.b16 %v5482
    %v5578 = vunpack.c.h.b16 %v5482
    %v5579 = vpack.c.b16 %v5519, %v5515
    %v5580 = vpack.c.b16 %v5520, %v5516
    %v5581 = vpack.c.b16 %v5521, %v5517
    %v5582 = vpack.c.b16 %v5522, %v5518
    %v5583 = vpack.c.b16 %v5527, %v5523
    %v5584 = vpack.c.b16 %v5528, %v5524
    %v5585 = vpack.c.b16 %v5529, %v5525
    %v5586 = vpack.c.b16 %v5530, %v5526
    %v5587 = vpack.c.b16 %v5535, %v5531
    %v5588 = vpack.c.b16 %v5536, %v5532
    %v5589 = vpack.c.b16 %v5537, %v5533
    %v5590 = vpack.c.b16 %v5538, %v5534
    %v5591 = vpack.c.b16 %v5543, %v5539
    %v5592 = vpack.c.b16 %v5544, %v5540
    %v5593 = vpack.c.b16 %v5545, %v5541
    %v5594 = vpack.c.b16 %v5546, %v5542
    %v5595 = vpack.c.b16 %v5551, %v5547
    %v5596 = vpack.c.b16 %v5552, %v5548
    %v5597 = vpack.c.b16 %v5553, %v5549
    %v5598 = vpack.c.b16 %v5554, %v5550
    %v5599 = vpack.c.b16 %v5559, %v5555
    %v5600 = vpack.c.b16 %v5560, %v5556
    %v5601 = vpack.c.b16 %v5561, %v5557
    %v5602 = vpack.c.b16 %v5562, %v5558
    %v5603 = vpack.c.b16 %v5567, %v5563
    %v5604 = vpack.c.b16 %v5568, %v5564
    %v5605 = vpack.c.b16 %v5569, %v5565
    %v5606 = vpack.c.b16 %v5570, %v5566
    %v5607 = vpack.c.b16 %v5575, %v5571
    %v5608 = vpack.c.b16 %v5576, %v5572
    %v5609 = vpack.c.b16 %v5577, %v5573
    %v5610 = vpack.c.b16 %v5578, %v5574
    %5643 = vmatprep.subr.bf16.mxu0 %v5580
    %5644 = vmatpush1.bf16.msra.mxu0 %v5579
    %5645 = vmatprep.subr.bf16.mxu0 %v5584
    %5646 = vmatpush1.bf16.msra.mxu0 %v5583
    %5647 = vmatprep.subr.bf16.mxu0 %v5588
    %5648 = vmatpush1.bf16.msra.mxu0 %v5587
    %5649 = vmatprep.subr.bf16.mxu0 %v5592
    %5650 = vmatpush1.bf16.msra.mxu0 %v5591
    %5651 = vmatprep.subr.bf16.mxu0 %v5596
    %5652 = vmatpush1.bf16.msra.mxu0 %v5595
    %5653 = vmatprep.subr.bf16.mxu0 %v5600
    %5654 = vmatpush1.bf16.msra.mxu0 %v5599
    %5655 = vmatprep.subr.bf16.mxu0 %v5604
    %5656 = vmatpush1.bf16.msra.mxu0 %v5603
    %5657 = vmatprep.subr.bf16.mxu0 %v5608
    %5658 = vmatpush1.bf16.msra.mxu0 %v5607
    %5659 = vmatprep.subr.bf16.mxu0 0
    %5660 = vmatpush1.bf16.msra.mxu0 0
    %5661 = vmatprep.subr.bf16.mxu0 0
    %5662 = vmatpush1.bf16.msra.mxu0 0
    %5663 = vmatprep.subr.bf16.mxu0 0
    %5664 = vmatpush1.bf16.msra.mxu0 0
    %5665 = vmatprep.subr.bf16.mxu0 0
    %5666 = vmatpush1.bf16.msra.mxu0 0
    %5667 = vmatprep.subr.bf16.mxu0 0
    %5668 = vmatpush1.bf16.msra.mxu0 0
    %5669 = vmatprep.subr.bf16.mxu0 0
    %5670 = vmatpush1.bf16.msra.mxu0 0
    %5671 = vmatprep.subr.bf16.mxu0 0
    %5672 = vmatpush1.bf16.msra.mxu0 0
    %5673 = vmatprep.subr.bf16.mxu0 0
    %5674 = vmatpush1.bf16.msra.mxu0 0
    %5675 = vmatprep.mubr.bf16.mxu0 0
    %5676 = vmatmul.mubr.bf16.gmra.mrb[0].mxu0 %v5450
    %v5677 = vpop.f32.mrb[0].mxu0
    %v5678 = vadd.f32 0.0, %v5677
    %v5679 = vpop.f32.mrb[0].mxu0
    %v5680 = vadd.f32 0.0, %v5679
    %v5681 = vpop.f32.mrb[0].mxu0
    %v5682 = vpop.f32.mrb[0].mxu0
    %5683 = vdwg.mxu0
    %5684 = vmatprep.subr.bf16.mxu0 %v5582
    %5685 = vmatpush1.bf16.msra.mxu0 %v5581
    %5686 = vmatprep.subr.bf16.mxu0 %v5586
    %5687 = vmatpush1.bf16.msra.mxu0 %v5585
    %5688 = vmatprep.subr.bf16.mxu0 %v5590
    %5689 = vmatpush1.bf16.msra.mxu0 %v5589
    %5690 = vmatprep.subr.bf16.mxu0 %v5594
    %5691 = vmatpush1.bf16.msra.mxu0 %v5593
    %5692 = vmatprep.subr.bf16.mxu0 %v5598
    %5693 = vmatpush1.bf16.msra.mxu0 %v5597
    %5694 = vmatprep.subr.bf16.mxu0 %v5602
    %5695 = vmatpush1.bf16.msra.mxu0 %v5601
    %5696 = vmatprep.subr.bf16.mxu0 %v5606
    %5697 = vmatpush1.bf16.msra.mxu0 %v5605
    %5698 = vmatprep.subr.bf16.mxu0 %v5610
    %5699 = vmatpush1.bf16.msra.mxu0 %v5609
    %5700 = vmatprep.subr.bf16.mxu0 0
    %5701 = vmatpush1.bf16.msra.mxu0 0
    %5702 = vmatprep.subr.bf16.mxu0 0
    %5703 = vmatpush1.bf16.msra.mxu0 0
    %5704 = vmatprep.subr.bf16.mxu0 0
    %5705 = vmatpush1.bf16.msra.mxu0 0
    %5706 = vmatprep.subr.bf16.mxu0 0
    %5707 = vmatpush1.bf16.msra.mxu0 0
    %5708 = vmatprep.subr.bf16.mxu0 0
    %5709 = vmatpush1.bf16.msra.mxu0 0
    %5710 = vmatprep.subr.bf16.mxu0 0
    %5711 = vmatpush1.bf16.msra.mxu0 0
    %5712 = vmatprep.subr.bf16.mxu0 0
    %5713 = vmatpush1.bf16.msra.mxu0 0
    %5714 = vmatprep.subr.bf16.mxu0 0
    %5715 = vmatpush1.bf16.msra.mxu0 0
    %5716 = vmatprep.mubr.bf16.mxu0 0
    %5717 = vmatmul.mubr.bf16.gmra.mrb[0].mxu0 %v5450
    %v5718 = vpop.f32.mrb[0].mxu0
    %v5719 = vadd.f32 0.0, %v5718
    %v5720 = vpop.f32.mrb[0].mxu0
    %v5721 = vadd.f32 0.0, %v5720
    %v5722 = vpop.f32.mrb[0].mxu0
    %v5723 = vpop.f32.mrb[0].mxu0
    %5724 = vdwg.mxu0
    %v5757 = vunpack.c.l.b16 %v5109
    %v5758 = vunpack.c.h.b16 %v5109
    %v5759 = vunpack.c.l.b16 %v5110
    %v5760 = vunpack.c.h.b16 %v5110
    %v5761 = vunpack.c.l.b16 %v5111
    %v5762 = vunpack.c.h.b16 %v5111
    %v5763 = vunpack.c.l.b16 %v5112
    %v5764 = vunpack.c.h.b16 %v5112
    %v5765 = vunpack.c.l.b16 %v5113
    %v5766 = vunpack.c.h.b16 %v5113
    %v5767 = vunpack.c.l.b16 %v5114
    %v5768 = vunpack.c.h.b16 %v5114
    %v5769 = vunpack.c.l.b16 %v5115
    %v5770 = vunpack.c.h.b16 %v5115
    %v5771 = vunpack.c.l.b16 %v5116
    %v5772 = vunpack.c.h.b16 %v5116
    %v5773 = vunpack.c.l.b16 %v5117
    %v5774 = vunpack.c.h.b16 %v5117
    %v5775 = vunpack.c.l.b16 %v5118
    %v5776 = vunpack.c.h.b16 %v5118
    %v5777 = vunpack.c.l.b16 %v5119
    %v5778 = vunpack.c.h.b16 %v5119
    %v5779 = vunpack.c.l.b16 %v5120
    %v5780 = vunpack.c.h.b16 %v5120
    %v5781 = vunpack.c.l.b16 %v5121
    %v5782 = vunpack.c.h.b16 %v5121
    %v5783 = vunpack.c.l.b16 %v5122
    %v5784 = vunpack.c.h.b16 %v5122
    %v5785 = vunpack.c.l.b16 %v5123
    %v5786 = vunpack.c.h.b16 %v5123
    %v5787 = vunpack.c.l.b16 %v5124
    %v5788 = vunpack.c.h.b16 %v5124
    %v5789 = vunpack.c.l.b16 %v5125
    %v5790 = vunpack.c.h.b16 %v5125
    %v5791 = vunpack.c.l.b16 %v5126
    %v5792 = vunpack.c.h.b16 %v5126
    %v5793 = vunpack.c.l.b16 %v5127
    %v5794 = vunpack.c.h.b16 %v5127
    %v5795 = vunpack.c.l.b16 %v5128
    %v5796 = vunpack.c.h.b16 %v5128
    %v5797 = vunpack.c.l.b16 %v5129
    %v5798 = vunpack.c.h.b16 %v5129
    %v5799 = vunpack.c.l.b16 %v5130
    %v5800 = vunpack.c.h.b16 %v5130
    %v5801 = vunpack.c.l.b16 %v5131
    %v5802 = vunpack.c.h.b16 %v5131
    %v5803 = vunpack.c.l.b16 %v5132
    %v5804 = vunpack.c.h.b16 %v5132
    %v5805 = vunpack.c.l.b16 %v5133
    %v5806 = vunpack.c.h.b16 %v5133
    %v5807 = vunpack.c.l.b16 %v5134
    %v5808 = vunpack.c.h.b16 %v5134
    %v5809 = vunpack.c.l.b16 %v5135
    %v5810 = vunpack.c.h.b16 %v5135
    %v5811 = vunpack.c.l.b16 %v5136
    %v5812 = vunpack.c.h.b16 %v5136
    %v5813 = vunpack.c.l.b16 %v5137
    %v5814 = vunpack.c.h.b16 %v5137
    %v5815 = vunpack.c.l.b16 %v5138
    %v5816 = vunpack.c.h.b16 %v5138
    %v5817 = vunpack.c.l.b16 %v5139
    %v5818 = vunpack.c.h.b16 %v5139
    %v5819 = vunpack.c.l.b16 %v5140
    %v5820 = vunpack.c.h.b16 %v5140
    %v5821 = vpack.c.b16 %v5761, %v5757
    %v5822 = vpack.c.b16 %v5762, %v5758
    %v5823 = vpack.c.b16 %v5763, %v5759
    %v5824 = vpack.c.b16 %v5764, %v5760
    %v5825 = vpack.c.b16 %v5769, %v5765
    %v5826 = vpack.c.b16 %v5770, %v5766
    %v5827 = vpack.c.b16 %v5771, %v5767
    %v5828 = vpack.c.b16 %v5772, %v5768
    %v5829 = vpack.c.b16 %v5777, %v5773
    %v5830 = vpack.c.b16 %v5778, %v5774
    %v5831 = vpack.c.b16 %v5779, %v5775
    %v5832 = vpack.c.b16 %v5780, %v5776
    %v5833 = vpack.c.b16 %v5785, %v5781
    %v5834 = vpack.c.b16 %v5786, %v5782
    %v5835 = vpack.c.b16 %v5787, %v5783
    %v5836 = vpack.c.b16 %v5788, %v5784
    %v5837 = vpack.c.b16 %v5793, %v5789
    %v5838 = vpack.c.b16 %v5794, %v5790
    %v5839 = vpack.c.b16 %v5795, %v5791
    %v5840 = vpack.c.b16 %v5796, %v5792
    %v5841 = vpack.c.b16 %v5801, %v5797
    %v5842 = vpack.c.b16 %v5802, %v5798
    %v5843 = vpack.c.b16 %v5803, %v5799
    %v5844 = vpack.c.b16 %v5804, %v5800
    %v5845 = vpack.c.b16 %v5809, %v5805
    %v5846 = vpack.c.b16 %v5810, %v5806
    %v5847 = vpack.c.b16 %v5811, %v5807
    %v5848 = vpack.c.b16 %v5812, %v5808
    %v5849 = vpack.c.b16 %v5817, %v5813
    %v5850 = vpack.c.b16 %v5818, %v5814
    %v5851 = vpack.c.b16 %v5819, %v5815
    %v5852 = vpack.c.b16 %v5820, %v5816
    %5885 = vmatprep.subr.bf16.mxu0 %v5822
    %5886 = vmatpush1.bf16.msra.mxu0 %v5821
    %5887 = vmatprep.subr.bf16.mxu0 %v5826
    %5888 = vmatpush1.bf16.msra.mxu0 %v5825
    %5889 = vmatprep.subr.bf16.mxu0 %v5830
    %5890 = vmatpush1.bf16.msra.mxu0 %v5829
    %5891 = vmatprep.subr.bf16.mxu0 %v5834
    %5892 = vmatpush1.bf16.msra.mxu0 %v5833
    %5893 = vmatprep.subr.bf16.mxu0 %v5838
    %5894 = vmatpush1.bf16.msra.mxu0 %v5837
    %5895 = vmatprep.subr.bf16.mxu0 %v5842
    %5896 = vmatpush1.bf16.msra.mxu0 %v5841
    %5897 = vmatprep.subr.bf16.mxu0 %v5846
    %5898 = vmatpush1.bf16.msra.mxu0 %v5845
    %5899 = vmatprep.subr.bf16.mxu0 %v5850
    %5900 = vmatpush1.bf16.msra.mxu0 %v5849
    %5901 = vmatprep.subr.bf16.mxu0 0
    %5902 = vmatpush1.bf16.msra.mxu0 0
    %5903 = vmatprep.subr.bf16.mxu0 0
    %5904 = vmatpush1.bf16.msra.mxu0 0
    %5905 = vmatprep.subr.bf16.mxu0 0
    %5906 = vmatpush1.bf16.msra.mxu0 0
    %5907 = vmatprep.subr.bf16.mxu0 0
    %5908 = vmatpush1.bf16.msra.mxu0 0
    %5909 = vmatprep.subr.bf16.mxu0 0
    %5910 = vmatpush1.bf16.msra.mxu0 0
    %5911 = vmatprep.subr.bf16.mxu0 0
    %5912 = vmatpush1.bf16.msra.mxu0 0
    %5913 = vmatprep.subr.bf16.mxu0 0
    %5914 = vmatpush1.bf16.msra.mxu0 0
    %5915 = vmatprep.subr.bf16.mxu0 0
    %5916 = vmatpush1.bf16.msra.mxu0 0
    %5917 = vmatprep.mubr.bf16.mxu0 0
    %5918 = vmatmul.mubr.bf16.gmra.mrb[0].mxu0 %v5108
    %v5919 = vpop.f32.mrb[0].mxu0
    %v5920 = vadd.f32 %v5403, %v5919
    %v5921 = vpop.f32.mrb[0].mxu0
    %v5922 = vadd.f32 %v5405, %v5921
    %v5923 = vpop.f32.mrb[0].mxu0
    %v5924 = vpop.f32.mrb[0].mxu0
    %5925 = vdwg.mxu0
    %5926 = vmatprep.subr.bf16.mxu0 %v5824
    %5927 = vmatpush1.bf16.msra.mxu0 %v5823
    %5928 = vmatprep.subr.bf16.mxu0 %v5828
    %5929 = vmatpush1.bf16.msra.mxu0 %v5827
    %5930 = vmatprep.subr.bf16.mxu0 %v5832
    %5931 = vmatpush1.bf16.msra.mxu0 %v5831
    %5932 = vmatprep.subr.bf16.mxu0 %v5836
    %5933 = vmatpush1.bf16.msra.mxu0 %v5835
    %5934 = vmatprep.subr.bf16.mxu0 %v5840
    %5935 = vmatpush1.bf16.msra.mxu0 %v5839
    %5936 = vmatprep.subr.bf16.mxu0 %v5844
    %5937 = vmatpush1.bf16.msra.mxu0 %v5843
    %5938 = vmatprep.subr.bf16.mxu0 %v5848
    %5939 = vmatpush1.bf16.msra.mxu0 %v5847
    %5940 = vmatprep.subr.bf16.mxu0 %v5852
    %5941 = vmatpush1.bf16.msra.mxu0 %v5851
    %5942 = vmatprep.subr.bf16.mxu0 0
    %5943 = vmatpush1.bf16.msra.mxu0 0
    %5944 = vmatprep.subr.bf16.mxu0 0
    %5945 = vmatpush1.bf16.msra.mxu0 0
    %5946 = vmatprep.subr.bf16.mxu0 0
    %5947 = vmatpush1.bf16.msra.mxu0 0
    %5948 = vmatprep.subr.bf16.mxu0 0
    %5949 = vmatpush1.bf16.msra.mxu0 0
    %5950 = vmatprep.subr.bf16.mxu0 0
    %5951 = vmatpush1.bf16.msra.mxu0 0
    %5952 = vmatprep.subr.bf16.mxu0 0
    %5953 = vmatpush1.bf16.msra.mxu0 0
    %5954 = vmatprep.subr.bf16.mxu0 0
    %5955 = vmatpush1.bf16.msra.mxu0 0
    %5956 = vmatprep.subr.bf16.mxu0 0
    %5957 = vmatpush1.bf16.msra.mxu0 0
    %5958 = vmatprep.mubr.bf16.mxu0 0
    %5959 = vmatmul.mubr.bf16.gmra.mrb[0].mxu0 %v5108
    %v5960 = vpop.f32.mrb[0].mxu0
    %v5961 = vadd.f32 %v5444, %v5960
    %v5962 = vpop.f32.mrb[0].mxu0
    %v5963 = vadd.f32 %v5446, %v5962
    %v5964 = vpop.f32.mrb[0].mxu0
    %v5965 = vpop.f32.mrb[0].mxu0
    %5966 = vdwg.mxu0
    %v5967 = vld [vmem:[%s6] sm:$0xf]
    %v5969 = vlaneseq
    %v5970 = vshrl.u32 %v5969, 7
    %v5971 = vsub.s32 0, %v5970
    %v5972 = vrot.slane %v5967, %v5971
    %v5973 = vlaneseq
    %v5974 = vshrl.u32 %v5973, 7
    %v5975 = vsub.s32 1, %v5974
    %v5976 = vrot.slane %v5967, %v5975
    %v5977 = vlaneseq
    %v5978 = vshrl.u32 %v5977, 7
    %v5979 = vsub.s32 2, %v5978
    %v5980 = vrot.slane %v5967, %v5979
    %v5981 = vlaneseq
    %v5982 = vshrl.u32 %v5981, 7
    %v5983 = vsub.s32 3, %v5982
    %v5984 = vrot.slane %v5967, %v5983
    %v5989 = vadd.f32 %v5920, %v5972
    %v5990 = vadd.f32 %v5922, %v5976
    %v5991 = vadd.f32 %v5961, %v5980
    %v5992 = vadd.f32 %v5963, %v5984
    %v5993 = vxor.u32 %v5989, 2147483648
    %v5994 = vmul.f32 %v5993, 1.442695
    %v5995 = vpow.pop %v5994
    %v5996 = vadd.f32 %v5995, 1.0
    %v5997 = vrcp.pop %v5996
    %v5998 = vmul.f32 1.0, %v5997
    %v5999 = vxor.u32 %v5990, 2147483648
    %v6000 = vmul.f32 %v5999, 1.442695
    %v6001 = vpow.pop %v6000
    %v6002 = vadd.f32 %v6001, 1.0
    %v6003 = vrcp.pop %v6002
    %v6004 = vmul.f32 1.0, %v6003
    %v6005 = vtanh.pop %v5991
    %v6006 = vxor.u32 %v5992, 2147483648
    %v6007 = vmul.f32 %v6006, 1.442695
    %v6008 = vpow.pop %v6007
    %v6009 = vadd.f32 %v6008, 1.0
    %v6010 = vrcp.pop %v6009
    %v6011 = vmul.f32 1.0, %v6010
    %v6012 = vmul.f32 %v6004, %v5103
    %v6013 = vmul.f32 %v5998, %v6005
    %v6014 = vadd.f32 %v6012, %v6013
    %v6015 = vtanh.pop %v6014
    %v6016 = vmul.f32 %v6011, %v6015
    %v6049 = vunpack.c.l.b16 %v5143
    %v6050 = vunpack.c.h.b16 %v5143
    %v6051 = vunpack.c.l.b16 %v5144
    %v6052 = vunpack.c.h.b16 %v5144
    %v6053 = vunpack.c.l.b16 %v5145
    %v6054 = vunpack.c.h.b16 %v5145
    %v6055 = vunpack.c.l.b16 %v5146
    %v6056 = vunpack.c.h.b16 %v5146
    %v6057 = vunpack.c.l.b16 %v5147
    %v6058 = vunpack.c.h.b16 %v5147
    %v6059 = vunpack.c.l.b16 %v5148
    %v6060 = vunpack.c.h.b16 %v5148
    %v6061 = vunpack.c.l.b16 %v5149
    %v6062 = vunpack.c.h.b16 %v5149
    %v6063 = vunpack.c.l.b16 %v5150
    %v6064 = vunpack.c.h.b16 %v5150
    %v6065 = vunpack.c.l.b16 %v5151
    %v6066 = vunpack.c.h.b16 %v5151
    %v6067 = vunpack.c.l.b16 %v5152
    %v6068 = vunpack.c.h.b16 %v5152
    %v6069 = vunpack.c.l.b16 %v5153
    %v6070 = vunpack.c.h.b16 %v5153
    %v6071 = vunpack.c.l.b16 %v5154
    %v6072 = vunpack.c.h.b16 %v5154
    %v6073 = vunpack.c.l.b16 %v5155
    %v6074 = vunpack.c.h.b16 %v5155
    %v6075 = vunpack.c.l.b16 %v5156
    %v6076 = vunpack.c.h.b16 %v5156
    %v6077 = vunpack.c.l.b16 %v5157
    %v6078 = vunpack.c.h.b16 %v5157
    %v6079 = vunpack.c.l.b16 %v5158
    %v6080 = vunpack.c.h.b16 %v5158
    %v6081 = vunpack.c.l.b16 %v5159
    %v6082 = vunpack.c.h.b16 %v5159
    %v6083 = vunpack.c.l.b16 %v5160
    %v6084 = vunpack.c.h.b16 %v5160
    %v6085 = vunpack.c.l.b16 %v5161
    %v6086 = vunpack.c.h.b16 %v5161
    %v6087 = vunpack.c.l.b16 %v5162
    %v6088 = vunpack.c.h.b16 %v5162
    %v6089 = vunpack.c.l.b16 %v5163
    %v6090 = vunpack.c.h.b16 %v5163
    %v6091 = vunpack.c.l.b16 %v5164
    %v6092 = vunpack.c.h.b16 %v5164
    %v6093 = vunpack.c.l.b16 %v5165
    %v6094 = vunpack.c.h.b16 %v5165
    %v6095 = vunpack.c.l.b16 %v5166
    %v6096 = vunpack.c.h.b16 %v5166
    %v6097 = vunpack.c.l.b16 %v5167
    %v6098 = vunpack.c.h.b16 %v5167
    %v6099 = vunpack.c.l.b16 %v5168
    %v6100 = vunpack.c.h.b16 %v5168
    %v6101 = vunpack.c.l.b16 %v5169
    %v6102 = vunpack.c.h.b16 %v5169
    %v6103 = vunpack.c.l.b16 %v5170
    %v6104 = vunpack.c.h.b16 %v5170
    %v6105 = vunpack.c.l.b16 %v5171
    %v6106 = vunpack.c.h.b16 %v5171
    %v6107 = vunpack.c.l.b16 %v5172
    %v6108 = vunpack.c.h.b16 %v5172
    %v6109 = vunpack.c.l.b16 %v5173
    %v6110 = vunpack.c.h.b16 %v5173
    %v6111 = vunpack.c.l.b16 %v5174
    %v6112 = vunpack.c.h.b16 %v5174
    %v6113 = vpack.c.b16 %v6053, %v6049
    %v6114 = vpack.c.b16 %v6054, %v6050
    %v6115 = vpack.c.b16 %v6055, %v6051
    %v6116 = vpack.c.b16 %v6056, %v6052
    %v6117 = vpack.c.b16 %v6061, %v6057
    %v6118 = vpack.c.b16 %v6062, %v6058
    %v6119 = vpack.c.b16 %v6063, %v6059
    %v6120 = vpack.c.b16 %v6064, %v6060
    %v6121 = vpack.c.b16 %v6069, %v6065
    %v6122 = vpack.c.b16 %v6070, %v6066
    %v6123 = vpack.c.b16 %v6071, %v6067
    %v6124 = vpack.c.b16 %v6072, %v6068
    %v6125 = vpack.c.b16 %v6077, %v6073
    %v6126 = vpack.c.b16 %v6078, %v6074
    %v6127 = vpack.c.b16 %v6079, %v6075
    %v6128 = vpack.c.b16 %v6080, %v6076
    %v6129 = vpack.c.b16 %v6085, %v6081
    %v6130 = vpack.c.b16 %v6086, %v6082
    %v6131 = vpack.c.b16 %v6087, %v6083
    %v6132 = vpack.c.b16 %v6088, %v6084
    %v6133 = vpack.c.b16 %v6093, %v6089
    %v6134 = vpack.c.b16 %v6094, %v6090
    %v6135 = vpack.c.b16 %v6095, %v6091
    %v6136 = vpack.c.b16 %v6096, %v6092
    %v6137 = vpack.c.b16 %v6101, %v6097
    %v6138 = vpack.c.b16 %v6102, %v6098
    %v6139 = vpack.c.b16 %v6103, %v6099
    %v6140 = vpack.c.b16 %v6104, %v6100
    %v6141 = vpack.c.b16 %v6109, %v6105
    %v6142 = vpack.c.b16 %v6110, %v6106
    %v6143 = vpack.c.b16 %v6111, %v6107
    %v6144 = vpack.c.b16 %v6112, %v6108
    %6177 = vmatprep.subr.bf16.mxu0 %v6114
    %6178 = vmatpush1.bf16.msra.mxu0 %v6113
    %6179 = vmatprep.subr.bf16.mxu0 %v6118
    %6180 = vmatpush1.bf16.msra.mxu0 %v6117
    %6181 = vmatprep.subr.bf16.mxu0 %v6122
    %6182 = vmatpush1.bf16.msra.mxu0 %v6121
    %6183 = vmatprep.subr.bf16.mxu0 %v6126
    %6184 = vmatpush1.bf16.msra.mxu0 %v6125
    %6185 = vmatprep.subr.bf16.mxu0 %v6130
    %6186 = vmatpush1.bf16.msra.mxu0 %v6129
    %6187 = vmatprep.subr.bf16.mxu0 %v6134
    %6188 = vmatpush1.bf16.msra.mxu0 %v6133
    %6189 = vmatprep.subr.bf16.mxu0 %v6138
    %6190 = vmatpush1.bf16.msra.mxu0 %v6137
    %6191 = vmatprep.subr.bf16.mxu0 %v6142
    %6192 = vmatpush1.bf16.msra.mxu0 %v6141
    %6193 = vmatprep.subr.bf16.mxu0 0
    %6194 = vmatpush1.bf16.msra.mxu0 0
    %6195 = vmatprep.subr.bf16.mxu0 0
    %6196 = vmatpush1.bf16.msra.mxu0 0
    %6197 = vmatprep.subr.bf16.mxu0 0
    %6198 = vmatpush1.bf16.msra.mxu0 0
    %6199 = vmatprep.subr.bf16.mxu0 0
    %6200 = vmatpush1.bf16.msra.mxu0 0
    %6201 = vmatprep.subr.bf16.mxu0 0
    %6202 = vmatpush1.bf16.msra.mxu0 0
    %6203 = vmatprep.subr.bf16.mxu0 0
    %6204 = vmatpush1.bf16.msra.mxu0 0
    %6205 = vmatprep.subr.bf16.mxu0 0
    %6206 = vmatpush1.bf16.msra.mxu0 0
    %6207 = vmatprep.subr.bf16.mxu0 0
    %6208 = vmatpush1.bf16.msra.mxu0 0
    %6209 = vmatprep.mubr.bf16.mxu0 0
    %6210 = vmatmul.mubr.bf16.gmra.mrb[0].mxu0 %v5142
    %v6211 = vpop.f32.mrb[0].mxu0
    %v6212 = vadd.f32 %v5678, %v6211
    %v6213 = vpop.f32.mrb[0].mxu0
    %v6214 = vadd.f32 %v5680, %v6213
    %v6215 = vpop.f32.mrb[0].mxu0
    %v6216 = vpop.f32.mrb[0].mxu0
    %6217 = vdwg.mxu0
    %6218 = vmatprep.subr.bf16.mxu0 %v6116
    %6219 = vmatpush1.bf16.msra.mxu0 %v6115
    %6220 = vmatprep.subr.bf16.mxu0 %v6120
    %6221 = vmatpush1.bf16.msra.mxu0 %v6119
    %6222 = vmatprep.subr.bf16.mxu0 %v6124
    %6223 = vmatpush1.bf16.msra.mxu0 %v6123
    %6224 = vmatprep.subr.bf16.mxu0 %v6128
    %6225 = vmatpush1.bf16.msra.mxu0 %v6127
    %6226 = vmatprep.subr.bf16.mxu0 %v6132
    %6227 = vmatpush1.bf16.msra.mxu0 %v6131
    %6228 = vmatprep.subr.bf16.mxu0 %v6136
    %6229 = vmatpush1.bf16.msra.mxu0 %v6135
    %6230 = vmatprep.subr.bf16.mxu0 %v6140
    %6231 = vmatpush1.bf16.msra.mxu0 %v6139
    %6232 = vmatprep.subr.bf16.mxu0 %v6144
    %6233 = vmatpush1.bf16.msra.mxu0 %v6143
    %6234 = vmatprep.subr.bf16.mxu0 0
    %6235 = vmatpush1.bf16.msra.mxu0 0
    %6236 = vmatprep.subr.bf16.mxu0 0
    %6237 = vmatpush1.bf16.msra.mxu0 0
    %6238 = vmatprep.subr.bf16.mxu0 0
    %6239 = vmatpush1.bf16.msra.mxu0 0
    %6240 = vmatprep.subr.bf16.mxu0 0
    %6241 = vmatpush1.bf16.msra.mxu0 0
    %6242 = vmatprep.subr.bf16.mxu0 0
    %6243 = vmatpush1.bf16.msra.mxu0 0
    %6244 = vmatprep.subr.bf16.mxu0 0
    %6245 = vmatpush1.bf16.msra.mxu0 0
    %6246 = vmatprep.subr.bf16.mxu0 0
    %6247 = vmatpush1.bf16.msra.mxu0 0
    %6248 = vmatprep.subr.bf16.mxu0 0
    %6249 = vmatpush1.bf16.msra.mxu0 0
    %6250 = vmatprep.mubr.bf16.mxu0 0
    %6251 = vmatmul.mubr.bf16.gmra.mrb[0].mxu0 %v5142
    %v6252 = vpop.f32.mrb[0].mxu0
    %v6253 = vadd.f32 %v5719, %v6252
    %v6254 = vpop.f32.mrb[0].mxu0
    %v6255 = vadd.f32 %v5721, %v6254
    %v6256 = vpop.f32.mrb[0].mxu0
    %v6257 = vpop.f32.mrb[0].mxu0
    %6258 = vdwg.mxu0
    %v6259 = vld [vmem:[%s1299] sm:$0xf]
    %v6261 = vlaneseq
    %v6262 = vshrl.u32 %v6261, 7
    %v6263 = vsub.s32 0, %v6262
    %v6264 = vrot.slane %v6259, %v6263
    %v6265 = vlaneseq
    %v6266 = vshrl.u32 %v6265, 7
    %v6267 = vsub.s32 1, %v6266
    %v6268 = vrot.slane %v6259, %v6267
    %v6269 = vlaneseq
    %v6270 = vshrl.u32 %v6269, 7
    %v6271 = vsub.s32 2, %v6270
    %v6272 = vrot.slane %v6259, %v6271
    %v6273 = vlaneseq
    %v6274 = vshrl.u32 %v6273, 7
    %v6275 = vsub.s32 3, %v6274
    %v6276 = vrot.slane %v6259, %v6275
    %v6281 = vadd.f32 %v6212, %v6264
    %v6282 = vadd.f32 %v6214, %v6268
    %v6283 = vadd.f32 %v6253, %v6272
    %v6284 = vadd.f32 %v6255, %v6276
    %v6285 = vxor.u32 %v6281, 2147483648
    %v6286 = vmul.f32 %v6285, 1.442695
    %v6287 = vpow.pop %v6286
    %v6288 = vadd.f32 %v6287, 1.0
    %v6289 = vrcp.pop %v6288
    %v6290 = vmul.f32 1.0, %v6289
    %v6291 = vxor.u32 %v6282, 2147483648
    %v6292 = vmul.f32 %v6291, 1.442695
    %v6293 = vpow.pop %v6292
    %v6294 = vadd.f32 %v6293, 1.0
    %v6295 = vrcp.pop %v6294
    %v6296 = vmul.f32 1.0, %v6295
    %v6297 = vtanh.pop %v6283
    %v6298 = vxor.u32 %v6284, 2147483648
    %v6299 = vmul.f32 %v6298, 1.442695
    %v6300 = vpow.pop %v6299
    %v6301 = vadd.f32 %v6300, 1.0
    %v6302 = vrcp.pop %v6301
    %v6303 = vmul.f32 1.0, %v6302
    %v6304 = vmul.f32 %v6296, %v5106
    %v6305 = vmul.f32 %v6290, %v6297
    %v6306 = vadd.f32 %v6304, %v6305
    %v6307 = vtanh.pop %v6306
    %v6308 = vmul.f32 %v6303, %v6307
    %6310 = vset.pattern.permute.xlu0 0
    %6311 = vperm.xlu0 %6310, %v114
    %v6312 = vpop.permute.xlu0 %6311
    %v6314 = vmul.f32 %v6312, %v6016
    %6316 = vset.pattern.permute.xlu0 0
    %6317 = vperm.xlu0 %6316, %v121
    %v6318 = vpop.permute.xlu0 %6317
    %v6320 = vmul.f32 %v6318, %v6308
    %v6321 = vpack.c.bf16 %v6314, %v6314
    %s6322 = scalar_lea.vmem [#allocation11], 4
    %6323 = vst [vmem:[%s6322] sm:$0x1] %v6321
    %v6324 = vpack.c.bf16 %v6320, %v6320
    %s6325 = scalar_lea.vmem [#allocation12], 3
    %6326 = vst [vmem:[%s6325] sm:$0x1] %v6324
    %6328 = vset.pattern.permute.xlu0 0
    %6329 = vperm.xlu0 %6328, %v130
    %v6330 = vpop.permute.xlu0 %6329
    %v6332 = vmul.f32 %v6330, %v5093
    %v6333 = vadd.f32 %v6314, %v6332
    %6335 = vset.pattern.permute.xlu0 0
    %6336 = vperm.xlu0 %6335, %v137
    %v6337 = vpop.permute.xlu0 %6336
    %v6339 = vmul.f32 %v6337, %v5100
    %v6340 = vadd.f32 %v6320, %v6339
    %v6341 = vmul.f32 %v6312, %v6014
    %v6342 = vmul.f32 %v6330, %v5103
    %v6343 = vadd.f32 %v6341, %v6342
    %v6344 = vmul.f32 %v6318, %v6306
    %v6345 = vmul.f32 %v6337, %v5106
    %v6346 = vadd.f32 %v6344, %v6345
    %s6347 = scalar_lea.vmem %s0, 5
    %v6348 = vld [vmem:[%s6347] sm:$0x1]
    %v6349 = vld [vmem:[#allocation6] sm:$0xff]
    %v6350 = vld [vmem:[#allocation6 + $0x8] sm:$0xff]
    %v6351 = vld [vmem:[#allocation6 + $0x10] sm:$0xff]
    %v6352 = vld [vmem:[#allocation6 + $0x18] sm:$0xff]
    %v6353 = vld [vmem:[#allocation6 + $0x20] sm:$0xff]
    %v6354 = vld [vmem:[#allocation6 + $0x28] sm:$0xff]
    %v6355 = vld [vmem:[#allocation6 + $0x30] sm:$0xff]
    %v6356 = vld [vmem:[#allocation6 + $0x38] sm:$0xff]
    %v6357 = vld [vmem:[#allocation6 + $0x40] sm:$0xff]
    %v6358 = vld [vmem:[#allocation6 + $0x48] sm:$0xff]
    %v6359 = vld [vmem:[#allocation6 + $0x50] sm:$0xff]
    %v6360 = vld [vmem:[#allocation6 + $0x58] sm:$0xff]
    %v6361 = vld [vmem:[#allocation6 + $0x60] sm:$0xff]
    %v6362 = vld [vmem:[#allocation6 + $0x68] sm:$0xff]
    %v6363 = vld [vmem:[#allocation6 + $0x70] sm:$0xff]
    %v6364 = vld [vmem:[#allocation6 + $0x78] sm:$0xff]
    %v6365 = vld [vmem:[#allocation6 + $0x80] sm:$0xff]
    %v6366 = vld [vmem:[#allocation6 + $0x88] sm:$0xff]
    %v6367 = vld [vmem:[#allocation6 + $0x90] sm:$0xff]
    %v6368 = vld [vmem:[#allocation6 + $0x98] sm:$0xff]
    %v6369 = vld [vmem:[#allocation6 + $0xa0] sm:$0xff]
    %v6370 = vld [vmem:[#allocation6 + $0xa8] sm:$0xff]
    %v6371 = vld [vmem:[#allocation6 + $0xb0] sm:$0xff]
    %v6372 = vld [vmem:[#allocation6 + $0xb8] sm:$0xff]
    %v6373 = vld [vmem:[#allocation6 + $0xc0] sm:$0xff]
    %v6374 = vld [vmem:[#allocation6 + $0xc8] sm:$0xff]
    %v6375 = vld [vmem:[#allocation6 + $0xd0] sm:$0xff]
    %v6376 = vld [vmem:[#allocation6 + $0xd8] sm:$0xff]
    %v6377 = vld [vmem:[#allocation6 + $0xe0] sm:$0xff]
    %v6378 = vld [vmem:[#allocation6 + $0xe8] sm:$0xff]
    %v6379 = vld [vmem:[#allocation6 + $0xf0] sm:$0xff]
    %v6380 = vld [vmem:[#allocation6 + $0xf8] sm:$0xff]
    %s6381 = scalar_lea.vmem %s88, 2
    %v6382 = vld [vmem:[%s6381] sm:$0x1]
    %v6383 = vld [vmem:[%s181] sm:$0xff]
    %v6384 = vld [vmem:[%s181 + $0x8] sm:$0xff]
    %v6385 = vld [vmem:[%s181 + $0x10] sm:$0xff]
    %v6386 = vld [vmem:[%s181 + $0x18] sm:$0xff]
    %v6387 = vld [vmem:[%s181 + $0x20] sm:$0xff]
    %v6388 = vld [vmem:[%s181 + $0x28] sm:$0xff]
    %v6389 = vld [vmem:[%s181 + $0x30] sm:$0xff]
    %v6390 = vld [vmem:[%s181 + $0x38] sm:$0xff]
    %v6391 = vld [vmem:[%s181 + $0x40] sm:$0xff]
    %v6392 = vld [vmem:[%s181 + $0x48] sm:$0xff]
    %v6393 = vld [vmem:[%s181 + $0x50] sm:$0xff]
    %v6394 = vld [vmem:[%s181 + $0x58] sm:$0xff]
    %v6395 = vld [vmem:[%s181 + $0x60] sm:$0xff]
    %v6396 = vld [vmem:[%s181 + $0x68] sm:$0xff]
    %v6397 = vld [vmem:[%s181 + $0x70] sm:$0xff]
    %v6398 = vld [vmem:[%s181 + $0x78] sm:$0xff]
    %v6399 = vld [vmem:[%s181 + $0x80] sm:$0xff]
    %v6400 = vld [vmem:[%s181 + $0x88] sm:$0xff]
    %v6401 = vld [vmem:[%s181 + $0x90] sm:$0xff]
    %v6402 = vld [vmem:[%s181 + $0x98] sm:$0xff]
    %v6403 = vld [vmem:[%s181 + $0xa0] sm:$0xff]
    %v6404 = vld [vmem:[%s181 + $0xa8] sm:$0xff]
    %v6405 = vld [vmem:[%s181 + $0xb0] sm:$0xff]
    %v6406 = vld [vmem:[%s181 + $0xb8] sm:$0xff]
    %v6407 = vld [vmem:[%s181 + $0xc0] sm:$0xff]
    %v6408 = vld [vmem:[%s181 + $0xc8] sm:$0xff]
    %v6409 = vld [vmem:[%s181 + $0xd0] sm:$0xff]
    %v6410 = vld [vmem:[%s181 + $0xd8] sm:$0xff]
    %v6411 = vld [vmem:[%s181 + $0xe0] sm:$0xff]
    %v6412 = vld [vmem:[%s181 + $0xe8] sm:$0xff]
    %v6413 = vld [vmem:[%s181 + $0xf0] sm:$0xff]
    %v6414 = vld [vmem:[%s181 + $0xf8] sm:$0xff]
    %v6415 = vpack.c.bf16 %v6333, %v6333
    %v6416 = vld [vmem:[#allocation9] sm:$0xff]
    %v6417 = vld [vmem:[#allocation9 + $0x8] sm:$0xff]
    %v6418 = vld [vmem:[#allocation9 + $0x10] sm:$0xff]
    %v6419 = vld [vmem:[#allocation9 + $0x18] sm:$0xff]
    %v6420 = vld [vmem:[#allocation9 + $0x20] sm:$0xff]
    %v6421 = vld [vmem:[#allocation9 + $0x28] sm:$0xff]
    %v6422 = vld [vmem:[#allocation9 + $0x30] sm:$0xff]
    %v6423 = vld [vmem:[#allocation9 + $0x38] sm:$0xff]
    %v6424 = vld [vmem:[#allocation9 + $0x40] sm:$0xff]
    %v6425 = vld [vmem:[#allocation9 + $0x48] sm:$0xff]
    %v6426 = vld [vmem:[#allocation9 + $0x50] sm:$0xff]
    %v6427 = vld [vmem:[#allocation9 + $0x58] sm:$0xff]
    %v6428 = vld [vmem:[#allocation9 + $0x60] sm:$0xff]
    %v6429 = vld [vmem:[#allocation9 + $0x68] sm:$0xff]
    %v6430 = vld [vmem:[#allocation9 + $0x70] sm:$0xff]
    %v6431 = vld [vmem:[#allocation9 + $0x78] sm:$0xff]
    %v6432 = vld [vmem:[#allocation9 + $0x80] sm:$0xff]
    %v6433 = vld [vmem:[#allocation9 + $0x88] sm:$0xff]
    %v6434 = vld [vmem:[#allocation9 + $0x90] sm:$0xff]
    %v6435 = vld [vmem:[#allocation9 + $0x98] sm:$0xff]
    %v6436 = vld [vmem:[#allocation9 + $0xa0] sm:$0xff]
    %v6437 = vld [vmem:[#allocation9 + $0xa8] sm:$0xff]
    %v6438 = vld [vmem:[#allocation9 + $0xb0] sm:$0xff]
    %v6439 = vld [vmem:[#allocation9 + $0xb8] sm:$0xff]
    %v6440 = vld [vmem:[#allocation9 + $0xc0] sm:$0xff]
    %v6441 = vld [vmem:[#allocation9 + $0xc8] sm:$0xff]
    %v6442 = vld [vmem:[#allocation9 + $0xd0] sm:$0xff]
    %v6443 = vld [vmem:[#allocation9 + $0xd8] sm:$0xff]
    %v6444 = vld [vmem:[#allocation9 + $0xe0] sm:$0xff]
    %v6445 = vld [vmem:[#allocation9 + $0xe8] sm:$0xff]
    %v6446 = vld [vmem:[#allocation9 + $0xf0] sm:$0xff]
    %v6447 = vld [vmem:[#allocation9 + $0xf8] sm:$0xff]
    %v6480 = vunpack.c.l.b16 %v6416
    %v6481 = vunpack.c.h.b16 %v6416
    %v6482 = vunpack.c.l.b16 %v6417
    %v6483 = vunpack.c.h.b16 %v6417
    %v6484 = vunpack.c.l.b16 %v6418
    %v6485 = vunpack.c.h.b16 %v6418
    %v6486 = vunpack.c.l.b16 %v6419
    %v6487 = vunpack.c.h.b16 %v6419
    %v6488 = vunpack.c.l.b16 %v6420
    %v6489 = vunpack.c.h.b16 %v6420
    %v6490 = vunpack.c.l.b16 %v6421
    %v6491 = vunpack.c.h.b16 %v6421
    %v6492 = vunpack.c.l.b16 %v6422
    %v6493 = vunpack.c.h.b16 %v6422
    %v6494 = vunpack.c.l.b16 %v6423
    %v6495 = vunpack.c.h.b16 %v6423
    %v6496 = vunpack.c.l.b16 %v6424
    %v6497 = vunpack.c.h.b16 %v6424
    %v6498 = vunpack.c.l.b16 %v6425
    %v6499 = vunpack.c.h.b16 %v6425
    %v6500 = vunpack.c.l.b16 %v6426
    %v6501 = vunpack.c.h.b16 %v6426
    %v6502 = vunpack.c.l.b16 %v6427
    %v6503 = vunpack.c.h.b16 %v6427
    %v6504 = vunpack.c.l.b16 %v6428
    %v6505 = vunpack.c.h.b16 %v6428
    %v6506 = vunpack.c.l.b16 %v6429
    %v6507 = vunpack.c.h.b16 %v6429
    %v6508 = vunpack.c.l.b16 %v6430
    %v6509 = vunpack.c.h.b16 %v6430
    %v6510 = vunpack.c.l.b16 %v6431
    %v6511 = vunpack.c.h.b16 %v6431
    %v6512 = vunpack.c.l.b16 %v6432
    %v6513 = vunpack.c.h.b16 %v6432
    %v6514 = vunpack.c.l.b16 %v6433
    %v6515 = vunpack.c.h.b16 %v6433
    %v6516 = vunpack.c.l.b16 %v6434
    %v6517 = vunpack.c.h.b16 %v6434
    %v6518 = vunpack.c.l.b16 %v6435
    %v6519 = vunpack.c.h.b16 %v6435
    %v6520 = vunpack.c.l.b16 %v6436
    %v6521 = vunpack.c.h.b16 %v6436
    %v6522 = vunpack.c.l.b16 %v6437
    %v6523 = vunpack.c.h.b16 %v6437
    %v6524 = vunpack.c.l.b16 %v6438
    %v6525 = vunpack.c.h.b16 %v6438
    %v6526 = vunpack.c.l.b16 %v6439
    %v6527 = vunpack.c.h.b16 %v6439
    %v6528 = vunpack.c.l.b16 %v6440
    %v6529 = vunpack.c.h.b16 %v6440
    %v6530 = vunpack.c.l.b16 %v6441
    %v6531 = vunpack.c.h.b16 %v6441
    %v6532 = vunpack.c.l.b16 %v6442
    %v6533 = vunpack.c.h.b16 %v6442
    %v6534 = vunpack.c.l.b16 %v6443
    %v6535 = vunpack.c.h.b16 %v6443
    %v6536 = vunpack.c.l.b16 %v6444
    %v6537 = vunpack.c.h.b16 %v6444
    %v6538 = vunpack.c.l.b16 %v6445
    %v6539 = vunpack.c.h.b16 %v6445
    %v6540 = vunpack.c.l.b16 %v6446
    %v6541 = vunpack.c.h.b16 %v6446
    %v6542 = vunpack.c.l.b16 %v6447
    %v6543 = vunpack.c.h.b16 %v6447
    %v6544 = vpack.c.b16 %v6484, %v6480
    %v6545 = vpack.c.b16 %v6485, %v6481
    %v6546 = vpack.c.b16 %v6486, %v6482
    %v6547 = vpack.c.b16 %v6487, %v6483
    %v6548 = vpack.c.b16 %v6492, %v6488
    %v6549 = vpack.c.b16 %v6493, %v6489
    %v6550 = vpack.c.b16 %v6494, %v6490
    %v6551 = vpack.c.b16 %v6495, %v6491
    %v6552 = vpack.c.b16 %v6500, %v6496
    %v6553 = vpack.c.b16 %v6501, %v6497
    %v6554 = vpack.c.b16 %v6502, %v6498
    %v6555 = vpack.c.b16 %v6503, %v6499
    %v6556 = vpack.c.b16 %v6508, %v6504
    %v6557 = vpack.c.b16 %v6509, %v6505
    %v6558 = vpack.c.b16 %v6510, %v6506
    %v6559 = vpack.c.b16 %v6511, %v6507
    %v6560 = vpack.c.b16 %v6516, %v6512
    %v6561 = vpack.c.b16 %v6517, %v6513
    %v6562 = vpack.c.b16 %v6518, %v6514
    %v6563 = vpack.c.b16 %v6519, %v6515
    %v6564 = vpack.c.b16 %v6524, %v6520
    %v6565 = vpack.c.b16 %v6525, %v6521
    %v6566 = vpack.c.b16 %v6526, %v6522
    %v6567 = vpack.c.b16 %v6527, %v6523
    %v6568 = vpack.c.b16 %v6532, %v6528
    %v6569 = vpack.c.b16 %v6533, %v6529
    %v6570 = vpack.c.b16 %v6534, %v6530
    %v6571 = vpack.c.b16 %v6535, %v6531
    %v6572 = vpack.c.b16 %v6540, %v6536
    %v6573 = vpack.c.b16 %v6541, %v6537
    %v6574 = vpack.c.b16 %v6542, %v6538
    %v6575 = vpack.c.b16 %v6543, %v6539
    %6608 = vmatprep.subr.bf16.mxu0 %v6545
    %6609 = vmatpush1.bf16.msra.mxu0 %v6544
    %6610 = vmatprep.subr.bf16.mxu0 %v6549
    %6611 = vmatpush1.bf16.msra.mxu0 %v6548
    %6612 = vmatprep.subr.bf16.mxu0 %v6553
    %6613 = vmatpush1.bf16.msra.mxu0 %v6552
    %6614 = vmatprep.subr.bf16.mxu0 %v6557
    %6615 = vmatpush1.bf16.msra.mxu0 %v6556
    %6616 = vmatprep.subr.bf16.mxu0 %v6561
    %6617 = vmatpush1.bf16.msra.mxu0 %v6560
    %6618 = vmatprep.subr.bf16.mxu0 %v6565
    %6619 = vmatpush1.bf16.msra.mxu0 %v6564
    %6620 = vmatprep.subr.bf16.mxu0 %v6569
    %6621 = vmatpush1.bf16.msra.mxu0 %v6568
    %6622 = vmatprep.subr.bf16.mxu0 %v6573
    %6623 = vmatpush1.bf16.msra.mxu0 %v6572
    %6624 = vmatprep.subr.bf16.mxu0 0
    %6625 = vmatpush1.bf16.msra.mxu0 0
    %6626 = vmatprep.subr.bf16.mxu0 0
    %6627 = vmatpush1.bf16.msra.mxu0 0
    %6628 = vmatprep.subr.bf16.mxu0 0
    %6629 = vmatpush1.bf16.msra.mxu0 0
    %6630 = vmatprep.subr.bf16.mxu0 0
    %6631 = vmatpush1.bf16.msra.mxu0 0
    %6632 = vmatprep.subr.bf16.mxu0 0
    %6633 = vmatpush1.bf16.msra.mxu0 0
    %6634 = vmatprep.subr.bf16.mxu0 0
    %6635 = vmatpush1.bf16.msra.mxu0 0
    %6636 = vmatprep.subr.bf16.mxu0 0
    %6637 = vmatpush1.bf16.msra.mxu0 0
    %6638 = vmatprep.subr.bf16.mxu0 0
    %6639 = vmatpush1.bf16.msra.mxu0 0
    %6640 = vmatprep.mubr.bf16.mxu0 0
    %6641 = vmatmul.mubr.bf16.gmra.mrb[0].mxu0 %v6415
    %v6642 = vpop.f32.mrb[0].mxu0
    %v6643 = vadd.f32 0.0, %v6642
    %v6644 = vpop.f32.mrb[0].mxu0
    %v6645 = vadd.f32 0.0, %v6644
    %v6646 = vpop.f32.mrb[0].mxu0
    %v6647 = vpop.f32.mrb[0].mxu0
    %6648 = vdwg.mxu0
    %6649 = vmatprep.subr.bf16.mxu0 %v6547
    %6650 = vmatpush1.bf16.msra.mxu0 %v6546
    %6651 = vmatprep.subr.bf16.mxu0 %v6551
    %6652 = vmatpush1.bf16.msra.mxu0 %v6550
    %6653 = vmatprep.subr.bf16.mxu0 %v6555
    %6654 = vmatpush1.bf16.msra.mxu0 %v6554
    %6655 = vmatprep.subr.bf16.mxu0 %v6559
    %6656 = vmatpush1.bf16.msra.mxu0 %v6558
    %6657 = vmatprep.subr.bf16.mxu0 %v6563
    %6658 = vmatpush1.bf16.msra.mxu0 %v6562
    %6659 = vmatprep.subr.bf16.mxu0 %v6567
    %6660 = vmatpush1.bf16.msra.mxu0 %v6566
    %6661 = vmatprep.subr.bf16.mxu0 %v6571
    %6662 = vmatpush1.bf16.msra.mxu0 %v6570
    %6663 = vmatprep.subr.bf16.mxu0 %v6575
    %6664 = vmatpush1.bf16.msra.mxu0 %v6574
    %6665 = vmatprep.subr.bf16.mxu0 0
    %6666 = vmatpush1.bf16.msra.mxu0 0
    %6667 = vmatprep.subr.bf16.mxu0 0
    %6668 = vmatpush1.bf16.msra.mxu0 0
    %6669 = vmatprep.subr.bf16.mxu0 0
    %6670 = vmatpush1.bf16.msra.mxu0 0
    %6671 = vmatprep.subr.bf16.mxu0 0
    %6672 = vmatpush1.bf16.msra.mxu0 0
    %6673 = vmatprep.subr.bf16.mxu0 0
    %6674 = vmatpush1.bf16.msra.mxu0 0
    %6675 = vmatprep.subr.bf16.mxu0 0
    %6676 = vmatpush1.bf16.msra.mxu0 0
    %6677 = vmatprep.subr.bf16.mxu0 0
    %6678 = vmatpush1.bf16.msra.mxu0 0
    %6679 = vmatprep.subr.bf16.mxu0 0
    %6680 = vmatpush1.bf16.msra.mxu0 0
    %6681 = vmatprep.mubr.bf16.mxu0 0
    %6682 = vmatmul.mubr.bf16.gmra.mrb[0].mxu0 %v6415
    %v6683 = vpop.f32.mrb[0].mxu0
    %v6684 = vadd.f32 0.0, %v6683
    %v6685 = vpop.f32.mrb[0].mxu0
    %v6686 = vadd.f32 0.0, %v6685
    %v6687 = vpop.f32.mrb[0].mxu0
    %v6688 = vpop.f32.mrb[0].mxu0
    %6689 = vdwg.mxu0
    %v6690 = vpack.c.bf16 %v6340, %v6340
    %v6691 = vld [vmem:[%s490] sm:$0xff]
    %v6692 = vld [vmem:[%s490 + $0x8] sm:$0xff]
    %v6693 = vld [vmem:[%s490 + $0x10] sm:$0xff]
    %v6694 = vld [vmem:[%s490 + $0x18] sm:$0xff]
    %v6695 = vld [vmem:[%s490 + $0x20] sm:$0xff]
    %v6696 = vld [vmem:[%s490 + $0x28] sm:$0xff]
    %v6697 = vld [vmem:[%s490 + $0x30] sm:$0xff]
    %v6698 = vld [vmem:[%s490 + $0x38] sm:$0xff]
    %v6699 = vld [vmem:[%s490 + $0x40] sm:$0xff]
    %v6700 = vld [vmem:[%s490 + $0x48] sm:$0xff]
    %v6701 = vld [vmem:[%s490 + $0x50] sm:$0xff]
    %v6702 = vld [vmem:[%s490 + $0x58] sm:$0xff]
    %v6703 = vld [vmem:[%s490 + $0x60] sm:$0xff]
    %v6704 = vld [vmem:[%s490 + $0x68] sm:$0xff]
    %v6705 = vld [vmem:[%s490 + $0x70] sm:$0xff]
    %v6706 = vld [vmem:[%s490 + $0x78] sm:$0xff]
    %v6707 = vld [vmem:[%s490 + $0x80] sm:$0xff]
    %v6708 = vld [vmem:[%s490 + $0x88] sm:$0xff]
    %v6709 = vld [vmem:[%s490 + $0x90] sm:$0xff]
    %v6710 = vld [vmem:[%s490 + $0x98] sm:$0xff]
    %v6711 = vld [vmem:[%s490 + $0xa0] sm:$0xff]
    %v6712 = vld [vmem:[%s490 + $0xa8] sm:$0xff]
    %v6713 = vld [vmem:[%s490 + $0xb0] sm:$0xff]
    %v6714 = vld [vmem:[%s490 + $0xb8] sm:$0xff]
    %v6715 = vld [vmem:[%s490 + $0xc0] sm:$0xff]
    %v6716 = vld [vmem:[%s490 + $0xc8] sm:$0xff]
    %v6717 = vld [vmem:[%s490 + $0xd0] sm:$0xff]
    %v6718 = vld [vmem:[%s490 + $0xd8] sm:$0xff]
    %v6719 = vld [vmem:[%s490 + $0xe0] sm:$0xff]
    %v6720 = vld [vmem:[%s490 + $0xe8] sm:$0xff]
    %v6721 = vld [vmem:[%s490 + $0xf0] sm:$0xff]
    %v6722 = vld [vmem:[%s490 + $0xf8] sm:$0xff]
    %v6755 = vunpack.c.l.b16 %v6691
    %v6756 = vunpack.c.h.b16 %v6691
    %v6757 = vunpack.c.l.b16 %v6692
    %v6758 = vunpack.c.h.b16 %v6692
    %v6759 = vunpack.c.l.b16 %v6693
    %v6760 = vunpack.c.h.b16 %v6693
    %v6761 = vunpack.c.l.b16 %v6694
    %v6762 = vunpack.c.h.b16 %v6694
    %v6763 = vunpack.c.l.b16 %v6695
    %v6764 = vunpack.c.h.b16 %v6695
    %v6765 = vunpack.c.l.b16 %v6696
    %v6766 = vunpack.c.h.b16 %v6696
    %v6767 = vunpack.c.l.b16 %v6697
    %v6768 = vunpack.c.h.b16 %v6697
    %v6769 = vunpack.c.l.b16 %v6698
    %v6770 = vunpack.c.h.b16 %v6698
    %v6771 = vunpack.c.l.b16 %v6699
    %v6772 = vunpack.c.h.b16 %v6699
    %v6773 = vunpack.c.l.b16 %v6700
    %v6774 = vunpack.c.h.b16 %v6700
    %v6775 = vunpack.c.l.b16 %v6701
    %v6776 = vunpack.c.h.b16 %v6701
    %v6777 = vunpack.c.l.b16 %v6702
    %v6778 = vunpack.c.h.b16 %v6702
    %v6779 = vunpack.c.l.b16 %v6703
    %v6780 = vunpack.c.h.b16 %v6703
    %v6781 = vunpack.c.l.b16 %v6704
    %v6782 = vunpack.c.h.b16 %v6704
    %v6783 = vunpack.c.l.b16 %v6705
    %v6784 = vunpack.c.h.b16 %v6705
    %v6785 = vunpack.c.l.b16 %v6706
    %v6786 = vunpack.c.h.b16 %v6706
    %v6787 = vunpack.c.l.b16 %v6707
    %v6788 = vunpack.c.h.b16 %v6707
    %v6789 = vunpack.c.l.b16 %v6708
    %v6790 = vunpack.c.h.b16 %v6708
    %v6791 = vunpack.c.l.b16 %v6709
    %v6792 = vunpack.c.h.b16 %v6709
    %v6793 = vunpack.c.l.b16 %v6710
    %v6794 = vunpack.c.h.b16 %v6710
    %v6795 = vunpack.c.l.b16 %v6711
    %v6796 = vunpack.c.h.b16 %v6711
    %v6797 = vunpack.c.l.b16 %v6712
    %v6798 = vunpack.c.h.b16 %v6712
    %v6799 = vunpack.c.l.b16 %v6713
    %v6800 = vunpack.c.h.b16 %v6713
    %v6801 = vunpack.c.l.b16 %v6714
    %v6802 = vunpack.c.h.b16 %v6714
    %v6803 = vunpack.c.l.b16 %v6715
    %v6804 = vunpack.c.h.b16 %v6715
    %v6805 = vunpack.c.l.b16 %v6716
    %v6806 = vunpack.c.h.b16 %v6716
    %v6807 = vunpack.c.l.b16 %v6717
    %v6808 = vunpack.c.h.b16 %v6717
    %v6809 = vunpack.c.l.b16 %v6718
    %v6810 = vunpack.c.h.b16 %v6718
    %v6811 = vunpack.c.l.b16 %v6719
    %v6812 = vunpack.c.h.b16 %v6719
    %v6813 = vunpack.c.l.b16 %v6720
    %v6814 = vunpack.c.h.b16 %v6720
    %v6815 = vunpack.c.l.b16 %v6721
    %v6816 = vunpack.c.h.b16 %v6721
    %v6817 = vunpack.c.l.b16 %v6722
    %v6818 = vunpack.c.h.b16 %v6722
    %v6819 = vpack.c.b16 %v6759, %v6755
    %v6820 = vpack.c.b16 %v6760, %v6756
    %v6821 = vpack.c.b16 %v6761, %v6757
    %v6822 = vpack.c.b16 %v6762, %v6758
    %v6823 = vpack.c.b16 %v6767, %v6763
    %v6824 = vpack.c.b16 %v6768, %v6764
    %v6825 = vpack.c.b16 %v6769, %v6765
    %v6826 = vpack.c.b16 %v6770, %v6766
    %v6827 = vpack.c.b16 %v6775, %v6771
    %v6828 = vpack.c.b16 %v6776, %v6772
    %v6829 = vpack.c.b16 %v6777, %v6773
    %v6830 = vpack.c.b16 %v6778, %v6774
    %v6831 = vpack.c.b16 %v6783, %v6779
    %v6832 = vpack.c.b16 %v6784, %v6780
    %v6833 = vpack.c.b16 %v6785, %v6781
    %v6834 = vpack.c.b16 %v6786, %v6782
    %v6835 = vpack.c.b16 %v6791, %v6787
    %v6836 = vpack.c.b16 %v6792, %v6788
    %v6837 = vpack.c.b16 %v6793, %v6789
    %v6838 = vpack.c.b16 %v6794, %v6790
    %v6839 = vpack.c.b16 %v6799, %v6795
    %v6840 = vpack.c.b16 %v6800, %v6796
    %v6841 = vpack.c.b16 %v6801, %v6797
    %v6842 = vpack.c.b16 %v6802, %v6798
    %v6843 = vpack.c.b16 %v6807, %v6803
    %v6844 = vpack.c.b16 %v6808, %v6804
    %v6845 = vpack.c.b16 %v6809, %v6805
    %v6846 = vpack.c.b16 %v6810, %v6806
    %v6847 = vpack.c.b16 %v6815, %v6811
    %v6848 = vpack.c.b16 %v6816, %v6812
    %v6849 = vpack.c.b16 %v6817, %v6813
    %v6850 = vpack.c.b16 %v6818, %v6814
    %6883 = vmatprep.subr.bf16.mxu0 %v6820
    %6884 = vmatpush1.bf16.msra.mxu0 %v6819
    %6885 = vmatprep.subr.bf16.mxu0 %v6824
    %6886 = vmatpush1.bf16.msra.mxu0 %v6823
    %6887 = vmatprep.subr.bf16.mxu0 %v6828
    %6888 = vmatpush1.bf16.msra.mxu0 %v6827
    %6889 = vmatprep.subr.bf16.mxu0 %v6832
    %6890 = vmatpush1.bf16.msra.mxu0 %v6831
    %6891 = vmatprep.subr.bf16.mxu0 %v6836
    %6892 = vmatpush1.bf16.msra.mxu0 %v6835
    %6893 = vmatprep.subr.bf16.mxu0 %v6840
    %6894 = vmatpush1.bf16.msra.mxu0 %v6839
    %6895 = vmatprep.subr.bf16.mxu0 %v6844
    %6896 = vmatpush1.bf16.msra.mxu0 %v6843
    %6897 = vmatprep.subr.bf16.mxu0 %v6848
    %6898 = vmatpush1.bf16.msra.mxu0 %v6847
    %6899 = vmatprep.subr.bf16.mxu0 0
    %6900 = vmatpush1.bf16.msra.mxu0 0
    %6901 = vmatprep.subr.bf16.mxu0 0
    %6902 = vmatpush1.bf16.msra.mxu0 0
    %6903 = vmatprep.subr.bf16.mxu0 0
    %6904 = vmatpush1.bf16.msra.mxu0 0
    %6905 = vmatprep.subr.bf16.mxu0 0
    %6906 = vmatpush1.bf16.msra.mxu0 0
    %6907 = vmatprep.subr.bf16.mxu0 0
    %6908 = vmatpush1.bf16.msra.mxu0 0
    %6909 = vmatprep.subr.bf16.mxu0 0
    %6910 = vmatpush1.bf16.msra.mxu0 0
    %6911 = vmatprep.subr.bf16.mxu0 0
    %6912 = vmatpush1.bf16.msra.mxu0 0
    %6913 = vmatprep.subr.bf16.mxu0 0
    %6914 = vmatpush1.bf16.msra.mxu0 0
    %6915 = vmatprep.mubr.bf16.mxu0 0
    %6916 = vmatmul.mubr.bf16.gmra.mrb[0].mxu0 %v6690
    %v6917 = vpop.f32.mrb[0].mxu0
    %v6918 = vadd.f32 0.0, %v6917
    %v6919 = vpop.f32.mrb[0].mxu0
    %v6920 = vadd.f32 0.0, %v6919
    %v6921 = vpop.f32.mrb[0].mxu0
    %v6922 = vpop.f32.mrb[0].mxu0
    %6923 = vdwg.mxu0
    %6924 = vmatprep.subr.bf16.mxu0 %v6822
    %6925 = vmatpush1.bf16.msra.mxu0 %v6821
    %6926 = vmatprep.subr.bf16.mxu0 %v6826
    %6927 = vmatpush1.bf16.msra.mxu0 %v6825
    %6928 = vmatprep.subr.bf16.mxu0 %v6830
    %6929 = vmatpush1.bf16.msra.mxu0 %v6829
    %6930 = vmatprep.subr.bf16.mxu0 %v6834
    %6931 = vmatpush1.bf16.msra.mxu0 %v6833
    %6932 = vmatprep.subr.bf16.mxu0 %v6838
    %6933 = vmatpush1.bf16.msra.mxu0 %v6837
    %6934 = vmatprep.subr.bf16.mxu0 %v6842
    %6935 = vmatpush1.bf16.msra.mxu0 %v6841
    %6936 = vmatprep.subr.bf16.mxu0 %v6846
    %6937 = vmatpush1.bf16.msra.mxu0 %v6845
    %6938 = vmatprep.subr.bf16.mxu0 %v6850
    %6939 = vmatpush1.bf16.msra.mxu0 %v6849
    %6940 = vmatprep.subr.bf16.mxu0 0
    %6941 = vmatpush1.bf16.msra.mxu0 0
    %6942 = vmatprep.subr.bf16.mxu0 0
    %6943 = vmatpush1.bf16.msra.mxu0 0
    %6944 = vmatprep.subr.bf16.mxu0 0
    %6945 = vmatpush1.bf16.msra.mxu0 0
    %6946 = vmatprep.subr.bf16.mxu0 0
    %6947 = vmatpush1.bf16.msra.mxu0 0
    %6948 = vmatprep.subr.bf16.mxu0 0
    %6949 = vmatpush1.bf16.msra.mxu0 0
    %6950 = vmatprep.subr.bf16.mxu0 0
    %6951 = vmatpush1.bf16.msra.mxu0 0
    %6952 = vmatprep.subr.bf16.mxu0 0
    %6953 = vmatpush1.bf16.msra.mxu0 0
    %6954 = vmatprep.subr.bf16.mxu0 0
    %6955 = vmatpush1.bf16.msra.mxu0 0
    %6956 = vmatprep.mubr.bf16.mxu0 0
    %6957 = vmatmul.mubr.bf16.gmra.mrb[0].mxu0 %v6690
    %v6958 = vpop.f32.mrb[0].mxu0
    %v6959 = vadd.f32 0.0, %v6958
    %v6960 = vpop.f32.mrb[0].mxu0
    %v6961 = vadd.f32 0.0, %v6960
    %v6962 = vpop.f32.mrb[0].mxu0
    %v6963 = vpop.f32.mrb[0].mxu0
    %6964 = vdwg.mxu0
    %v6997 = vunpack.c.l.b16 %v6349
    %v6998 = vunpack.c.h.b16 %v6349
    %v6999 = vunpack.c.l.b16 %v6350
    %v7000 = vunpack.c.h.b16 %v6350
    %v7001 = vunpack.c.l.b16 %v6351
    %v7002 = vunpack.c.h.b16 %v6351
    %v7003 = vunpack.c.l.b16 %v6352
    %v7004 = vunpack.c.h.b16 %v6352
    %v7005 = vunpack.c.l.b16 %v6353
    %v7006 = vunpack.c.h.b16 %v6353
    %v7007 = vunpack.c.l.b16 %v6354
    %v7008 = vunpack.c.h.b16 %v6354
    %v7009 = vunpack.c.l.b16 %v6355
    %v7010 = vunpack.c.h.b16 %v6355
    %v7011 = vunpack.c.l.b16 %v6356
    %v7012 = vunpack.c.h.b16 %v6356
    %v7013 = vunpack.c.l.b16 %v6357
    %v7014 = vunpack.c.h.b16 %v6357
    %v7015 = vunpack.c.l.b16 %v6358
    %v7016 = vunpack.c.h.b16 %v6358
    %v7017 = vunpack.c.l.b16 %v6359
    %v7018 = vunpack.c.h.b16 %v6359
    %v7019 = vunpack.c.l.b16 %v6360
    %v7020 = vunpack.c.h.b16 %v6360
    %v7021 = vunpack.c.l.b16 %v6361
    %v7022 = vunpack.c.h.b16 %v6361
    %v7023 = vunpack.c.l.b16 %v6362
    %v7024 = vunpack.c.h.b16 %v6362
    %v7025 = vunpack.c.l.b16 %v6363
    %v7026 = vunpack.c.h.b16 %v6363
    %v7027 = vunpack.c.l.b16 %v6364
    %v7028 = vunpack.c.h.b16 %v6364
    %v7029 = vunpack.c.l.b16 %v6365
    %v7030 = vunpack.c.h.b16 %v6365
    %v7031 = vunpack.c.l.b16 %v6366
    %v7032 = vunpack.c.h.b16 %v6366
    %v7033 = vunpack.c.l.b16 %v6367
    %v7034 = vunpack.c.h.b16 %v6367
    %v7035 = vunpack.c.l.b16 %v6368
    %v7036 = vunpack.c.h.b16 %v6368
    %v7037 = vunpack.c.l.b16 %v6369
    %v7038 = vunpack.c.h.b16 %v6369
    %v7039 = vunpack.c.l.b16 %v6370
    %v7040 = vunpack.c.h.b16 %v6370
    %v7041 = vunpack.c.l.b16 %v6371
    %v7042 = vunpack.c.h.b16 %v6371
    %v7043 = vunpack.c.l.b16 %v6372
    %v7044 = vunpack.c.h.b16 %v6372
    %v7045 = vunpack.c.l.b16 %v6373
    %v7046 = vunpack.c.h.b16 %v6373
    %v7047 = vunpack.c.l.b16 %v6374
    %v7048 = vunpack.c.h.b16 %v6374
    %v7049 = vunpack.c.l.b16 %v6375
    %v7050 = vunpack.c.h.b16 %v6375
    %v7051 = vunpack.c.l.b16 %v6376
    %v7052 = vunpack.c.h.b16 %v6376
    %v7053 = vunpack.c.l.b16 %v6377
    %v7054 = vunpack.c.h.b16 %v6377
    %v7055 = vunpack.c.l.b16 %v6378
    %v7056 = vunpack.c.h.b16 %v6378
    %v7057 = vunpack.c.l.b16 %v6379
    %v7058 = vunpack.c.h.b16 %v6379
    %v7059 = vunpack.c.l.b16 %v6380
    %v7060 = vunpack.c.h.b16 %v6380
    %v7061 = vpack.c.b16 %v7001, %v6997
    %v7062 = vpack.c.b16 %v7002, %v6998
    %v7063 = vpack.c.b16 %v7003, %v6999
    %v7064 = vpack.c.b16 %v7004, %v7000
    %v7065 = vpack.c.b16 %v7009, %v7005
    %v7066 = vpack.c.b16 %v7010, %v7006
    %v7067 = vpack.c.b16 %v7011, %v7007
    %v7068 = vpack.c.b16 %v7012, %v7008
    %v7069 = vpack.c.b16 %v7017, %v7013
    %v7070 = vpack.c.b16 %v7018, %v7014
    %v7071 = vpack.c.b16 %v7019, %v7015
    %v7072 = vpack.c.b16 %v7020, %v7016
    %v7073 = vpack.c.b16 %v7025, %v7021
    %v7074 = vpack.c.b16 %v7026, %v7022
    %v7075 = vpack.c.b16 %v7027, %v7023
    %v7076 = vpack.c.b16 %v7028, %v7024
    %v7077 = vpack.c.b16 %v7033, %v7029
    %v7078 = vpack.c.b16 %v7034, %v7030
    %v7079 = vpack.c.b16 %v7035, %v7031
    %v7080 = vpack.c.b16 %v7036, %v7032
    %v7081 = vpack.c.b16 %v7041, %v7037
    %v7082 = vpack.c.b16 %v7042, %v7038
    %v7083 = vpack.c.b16 %v7043, %v7039
    %v7084 = vpack.c.b16 %v7044, %v7040
    %v7085 = vpack.c.b16 %v7049, %v7045
    %v7086 = vpack.c.b16 %v7050, %v7046
    %v7087 = vpack.c.b16 %v7051, %v7047
    %v7088 = vpack.c.b16 %v7052, %v7048
    %v7089 = vpack.c.b16 %v7057, %v7053
    %v7090 = vpack.c.b16 %v7058, %v7054
    %v7091 = vpack.c.b16 %v7059, %v7055
    %v7092 = vpack.c.b16 %v7060, %v7056
    %7125 = vmatprep.subr.bf16.mxu0 %v7062
    %7126 = vmatpush1.bf16.msra.mxu0 %v7061
    %7127 = vmatprep.subr.bf16.mxu0 %v7066
    %7128 = vmatpush1.bf16.msra.mxu0 %v7065
    %7129 = vmatprep.subr.bf16.mxu0 %v7070
    %7130 = vmatpush1.bf16.msra.mxu0 %v7069
    %7131 = vmatprep.subr.bf16.mxu0 %v7074
    %7132 = vmatpush1.bf16.msra.mxu0 %v7073
    %7133 = vmatprep.subr.bf16.mxu0 %v7078
    %7134 = vmatpush1.bf16.msra.mxu0 %v7077
    %7135 = vmatprep.subr.bf16.mxu0 %v7082
    %7136 = vmatpush1.bf16.msra.mxu0 %v7081
    %7137 = vmatprep.subr.bf16.mxu0 %v7086
    %7138 = vmatpush1.bf16.msra.mxu0 %v7085
    %7139 = vmatprep.subr.bf16.mxu0 %v7090
    %7140 = vmatpush1.bf16.msra.mxu0 %v7089
    %7141 = vmatprep.subr.bf16.mxu0 0
    %7142 = vmatpush1.bf16.msra.mxu0 0
    %7143 = vmatprep.subr.bf16.mxu0 0
    %7144 = vmatpush1.bf16.msra.mxu0 0
    %7145 = vmatprep.subr.bf16.mxu0 0
    %7146 = vmatpush1.bf16.msra.mxu0 0
    %7147 = vmatprep.subr.bf16.mxu0 0
    %7148 = vmatpush1.bf16.msra.mxu0 0
    %7149 = vmatprep.subr.bf16.mxu0 0
    %7150 = vmatpush1.bf16.msra.mxu0 0
    %7151 = vmatprep.subr.bf16.mxu0 0
    %7152 = vmatpush1.bf16.msra.mxu0 0
    %7153 = vmatprep.subr.bf16.mxu0 0
    %7154 = vmatpush1.bf16.msra.mxu0 0
    %7155 = vmatprep.subr.bf16.mxu0 0
    %7156 = vmatpush1.bf16.msra.mxu0 0
    %7157 = vmatprep.mubr.bf16.mxu0 0
    %7158 = vmatmul.mubr.bf16.gmra.mrb[0].mxu0 %v6348
    %v7159 = vpop.f32.mrb[0].mxu0
    %v7160 = vadd.f32 %v6643, %v7159
    %v7161 = vpop.f32.mrb[0].mxu0
    %v7162 = vadd.f32 %v6645, %v7161
    %v7163 = vpop.f32.mrb[0].mxu0
    %v7164 = vpop.f32.mrb[0].mxu0
    %7165 = vdwg.mxu0
    %7166 = vmatprep.subr.bf16.mxu0 %v7064
    %7167 = vmatpush1.bf16.msra.mxu0 %v7063
    %7168 = vmatprep.subr.bf16.mxu0 %v7068
    %7169 = vmatpush1.bf16.msra.mxu0 %v7067
    %7170 = vmatprep.subr.bf16.mxu0 %v7072
    %7171 = vmatpush1.bf16.msra.mxu0 %v7071
    %7172 = vmatprep.subr.bf16.mxu0 %v7076
    %7173 = vmatpush1.bf16.msra.mxu0 %v7075
    %7174 = vmatprep.subr.bf16.mxu0 %v7080
    %7175 = vmatpush1.bf16.msra.mxu0 %v7079
    %7176 = vmatprep.subr.bf16.mxu0 %v7084
    %7177 = vmatpush1.bf16.msra.mxu0 %v7083
    %7178 = vmatprep.subr.bf16.mxu0 %v7088
    %7179 = vmatpush1.bf16.msra.mxu0 %v7087
    %7180 = vmatprep.subr.bf16.mxu0 %v7092
    %7181 = vmatpush1.bf16.msra.mxu0 %v7091
    %7182 = vmatprep.subr.bf16.mxu0 0
    %7183 = vmatpush1.bf16.msra.mxu0 0
    %7184 = vmatprep.subr.bf16.mxu0 0
    %7185 = vmatpush1.bf16.msra.mxu0 0
    %7186 = vmatprep.subr.bf16.mxu0 0
    %7187 = vmatpush1.bf16.msra.mxu0 0
    %7188 = vmatprep.subr.bf16.mxu0 0
    %7189 = vmatpush1.bf16.msra.mxu0 0
    %7190 = vmatprep.subr.bf16.mxu0 0
    %7191 = vmatpush1.bf16.msra.mxu0 0
    %7192 = vmatprep.subr.bf16.mxu0 0
    %7193 = vmatpush1.bf16.msra.mxu0 0
    %7194 = vmatprep.subr.bf16.mxu0 0
    %7195 = vmatpush1.bf16.msra.mxu0 0
    %7196 = vmatprep.subr.bf16.mxu0 0
    %7197 = vmatpush1.bf16.msra.mxu0 0
    %7198 = vmatprep.mubr.bf16.mxu0 0
    %7199 = vmatmul.mubr.bf16.gmra.mrb[0].mxu0 %v6348
    %v7200 = vpop.f32.mrb[0].mxu0
    %v7201 = vadd.f32 %v6684, %v7200
    %v7202 = vpop.f32.mrb[0].mxu0
    %v7203 = vadd.f32 %v6686, %v7202
    %v7204 = vpop.f32.mrb[0].mxu0
    %v7205 = vpop.f32.mrb[0].mxu0
    %7206 = vdwg.mxu0
    %v7207 = vld [vmem:[%s6] sm:$0xf]
    %v7209 = vlaneseq
    %v7210 = vshrl.u32 %v7209, 7
    %v7211 = vsub.s32 0, %v7210
    %v7212 = vrot.slane %v7207, %v7211
    %v7213 = vlaneseq
    %v7214 = vshrl.u32 %v7213, 7
    %v7215 = vsub.s32 1, %v7214
    %v7216 = vrot.slane %v7207, %v7215
    %v7217 = vlaneseq
    %v7218 = vshrl.u32 %v7217, 7
    %v7219 = vsub.s32 2, %v7218
    %v7220 = vrot.slane %v7207, %v7219
    %v7221 = vlaneseq
    %v7222 = vshrl.u32 %v7221, 7
    %v7223 = vsub.s32 3, %v7222
    %v7224 = vrot.slane %v7207, %v7223
    %v7229 = vadd.f32 %v7160, %v7212
    %v7230 = vadd.f32 %v7162, %v7216
    %v7231 = vadd.f32 %v7201, %v7220
    %v7232 = vadd.f32 %v7203, %v7224
    %v7233 = vxor.u32 %v7229, 2147483648
    %v7234 = vmul.f32 %v7233, 1.442695
    %v7235 = vpow.pop %v7234
    %v7236 = vadd.f32 %v7235, 1.0
    %v7237 = vrcp.pop %v7236
    %v7238 = vmul.f32 1.0, %v7237
    %v7239 = vxor.u32 %v7230, 2147483648
    %v7240 = vmul.f32 %v7239, 1.442695
    %v7241 = vpow.pop %v7240
    %v7242 = vadd.f32 %v7241, 1.0
    %v7243 = vrcp.pop %v7242
    %v7244 = vmul.f32 1.0, %v7243
    %v7245 = vtanh.pop %v7231
    %v7246 = vxor.u32 %v7232, 2147483648
    %v7247 = vmul.f32 %v7246, 1.442695
    %v7248 = vpow.pop %v7247
    %v7249 = vadd.f32 %v7248, 1.0
    %v7250 = vrcp.pop %v7249
    %v7251 = vmul.f32 1.0, %v7250
    %v7252 = vmul.f32 %v7244, %v6343
    %v7253 = vmul.f32 %v7238, %v7245
    %v7254 = vadd.f32 %v7252, %v7253
    %v7255 = vtanh.pop %v7254
    %v7256 = vmul.f32 %v7251, %v7255
    %v7289 = vunpack.c.l.b16 %v6383
    %v7290 = vunpack.c.h.b16 %v6383
    %v7291 = vunpack.c.l.b16 %v6384
    %v7292 = vunpack.c.h.b16 %v6384
    %v7293 = vunpack.c.l.b16 %v6385
    %v7294 = vunpack.c.h.b16 %v6385
    %v7295 = vunpack.c.l.b16 %v6386
    %v7296 = vunpack.c.h.b16 %v6386
    %v7297 = vunpack.c.l.b16 %v6387
    %v7298 = vunpack.c.h.b16 %v6387
    %v7299 = vunpack.c.l.b16 %v6388
    %v7300 = vunpack.c.h.b16 %v6388
    %v7301 = vunpack.c.l.b16 %v6389
    %v7302 = vunpack.c.h.b16 %v6389
    %v7303 = vunpack.c.l.b16 %v6390
    %v7304 = vunpack.c.h.b16 %v6390
    %v7305 = vunpack.c.l.b16 %v6391
    %v7306 = vunpack.c.h.b16 %v6391
    %v7307 = vunpack.c.l.b16 %v6392
    %v7308 = vunpack.c.h.b16 %v6392
    %v7309 = vunpack.c.l.b16 %v6393
    %v7310 = vunpack.c.h.b16 %v6393
    %v7311 = vunpack.c.l.b16 %v6394
    %v7312 = vunpack.c.h.b16 %v6394
    %v7313 = vunpack.c.l.b16 %v6395
    %v7314 = vunpack.c.h.b16 %v6395
    %v7315 = vunpack.c.l.b16 %v6396
    %v7316 = vunpack.c.h.b16 %v6396
    %v7317 = vunpack.c.l.b16 %v6397
    %v7318 = vunpack.c.h.b16 %v6397
    %v7319 = vunpack.c.l.b16 %v6398
    %v7320 = vunpack.c.h.b16 %v6398
    %v7321 = vunpack.c.l.b16 %v6399
    %v7322 = vunpack.c.h.b16 %v6399
    %v7323 = vunpack.c.l.b16 %v6400
    %v7324 = vunpack.c.h.b16 %v6400
    %v7325 = vunpack.c.l.b16 %v6401
    %v7326 = vunpack.c.h.b16 %v6401
    %v7327 = vunpack.c.l.b16 %v6402
    %v7328 = vunpack.c.h.b16 %v6402
    %v7329 = vunpack.c.l.b16 %v6403
    %v7330 = vunpack.c.h.b16 %v6403
    %v7331 = vunpack.c.l.b16 %v6404
    %v7332 = vunpack.c.h.b16 %v6404
    %v7333 = vunpack.c.l.b16 %v6405
    %v7334 = vunpack.c.h.b16 %v6405
    %v7335 = vunpack.c.l.b16 %v6406
    %v7336 = vunpack.c.h.b16 %v6406
    %v7337 = vunpack.c.l.b16 %v6407
    %v7338 = vunpack.c.h.b16 %v6407
    %v7339 = vunpack.c.l.b16 %v6408
    %v7340 = vunpack.c.h.b16 %v6408
    %v7341 = vunpack.c.l.b16 %v6409
    %v7342 = vunpack.c.h.b16 %v6409
    %v7343 = vunpack.c.l.b16 %v6410
    %v7344 = vunpack.c.h.b16 %v6410
    %v7345 = vunpack.c.l.b16 %v6411
    %v7346 = vunpack.c.h.b16 %v6411
    %v7347 = vunpack.c.l.b16 %v6412
    %v7348 = vunpack.c.h.b16 %v6412
    %v7349 = vunpack.c.l.b16 %v6413
    %v7350 = vunpack.c.h.b16 %v6413
    %v7351 = vunpack.c.l.b16 %v6414
    %v7352 = vunpack.c.h.b16 %v6414
    %v7353 = vpack.c.b16 %v7293, %v7289
    %v7354 = vpack.c.b16 %v7294, %v7290
    %v7355 = vpack.c.b16 %v7295, %v7291
    %v7356 = vpack.c.b16 %v7296, %v7292
    %v7357 = vpack.c.b16 %v7301, %v7297
    %v7358 = vpack.c.b16 %v7302, %v7298
    %v7359 = vpack.c.b16 %v7303, %v7299
    %v7360 = vpack.c.b16 %v7304, %v7300
    %v7361 = vpack.c.b16 %v7309, %v7305
    %v7362 = vpack.c.b16 %v7310, %v7306
    %v7363 = vpack.c.b16 %v7311, %v7307
    %v7364 = vpack.c.b16 %v7312, %v7308
    %v7365 = vpack.c.b16 %v7317, %v7313
    %v7366 = vpack.c.b16 %v7318, %v7314
    %v7367 = vpack.c.b16 %v7319, %v7315
    %v7368 = vpack.c.b16 %v7320, %v7316
    %v7369 = vpack.c.b16 %v7325, %v7321
    %v7370 = vpack.c.b16 %v7326, %v7322
    %v7371 = vpack.c.b16 %v7327, %v7323
    %v7372 = vpack.c.b16 %v7328, %v7324
    %v7373 = vpack.c.b16 %v7333, %v7329
    %v7374 = vpack.c.b16 %v7334, %v7330
    %v7375 = vpack.c.b16 %v7335, %v7331
    %v7376 = vpack.c.b16 %v7336, %v7332
    %v7377 = vpack.c.b16 %v7341, %v7337
    %v7378 = vpack.c.b16 %v7342, %v7338
    %v7379 = vpack.c.b16 %v7343, %v7339
    %v7380 = vpack.c.b16 %v7344, %v7340
    %v7381 = vpack.c.b16 %v7349, %v7345
    %v7382 = vpack.c.b16 %v7350, %v7346
    %v7383 = vpack.c.b16 %v7351, %v7347
    %v7384 = vpack.c.b16 %v7352, %v7348
    %7417 = vmatprep.subr.bf16.mxu0 %v7354
    %7418 = vmatpush1.bf16.msra.mxu0 %v7353
    %7419 = vmatprep.subr.bf16.mxu0 %v7358
    %7420 = vmatpush1.bf16.msra.mxu0 %v7357
    %7421 = vmatprep.subr.bf16.mxu0 %v7362
    %7422 = vmatpush1.bf16.msra.mxu0 %v7361
    %7423 = vmatprep.subr.bf16.mxu0 %v7366
    %7424 = vmatpush1.bf16.msra.mxu0 %v7365
    %7425 = vmatprep.subr.bf16.mxu0 %v7370
    %7426 = vmatpush1.bf16.msra.mxu0 %v7369
    %7427 = vmatprep.subr.bf16.mxu0 %v7374
    %7428 = vmatpush1.bf16.msra.mxu0 %v7373
    %7429 = vmatprep.subr.bf16.mxu0 %v7378
    %7430 = vmatpush1.bf16.msra.mxu0 %v7377
    %7431 = vmatprep.subr.bf16.mxu0 %v7382
    %7432 = vmatpush1.bf16.msra.mxu0 %v7381
    %7433 = vmatprep.subr.bf16.mxu0 0
    %7434 = vmatpush1.bf16.msra.mxu0 0
    %7435 = vmatprep.subr.bf16.mxu0 0
    %7436 = vmatpush1.bf16.msra.mxu0 0
    %7437 = vmatprep.subr.bf16.mxu0 0
    %7438 = vmatpush1.bf16.msra.mxu0 0
    %7439 = vmatprep.subr.bf16.mxu0 0
    %7440 = vmatpush1.bf16.msra.mxu0 0
    %7441 = vmatprep.subr.bf16.mxu0 0
    %7442 = vmatpush1.bf16.msra.mxu0 0
    %7443 = vmatprep.subr.bf16.mxu0 0
    %7444 = vmatpush1.bf16.msra.mxu0 0
    %7445 = vmatprep.subr.bf16.mxu0 0
    %7446 = vmatpush1.bf16.msra.mxu0 0
    %7447 = vmatprep.subr.bf16.mxu0 0
    %7448 = vmatpush1.bf16.msra.mxu0 0
    %7449 = vmatprep.mubr.bf16.mxu0 0
    %7450 = vmatmul.mubr.bf16.gmra.mrb[0].mxu0 %v6382
    %v7451 = vpop.f32.mrb[0].mxu0
    %v7452 = vadd.f32 %v6918, %v7451
    %v7453 = vpop.f32.mrb[0].mxu0
    %v7454 = vadd.f32 %v6920, %v7453
    %v7455 = vpop.f32.mrb[0].mxu0
    %v7456 = vpop.f32.mrb[0].mxu0
    %7457 = vdwg.mxu0
    %7458 = vmatprep.subr.bf16.mxu0 %v7356
    %7459 = vmatpush1.bf16.msra.mxu0 %v7355
    %7460 = vmatprep.subr.bf16.mxu0 %v7360
    %7461 = vmatpush1.bf16.msra.mxu0 %v7359
    %7462 = vmatprep.subr.bf16.mxu0 %v7364
    %7463 = vmatpush1.bf16.msra.mxu0 %v7363
    %7464 = vmatprep.subr.bf16.mxu0 %v7368
    %7465 = vmatpush1.bf16.msra.mxu0 %v7367
    %7466 = vmatprep.subr.bf16.mxu0 %v7372
    %7467 = vmatpush1.bf16.msra.mxu0 %v7371
    %7468 = vmatprep.subr.bf16.mxu0 %v7376
    %7469 = vmatpush1.bf16.msra.mxu0 %v7375
    %7470 = vmatprep.subr.bf16.mxu0 %v7380
    %7471 = vmatpush1.bf16.msra.mxu0 %v7379
    %7472 = vmatprep.subr.bf16.mxu0 %v7384
    %7473 = vmatpush1.bf16.msra.mxu0 %v7383
    %7474 = vmatprep.subr.bf16.mxu0 0
    %7475 = vmatpush1.bf16.msra.mxu0 0
    %7476 = vmatprep.subr.bf16.mxu0 0
    %7477 = vmatpush1.bf16.msra.mxu0 0
    %7478 = vmatprep.subr.bf16.mxu0 0
    %7479 = vmatpush1.bf16.msra.mxu0 0
    %7480 = vmatprep.subr.bf16.mxu0 0
    %7481 = vmatpush1.bf16.msra.mxu0 0
    %7482 = vmatprep.subr.bf16.mxu0 0
    %7483 = vmatpush1.bf16.msra.mxu0 0
    %7484 = vmatprep.subr.bf16.mxu0 0
    %7485 = vmatpush1.bf16.msra.mxu0 0
    %7486 = vmatprep.subr.bf16.mxu0 0
    %7487 = vmatpush1.bf16.msra.mxu0 0
    %7488 = vmatprep.subr.bf16.mxu0 0
    %7489 = vmatpush1.bf16.msra.mxu0 0
    %7490 = vmatprep.mubr.bf16.mxu0 0
    %7491 = vmatmul.mubr.bf16.gmra.mrb[0].mxu0 %v6382
    %v7492 = vpop.f32.mrb[0].mxu0
    %v7493 = vadd.f32 %v6959, %v7492
    %v7494 = vpop.f32.mrb[0].mxu0
    %v7495 = vadd.f32 %v6961, %v7494
    %v7496 = vpop.f32.mrb[0].mxu0
    %v7497 = vpop.f32.mrb[0].mxu0
    %7498 = vdwg.mxu0
    %v7499 = vld [vmem:[%s1299] sm:$0xf]
    %v7501 = vlaneseq
    %v7502 = vshrl.u32 %v7501, 7
    %v7503 = vsub.s32 0, %v7502
    %v7504 = vrot.slane %v7499, %v7503
    %v7505 = vlaneseq
    %v7506 = vshrl.u32 %v7505, 7
    %v7507 = vsub.s32 1, %v7506
    %v7508 = vrot.slane %v7499, %v7507
    %v7509 = vlaneseq
    %v7510 = vshrl.u32 %v7509, 7
    %v7511 = vsub.s32 2, %v7510
    %v7512 = vrot.slane %v7499, %v7511
    %v7513 = vlaneseq
    %v7514 = vshrl.u32 %v7513, 7
    %v7515 = vsub.s32 3, %v7514
    %v7516 = vrot.slane %v7499, %v7515
    %v7521 = vadd.f32 %v7452, %v7504
    %v7522 = vadd.f32 %v7454, %v7508
    %v7523 = vadd.f32 %v7493, %v7512
    %v7524 = vadd.f32 %v7495, %v7516
    %v7525 = vxor.u32 %v7521, 2147483648
    %v7526 = vmul.f32 %v7525, 1.442695
    %v7527 = vpow.pop %v7526
    %v7528 = vadd.f32 %v7527, 1.0
    %v7529 = vrcp.pop %v7528
    %v7530 = vmul.f32 1.0, %v7529
    %v7531 = vxor.u32 %v7522, 2147483648
    %v7532 = vmul.f32 %v7531, 1.442695
    %v7533 = vpow.pop %v7532
    %v7534 = vadd.f32 %v7533, 1.0
    %v7535 = vrcp.pop %v7534
    %v7536 = vmul.f32 1.0, %v7535
    %v7537 = vtanh.pop %v7523
    %v7538 = vxor.u32 %v7524, 2147483648
    %v7539 = vmul.f32 %v7538, 1.442695
    %v7540 = vpow.pop %v7539
    %v7541 = vadd.f32 %v7540, 1.0
    %v7542 = vrcp.pop %v7541
    %v7543 = vmul.f32 1.0, %v7542
    %v7544 = vmul.f32 %v7536, %v6346
    %v7545 = vmul.f32 %v7530, %v7537
    %v7546 = vadd.f32 %v7544, %v7545
    %v7547 = vtanh.pop %v7546
    %v7548 = vmul.f32 %v7543, %v7547
    %7550 = vset.pattern.permute.xlu0 0
    %7551 = vperm.xlu0 %7550, %v115
    %v7552 = vpop.permute.xlu0 %7551
    %v7554 = vmul.f32 %v7552, %v7256
    %7556 = vset.pattern.permute.xlu0 0
    %7557 = vperm.xlu0 %7556, %v120
    %v7558 = vpop.permute.xlu0 %7557
    %v7560 = vmul.f32 %v7558, %v7548
    %v7561 = vpack.c.bf16 %v7554, %v7554
    %s7562 = scalar_lea.vmem [#allocation11], 5
    %7563 = vst [vmem:[%s7562] sm:$0x1] %v7561
    %v7564 = vpack.c.bf16 %v7560, %v7560
    %s7565 = scalar_lea.vmem [#allocation12], 2
    %7566 = vst [vmem:[%s7565] sm:$0x1] %v7564
    %7568 = vset.pattern.permute.xlu0 0
    %7569 = vperm.xlu0 %7568, %v131
    %v7570 = vpop.permute.xlu0 %7569
    %v7572 = vmul.f32 %v7570, %v6333
    %v7573 = vadd.f32 %v7554, %v7572
    %7575 = vset.pattern.permute.xlu0 0
    %7576 = vperm.xlu0 %7575, %v136
    %v7577 = vpop.permute.xlu0 %7576
    %v7579 = vmul.f32 %v7577, %v6340
    %v7580 = vadd.f32 %v7560, %v7579
    %v7581 = vmul.f32 %v7552, %v7254
    %v7582 = vmul.f32 %v7570, %v6343
    %v7583 = vadd.f32 %v7581, %v7582
    %v7584 = vmul.f32 %v7558, %v7546
    %v7585 = vmul.f32 %v7577, %v6346
    %v7586 = vadd.f32 %v7584, %v7585
    %s7587 = scalar_lea.vmem %s0, 6
    %v7588 = vld [vmem:[%s7587] sm:$0x1]
    %v7589 = vld [vmem:[#allocation6] sm:$0xff]
    %v7590 = vld [vmem:[#allocation6 + $0x8] sm:$0xff]
    %v7591 = vld [vmem:[#allocation6 + $0x10] sm:$0xff]
    %v7592 = vld [vmem:[#allocation6 + $0x18] sm:$0xff]
    %v7593 = vld [vmem:[#allocation6 + $0x20] sm:$0xff]
    %v7594 = vld [vmem:[#allocation6 + $0x28] sm:$0xff]
    %v7595 = vld [vmem:[#allocation6 + $0x30] sm:$0xff]
    %v7596 = vld [vmem:[#allocation6 + $0x38] sm:$0xff]
    %v7597 = vld [vmem:[#allocation6 + $0x40] sm:$0xff]
    %v7598 = vld [vmem:[#allocation6 + $0x48] sm:$0xff]
    %v7599 = vld [vmem:[#allocation6 + $0x50] sm:$0xff]
    %v7600 = vld [vmem:[#allocation6 + $0x58] sm:$0xff]
    %v7601 = vld [vmem:[#allocation6 + $0x60] sm:$0xff]
    %v7602 = vld [vmem:[#allocation6 + $0x68] sm:$0xff]
    %v7603 = vld [vmem:[#allocation6 + $0x70] sm:$0xff]
    %v7604 = vld [vmem:[#allocation6 + $0x78] sm:$0xff]
    %v7605 = vld [vmem:[#allocation6 + $0x80] sm:$0xff]
    %v7606 = vld [vmem:[#allocation6 + $0x88] sm:$0xff]
    %v7607 = vld [vmem:[#allocation6 + $0x90] sm:$0xff]
    %v7608 = vld [vmem:[#allocation6 + $0x98] sm:$0xff]
    %v7609 = vld [vmem:[#allocation6 + $0xa0] sm:$0xff]
    %v7610 = vld [vmem:[#allocation6 + $0xa8] sm:$0xff]
    %v7611 = vld [vmem:[#allocation6 + $0xb0] sm:$0xff]
    %v7612 = vld [vmem:[#allocation6 + $0xb8] sm:$0xff]
    %v7613 = vld [vmem:[#allocation6 + $0xc0] sm:$0xff]
    %v7614 = vld [vmem:[#allocation6 + $0xc8] sm:$0xff]
    %v7615 = vld [vmem:[#allocation6 + $0xd0] sm:$0xff]
    %v7616 = vld [vmem:[#allocation6 + $0xd8] sm:$0xff]
    %v7617 = vld [vmem:[#allocation6 + $0xe0] sm:$0xff]
    %v7618 = vld [vmem:[#allocation6 + $0xe8] sm:$0xff]
    %v7619 = vld [vmem:[#allocation6 + $0xf0] sm:$0xff]
    %v7620 = vld [vmem:[#allocation6 + $0xf8] sm:$0xff]
    %s7621 = scalar_lea.vmem %s88, 1
    %v7622 = vld [vmem:[%s7621] sm:$0x1]
    %v7623 = vld [vmem:[%s181] sm:$0xff]
    %v7624 = vld [vmem:[%s181 + $0x8] sm:$0xff]
    %v7625 = vld [vmem:[%s181 + $0x10] sm:$0xff]
    %v7626 = vld [vmem:[%s181 + $0x18] sm:$0xff]
    %v7627 = vld [vmem:[%s181 + $0x20] sm:$0xff]
    %v7628 = vld [vmem:[%s181 + $0x28] sm:$0xff]
    %v7629 = vld [vmem:[%s181 + $0x30] sm:$0xff]
    %v7630 = vld [vmem:[%s181 + $0x38] sm:$0xff]
    %v7631 = vld [vmem:[%s181 + $0x40] sm:$0xff]
    %v7632 = vld [vmem:[%s181 + $0x48] sm:$0xff]
    %v7633 = vld [vmem:[%s181 + $0x50] sm:$0xff]
    %v7634 = vld [vmem:[%s181 + $0x58] sm:$0xff]
    %v7635 = vld [vmem:[%s181 + $0x60] sm:$0xff]
    %v7636 = vld [vmem:[%s181 + $0x68] sm:$0xff]
    %v7637 = vld [vmem:[%s181 + $0x70] sm:$0xff]
    %v7638 = vld [vmem:[%s181 + $0x78] sm:$0xff]
    %v7639 = vld [vmem:[%s181 + $0x80] sm:$0xff]
    %v7640 = vld [vmem:[%s181 + $0x88] sm:$0xff]
    %v7641 = vld [vmem:[%s181 + $0x90] sm:$0xff]
    %v7642 = vld [vmem:[%s181 + $0x98] sm:$0xff]
    %v7643 = vld [vmem:[%s181 + $0xa0] sm:$0xff]
    %v7644 = vld [vmem:[%s181 + $0xa8] sm:$0xff]
    %v7645 = vld [vmem:[%s181 + $0xb0] sm:$0xff]
    %v7646 = vld [vmem:[%s181 + $0xb8] sm:$0xff]
    %v7647 = vld [vmem:[%s181 + $0xc0] sm:$0xff]
    %v7648 = vld [vmem:[%s181 + $0xc8] sm:$0xff]
    %v7649 = vld [vmem:[%s181 + $0xd0] sm:$0xff]
    %v7650 = vld [vmem:[%s181 + $0xd8] sm:$0xff]
    %v7651 = vld [vmem:[%s181 + $0xe0] sm:$0xff]
    %v7652 = vld [vmem:[%s181 + $0xe8] sm:$0xff]
    %v7653 = vld [vmem:[%s181 + $0xf0] sm:$0xff]
    %v7654 = vld [vmem:[%s181 + $0xf8] sm:$0xff]
    %v7655 = vpack.c.bf16 %v7573, %v7573
    %v7656 = vld [vmem:[#allocation9] sm:$0xff]
    %v7657 = vld [vmem:[#allocation9 + $0x8] sm:$0xff]
    %v7658 = vld [vmem:[#allocation9 + $0x10] sm:$0xff]
    %v7659 = vld [vmem:[#allocation9 + $0x18] sm:$0xff]
    %v7660 = vld [vmem:[#allocation9 + $0x20] sm:$0xff]
    %v7661 = vld [vmem:[#allocation9 + $0x28] sm:$0xff]
    %v7662 = vld [vmem:[#allocation9 + $0x30] sm:$0xff]
    %v7663 = vld [vmem:[#allocation9 + $0x38] sm:$0xff]
    %v7664 = vld [vmem:[#allocation9 + $0x40] sm:$0xff]
    %v7665 = vld [vmem:[#allocation9 + $0x48] sm:$0xff]
    %v7666 = vld [vmem:[#allocation9 + $0x50] sm:$0xff]
    %v7667 = vld [vmem:[#allocation9 + $0x58] sm:$0xff]
    %v7668 = vld [vmem:[#allocation9 + $0x60] sm:$0xff]
    %v7669 = vld [vmem:[#allocation9 + $0x68] sm:$0xff]
    %v7670 = vld [vmem:[#allocation9 + $0x70] sm:$0xff]
    %v7671 = vld [vmem:[#allocation9 + $0x78] sm:$0xff]
    %v7672 = vld [vmem:[#allocation9 + $0x80] sm:$0xff]
    %v7673 = vld [vmem:[#allocation9 + $0x88] sm:$0xff]
    %v7674 = vld [vmem:[#allocation9 + $0x90] sm:$0xff]
    %v7675 = vld [vmem:[#allocation9 + $0x98] sm:$0xff]
    %v7676 = vld [vmem:[#allocation9 + $0xa0] sm:$0xff]
    %v7677 = vld [vmem:[#allocation9 + $0xa8] sm:$0xff]
    %v7678 = vld [vmem:[#allocation9 + $0xb0] sm:$0xff]
    %v7679 = vld [vmem:[#allocation9 + $0xb8] sm:$0xff]
    %v7680 = vld [vmem:[#allocation9 + $0xc0] sm:$0xff]
    %v7681 = vld [vmem:[#allocation9 + $0xc8] sm:$0xff]
    %v7682 = vld [vmem:[#allocation9 + $0xd0] sm:$0xff]
    %v7683 = vld [vmem:[#allocation9 + $0xd8] sm:$0xff]
    %v7684 = vld [vmem:[#allocation9 + $0xe0] sm:$0xff]
    %v7685 = vld [vmem:[#allocation9 + $0xe8] sm:$0xff]
    %v7686 = vld [vmem:[#allocation9 + $0xf0] sm:$0xff]
    %v7687 = vld [vmem:[#allocation9 + $0xf8] sm:$0xff]
    %v7720 = vunpack.c.l.b16 %v7656
    %v7721 = vunpack.c.h.b16 %v7656
    %v7722 = vunpack.c.l.b16 %v7657
    %v7723 = vunpack.c.h.b16 %v7657
    %v7724 = vunpack.c.l.b16 %v7658
    %v7725 = vunpack.c.h.b16 %v7658
    %v7726 = vunpack.c.l.b16 %v7659
    %v7727 = vunpack.c.h.b16 %v7659
    %v7728 = vunpack.c.l.b16 %v7660
    %v7729 = vunpack.c.h.b16 %v7660
    %v7730 = vunpack.c.l.b16 %v7661
    %v7731 = vunpack.c.h.b16 %v7661
    %v7732 = vunpack.c.l.b16 %v7662
    %v7733 = vunpack.c.h.b16 %v7662
    %v7734 = vunpack.c.l.b16 %v7663
    %v7735 = vunpack.c.h.b16 %v7663
    %v7736 = vunpack.c.l.b16 %v7664
    %v7737 = vunpack.c.h.b16 %v7664
    %v7738 = vunpack.c.l.b16 %v7665
    %v7739 = vunpack.c.h.b16 %v7665
    %v7740 = vunpack.c.l.b16 %v7666
    %v7741 = vunpack.c.h.b16 %v7666
    %v7742 = vunpack.c.l.b16 %v7667
    %v7743 = vunpack.c.h.b16 %v7667
    %v7744 = vunpack.c.l.b16 %v7668
    %v7745 = vunpack.c.h.b16 %v7668
    %v7746 = vunpack.c.l.b16 %v7669
    %v7747 = vunpack.c.h.b16 %v7669
    %v7748 = vunpack.c.l.b16 %v7670
    %v7749 = vunpack.c.h.b16 %v7670
    %v7750 = vunpack.c.l.b16 %v7671
    %v7751 = vunpack.c.h.b16 %v7671
    %v7752 = vunpack.c.l.b16 %v7672
    %v7753 = vunpack.c.h.b16 %v7672
    %v7754 = vunpack.c.l.b16 %v7673
    %v7755 = vunpack.c.h.b16 %v7673
    %v7756 = vunpack.c.l.b16 %v7674
    %v7757 = vunpack.c.h.b16 %v7674
    %v7758 = vunpack.c.l.b16 %v7675
    %v7759 = vunpack.c.h.b16 %v7675
    %v7760 = vunpack.c.l.b16 %v7676
    %v7761 = vunpack.c.h.b16 %v7676
    %v7762 = vunpack.c.l.b16 %v7677
    %v7763 = vunpack.c.h.b16 %v7677
    %v7764 = vunpack.c.l.b16 %v7678
    %v7765 = vunpack.c.h.b16 %v7678
    %v7766 = vunpack.c.l.b16 %v7679
    %v7767 = vunpack.c.h.b16 %v7679
    %v7768 = vunpack.c.l.b16 %v7680
    %v7769 = vunpack.c.h.b16 %v7680
    %v7770 = vunpack.c.l.b16 %v7681
    %v7771 = vunpack.c.h.b16 %v7681
    %v7772 = vunpack.c.l.b16 %v7682
    %v7773 = vunpack.c.h.b16 %v7682
    %v7774 = vunpack.c.l.b16 %v7683
    %v7775 = vunpack.c.h.b16 %v7683
    %v7776 = vunpack.c.l.b16 %v7684
    %v7777 = vunpack.c.h.b16 %v7684
    %v7778 = vunpack.c.l.b16 %v7685
    %v7779 = vunpack.c.h.b16 %v7685
    %v7780 = vunpack.c.l.b16 %v7686
    %v7781 = vunpack.c.h.b16 %v7686
    %v7782 = vunpack.c.l.b16 %v7687
    %v7783 = vunpack.c.h.b16 %v7687
    %v7784 = vpack.c.b16 %v7724, %v7720
    %v7785 = vpack.c.b16 %v7725, %v7721
    %v7786 = vpack.c.b16 %v7726, %v7722
    %v7787 = vpack.c.b16 %v7727, %v7723
    %v7788 = vpack.c.b16 %v7732, %v7728
    %v7789 = vpack.c.b16 %v7733, %v7729
    %v7790 = vpack.c.b16 %v7734, %v7730
    %v7791 = vpack.c.b16 %v7735, %v7731
    %v7792 = vpack.c.b16 %v7740, %v7736
    %v7793 = vpack.c.b16 %v7741, %v7737
    %v7794 = vpack.c.b16 %v7742, %v7738
    %v7795 = vpack.c.b16 %v7743, %v7739
    %v7796 = vpack.c.b16 %v7748, %v7744
    %v7797 = vpack.c.b16 %v7749, %v7745
    %v7798 = vpack.c.b16 %v7750, %v7746
    %v7799 = vpack.c.b16 %v7751, %v7747
    %v7800 = vpack.c.b16 %v7756, %v7752
    %v7801 = vpack.c.b16 %v7757, %v7753
    %v7802 = vpack.c.b16 %v7758, %v7754
    %v7803 = vpack.c.b16 %v7759, %v7755
    %v7804 = vpack.c.b16 %v7764, %v7760
    %v7805 = vpack.c.b16 %v7765, %v7761
    %v7806 = vpack.c.b16 %v7766, %v7762
    %v7807 = vpack.c.b16 %v7767, %v7763
    %v7808 = vpack.c.b16 %v7772, %v7768
    %v7809 = vpack.c.b16 %v7773, %v7769
    %v7810 = vpack.c.b16 %v7774, %v7770
    %v7811 = vpack.c.b16 %v7775, %v7771
    %v7812 = vpack.c.b16 %v7780, %v7776
    %v7813 = vpack.c.b16 %v7781, %v7777
    %v7814 = vpack.c.b16 %v7782, %v7778
    %v7815 = vpack.c.b16 %v7783, %v7779
    %7848 = vmatprep.subr.bf16.mxu0 %v7785
    %7849 = vmatpush1.bf16.msra.mxu0 %v7784
    %7850 = vmatprep.subr.bf16.mxu0 %v7789
    %7851 = vmatpush1.bf16.msra.mxu0 %v7788
    %7852 = vmatprep.subr.bf16.mxu0 %v7793
    %7853 = vmatpush1.bf16.msra.mxu0 %v7792
    %7854 = vmatprep.subr.bf16.mxu0 %v7797
    %7855 = vmatpush1.bf16.msra.mxu0 %v7796
    %7856 = vmatprep.subr.bf16.mxu0 %v7801
    %7857 = vmatpush1.bf16.msra.mxu0 %v7800
    %7858 = vmatprep.subr.bf16.mxu0 %v7805
    %7859 = vmatpush1.bf16.msra.mxu0 %v7804
    %7860 = vmatprep.subr.bf16.mxu0 %v7809
    %7861 = vmatpush1.bf16.msra.mxu0 %v7808
    %7862 = vmatprep.subr.bf16.mxu0 %v7813
    %7863 = vmatpush1.bf16.msra.mxu0 %v7812
    %7864 = vmatprep.subr.bf16.mxu0 0
    %7865 = vmatpush1.bf16.msra.mxu0 0
    %7866 = vmatprep.subr.bf16.mxu0 0
    %7867 = vmatpush1.bf16.msra.mxu0 0
    %7868 = vmatprep.subr.bf16.mxu0 0
    %7869 = vmatpush1.bf16.msra.mxu0 0
    %7870 = vmatprep.subr.bf16.mxu0 0
    %7871 = vmatpush1.bf16.msra.mxu0 0
    %7872 = vmatprep.subr.bf16.mxu0 0
    %7873 = vmatpush1.bf16.msra.mxu0 0
    %7874 = vmatprep.subr.bf16.mxu0 0
    %7875 = vmatpush1.bf16.msra.mxu0 0
    %7876 = vmatprep.subr.bf16.mxu0 0
    %7877 = vmatpush1.bf16.msra.mxu0 0
    %7878 = vmatprep.subr.bf16.mxu0 0
    %7879 = vmatpush1.bf16.msra.mxu0 0
    %7880 = vmatprep.mubr.bf16.mxu0 0
    %7881 = vmatmul.mubr.bf16.gmra.mrb[0].mxu0 %v7655
    %v7882 = vpop.f32.mrb[0].mxu0
    %v7883 = vadd.f32 0.0, %v7882
    %v7884 = vpop.f32.mrb[0].mxu0
    %v7885 = vadd.f32 0.0, %v7884
    %v7886 = vpop.f32.mrb[0].mxu0
    %v7887 = vpop.f32.mrb[0].mxu0
    %7888 = vdwg.mxu0
    %7889 = vmatprep.subr.bf16.mxu0 %v7787
    %7890 = vmatpush1.bf16.msra.mxu0 %v7786
    %7891 = vmatprep.subr.bf16.mxu0 %v7791
    %7892 = vmatpush1.bf16.msra.mxu0 %v7790
    %7893 = vmatprep.subr.bf16.mxu0 %v7795
    %7894 = vmatpush1.bf16.msra.mxu0 %v7794
    %7895 = vmatprep.subr.bf16.mxu0 %v7799
    %7896 = vmatpush1.bf16.msra.mxu0 %v7798
    %7897 = vmatprep.subr.bf16.mxu0 %v7803
    %7898 = vmatpush1.bf16.msra.mxu0 %v7802
    %7899 = vmatprep.subr.bf16.mxu0 %v7807
    %7900 = vmatpush1.bf16.msra.mxu0 %v7806
    %7901 = vmatprep.subr.bf16.mxu0 %v7811
    %7902 = vmatpush1.bf16.msra.mxu0 %v7810
    %7903 = vmatprep.subr.bf16.mxu0 %v7815
    %7904 = vmatpush1.bf16.msra.mxu0 %v7814
    %7905 = vmatprep.subr.bf16.mxu0 0
    %7906 = vmatpush1.bf16.msra.mxu0 0
    %7907 = vmatprep.subr.bf16.mxu0 0
    %7908 = vmatpush1.bf16.msra.mxu0 0
    %7909 = vmatprep.subr.bf16.mxu0 0
    %7910 = vmatpush1.bf16.msra.mxu0 0
    %7911 = vmatprep.subr.bf16.mxu0 0
    %7912 = vmatpush1.bf16.msra.mxu0 0
    %7913 = vmatprep.subr.bf16.mxu0 0
    %7914 = vmatpush1.bf16.msra.mxu0 0
    %7915 = vmatprep.subr.bf16.mxu0 0
    %7916 = vmatpush1.bf16.msra.mxu0 0
    %7917 = vmatprep.subr.bf16.mxu0 0
    %7918 = vmatpush1.bf16.msra.mxu0 0
    %7919 = vmatprep.subr.bf16.mxu0 0
    %7920 = vmatpush1.bf16.msra.mxu0 0
    %7921 = vmatprep.mubr.bf16.mxu0 0
    %7922 = vmatmul.mubr.bf16.gmra.mrb[0].mxu0 %v7655
    %v7923 = vpop.f32.mrb[0].mxu0
    %v7924 = vadd.f32 0.0, %v7923
    %v7925 = vpop.f32.mrb[0].mxu0
    %v7926 = vadd.f32 0.0, %v7925
    %v7927 = vpop.f32.mrb[0].mxu0
    %v7928 = vpop.f32.mrb[0].mxu0
    %7929 = vdwg.mxu0
    %v7930 = vpack.c.bf16 %v7580, %v7580
    %v7931 = vld [vmem:[%s490] sm:$0xff]
    %v7932 = vld [vmem:[%s490 + $0x8] sm:$0xff]
    %v7933 = vld [vmem:[%s490 + $0x10] sm:$0xff]
    %v7934 = vld [vmem:[%s490 + $0x18] sm:$0xff]
    %v7935 = vld [vmem:[%s490 + $0x20] sm:$0xff]
    %v7936 = vld [vmem:[%s490 + $0x28] sm:$0xff]
    %v7937 = vld [vmem:[%s490 + $0x30] sm:$0xff]
    %v7938 = vld [vmem:[%s490 + $0x38] sm:$0xff]
    %v7939 = vld [vmem:[%s490 + $0x40] sm:$0xff]
    %v7940 = vld [vmem:[%s490 + $0x48] sm:$0xff]
    %v7941 = vld [vmem:[%s490 + $0x50] sm:$0xff]
    %v7942 = vld [vmem:[%s490 + $0x58] sm:$0xff]
    %v7943 = vld [vmem:[%s490 + $0x60] sm:$0xff]
    %v7944 = vld [vmem:[%s490 + $0x68] sm:$0xff]
    %v7945 = vld [vmem:[%s490 + $0x70] sm:$0xff]
    %v7946 = vld [vmem:[%s490 + $0x78] sm:$0xff]
    %v7947 = vld [vmem:[%s490 + $0x80] sm:$0xff]
    %v7948 = vld [vmem:[%s490 + $0x88] sm:$0xff]
    %v7949 = vld [vmem:[%s490 + $0x90] sm:$0xff]
    %v7950 = vld [vmem:[%s490 + $0x98] sm:$0xff]
    %v7951 = vld [vmem:[%s490 + $0xa0] sm:$0xff]
    %v7952 = vld [vmem:[%s490 + $0xa8] sm:$0xff]
    %v7953 = vld [vmem:[%s490 + $0xb0] sm:$0xff]
    %v7954 = vld [vmem:[%s490 + $0xb8] sm:$0xff]
    %v7955 = vld [vmem:[%s490 + $0xc0] sm:$0xff]
    %v7956 = vld [vmem:[%s490 + $0xc8] sm:$0xff]
    %v7957 = vld [vmem:[%s490 + $0xd0] sm:$0xff]
    %v7958 = vld [vmem:[%s490 + $0xd8] sm:$0xff]
    %v7959 = vld [vmem:[%s490 + $0xe0] sm:$0xff]
    %v7960 = vld [vmem:[%s490 + $0xe8] sm:$0xff]
    %v7961 = vld [vmem:[%s490 + $0xf0] sm:$0xff]
    %v7962 = vld [vmem:[%s490 + $0xf8] sm:$0xff]
    %v7995 = vunpack.c.l.b16 %v7931
    %v7996 = vunpack.c.h.b16 %v7931
    %v7997 = vunpack.c.l.b16 %v7932
    %v7998 = vunpack.c.h.b16 %v7932
    %v7999 = vunpack.c.l.b16 %v7933
    %v8000 = vunpack.c.h.b16 %v7933
    %v8001 = vunpack.c.l.b16 %v7934
    %v8002 = vunpack.c.h.b16 %v7934
    %v8003 = vunpack.c.l.b16 %v7935
    %v8004 = vunpack.c.h.b16 %v7935
    %v8005 = vunpack.c.l.b16 %v7936
    %v8006 = vunpack.c.h.b16 %v7936
    %v8007 = vunpack.c.l.b16 %v7937
    %v8008 = vunpack.c.h.b16 %v7937
    %v8009 = vunpack.c.l.b16 %v7938
    %v8010 = vunpack.c.h.b16 %v7938
    %v8011 = vunpack.c.l.b16 %v7939
    %v8012 = vunpack.c.h.b16 %v7939
    %v8013 = vunpack.c.l.b16 %v7940
    %v8014 = vunpack.c.h.b16 %v7940
    %v8015 = vunpack.c.l.b16 %v7941
    %v8016 = vunpack.c.h.b16 %v7941
    %v8017 = vunpack.c.l.b16 %v7942
    %v8018 = vunpack.c.h.b16 %v7942
    %v8019 = vunpack.c.l.b16 %v7943
    %v8020 = vunpack.c.h.b16 %v7943
    %v8021 = vunpack.c.l.b16 %v7944
    %v8022 = vunpack.c.h.b16 %v7944
    %v8023 = vunpack.c.l.b16 %v7945
    %v8024 = vunpack.c.h.b16 %v7945
    %v8025 = vunpack.c.l.b16 %v7946
    %v8026 = vunpack.c.h.b16 %v7946
    %v8027 = vunpack.c.l.b16 %v7947
    %v8028 = vunpack.c.h.b16 %v7947
    %v8029 = vunpack.c.l.b16 %v7948
    %v8030 = vunpack.c.h.b16 %v7948
    %v8031 = vunpack.c.l.b16 %v7949
    %v8032 = vunpack.c.h.b16 %v7949
    %v8033 = vunpack.c.l.b16 %v7950
    %v8034 = vunpack.c.h.b16 %v7950
    %v8035 = vunpack.c.l.b16 %v7951
    %v8036 = vunpack.c.h.b16 %v7951
    %v8037 = vunpack.c.l.b16 %v7952
    %v8038 = vunpack.c.h.b16 %v7952
    %v8039 = vunpack.c.l.b16 %v7953
    %v8040 = vunpack.c.h.b16 %v7953
    %v8041 = vunpack.c.l.b16 %v7954
    %v8042 = vunpack.c.h.b16 %v7954
    %v8043 = vunpack.c.l.b16 %v7955
    %v8044 = vunpack.c.h.b16 %v7955
    %v8045 = vunpack.c.l.b16 %v7956
    %v8046 = vunpack.c.h.b16 %v7956
    %v8047 = vunpack.c.l.b16 %v7957
    %v8048 = vunpack.c.h.b16 %v7957
    %v8049 = vunpack.c.l.b16 %v7958
    %v8050 = vunpack.c.h.b16 %v7958
    %v8051 = vunpack.c.l.b16 %v7959
    %v8052 = vunpack.c.h.b16 %v7959
    %v8053 = vunpack.c.l.b16 %v7960
    %v8054 = vunpack.c.h.b16 %v7960
    %v8055 = vunpack.c.l.b16 %v7961
    %v8056 = vunpack.c.h.b16 %v7961
    %v8057 = vunpack.c.l.b16 %v7962
    %v8058 = vunpack.c.h.b16 %v7962
    %v8059 = vpack.c.b16 %v7999, %v7995
    %v8060 = vpack.c.b16 %v8000, %v7996
    %v8061 = vpack.c.b16 %v8001, %v7997
    %v8062 = vpack.c.b16 %v8002, %v7998
    %v8063 = vpack.c.b16 %v8007, %v8003
    %v8064 = vpack.c.b16 %v8008, %v8004
    %v8065 = vpack.c.b16 %v8009, %v8005
    %v8066 = vpack.c.b16 %v8010, %v8006
    %v8067 = vpack.c.b16 %v8015, %v8011
    %v8068 = vpack.c.b16 %v8016, %v8012
    %v8069 = vpack.c.b16 %v8017, %v8013
    %v8070 = vpack.c.b16 %v8018, %v8014
    %v8071 = vpack.c.b16 %v8023, %v8019
    %v8072 = vpack.c.b16 %v8024, %v8020
    %v8073 = vpack.c.b16 %v8025, %v8021
    %v8074 = vpack.c.b16 %v8026, %v8022
    %v8075 = vpack.c.b16 %v8031, %v8027
    %v8076 = vpack.c.b16 %v8032, %v8028
    %v8077 = vpack.c.b16 %v8033, %v8029
    %v8078 = vpack.c.b16 %v8034, %v8030
    %v8079 = vpack.c.b16 %v8039, %v8035
    %v8080 = vpack.c.b16 %v8040, %v8036
    %v8081 = vpack.c.b16 %v8041, %v8037
    %v8082 = vpack.c.b16 %v8042, %v8038
    %v8083 = vpack.c.b16 %v8047, %v8043
    %v8084 = vpack.c.b16 %v8048, %v8044
    %v8085 = vpack.c.b16 %v8049, %v8045
    %v8086 = vpack.c.b16 %v8050, %v8046
    %v8087 = vpack.c.b16 %v8055, %v8051
    %v8088 = vpack.c.b16 %v8056, %v8052
    %v8089 = vpack.c.b16 %v8057, %v8053
    %v8090 = vpack.c.b16 %v8058, %v8054
    %8123 = vmatprep.subr.bf16.mxu0 %v8060
    %8124 = vmatpush1.bf16.msra.mxu0 %v8059
    %8125 = vmatprep.subr.bf16.mxu0 %v8064
    %8126 = vmatpush1.bf16.msra.mxu0 %v8063
    %8127 = vmatprep.subr.bf16.mxu0 %v8068
    %8128 = vmatpush1.bf16.msra.mxu0 %v8067
    %8129 = vmatprep.subr.bf16.mxu0 %v8072
    %8130 = vmatpush1.bf16.msra.mxu0 %v8071
    %8131 = vmatprep.subr.bf16.mxu0 %v8076
    %8132 = vmatpush1.bf16.msra.mxu0 %v8075
    %8133 = vmatprep.subr.bf16.mxu0 %v8080
    %8134 = vmatpush1.bf16.msra.mxu0 %v8079
    %8135 = vmatprep.subr.bf16.mxu0 %v8084
    %8136 = vmatpush1.bf16.msra.mxu0 %v8083
    %8137 = vmatprep.subr.bf16.mxu0 %v8088
    %8138 = vmatpush1.bf16.msra.mxu0 %v8087
    %8139 = vmatprep.subr.bf16.mxu0 0
    %8140 = vmatpush1.bf16.msra.mxu0 0
    %8141 = vmatprep.subr.bf16.mxu0 0
    %8142 = vmatpush1.bf16.msra.mxu0 0
    %8143 = vmatprep.subr.bf16.mxu0 0
    %8144 = vmatpush1.bf16.msra.mxu0 0
    %8145 = vmatprep.subr.bf16.mxu0 0
    %8146 = vmatpush1.bf16.msra.mxu0 0
    %8147 = vmatprep.subr.bf16.mxu0 0
    %8148 = vmatpush1.bf16.msra.mxu0 0
    %8149 = vmatprep.subr.bf16.mxu0 0
    %8150 = vmatpush1.bf16.msra.mxu0 0
    %8151 = vmatprep.subr.bf16.mxu0 0
    %8152 = vmatpush1.bf16.msra.mxu0 0
    %8153 = vmatprep.subr.bf16.mxu0 0
    %8154 = vmatpush1.bf16.msra.mxu0 0
    %8155 = vmatprep.mubr.bf16.mxu0 0
    %8156 = vmatmul.mubr.bf16.gmra.mrb[0].mxu0 %v7930
    %v8157 = vpop.f32.mrb[0].mxu0
    %v8158 = vadd.f32 0.0, %v8157
    %v8159 = vpop.f32.mrb[0].mxu0
    %v8160 = vadd.f32 0.0, %v8159
    %v8161 = vpop.f32.mrb[0].mxu0
    %v8162 = vpop.f32.mrb[0].mxu0
    %8163 = vdwg.mxu0
    %8164 = vmatprep.subr.bf16.mxu0 %v8062
    %8165 = vmatpush1.bf16.msra.mxu0 %v8061
    %8166 = vmatprep.subr.bf16.mxu0 %v8066
    %8167 = vmatpush1.bf16.msra.mxu0 %v8065
    %8168 = vmatprep.subr.bf16.mxu0 %v8070
    %8169 = vmatpush1.bf16.msra.mxu0 %v8069
    %8170 = vmatprep.subr.bf16.mxu0 %v8074
    %8171 = vmatpush1.bf16.msra.mxu0 %v8073
    %8172 = vmatprep.subr.bf16.mxu0 %v8078
    %8173 = vmatpush1.bf16.msra.mxu0 %v8077
    %8174 = vmatprep.subr.bf16.mxu0 %v8082
    %8175 = vmatpush1.bf16.msra.mxu0 %v8081
    %8176 = vmatprep.subr.bf16.mxu0 %v8086
    %8177 = vmatpush1.bf16.msra.mxu0 %v8085
    %8178 = vmatprep.subr.bf16.mxu0 %v8090
    %8179 = vmatpush1.bf16.msra.mxu0 %v8089
    %8180 = vmatprep.subr.bf16.mxu0 0
    %8181 = vmatpush1.bf16.msra.mxu0 0
    %8182 = vmatprep.subr.bf16.mxu0 0
    %8183 = vmatpush1.bf16.msra.mxu0 0
    %8184 = vmatprep.subr.bf16.mxu0 0
    %8185 = vmatpush1.bf16.msra.mxu0 0
    %8186 = vmatprep.subr.bf16.mxu0 0
    %8187 = vmatpush1.bf16.msra.mxu0 0
    %8188 = vmatprep.subr.bf16.mxu0 0
    %8189 = vmatpush1.bf16.msra.mxu0 0
    %8190 = vmatprep.subr.bf16.mxu0 0
    %8191 = vmatpush1.bf16.msra.mxu0 0
    %8192 = vmatprep.subr.bf16.mxu0 0
    %8193 = vmatpush1.bf16.msra.mxu0 0
    %8194 = vmatprep.subr.bf16.mxu0 0
    %8195 = vmatpush1.bf16.msra.mxu0 0
    %8196 = vmatprep.mubr.bf16.mxu0 0
    %8197 = vmatmul.mubr.bf16.gmra.mrb[0].mxu0 %v7930
    %v8198 = vpop.f32.mrb[0].mxu0
    %v8199 = vadd.f32 0.0, %v8198
    %v8200 = vpop.f32.mrb[0].mxu0
    %v8201 = vadd.f32 0.0, %v8200
    %v8202 = vpop.f32.mrb[0].mxu0
    %v8203 = vpop.f32.mrb[0].mxu0
    %8204 = vdwg.mxu0
    %v8237 = vunpack.c.l.b16 %v7589
    %v8238 = vunpack.c.h.b16 %v7589
    %v8239 = vunpack.c.l.b16 %v7590
    %v8240 = vunpack.c.h.b16 %v7590
    %v8241 = vunpack.c.l.b16 %v7591
    %v8242 = vunpack.c.h.b16 %v7591
    %v8243 = vunpack.c.l.b16 %v7592
    %v8244 = vunpack.c.h.b16 %v7592
    %v8245 = vunpack.c.l.b16 %v7593
    %v8246 = vunpack.c.h.b16 %v7593
    %v8247 = vunpack.c.l.b16 %v7594
    %v8248 = vunpack.c.h.b16 %v7594
    %v8249 = vunpack.c.l.b16 %v7595
    %v8250 = vunpack.c.h.b16 %v7595
    %v8251 = vunpack.c.l.b16 %v7596
    %v8252 = vunpack.c.h.b16 %v7596
    %v8253 = vunpack.c.l.b16 %v7597
    %v8254 = vunpack.c.h.b16 %v7597
    %v8255 = vunpack.c.l.b16 %v7598
    %v8256 = vunpack.c.h.b16 %v7598
    %v8257 = vunpack.c.l.b16 %v7599
    %v8258 = vunpack.c.h.b16 %v7599
    %v8259 = vunpack.c.l.b16 %v7600
    %v8260 = vunpack.c.h.b16 %v7600
    %v8261 = vunpack.c.l.b16 %v7601
    %v8262 = vunpack.c.h.b16 %v7601
    %v8263 = vunpack.c.l.b16 %v7602
    %v8264 = vunpack.c.h.b16 %v7602
    %v8265 = vunpack.c.l.b16 %v7603
    %v8266 = vunpack.c.h.b16 %v7603
    %v8267 = vunpack.c.l.b16 %v7604
    %v8268 = vunpack.c.h.b16 %v7604
    %v8269 = vunpack.c.l.b16 %v7605
    %v8270 = vunpack.c.h.b16 %v7605
    %v8271 = vunpack.c.l.b16 %v7606
    %v8272 = vunpack.c.h.b16 %v7606
    %v8273 = vunpack.c.l.b16 %v7607
    %v8274 = vunpack.c.h.b16 %v7607
    %v8275 = vunpack.c.l.b16 %v7608
    %v8276 = vunpack.c.h.b16 %v7608
    %v8277 = vunpack.c.l.b16 %v7609
    %v8278 = vunpack.c.h.b16 %v7609
    %v8279 = vunpack.c.l.b16 %v7610
    %v8280 = vunpack.c.h.b16 %v7610
    %v8281 = vunpack.c.l.b16 %v7611
    %v8282 = vunpack.c.h.b16 %v7611
    %v8283 = vunpack.c.l.b16 %v7612
    %v8284 = vunpack.c.h.b16 %v7612
    %v8285 = vunpack.c.l.b16 %v7613
    %v8286 = vunpack.c.h.b16 %v7613
    %v8287 = vunpack.c.l.b16 %v7614
    %v8288 = vunpack.c.h.b16 %v7614
    %v8289 = vunpack.c.l.b16 %v7615
    %v8290 = vunpack.c.h.b16 %v7615
    %v8291 = vunpack.c.l.b16 %v7616
    %v8292 = vunpack.c.h.b16 %v7616
    %v8293 = vunpack.c.l.b16 %v7617
    %v8294 = vunpack.c.h.b16 %v7617
    %v8295 = vunpack.c.l.b16 %v7618
    %v8296 = vunpack.c.h.b16 %v7618
    %v8297 = vunpack.c.l.b16 %v7619
    %v8298 = vunpack.c.h.b16 %v7619
    %v8299 = vunpack.c.l.b16 %v7620
    %v8300 = vunpack.c.h.b16 %v7620
    %v8301 = vpack.c.b16 %v8241, %v8237
    %v8302 = vpack.c.b16 %v8242, %v8238
    %v8303 = vpack.c.b16 %v8243, %v8239
    %v8304 = vpack.c.b16 %v8244, %v8240
    %v8305 = vpack.c.b16 %v8249, %v8245
    %v8306 = vpack.c.b16 %v8250, %v8246
    %v8307 = vpack.c.b16 %v8251, %v8247
    %v8308 = vpack.c.b16 %v8252, %v8248
    %v8309 = vpack.c.b16 %v8257, %v8253
    %v8310 = vpack.c.b16 %v8258, %v8254
    %v8311 = vpack.c.b16 %v8259, %v8255
    %v8312 = vpack.c.b16 %v8260, %v8256
    %v8313 = vpack.c.b16 %v8265, %v8261
    %v8314 = vpack.c.b16 %v8266, %v8262
    %v8315 = vpack.c.b16 %v8267, %v8263
    %v8316 = vpack.c.b16 %v8268, %v8264
    %v8317 = vpack.c.b16 %v8273, %v8269
    %v8318 = vpack.c.b16 %v8274, %v8270
    %v8319 = vpack.c.b16 %v8275, %v8271
    %v8320 = vpack.c.b16 %v8276, %v8272
    %v8321 = vpack.c.b16 %v8281, %v8277
    %v8322 = vpack.c.b16 %v8282, %v8278
    %v8323 = vpack.c.b16 %v8283, %v8279
    %v8324 = vpack.c.b16 %v8284, %v8280
    %v8325 = vpack.c.b16 %v8289, %v8285
    %v8326 = vpack.c.b16 %v8290, %v8286
    %v8327 = vpack.c.b16 %v8291, %v8287
    %v8328 = vpack.c.b16 %v8292, %v8288
    %v8329 = vpack.c.b16 %v8297, %v8293
    %v8330 = vpack.c.b16 %v8298, %v8294
    %v8331 = vpack.c.b16 %v8299, %v8295
    %v8332 = vpack.c.b16 %v8300, %v8296
    %8365 = vmatprep.subr.bf16.mxu0 %v8302
    %8366 = vmatpush1.bf16.msra.mxu0 %v8301
    %8367 = vmatprep.subr.bf16.mxu0 %v8306
    %8368 = vmatpush1.bf16.msra.mxu0 %v8305
    %8369 = vmatprep.subr.bf16.mxu0 %v8310
    %8370 = vmatpush1.bf16.msra.mxu0 %v8309
    %8371 = vmatprep.subr.bf16.mxu0 %v8314
    %8372 = vmatpush1.bf16.msra.mxu0 %v8313
    %8373 = vmatprep.subr.bf16.mxu0 %v8318
    %8374 = vmatpush1.bf16.msra.mxu0 %v8317
    %8375 = vmatprep.subr.bf16.mxu0 %v8322
    %8376 = vmatpush1.bf16.msra.mxu0 %v8321
    %8377 = vmatprep.subr.bf16.mxu0 %v8326
    %8378 = vmatpush1.bf16.msra.mxu0 %v8325
    %8379 = vmatprep.subr.bf16.mxu0 %v8330
    %8380 = vmatpush1.bf16.msra.mxu0 %v8329
    %8381 = vmatprep.subr.bf16.mxu0 0
    %8382 = vmatpush1.bf16.msra.mxu0 0
    %8383 = vmatprep.subr.bf16.mxu0 0
    %8384 = vmatpush1.bf16.msra.mxu0 0
    %8385 = vmatprep.subr.bf16.mxu0 0
    %8386 = vmatpush1.bf16.msra.mxu0 0
    %8387 = vmatprep.subr.bf16.mxu0 0
    %8388 = vmatpush1.bf16.msra.mxu0 0
    %8389 = vmatprep.subr.bf16.mxu0 0
    %8390 = vmatpush1.bf16.msra.mxu0 0
    %8391 = vmatprep.subr.bf16.mxu0 0
    %8392 = vmatpush1.bf16.msra.mxu0 0
    %8393 = vmatprep.subr.bf16.mxu0 0
    %8394 = vmatpush1.bf16.msra.mxu0 0
    %8395 = vmatprep.subr.bf16.mxu0 0
    %8396 = vmatpush1.bf16.msra.mxu0 0
    %8397 = vmatprep.mubr.bf16.mxu0 0
    %8398 = vmatmul.mubr.bf16.gmra.mrb[0].mxu0 %v7588
    %v8399 = vpop.f32.mrb[0].mxu0
    %v8400 = vadd.f32 %v7883, %v8399
    %v8401 = vpop.f32.mrb[0].mxu0
    %v8402 = vadd.f32 %v7885, %v8401
    %v8403 = vpop.f32.mrb[0].mxu0
    %v8404 = vpop.f32.mrb[0].mxu0
    %8405 = vdwg.mxu0
    %8406 = vmatprep.subr.bf16.mxu0 %v8304
    %8407 = vmatpush1.bf16.msra.mxu0 %v8303
    %8408 = vmatprep.subr.bf16.mxu0 %v8308
    %8409 = vmatpush1.bf16.msra.mxu0 %v8307
    %8410 = vmatprep.subr.bf16.mxu0 %v8312
    %8411 = vmatpush1.bf16.msra.mxu0 %v8311
    %8412 = vmatprep.subr.bf16.mxu0 %v8316
    %8413 = vmatpush1.bf16.msra.mxu0 %v8315
    %8414 = vmatprep.subr.bf16.mxu0 %v8320
    %8415 = vmatpush1.bf16.msra.mxu0 %v8319
    %8416 = vmatprep.subr.bf16.mxu0 %v8324
    %8417 = vmatpush1.bf16.msra.mxu0 %v8323
    %8418 = vmatprep.subr.bf16.mxu0 %v8328
    %8419 = vmatpush1.bf16.msra.mxu0 %v8327
    %8420 = vmatprep.subr.bf16.mxu0 %v8332
    %8421 = vmatpush1.bf16.msra.mxu0 %v8331
    %8422 = vmatprep.subr.bf16.mxu0 0
    %8423 = vmatpush1.bf16.msra.mxu0 0
    %8424 = vmatprep.subr.bf16.mxu0 0
    %8425 = vmatpush1.bf16.msra.mxu0 0
    %8426 = vmatprep.subr.bf16.mxu0 0
    %8427 = vmatpush1.bf16.msra.mxu0 0
    %8428 = vmatprep.subr.bf16.mxu0 0
    %8429 = vmatpush1.bf16.msra.mxu0 0
    %8430 = vmatprep.subr.bf16.mxu0 0
    %8431 = vmatpush1.bf16.msra.mxu0 0
    %8432 = vmatprep.subr.bf16.mxu0 0
    %8433 = vmatpush1.bf16.msra.mxu0 0
    %8434 = vmatprep.subr.bf16.mxu0 0
    %8435 = vmatpush1.bf16.msra.mxu0 0
    %8436 = vmatprep.subr.bf16.mxu0 0
    %8437 = vmatpush1.bf16.msra.mxu0 0
    %8438 = vmatprep.mubr.bf16.mxu0 0
    %8439 = vmatmul.mubr.bf16.gmra.mrb[0].mxu0 %v7588
    %v8440 = vpop.f32.mrb[0].mxu0
    %v8441 = vadd.f32 %v7924, %v8440
    %v8442 = vpop.f32.mrb[0].mxu0
    %v8443 = vadd.f32 %v7926, %v8442
    %v8444 = vpop.f32.mrb[0].mxu0
    %v8445 = vpop.f32.mrb[0].mxu0
    %8446 = vdwg.mxu0
    %v8447 = vld [vmem:[%s6] sm:$0xf]
    %v8449 = vlaneseq
    %v8450 = vshrl.u32 %v8449, 7
    %v8451 = vsub.s32 0, %v8450
    %v8452 = vrot.slane %v8447, %v8451
    %v8453 = vlaneseq
    %v8454 = vshrl.u32 %v8453, 7
    %v8455 = vsub.s32 1, %v8454
    %v8456 = vrot.slane %v8447, %v8455
    %v8457 = vlaneseq
    %v8458 = vshrl.u32 %v8457, 7
    %v8459 = vsub.s32 2, %v8458
    %v8460 = vrot.slane %v8447, %v8459
    %v8461 = vlaneseq
    %v8462 = vshrl.u32 %v8461, 7
    %v8463 = vsub.s32 3, %v8462
    %v8464 = vrot.slane %v8447, %v8463
    %v8469 = vadd.f32 %v8400, %v8452
    %v8470 = vadd.f32 %v8402, %v8456
    %v8471 = vadd.f32 %v8441, %v8460
    %v8472 = vadd.f32 %v8443, %v8464
    %v8473 = vxor.u32 %v8469, 2147483648
    %v8474 = vmul.f32 %v8473, 1.442695
    %v8475 = vpow.pop %v8474
    %v8476 = vadd.f32 %v8475, 1.0
    %v8477 = vrcp.pop %v8476
    %v8478 = vmul.f32 1.0, %v8477
    %v8479 = vxor.u32 %v8470, 2147483648
    %v8480 = vmul.f32 %v8479, 1.442695
    %v8481 = vpow.pop %v8480
    %v8482 = vadd.f32 %v8481, 1.0
    %v8483 = vrcp.pop %v8482
    %v8484 = vmul.f32 1.0, %v8483
    %v8485 = vtanh.pop %v8471
    %v8486 = vxor.u32 %v8472, 2147483648
    %v8487 = vmul.f32 %v8486, 1.442695
    %v8488 = vpow.pop %v8487
    %v8489 = vadd.f32 %v8488, 1.0
    %v8490 = vrcp.pop %v8489
    %v8491 = vmul.f32 1.0, %v8490
    %v8492 = vmul.f32 %v8484, %v7583
    %v8493 = vmul.f32 %v8478, %v8485
    %v8494 = vadd.f32 %v8492, %v8493
    %v8495 = vtanh.pop %v8494
    %v8496 = vmul.f32 %v8491, %v8495
    %v8529 = vunpack.c.l.b16 %v7623
    %v8530 = vunpack.c.h.b16 %v7623
    %v8531 = vunpack.c.l.b16 %v7624
    %v8532 = vunpack.c.h.b16 %v7624
    %v8533 = vunpack.c.l.b16 %v7625
    %v8534 = vunpack.c.h.b16 %v7625
    %v8535 = vunpack.c.l.b16 %v7626
    %v8536 = vunpack.c.h.b16 %v7626
    %v8537 = vunpack.c.l.b16 %v7627
    %v8538 = vunpack.c.h.b16 %v7627
    %v8539 = vunpack.c.l.b16 %v7628
    %v8540 = vunpack.c.h.b16 %v7628
    %v8541 = vunpack.c.l.b16 %v7629
    %v8542 = vunpack.c.h.b16 %v7629
    %v8543 = vunpack.c.l.b16 %v7630
    %v8544 = vunpack.c.h.b16 %v7630
    %v8545 = vunpack.c.l.b16 %v7631
    %v8546 = vunpack.c.h.b16 %v7631
    %v8547 = vunpack.c.l.b16 %v7632
    %v8548 = vunpack.c.h.b16 %v7632
    %v8549 = vunpack.c.l.b16 %v7633
    %v8550 = vunpack.c.h.b16 %v7633
    %v8551 = vunpack.c.l.b16 %v7634
    %v8552 = vunpack.c.h.b16 %v7634
    %v8553 = vunpack.c.l.b16 %v7635
    %v8554 = vunpack.c.h.b16 %v7635
    %v8555 = vunpack.c.l.b16 %v7636
    %v8556 = vunpack.c.h.b16 %v7636
    %v8557 = vunpack.c.l.b16 %v7637
    %v8558 = vunpack.c.h.b16 %v7637
    %v8559 = vunpack.c.l.b16 %v7638
    %v8560 = vunpack.c.h.b16 %v7638
    %v8561 = vunpack.c.l.b16 %v7639
    %v8562 = vunpack.c.h.b16 %v7639
    %v8563 = vunpack.c.l.b16 %v7640
    %v8564 = vunpack.c.h.b16 %v7640
    %v8565 = vunpack.c.l.b16 %v7641
    %v8566 = vunpack.c.h.b16 %v7641
    %v8567 = vunpack.c.l.b16 %v7642
    %v8568 = vunpack.c.h.b16 %v7642
    %v8569 = vunpack.c.l.b16 %v7643
    %v8570 = vunpack.c.h.b16 %v7643
    %v8571 = vunpack.c.l.b16 %v7644
    %v8572 = vunpack.c.h.b16 %v7644
    %v8573 = vunpack.c.l.b16 %v7645
    %v8574 = vunpack.c.h.b16 %v7645
    %v8575 = vunpack.c.l.b16 %v7646
    %v8576 = vunpack.c.h.b16 %v7646
    %v8577 = vunpack.c.l.b16 %v7647
    %v8578 = vunpack.c.h.b16 %v7647
    %v8579 = vunpack.c.l.b16 %v7648
    %v8580 = vunpack.c.h.b16 %v7648
    %v8581 = vunpack.c.l.b16 %v7649
    %v8582 = vunpack.c.h.b16 %v7649
    %v8583 = vunpack.c.l.b16 %v7650
    %v8584 = vunpack.c.h.b16 %v7650
    %v8585 = vunpack.c.l.b16 %v7651
    %v8586 = vunpack.c.h.b16 %v7651
    %v8587 = vunpack.c.l.b16 %v7652
    %v8588 = vunpack.c.h.b16 %v7652
    %v8589 = vunpack.c.l.b16 %v7653
    %v8590 = vunpack.c.h.b16 %v7653
    %v8591 = vunpack.c.l.b16 %v7654
    %v8592 = vunpack.c.h.b16 %v7654
    %v8593 = vpack.c.b16 %v8533, %v8529
    %v8594 = vpack.c.b16 %v8534, %v8530
    %v8595 = vpack.c.b16 %v8535, %v8531
    %v8596 = vpack.c.b16 %v8536, %v8532
    %v8597 = vpack.c.b16 %v8541, %v8537
    %v8598 = vpack.c.b16 %v8542, %v8538
    %v8599 = vpack.c.b16 %v8543, %v8539
    %v8600 = vpack.c.b16 %v8544, %v8540
    %v8601 = vpack.c.b16 %v8549, %v8545
    %v8602 = vpack.c.b16 %v8550, %v8546
    %v8603 = vpack.c.b16 %v8551, %v8547
    %v8604 = vpack.c.b16 %v8552, %v8548
    %v8605 = vpack.c.b16 %v8557, %v8553
    %v8606 = vpack.c.b16 %v8558, %v8554
    %v8607 = vpack.c.b16 %v8559, %v8555
    %v8608 = vpack.c.b16 %v8560, %v8556
    %v8609 = vpack.c.b16 %v8565, %v8561
    %v8610 = vpack.c.b16 %v8566, %v8562
    %v8611 = vpack.c.b16 %v8567, %v8563
    %v8612 = vpack.c.b16 %v8568, %v8564
    %v8613 = vpack.c.b16 %v8573, %v8569
    %v8614 = vpack.c.b16 %v8574, %v8570
    %v8615 = vpack.c.b16 %v8575, %v8571
    %v8616 = vpack.c.b16 %v8576, %v8572
    %v8617 = vpack.c.b16 %v8581, %v8577
    %v8618 = vpack.c.b16 %v8582, %v8578
    %v8619 = vpack.c.b16 %v8583, %v8579
    %v8620 = vpack.c.b16 %v8584, %v8580
    %v8621 = vpack.c.b16 %v8589, %v8585
    %v8622 = vpack.c.b16 %v8590, %v8586
    %v8623 = vpack.c.b16 %v8591, %v8587
    %v8624 = vpack.c.b16 %v8592, %v8588
    %8657 = vmatprep.subr.bf16.mxu0 %v8594
    %8658 = vmatpush1.bf16.msra.mxu0 %v8593
    %8659 = vmatprep.subr.bf16.mxu0 %v8598
    %8660 = vmatpush1.bf16.msra.mxu0 %v8597
    %8661 = vmatprep.subr.bf16.mxu0 %v8602
    %8662 = vmatpush1.bf16.msra.mxu0 %v8601
    %8663 = vmatprep.subr.bf16.mxu0 %v8606
    %8664 = vmatpush1.bf16.msra.mxu0 %v8605
    %8665 = vmatprep.subr.bf16.mxu0 %v8610
    %8666 = vmatpush1.bf16.msra.mxu0 %v8609
    %8667 = vmatprep.subr.bf16.mxu0 %v8614
    %8668 = vmatpush1.bf16.msra.mxu0 %v8613
    %8669 = vmatprep.subr.bf16.mxu0 %v8618
    %8670 = vmatpush1.bf16.msra.mxu0 %v8617
    %8671 = vmatprep.subr.bf16.mxu0 %v8622
    %8672 = vmatpush1.bf16.msra.mxu0 %v8621
    %8673 = vmatprep.subr.bf16.mxu0 0
    %8674 = vmatpush1.bf16.msra.mxu0 0
    %8675 = vmatprep.subr.bf16.mxu0 0
    %8676 = vmatpush1.bf16.msra.mxu0 0
    %8677 = vmatprep.subr.bf16.mxu0 0
    %8678 = vmatpush1.bf16.msra.mxu0 0
    %8679 = vmatprep.subr.bf16.mxu0 0
    %8680 = vmatpush1.bf16.msra.mxu0 0
    %8681 = vmatprep.subr.bf16.mxu0 0
    %8682 = vmatpush1.bf16.msra.mxu0 0
    %8683 = vmatprep.subr.bf16.mxu0 0
    %8684 = vmatpush1.bf16.msra.mxu0 0
    %8685 = vmatprep.subr.bf16.mxu0 0
    %8686 = vmatpush1.bf16.msra.mxu0 0
    %8687 = vmatprep.subr.bf16.mxu0 0
    %8688 = vmatpush1.bf16.msra.mxu0 0
    %8689 = vmatprep.mubr.bf16.mxu0 0
    %8690 = vmatmul.mubr.bf16.gmra.mrb[0].mxu0 %v7622
    %v8691 = vpop.f32.mrb[0].mxu0
    %v8692 = vadd.f32 %v8158, %v8691
    %v8693 = vpop.f32.mrb[0].mxu0
    %v8694 = vadd.f32 %v8160, %v8693
    %v8695 = vpop.f32.mrb[0].mxu0
    %v8696 = vpop.f32.mrb[0].mxu0
    %8697 = vdwg.mxu0
    %8698 = vmatprep.subr.bf16.mxu0 %v8596
    %8699 = vmatpush1.bf16.msra.mxu0 %v8595
    %8700 = vmatprep.subr.bf16.mxu0 %v8600
    %8701 = vmatpush1.bf16.msra.mxu0 %v8599
    %8702 = vmatprep.subr.bf16.mxu0 %v8604
    %8703 = vmatpush1.bf16.msra.mxu0 %v8603
    %8704 = vmatprep.subr.bf16.mxu0 %v8608
    %8705 = vmatpush1.bf16.msra.mxu0 %v8607
    %8706 = vmatprep.subr.bf16.mxu0 %v8612
    %8707 = vmatpush1.bf16.msra.mxu0 %v8611
    %8708 = vmatprep.subr.bf16.mxu0 %v8616
    %8709 = vmatpush1.bf16.msra.mxu0 %v8615
    %8710 = vmatprep.subr.bf16.mxu0 %v8620
    %8711 = vmatpush1.bf16.msra.mxu0 %v8619
    %8712 = vmatprep.subr.bf16.mxu0 %v8624
    %8713 = vmatpush1.bf16.msra.mxu0 %v8623
    %8714 = vmatprep.subr.bf16.mxu0 0
    %8715 = vmatpush1.bf16.msra.mxu0 0
    %8716 = vmatprep.subr.bf16.mxu0 0
    %8717 = vmatpush1.bf16.msra.mxu0 0
    %8718 = vmatprep.subr.bf16.mxu0 0
    %8719 = vmatpush1.bf16.msra.mxu0 0
    %8720 = vmatprep.subr.bf16.mxu0 0
    %8721 = vmatpush1.bf16.msra.mxu0 0
    %8722 = vmatprep.subr.bf16.mxu0 0
    %8723 = vmatpush1.bf16.msra.mxu0 0
    %8724 = vmatprep.subr.bf16.mxu0 0
    %8725 = vmatpush1.bf16.msra.mxu0 0
    %8726 = vmatprep.subr.bf16.mxu0 0
    %8727 = vmatpush1.bf16.msra.mxu0 0
    %8728 = vmatprep.subr.bf16.mxu0 0
    %8729 = vmatpush1.bf16.msra.mxu0 0
    %8730 = vmatprep.mubr.bf16.mxu0 0
    %8731 = vmatmul.mubr.bf16.gmra.mrb[0].mxu0 %v7622
    %v8732 = vpop.f32.mrb[0].mxu0
    %v8733 = vadd.f32 %v8199, %v8732
    %v8734 = vpop.f32.mrb[0].mxu0
    %v8735 = vadd.f32 %v8201, %v8734
    %v8736 = vpop.f32.mrb[0].mxu0
    %v8737 = vpop.f32.mrb[0].mxu0
    %8738 = vdwg.mxu0
    %v8739 = vld [vmem:[%s1299] sm:$0xf]
    %v8741 = vlaneseq
    %v8742 = vshrl.u32 %v8741, 7
    %v8743 = vsub.s32 0, %v8742
    %v8744 = vrot.slane %v8739, %v8743
    %v8745 = vlaneseq
    %v8746 = vshrl.u32 %v8745, 7
    %v8747 = vsub.s32 1, %v8746
    %v8748 = vrot.slane %v8739, %v8747
    %v8749 = vlaneseq
    %v8750 = vshrl.u32 %v8749, 7
    %v8751 = vsub.s32 2, %v8750
    %v8752 = vrot.slane %v8739, %v8751
    %v8753 = vlaneseq
    %v8754 = vshrl.u32 %v8753, 7
    %v8755 = vsub.s32 3, %v8754
    %v8756 = vrot.slane %v8739, %v8755
    %v8761 = vadd.f32 %v8692, %v8744
    %v8762 = vadd.f32 %v8694, %v8748
    %v8763 = vadd.f32 %v8733, %v8752
    %v8764 = vadd.f32 %v8735, %v8756
    %v8765 = vxor.u32 %v8761, 2147483648
    %v8766 = vmul.f32 %v8765, 1.442695
    %v8767 = vpow.pop %v8766
    %v8768 = vadd.f32 %v8767, 1.0
    %v8769 = vrcp.pop %v8768
    %v8770 = vmul.f32 1.0, %v8769
    %v8771 = vxor.u32 %v8762, 2147483648
    %v8772 = vmul.f32 %v8771, 1.442695
    %v8773 = vpow.pop %v8772
    %v8774 = vadd.f32 %v8773, 1.0
    %v8775 = vrcp.pop %v8774
    %v8776 = vmul.f32 1.0, %v8775
    %v8777 = vtanh.pop %v8763
    %v8778 = vxor.u32 %v8764, 2147483648
    %v8779 = vmul.f32 %v8778, 1.442695
    %v8780 = vpow.pop %v8779
    %v8781 = vadd.f32 %v8780, 1.0
    %v8782 = vrcp.pop %v8781
    %v8783 = vmul.f32 1.0, %v8782
    %v8784 = vmul.f32 %v8776, %v7586
    %v8785 = vmul.f32 %v8770, %v8777
    %v8786 = vadd.f32 %v8784, %v8785
    %v8787 = vtanh.pop %v8786
    %v8788 = vmul.f32 %v8783, %v8787
    %8790 = vset.pattern.permute.xlu0 0
    %8791 = vperm.xlu0 %8790, %v116
    %v8792 = vpop.permute.xlu0 %8791
    %v8794 = vmul.f32 %v8792, %v8496
    %8796 = vset.pattern.permute.xlu0 0
    %8797 = vperm.xlu0 %8796, %v119
    %v8798 = vpop.permute.xlu0 %8797
    %v8800 = vmul.f32 %v8798, %v8788
    %v8801 = vpack.c.bf16 %v8794, %v8794
    %s8802 = scalar_lea.vmem [#allocation11], 6
    %8803 = vst [vmem:[%s8802] sm:$0x1] %v8801
    %v8804 = vpack.c.bf16 %v8800, %v8800
    %s8805 = scalar_lea.vmem [#allocation12], 1
    %8806 = vst [vmem:[%s8805] sm:$0x1] %v8804
    %8808 = vset.pattern.permute.xlu0 0
    %8809 = vperm.xlu0 %8808, %v132
    %v8810 = vpop.permute.xlu0 %8809
    %v8812 = vmul.f32 %v8810, %v7573
    %v8813 = vadd.f32 %v8794, %v8812
    %8815 = vset.pattern.permute.xlu0 0
    %8816 = vperm.xlu0 %8815, %v135
    %v8817 = vpop.permute.xlu0 %8816
    %v8819 = vmul.f32 %v8817, %v7580
    %v8820 = vadd.f32 %v8800, %v8819
    %v8821 = vmul.f32 %v8792, %v8494
    %v8822 = vmul.f32 %v8810, %v7583
    %v8823 = vadd.f32 %v8821, %v8822
    %v8824 = vmul.f32 %v8798, %v8786
    %v8825 = vmul.f32 %v8817, %v7586
    %v8826 = vadd.f32 %v8824, %v8825
    %s8827 = scalar_lea.vmem %s0, 7
    %v8828 = vld [vmem:[%s8827] sm:$0x1]
    %v8829 = vld [vmem:[#allocation6] sm:$0xff]
    %v8830 = vld [vmem:[#allocation6 + $0x8] sm:$0xff]
    %v8831 = vld [vmem:[#allocation6 + $0x10] sm:$0xff]
    %v8832 = vld [vmem:[#allocation6 + $0x18] sm:$0xff]
    %v8833 = vld [vmem:[#allocation6 + $0x20] sm:$0xff]
    %v8834 = vld [vmem:[#allocation6 + $0x28] sm:$0xff]
    %v8835 = vld [vmem:[#allocation6 + $0x30] sm:$0xff]
    %v8836 = vld [vmem:[#allocation6 + $0x38] sm:$0xff]
    %v8837 = vld [vmem:[#allocation6 + $0x40] sm:$0xff]
    %v8838 = vld [vmem:[#allocation6 + $0x48] sm:$0xff]
    %v8839 = vld [vmem:[#allocation6 + $0x50] sm:$0xff]
    %v8840 = vld [vmem:[#allocation6 + $0x58] sm:$0xff]
    %v8841 = vld [vmem:[#allocation6 + $0x60] sm:$0xff]
    %v8842 = vld [vmem:[#allocation6 + $0x68] sm:$0xff]
    %v8843 = vld [vmem:[#allocation6 + $0x70] sm:$0xff]
    %v8844 = vld [vmem:[#allocation6 + $0x78] sm:$0xff]
    %v8845 = vld [vmem:[#allocation6 + $0x80] sm:$0xff]
    %v8846 = vld [vmem:[#allocation6 + $0x88] sm:$0xff]
    %v8847 = vld [vmem:[#allocation6 + $0x90] sm:$0xff]
    %v8848 = vld [vmem:[#allocation6 + $0x98] sm:$0xff]
    %v8849 = vld [vmem:[#allocation6 + $0xa0] sm:$0xff]
    %v8850 = vld [vmem:[#allocation6 + $0xa8] sm:$0xff]
    %v8851 = vld [vmem:[#allocation6 + $0xb0] sm:$0xff]
    %v8852 = vld [vmem:[#allocation6 + $0xb8] sm:$0xff]
    %v8853 = vld [vmem:[#allocation6 + $0xc0] sm:$0xff]
    %v8854 = vld [vmem:[#allocation6 + $0xc8] sm:$0xff]
    %v8855 = vld [vmem:[#allocation6 + $0xd0] sm:$0xff]
    %v8856 = vld [vmem:[#allocation6 + $0xd8] sm:$0xff]
    %v8857 = vld [vmem:[#allocation6 + $0xe0] sm:$0xff]
    %v8858 = vld [vmem:[#allocation6 + $0xe8] sm:$0xff]
    %v8859 = vld [vmem:[#allocation6 + $0xf0] sm:$0xff]
    %v8860 = vld [vmem:[#allocation6 + $0xf8] sm:$0xff]
    %v8861 = vld [vmem:[%s88] sm:$0x1]
    %v8862 = vld [vmem:[%s181] sm:$0xff]
    %v8863 = vld [vmem:[%s181 + $0x8] sm:$0xff]
    %v8864 = vld [vmem:[%s181 + $0x10] sm:$0xff]
    %v8865 = vld [vmem:[%s181 + $0x18] sm:$0xff]
    %v8866 = vld [vmem:[%s181 + $0x20] sm:$0xff]
    %v8867 = vld [vmem:[%s181 + $0x28] sm:$0xff]
    %v8868 = vld [vmem:[%s181 + $0x30] sm:$0xff]
    %v8869 = vld [vmem:[%s181 + $0x38] sm:$0xff]
    %v8870 = vld [vmem:[%s181 + $0x40] sm:$0xff]
    %v8871 = vld [vmem:[%s181 + $0x48] sm:$0xff]
    %v8872 = vld [vmem:[%s181 + $0x50] sm:$0xff]
    %v8873 = vld [vmem:[%s181 + $0x58] sm:$0xff]
    %v8874 = vld [vmem:[%s181 + $0x60] sm:$0xff]
    %v8875 = vld [vmem:[%s181 + $0x68] sm:$0xff]
    %v8876 = vld [vmem:[%s181 + $0x70] sm:$0xff]
    %v8877 = vld [vmem:[%s181 + $0x78] sm:$0xff]
    %v8878 = vld [vmem:[%s181 + $0x80] sm:$0xff]
    %v8879 = vld [vmem:[%s181 + $0x88] sm:$0xff]
    %v8880 = vld [vmem:[%s181 + $0x90] sm:$0xff]
    %v8881 = vld [vmem:[%s181 + $0x98] sm:$0xff]
    %v8882 = vld [vmem:[%s181 + $0xa0] sm:$0xff]
    %v8883 = vld [vmem:[%s181 + $0xa8] sm:$0xff]
    %v8884 = vld [vmem:[%s181 + $0xb0] sm:$0xff]
    %v8885 = vld [vmem:[%s181 + $0xb8] sm:$0xff]
    %v8886 = vld [vmem:[%s181 + $0xc0] sm:$0xff]
    %v8887 = vld [vmem:[%s181 + $0xc8] sm:$0xff]
    %v8888 = vld [vmem:[%s181 + $0xd0] sm:$0xff]
    %v8889 = vld [vmem:[%s181 + $0xd8] sm:$0xff]
    %v8890 = vld [vmem:[%s181 + $0xe0] sm:$0xff]
    %v8891 = vld [vmem:[%s181 + $0xe8] sm:$0xff]
    %v8892 = vld [vmem:[%s181 + $0xf0] sm:$0xff]
    %v8893 = vld [vmem:[%s181 + $0xf8] sm:$0xff]
    %v8894 = vpack.c.bf16 %v8813, %v8813
    %v8895 = vld [vmem:[#allocation9] sm:$0xff]
    %v8896 = vld [vmem:[#allocation9 + $0x8] sm:$0xff]
    %v8897 = vld [vmem:[#allocation9 + $0x10] sm:$0xff]
    %v8898 = vld [vmem:[#allocation9 + $0x18] sm:$0xff]
    %v8899 = vld [vmem:[#allocation9 + $0x20] sm:$0xff]
    %v8900 = vld [vmem:[#allocation9 + $0x28] sm:$0xff]
    %v8901 = vld [vmem:[#allocation9 + $0x30] sm:$0xff]
    %v8902 = vld [vmem:[#allocation9 + $0x38] sm:$0xff]
    %v8903 = vld [vmem:[#allocation9 + $0x40] sm:$0xff]
    %v8904 = vld [vmem:[#allocation9 + $0x48] sm:$0xff]
    %v8905 = vld [vmem:[#allocation9 + $0x50] sm:$0xff]
    %v8906 = vld [vmem:[#allocation9 + $0x58] sm:$0xff]
    %v8907 = vld [vmem:[#allocation9 + $0x60] sm:$0xff]
    %v8908 = vld [vmem:[#allocation9 + $0x68] sm:$0xff]
    %v8909 = vld [vmem:[#allocation9 + $0x70] sm:$0xff]
    %v8910 = vld [vmem:[#allocation9 + $0x78] sm:$0xff]
    %v8911 = vld [vmem:[#allocation9 + $0x80] sm:$0xff]
    %v8912 = vld [vmem:[#allocation9 + $0x88] sm:$0xff]
    %v8913 = vld [vmem:[#allocation9 + $0x90] sm:$0xff]
    %v8914 = vld [vmem:[#allocation9 + $0x98] sm:$0xff]
    %v8915 = vld [vmem:[#allocation9 + $0xa0] sm:$0xff]
    %v8916 = vld [vmem:[#allocation9 + $0xa8] sm:$0xff]
    %v8917 = vld [vmem:[#allocation9 + $0xb0] sm:$0xff]
    %v8918 = vld [vmem:[#allocation9 + $0xb8] sm:$0xff]
    %v8919 = vld [vmem:[#allocation9 + $0xc0] sm:$0xff]
    %v8920 = vld [vmem:[#allocation9 + $0xc8] sm:$0xff]
    %v8921 = vld [vmem:[#allocation9 + $0xd0] sm:$0xff]
    %v8922 = vld [vmem:[#allocation9 + $0xd8] sm:$0xff]
    %v8923 = vld [vmem:[#allocation9 + $0xe0] sm:$0xff]
    %v8924 = vld [vmem:[#allocation9 + $0xe8] sm:$0xff]
    %v8925 = vld [vmem:[#allocation9 + $0xf0] sm:$0xff]
    %v8926 = vld [vmem:[#allocation9 + $0xf8] sm:$0xff]
    %v8959 = vunpack.c.l.b16 %v8895
    %v8960 = vunpack.c.h.b16 %v8895
    %v8961 = vunpack.c.l.b16 %v8896
    %v8962 = vunpack.c.h.b16 %v8896
    %v8963 = vunpack.c.l.b16 %v8897
    %v8964 = vunpack.c.h.b16 %v8897
    %v8965 = vunpack.c.l.b16 %v8898
    %v8966 = vunpack.c.h.b16 %v8898
    %v8967 = vunpack.c.l.b16 %v8899
    %v8968 = vunpack.c.h.b16 %v8899
    %v8969 = vunpack.c.l.b16 %v8900
    %v8970 = vunpack.c.h.b16 %v8900
    %v8971 = vunpack.c.l.b16 %v8901
    %v8972 = vunpack.c.h.b16 %v8901
    %v8973 = vunpack.c.l.b16 %v8902
    %v8974 = vunpack.c.h.b16 %v8902
    %v8975 = vunpack.c.l.b16 %v8903
    %v8976 = vunpack.c.h.b16 %v8903
    %v8977 = vunpack.c.l.b16 %v8904
    %v8978 = vunpack.c.h.b16 %v8904
    %v8979 = vunpack.c.l.b16 %v8905
    %v8980 = vunpack.c.h.b16 %v8905
    %v8981 = vunpack.c.l.b16 %v8906
    %v8982 = vunpack.c.h.b16 %v8906
    %v8983 = vunpack.c.l.b16 %v8907
    %v8984 = vunpack.c.h.b16 %v8907
    %v8985 = vunpack.c.l.b16 %v8908
    %v8986 = vunpack.c.h.b16 %v8908
    %v8987 = vunpack.c.l.b16 %v8909
    %v8988 = vunpack.c.h.b16 %v8909
    %v8989 = vunpack.c.l.b16 %v8910
    %v8990 = vunpack.c.h.b16 %v8910
    %v8991 = vunpack.c.l.b16 %v8911
    %v8992 = vunpack.c.h.b16 %v8911
    %v8993 = vunpack.c.l.b16 %v8912
    %v8994 = vunpack.c.h.b16 %v8912
    %v8995 = vunpack.c.l.b16 %v8913
    %v8996 = vunpack.c.h.b16 %v8913
    %v8997 = vunpack.c.l.b16 %v8914
    %v8998 = vunpack.c.h.b16 %v8914
    %v8999 = vunpack.c.l.b16 %v8915
    %v9000 = vunpack.c.h.b16 %v8915
    %v9001 = vunpack.c.l.b16 %v8916
    %v9002 = vunpack.c.h.b16 %v8916
    %v9003 = vunpack.c.l.b16 %v8917
    %v9004 = vunpack.c.h.b16 %v8917
    %v9005 = vunpack.c.l.b16 %v8918
    %v9006 = vunpack.c.h.b16 %v8918
    %v9007 = vunpack.c.l.b16 %v8919
    %v9008 = vunpack.c.h.b16 %v8919
    %v9009 = vunpack.c.l.b16 %v8920
    %v9010 = vunpack.c.h.b16 %v8920
    %v9011 = vunpack.c.l.b16 %v8921
    %v9012 = vunpack.c.h.b16 %v8921
    %v9013 = vunpack.c.l.b16 %v8922
    %v9014 = vunpack.c.h.b16 %v8922
    %v9015 = vunpack.c.l.b16 %v8923
    %v9016 = vunpack.c.h.b16 %v8923
    %v9017 = vunpack.c.l.b16 %v8924
    %v9018 = vunpack.c.h.b16 %v8924
    %v9019 = vunpack.c.l.b16 %v8925
    %v9020 = vunpack.c.h.b16 %v8925
    %v9021 = vunpack.c.l.b16 %v8926
    %v9022 = vunpack.c.h.b16 %v8926
    %v9023 = vpack.c.b16 %v8963, %v8959
    %v9024 = vpack.c.b16 %v8964, %v8960
    %v9025 = vpack.c.b16 %v8965, %v8961
    %v9026 = vpack.c.b16 %v8966, %v8962
    %v9027 = vpack.c.b16 %v8971, %v8967
    %v9028 = vpack.c.b16 %v8972, %v8968
    %v9029 = vpack.c.b16 %v8973, %v8969
    %v9030 = vpack.c.b16 %v8974, %v8970
    %v9031 = vpack.c.b16 %v8979, %v8975
    %v9032 = vpack.c.b16 %v8980, %v8976
    %v9033 = vpack.c.b16 %v8981, %v8977
    %v9034 = vpack.c.b16 %v8982, %v8978
    %v9035 = vpack.c.b16 %v8987, %v8983
    %v9036 = vpack.c.b16 %v8988, %v8984
    %v9037 = vpack.c.b16 %v8989, %v8985
    %v9038 = vpack.c.b16 %v8990, %v8986
    %v9039 = vpack.c.b16 %v8995, %v8991
    %v9040 = vpack.c.b16 %v8996, %v8992
    %v9041 = vpack.c.b16 %v8997, %v8993
    %v9042 = vpack.c.b16 %v8998, %v8994
    %v9043 = vpack.c.b16 %v9003, %v8999
    %v9044 = vpack.c.b16 %v9004, %v9000
    %v9045 = vpack.c.b16 %v9005, %v9001
    %v9046 = vpack.c.b16 %v9006, %v9002
    %v9047 = vpack.c.b16 %v9011, %v9007
    %v9048 = vpack.c.b16 %v9012, %v9008
    %v9049 = vpack.c.b16 %v9013, %v9009
    %v9050 = vpack.c.b16 %v9014, %v9010
    %v9051 = vpack.c.b16 %v9019, %v9015
    %v9052 = vpack.c.b16 %v9020, %v9016
    %v9053 = vpack.c.b16 %v9021, %v9017
    %v9054 = vpack.c.b16 %v9022, %v9018
    %9087 = vmatprep.subr.bf16.mxu0 %v9024
    %9088 = vmatpush1.bf16.msra.mxu0 %v9023
    %9089 = vmatprep.subr.bf16.mxu0 %v9028
    %9090 = vmatpush1.bf16.msra.mxu0 %v9027
    %9091 = vmatprep.subr.bf16.mxu0 %v9032
    %9092 = vmatpush1.bf16.msra.mxu0 %v9031
    %9093 = vmatprep.subr.bf16.mxu0 %v9036
    %9094 = vmatpush1.bf16.msra.mxu0 %v9035
    %9095 = vmatprep.subr.bf16.mxu0 %v9040
    %9096 = vmatpush1.bf16.msra.mxu0 %v9039
    %9097 = vmatprep.subr.bf16.mxu0 %v9044
    %9098 = vmatpush1.bf16.msra.mxu0 %v9043
    %9099 = vmatprep.subr.bf16.mxu0 %v9048
    %9100 = vmatpush1.bf16.msra.mxu0 %v9047
    %9101 = vmatprep.subr.bf16.mxu0 %v9052
    %9102 = vmatpush1.bf16.msra.mxu0 %v9051
    %9103 = vmatprep.subr.bf16.mxu0 0
    %9104 = vmatpush1.bf16.msra.mxu0 0
    %9105 = vmatprep.subr.bf16.mxu0 0
    %9106 = vmatpush1.bf16.msra.mxu0 0
    %9107 = vmatprep.subr.bf16.mxu0 0
    %9108 = vmatpush1.bf16.msra.mxu0 0
    %9109 = vmatprep.subr.bf16.mxu0 0
    %9110 = vmatpush1.bf16.msra.mxu0 0
    %9111 = vmatprep.subr.bf16.mxu0 0
    %9112 = vmatpush1.bf16.msra.mxu0 0
    %9113 = vmatprep.subr.bf16.mxu0 0
    %9114 = vmatpush1.bf16.msra.mxu0 0
    %9115 = vmatprep.subr.bf16.mxu0 0
    %9116 = vmatpush1.bf16.msra.mxu0 0
    %9117 = vmatprep.subr.bf16.mxu0 0
    %9118 = vmatpush1.bf16.msra.mxu0 0
    %9119 = vmatprep.mubr.bf16.mxu0 0
    %9120 = vmatmul.mubr.bf16.gmra.mrb[0].mxu0 %v8894
    %v9121 = vpop.f32.mrb[0].mxu0
    %v9122 = vadd.f32 0.0, %v9121
    %v9123 = vpop.f32.mrb[0].mxu0
    %v9124 = vadd.f32 0.0, %v9123
    %v9125 = vpop.f32.mrb[0].mxu0
    %v9126 = vpop.f32.mrb[0].mxu0
    %9127 = vdwg.mxu0
    %9128 = vmatprep.subr.bf16.mxu0 %v9026
    %9129 = vmatpush1.bf16.msra.mxu0 %v9025
    %9130 = vmatprep.subr.bf16.mxu0 %v9030
    %9131 = vmatpush1.bf16.msra.mxu0 %v9029
    %9132 = vmatprep.subr.bf16.mxu0 %v9034
    %9133 = vmatpush1.bf16.msra.mxu0 %v9033
    %9134 = vmatprep.subr.bf16.mxu0 %v9038
    %9135 = vmatpush1.bf16.msra.mxu0 %v9037
    %9136 = vmatprep.subr.bf16.mxu0 %v9042
    %9137 = vmatpush1.bf16.msra.mxu0 %v9041
    %9138 = vmatprep.subr.bf16.mxu0 %v9046
    %9139 = vmatpush1.bf16.msra.mxu0 %v9045
    %9140 = vmatprep.subr.bf16.mxu0 %v9050
    %9141 = vmatpush1.bf16.msra.mxu0 %v9049
    %9142 = vmatprep.subr.bf16.mxu0 %v9054
    %9143 = vmatpush1.bf16.msra.mxu0 %v9053
    %9144 = vmatprep.subr.bf16.mxu0 0
    %9145 = vmatpush1.bf16.msra.mxu0 0
    %9146 = vmatprep.subr.bf16.mxu0 0
    %9147 = vmatpush1.bf16.msra.mxu0 0
    %9148 = vmatprep.subr.bf16.mxu0 0
    %9149 = vmatpush1.bf16.msra.mxu0 0
    %9150 = vmatprep.subr.bf16.mxu0 0
    %9151 = vmatpush1.bf16.msra.mxu0 0
    %9152 = vmatprep.subr.bf16.mxu0 0
    %9153 = vmatpush1.bf16.msra.mxu0 0
    %9154 = vmatprep.subr.bf16.mxu0 0
    %9155 = vmatpush1.bf16.msra.mxu0 0
    %9156 = vmatprep.subr.bf16.mxu0 0
    %9157 = vmatpush1.bf16.msra.mxu0 0
    %9158 = vmatprep.subr.bf16.mxu0 0
    %9159 = vmatpush1.bf16.msra.mxu0 0
    %9160 = vmatprep.mubr.bf16.mxu0 0
    %9161 = vmatmul.mubr.bf16.gmra.mrb[0].mxu0 %v8894
    %v9162 = vpop.f32.mrb[0].mxu0
    %v9163 = vadd.f32 0.0, %v9162
    %v9164 = vpop.f32.mrb[0].mxu0
    %v9165 = vadd.f32 0.0, %v9164
    %v9166 = vpop.f32.mrb[0].mxu0
    %v9167 = vpop.f32.mrb[0].mxu0
    %9168 = vdwg.mxu0
    %v9169 = vpack.c.bf16 %v8820, %v8820
    %v9170 = vld [vmem:[%s490] sm:$0xff]
    %v9171 = vld [vmem:[%s490 + $0x8] sm:$0xff]
    %v9172 = vld [vmem:[%s490 + $0x10] sm:$0xff]
    %v9173 = vld [vmem:[%s490 + $0x18] sm:$0xff]
    %v9174 = vld [vmem:[%s490 + $0x20] sm:$0xff]
    %v9175 = vld [vmem:[%s490 + $0x28] sm:$0xff]
    %v9176 = vld [vmem:[%s490 + $0x30] sm:$0xff]
    %v9177 = vld [vmem:[%s490 + $0x38] sm:$0xff]
    %v9178 = vld [vmem:[%s490 + $0x40] sm:$0xff]
    %v9179 = vld [vmem:[%s490 + $0x48] sm:$0xff]
    %v9180 = vld [vmem:[%s490 + $0x50] sm:$0xff]
    %v9181 = vld [vmem:[%s490 + $0x58] sm:$0xff]
    %v9182 = vld [vmem:[%s490 + $0x60] sm:$0xff]
    %v9183 = vld [vmem:[%s490 + $0x68] sm:$0xff]
    %v9184 = vld [vmem:[%s490 + $0x70] sm:$0xff]
    %v9185 = vld [vmem:[%s490 + $0x78] sm:$0xff]
    %v9186 = vld [vmem:[%s490 + $0x80] sm:$0xff]
    %v9187 = vld [vmem:[%s490 + $0x88] sm:$0xff]
    %v9188 = vld [vmem:[%s490 + $0x90] sm:$0xff]
    %v9189 = vld [vmem:[%s490 + $0x98] sm:$0xff]
    %v9190 = vld [vmem:[%s490 + $0xa0] sm:$0xff]
    %v9191 = vld [vmem:[%s490 + $0xa8] sm:$0xff]
    %v9192 = vld [vmem:[%s490 + $0xb0] sm:$0xff]
    %v9193 = vld [vmem:[%s490 + $0xb8] sm:$0xff]
    %v9194 = vld [vmem:[%s490 + $0xc0] sm:$0xff]
    %v9195 = vld [vmem:[%s490 + $0xc8] sm:$0xff]
    %v9196 = vld [vmem:[%s490 + $0xd0] sm:$0xff]
    %v9197 = vld [vmem:[%s490 + $0xd8] sm:$0xff]
    %v9198 = vld [vmem:[%s490 + $0xe0] sm:$0xff]
    %v9199 = vld [vmem:[%s490 + $0xe8] sm:$0xff]
    %v9200 = vld [vmem:[%s490 + $0xf0] sm:$0xff]
    %v9201 = vld [vmem:[%s490 + $0xf8] sm:$0xff]
    %v9234 = vunpack.c.l.b16 %v9170
    %v9235 = vunpack.c.h.b16 %v9170
    %v9236 = vunpack.c.l.b16 %v9171
    %v9237 = vunpack.c.h.b16 %v9171
    %v9238 = vunpack.c.l.b16 %v9172
    %v9239 = vunpack.c.h.b16 %v9172
    %v9240 = vunpack.c.l.b16 %v9173
    %v9241 = vunpack.c.h.b16 %v9173
    %v9242 = vunpack.c.l.b16 %v9174
    %v9243 = vunpack.c.h.b16 %v9174
    %v9244 = vunpack.c.l.b16 %v9175
    %v9245 = vunpack.c.h.b16 %v9175
    %v9246 = vunpack.c.l.b16 %v9176
    %v9247 = vunpack.c.h.b16 %v9176
    %v9248 = vunpack.c.l.b16 %v9177
    %v9249 = vunpack.c.h.b16 %v9177
    %v9250 = vunpack.c.l.b16 %v9178
    %v9251 = vunpack.c.h.b16 %v9178
    %v9252 = vunpack.c.l.b16 %v9179
    %v9253 = vunpack.c.h.b16 %v9179
    %v9254 = vunpack.c.l.b16 %v9180
    %v9255 = vunpack.c.h.b16 %v9180
    %v9256 = vunpack.c.l.b16 %v9181
    %v9257 = vunpack.c.h.b16 %v9181
    %v9258 = vunpack.c.l.b16 %v9182
    %v9259 = vunpack.c.h.b16 %v9182
    %v9260 = vunpack.c.l.b16 %v9183
    %v9261 = vunpack.c.h.b16 %v9183
    %v9262 = vunpack.c.l.b16 %v9184
    %v9263 = vunpack.c.h.b16 %v9184
    %v9264 = vunpack.c.l.b16 %v9185
    %v9265 = vunpack.c.h.b16 %v9185
    %v9266 = vunpack.c.l.b16 %v9186
    %v9267 = vunpack.c.h.b16 %v9186
    %v9268 = vunpack.c.l.b16 %v9187
    %v9269 = vunpack.c.h.b16 %v9187
    %v9270 = vunpack.c.l.b16 %v9188
    %v9271 = vunpack.c.h.b16 %v9188
    %v9272 = vunpack.c.l.b16 %v9189
    %v9273 = vunpack.c.h.b16 %v9189
    %v9274 = vunpack.c.l.b16 %v9190
    %v9275 = vunpack.c.h.b16 %v9190
    %v9276 = vunpack.c.l.b16 %v9191
    %v9277 = vunpack.c.h.b16 %v9191
    %v9278 = vunpack.c.l.b16 %v9192
    %v9279 = vunpack.c.h.b16 %v9192
    %v9280 = vunpack.c.l.b16 %v9193
    %v9281 = vunpack.c.h.b16 %v9193
    %v9282 = vunpack.c.l.b16 %v9194
    %v9283 = vunpack.c.h.b16 %v9194
    %v9284 = vunpack.c.l.b16 %v9195
    %v9285 = vunpack.c.h.b16 %v9195
    %v9286 = vunpack.c.l.b16 %v9196
    %v9287 = vunpack.c.h.b16 %v9196
    %v9288 = vunpack.c.l.b16 %v9197
    %v9289 = vunpack.c.h.b16 %v9197
    %v9290 = vunpack.c.l.b16 %v9198
    %v9291 = vunpack.c.h.b16 %v9198
    %v9292 = vunpack.c.l.b16 %v9199
    %v9293 = vunpack.c.h.b16 %v9199
    %v9294 = vunpack.c.l.b16 %v9200
    %v9295 = vunpack.c.h.b16 %v9200
    %v9296 = vunpack.c.l.b16 %v9201
    %v9297 = vunpack.c.h.b16 %v9201
    %v9298 = vpack.c.b16 %v9238, %v9234
    %v9299 = vpack.c.b16 %v9239, %v9235
    %v9300 = vpack.c.b16 %v9240, %v9236
    %v9301 = vpack.c.b16 %v9241, %v9237
    %v9302 = vpack.c.b16 %v9246, %v9242
    %v9303 = vpack.c.b16 %v9247, %v9243
    %v9304 = vpack.c.b16 %v9248, %v9244
    %v9305 = vpack.c.b16 %v9249, %v9245
    %v9306 = vpack.c.b16 %v9254, %v9250
    %v9307 = vpack.c.b16 %v9255, %v9251
    %v9308 = vpack.c.b16 %v9256, %v9252
    %v9309 = vpack.c.b16 %v9257, %v9253
    %v9310 = vpack.c.b16 %v9262, %v9258
    %v9311 = vpack.c.b16 %v9263, %v9259
    %v9312 = vpack.c.b16 %v9264, %v9260
    %v9313 = vpack.c.b16 %v9265, %v9261
    %v9314 = vpack.c.b16 %v9270, %v9266
    %v9315 = vpack.c.b16 %v9271, %v9267
    %v9316 = vpack.c.b16 %v9272, %v9268
    %v9317 = vpack.c.b16 %v9273, %v9269
    %v9318 = vpack.c.b16 %v9278, %v9274
    %v9319 = vpack.c.b16 %v9279, %v9275
    %v9320 = vpack.c.b16 %v9280, %v9276
    %v9321 = vpack.c.b16 %v9281, %v9277
    %v9322 = vpack.c.b16 %v9286, %v9282
    %v9323 = vpack.c.b16 %v9287, %v9283
    %v9324 = vpack.c.b16 %v9288, %v9284
    %v9325 = vpack.c.b16 %v9289, %v9285
    %v9326 = vpack.c.b16 %v9294, %v9290
    %v9327 = vpack.c.b16 %v9295, %v9291
    %v9328 = vpack.c.b16 %v9296, %v9292
    %v9329 = vpack.c.b16 %v9297, %v9293
    %9362 = vmatprep.subr.bf16.mxu0 %v9299
    %9363 = vmatpush1.bf16.msra.mxu0 %v9298
    %9364 = vmatprep.subr.bf16.mxu0 %v9303
    %9365 = vmatpush1.bf16.msra.mxu0 %v9302
    %9366 = vmatprep.subr.bf16.mxu0 %v9307
    %9367 = vmatpush1.bf16.msra.mxu0 %v9306
    %9368 = vmatprep.subr.bf16.mxu0 %v9311
    %9369 = vmatpush1.bf16.msra.mxu0 %v9310
    %9370 = vmatprep.subr.bf16.mxu0 %v9315
    %9371 = vmatpush1.bf16.msra.mxu0 %v9314
    %9372 = vmatprep.subr.bf16.mxu0 %v9319
    %9373 = vmatpush1.bf16.msra.mxu0 %v9318
    %9374 = vmatprep.subr.bf16.mxu0 %v9323
    %9375 = vmatpush1.bf16.msra.mxu0 %v9322
    %9376 = vmatprep.subr.bf16.mxu0 %v9327
    %9377 = vmatpush1.bf16.msra.mxu0 %v9326
    %9378 = vmatprep.subr.bf16.mxu0 0
    %9379 = vmatpush1.bf16.msra.mxu0 0
    %9380 = vmatprep.subr.bf16.mxu0 0
    %9381 = vmatpush1.bf16.msra.mxu0 0
    %9382 = vmatprep.subr.bf16.mxu0 0
    %9383 = vmatpush1.bf16.msra.mxu0 0
    %9384 = vmatprep.subr.bf16.mxu0 0
    %9385 = vmatpush1.bf16.msra.mxu0 0
    %9386 = vmatprep.subr.bf16.mxu0 0
    %9387 = vmatpush1.bf16.msra.mxu0 0
    %9388 = vmatprep.subr.bf16.mxu0 0
    %9389 = vmatpush1.bf16.msra.mxu0 0
    %9390 = vmatprep.subr.bf16.mxu0 0
    %9391 = vmatpush1.bf16.msra.mxu0 0
    %9392 = vmatprep.subr.bf16.mxu0 0
    %9393 = vmatpush1.bf16.msra.mxu0 0
    %9394 = vmatprep.mubr.bf16.mxu0 0
    %9395 = vmatmul.mubr.bf16.gmra.mrb[0].mxu0 %v9169
    %v9396 = vpop.f32.mrb[0].mxu0
    %v9397 = vadd.f32 0.0, %v9396
    %v9398 = vpop.f32.mrb[0].mxu0
    %v9399 = vadd.f32 0.0, %v9398
    %v9400 = vpop.f32.mrb[0].mxu0
    %v9401 = vpop.f32.mrb[0].mxu0
    %9402 = vdwg.mxu0
    %9403 = vmatprep.subr.bf16.mxu0 %v9301
    %9404 = vmatpush1.bf16.msra.mxu0 %v9300
    %9405 = vmatprep.subr.bf16.mxu0 %v9305
    %9406 = vmatpush1.bf16.msra.mxu0 %v9304
    %9407 = vmatprep.subr.bf16.mxu0 %v9309
    %9408 = vmatpush1.bf16.msra.mxu0 %v9308
    %9409 = vmatprep.subr.bf16.mxu0 %v9313
    %9410 = vmatpush1.bf16.msra.mxu0 %v9312
    %9411 = vmatprep.subr.bf16.mxu0 %v9317
    %9412 = vmatpush1.bf16.msra.mxu0 %v9316
    %9413 = vmatprep.subr.bf16.mxu0 %v9321
    %9414 = vmatpush1.bf16.msra.mxu0 %v9320
    %9415 = vmatprep.subr.bf16.mxu0 %v9325
    %9416 = vmatpush1.bf16.msra.mxu0 %v9324
    %9417 = vmatprep.subr.bf16.mxu0 %v9329
    %9418 = vmatpush1.bf16.msra.mxu0 %v9328
    %9419 = vmatprep.subr.bf16.mxu0 0
    %9420 = vmatpush1.bf16.msra.mxu0 0
    %9421 = vmatprep.subr.bf16.mxu0 0
    %9422 = vmatpush1.bf16.msra.mxu0 0
    %9423 = vmatprep.subr.bf16.mxu0 0
    %9424 = vmatpush1.bf16.msra.mxu0 0
    %9425 = vmatprep.subr.bf16.mxu0 0
    %9426 = vmatpush1.bf16.msra.mxu0 0
    %9427 = vmatprep.subr.bf16.mxu0 0
    %9428 = vmatpush1.bf16.msra.mxu0 0
    %9429 = vmatprep.subr.bf16.mxu0 0
    %9430 = vmatpush1.bf16.msra.mxu0 0
    %9431 = vmatprep.subr.bf16.mxu0 0
    %9432 = vmatpush1.bf16.msra.mxu0 0
    %9433 = vmatprep.subr.bf16.mxu0 0
    %9434 = vmatpush1.bf16.msra.mxu0 0
    %9435 = vmatprep.mubr.bf16.mxu0 0
    %9436 = vmatmul.mubr.bf16.gmra.mrb[0].mxu0 %v9169
    %v9437 = vpop.f32.mrb[0].mxu0
    %v9438 = vadd.f32 0.0, %v9437
    %v9439 = vpop.f32.mrb[0].mxu0
    %v9440 = vadd.f32 0.0, %v9439
    %v9441 = vpop.f32.mrb[0].mxu0
    %v9442 = vpop.f32.mrb[0].mxu0
    %9443 = vdwg.mxu0
    %v9476 = vunpack.c.l.b16 %v8829
    %v9477 = vunpack.c.h.b16 %v8829
    %v9478 = vunpack.c.l.b16 %v8830
    %v9479 = vunpack.c.h.b16 %v8830
    %v9480 = vunpack.c.l.b16 %v8831
    %v9481 = vunpack.c.h.b16 %v8831
    %v9482 = vunpack.c.l.b16 %v8832
    %v9483 = vunpack.c.h.b16 %v8832
    %v9484 = vunpack.c.l.b16 %v8833
    %v9485 = vunpack.c.h.b16 %v8833
    %v9486 = vunpack.c.l.b16 %v8834
    %v9487 = vunpack.c.h.b16 %v8834
    %v9488 = vunpack.c.l.b16 %v8835
    %v9489 = vunpack.c.h.b16 %v8835
    %v9490 = vunpack.c.l.b16 %v8836
    %v9491 = vunpack.c.h.b16 %v8836
    %v9492 = vunpack.c.l.b16 %v8837
    %v9493 = vunpack.c.h.b16 %v8837
    %v9494 = vunpack.c.l.b16 %v8838
    %v9495 = vunpack.c.h.b16 %v8838
    %v9496 = vunpack.c.l.b16 %v8839
    %v9497 = vunpack.c.h.b16 %v8839
    %v9498 = vunpack.c.l.b16 %v8840
    %v9499 = vunpack.c.h.b16 %v8840
    %v9500 = vunpack.c.l.b16 %v8841
    %v9501 = vunpack.c.h.b16 %v8841
    %v9502 = vunpack.c.l.b16 %v8842
    %v9503 = vunpack.c.h.b16 %v8842
    %v9504 = vunpack.c.l.b16 %v8843
    %v9505 = vunpack.c.h.b16 %v8843
    %v9506 = vunpack.c.l.b16 %v8844
    %v9507 = vunpack.c.h.b16 %v8844
    %v9508 = vunpack.c.l.b16 %v8845
    %v9509 = vunpack.c.h.b16 %v8845
    %v9510 = vunpack.c.l.b16 %v8846
    %v9511 = vunpack.c.h.b16 %v8846
    %v9512 = vunpack.c.l.b16 %v8847
    %v9513 = vunpack.c.h.b16 %v8847
    %v9514 = vunpack.c.l.b16 %v8848
    %v9515 = vunpack.c.h.b16 %v8848
    %v9516 = vunpack.c.l.b16 %v8849
    %v9517 = vunpack.c.h.b16 %v8849
    %v9518 = vunpack.c.l.b16 %v8850
    %v9519 = vunpack.c.h.b16 %v8850
    %v9520 = vunpack.c.l.b16 %v8851
    %v9521 = vunpack.c.h.b16 %v8851
    %v9522 = vunpack.c.l.b16 %v8852
    %v9523 = vunpack.c.h.b16 %v8852
    %v9524 = vunpack.c.l.b16 %v8853
    %v9525 = vunpack.c.h.b16 %v8853
    %v9526 = vunpack.c.l.b16 %v8854
    %v9527 = vunpack.c.h.b16 %v8854
    %v9528 = vunpack.c.l.b16 %v8855
    %v9529 = vunpack.c.h.b16 %v8855
    %v9530 = vunpack.c.l.b16 %v8856
    %v9531 = vunpack.c.h.b16 %v8856
    %v9532 = vunpack.c.l.b16 %v8857
    %v9533 = vunpack.c.h.b16 %v8857
    %v9534 = vunpack.c.l.b16 %v8858
    %v9535 = vunpack.c.h.b16 %v8858
    %v9536 = vunpack.c.l.b16 %v8859
    %v9537 = vunpack.c.h.b16 %v8859
    %v9538 = vunpack.c.l.b16 %v8860
    %v9539 = vunpack.c.h.b16 %v8860
    %v9540 = vpack.c.b16 %v9480, %v9476
    %v9541 = vpack.c.b16 %v9481, %v9477
    %v9542 = vpack.c.b16 %v9482, %v9478
    %v9543 = vpack.c.b16 %v9483, %v9479
    %v9544 = vpack.c.b16 %v9488, %v9484
    %v9545 = vpack.c.b16 %v9489, %v9485
    %v9546 = vpack.c.b16 %v9490, %v9486
    %v9547 = vpack.c.b16 %v9491, %v9487
    %v9548 = vpack.c.b16 %v9496, %v9492
    %v9549 = vpack.c.b16 %v9497, %v9493
    %v9550 = vpack.c.b16 %v9498, %v9494
    %v9551 = vpack.c.b16 %v9499, %v9495
    %v9552 = vpack.c.b16 %v9504, %v9500
    %v9553 = vpack.c.b16 %v9505, %v9501
    %v9554 = vpack.c.b16 %v9506, %v9502
    %v9555 = vpack.c.b16 %v9507, %v9503
    %v9556 = vpack.c.b16 %v9512, %v9508
    %v9557 = vpack.c.b16 %v9513, %v9509
    %v9558 = vpack.c.b16 %v9514, %v9510
    %v9559 = vpack.c.b16 %v9515, %v9511
    %v9560 = vpack.c.b16 %v9520, %v9516
    %v9561 = vpack.c.b16 %v9521, %v9517
    %v9562 = vpack.c.b16 %v9522, %v9518
    %v9563 = vpack.c.b16 %v9523, %v9519
    %v9564 = vpack.c.b16 %v9528, %v9524
    %v9565 = vpack.c.b16 %v9529, %v9525
    %v9566 = vpack.c.b16 %v9530, %v9526
    %v9567 = vpack.c.b16 %v9531, %v9527
    %v9568 = vpack.c.b16 %v9536, %v9532
    %v9569 = vpack.c.b16 %v9537, %v9533
    %v9570 = vpack.c.b16 %v9538, %v9534
    %v9571 = vpack.c.b16 %v9539, %v9535
    %9604 = vmatprep.subr.bf16.mxu0 %v9541
    %9605 = vmatpush1.bf16.msra.mxu0 %v9540
    %9606 = vmatprep.subr.bf16.mxu0 %v9545
    %9607 = vmatpush1.bf16.msra.mxu0 %v9544
    %9608 = vmatprep.subr.bf16.mxu0 %v9549
    %9609 = vmatpush1.bf16.msra.mxu0 %v9548
    %9610 = vmatprep.subr.bf16.mxu0 %v9553
    %9611 = vmatpush1.bf16.msra.mxu0 %v9552
    %9612 = vmatprep.subr.bf16.mxu0 %v9557
    %9613 = vmatpush1.bf16.msra.mxu0 %v9556
    %9614 = vmatprep.subr.bf16.mxu0 %v9561
    %9615 = vmatpush1.bf16.msra.mxu0 %v9560
    %9616 = vmatprep.subr.bf16.mxu0 %v9565
    %9617 = vmatpush1.bf16.msra.mxu0 %v9564
    %9618 = vmatprep.subr.bf16.mxu0 %v9569
    %9619 = vmatpush1.bf16.msra.mxu0 %v9568
    %9620 = vmatprep.subr.bf16.mxu0 0
    %9621 = vmatpush1.bf16.msra.mxu0 0
    %9622 = vmatprep.subr.bf16.mxu0 0
    %9623 = vmatpush1.bf16.msra.mxu0 0
    %9624 = vmatprep.subr.bf16.mxu0 0
    %9625 = vmatpush1.bf16.msra.mxu0 0
    %9626 = vmatprep.subr.bf16.mxu0 0
    %9627 = vmatpush1.bf16.msra.mxu0 0
    %9628 = vmatprep.subr.bf16.mxu0 0
    %9629 = vmatpush1.bf16.msra.mxu0 0
    %9630 = vmatprep.subr.bf16.mxu0 0
    %9631 = vmatpush1.bf16.msra.mxu0 0
    %9632 = vmatprep.subr.bf16.mxu0 0
    %9633 = vmatpush1.bf16.msra.mxu0 0
    %9634 = vmatprep.subr.bf16.mxu0 0
    %9635 = vmatpush1.bf16.msra.mxu0 0
    %9636 = vmatprep.mubr.bf16.mxu0 0
    %9637 = vmatmul.mubr.bf16.gmra.mrb[0].mxu0 %v8828
    %v9638 = vpop.f32.mrb[0].mxu0
    %v9639 = vadd.f32 %v9122, %v9638
    %v9640 = vpop.f32.mrb[0].mxu0
    %v9641 = vadd.f32 %v9124, %v9640
    %v9642 = vpop.f32.mrb[0].mxu0
    %v9643 = vpop.f32.mrb[0].mxu0
    %9644 = vdwg.mxu0
    %9645 = vmatprep.subr.bf16.mxu0 %v9543
    %9646 = vmatpush1.bf16.msra.mxu0 %v9542
    %9647 = vmatprep.subr.bf16.mxu0 %v9547
    %9648 = vmatpush1.bf16.msra.mxu0 %v9546
    %9649 = vmatprep.subr.bf16.mxu0 %v9551
    %9650 = vmatpush1.bf16.msra.mxu0 %v9550
    %9651 = vmatprep.subr.bf16.mxu0 %v9555
    %9652 = vmatpush1.bf16.msra.mxu0 %v9554
    %9653 = vmatprep.subr.bf16.mxu0 %v9559
    %9654 = vmatpush1.bf16.msra.mxu0 %v9558
    %9655 = vmatprep.subr.bf16.mxu0 %v9563
    %9656 = vmatpush1.bf16.msra.mxu0 %v9562
    %9657 = vmatprep.subr.bf16.mxu0 %v9567
    %9658 = vmatpush1.bf16.msra.mxu0 %v9566
    %9659 = vmatprep.subr.bf16.mxu0 %v9571
    %9660 = vmatpush1.bf16.msra.mxu0 %v9570
    %9661 = vmatprep.subr.bf16.mxu0 0
    %9662 = vmatpush1.bf16.msra.mxu0 0
    %9663 = vmatprep.subr.bf16.mxu0 0
    %9664 = vmatpush1.bf16.msra.mxu0 0
    %9665 = vmatprep.subr.bf16.mxu0 0
    %9666 = vmatpush1.bf16.msra.mxu0 0
    %9667 = vmatprep.subr.bf16.mxu0 0
    %9668 = vmatpush1.bf16.msra.mxu0 0
    %9669 = vmatprep.subr.bf16.mxu0 0
    %9670 = vmatpush1.bf16.msra.mxu0 0
    %9671 = vmatprep.subr.bf16.mxu0 0
    %9672 = vmatpush1.bf16.msra.mxu0 0
    %9673 = vmatprep.subr.bf16.mxu0 0
    %9674 = vmatpush1.bf16.msra.mxu0 0
    %9675 = vmatprep.subr.bf16.mxu0 0
    %9676 = vmatpush1.bf16.msra.mxu0 0
    %9677 = vmatprep.mubr.bf16.mxu0 0
    %9678 = vmatmul.mubr.bf16.gmra.mrb[0].mxu0 %v8828
    %v9679 = vpop.f32.mrb[0].mxu0
    %v9680 = vadd.f32 %v9163, %v9679
    %v9681 = vpop.f32.mrb[0].mxu0
    %v9682 = vadd.f32 %v9165, %v9681
    %v9683 = vpop.f32.mrb[0].mxu0
    %v9684 = vpop.f32.mrb[0].mxu0
    %9685 = vdwg.mxu0
    %v9686 = vld [vmem:[%s6] sm:$0xf]
    %v9688 = vlaneseq
    %v9689 = vshrl.u32 %v9688, 7
    %v9690 = vsub.s32 0, %v9689
    %v9691 = vrot.slane %v9686, %v9690
    %v9692 = vlaneseq
    %v9693 = vshrl.u32 %v9692, 7
    %v9694 = vsub.s32 1, %v9693
    %v9695 = vrot.slane %v9686, %v9694
    %v9696 = vlaneseq
    %v9697 = vshrl.u32 %v9696, 7
    %v9698 = vsub.s32 2, %v9697
    %v9699 = vrot.slane %v9686, %v9698
    %v9700 = vlaneseq
    %v9701 = vshrl.u32 %v9700, 7
    %v9702 = vsub.s32 3, %v9701
    %v9703 = vrot.slane %v9686, %v9702
    %v9708 = vadd.f32 %v9639, %v9691
    %v9709 = vadd.f32 %v9641, %v9695
    %v9710 = vadd.f32 %v9680, %v9699
    %v9711 = vadd.f32 %v9682, %v9703
    %v9712 = vxor.u32 %v9708, 2147483648
    %v9713 = vmul.f32 %v9712, 1.442695
    %v9714 = vpow.pop %v9713
    %v9715 = vadd.f32 %v9714, 1.0
    %v9716 = vrcp.pop %v9715
    %v9717 = vmul.f32 1.0, %v9716
    %v9718 = vxor.u32 %v9709, 2147483648
    %v9719 = vmul.f32 %v9718, 1.442695
    %v9720 = vpow.pop %v9719
    %v9721 = vadd.f32 %v9720, 1.0
    %v9722 = vrcp.pop %v9721
    %v9723 = vmul.f32 1.0, %v9722
    %v9724 = vtanh.pop %v9710
    %v9725 = vxor.u32 %v9711, 2147483648
    %v9726 = vmul.f32 %v9725, 1.442695
    %v9727 = vpow.pop %v9726
    %v9728 = vadd.f32 %v9727, 1.0
    %v9729 = vrcp.pop %v9728
    %v9730 = vmul.f32 1.0, %v9729
    %v9731 = vmul.f32 %v9723, %v8823
    %v9732 = vmul.f32 %v9717, %v9724
    %v9733 = vadd.f32 %v9731, %v9732
    %v9734 = vtanh.pop %v9733
    %v9735 = vmul.f32 %v9730, %v9734
    %v9768 = vunpack.c.l.b16 %v8862
    %v9769 = vunpack.c.h.b16 %v8862
    %v9770 = vunpack.c.l.b16 %v8863
    %v9771 = vunpack.c.h.b16 %v8863
    %v9772 = vunpack.c.l.b16 %v8864
    %v9773 = vunpack.c.h.b16 %v8864
    %v9774 = vunpack.c.l.b16 %v8865
    %v9775 = vunpack.c.h.b16 %v8865
    %v9776 = vunpack.c.l.b16 %v8866
    %v9777 = vunpack.c.h.b16 %v8866
    %v9778 = vunpack.c.l.b16 %v8867
    %v9779 = vunpack.c.h.b16 %v8867
    %v9780 = vunpack.c.l.b16 %v8868
    %v9781 = vunpack.c.h.b16 %v8868
    %v9782 = vunpack.c.l.b16 %v8869
    %v9783 = vunpack.c.h.b16 %v8869
    %v9784 = vunpack.c.l.b16 %v8870
    %v9785 = vunpack.c.h.b16 %v8870
    %v9786 = vunpack.c.l.b16 %v8871
    %v9787 = vunpack.c.h.b16 %v8871
    %v9788 = vunpack.c.l.b16 %v8872
    %v9789 = vunpack.c.h.b16 %v8872
    %v9790 = vunpack.c.l.b16 %v8873
    %v9791 = vunpack.c.h.b16 %v8873
    %v9792 = vunpack.c.l.b16 %v8874
    %v9793 = vunpack.c.h.b16 %v8874
    %v9794 = vunpack.c.l.b16 %v8875
    %v9795 = vunpack.c.h.b16 %v8875
    %v9796 = vunpack.c.l.b16 %v8876
    %v9797 = vunpack.c.h.b16 %v8876
    %v9798 = vunpack.c.l.b16 %v8877
    %v9799 = vunpack.c.h.b16 %v8877
    %v9800 = vunpack.c.l.b16 %v8878
    %v9801 = vunpack.c.h.b16 %v8878
    %v9802 = vunpack.c.l.b16 %v8879
    %v9803 = vunpack.c.h.b16 %v8879
    %v9804 = vunpack.c.l.b16 %v8880
    %v9805 = vunpack.c.h.b16 %v8880
    %v9806 = vunpack.c.l.b16 %v8881
    %v9807 = vunpack.c.h.b16 %v8881
    %v9808 = vunpack.c.l.b16 %v8882
    %v9809 = vunpack.c.h.b16 %v8882
    %v9810 = vunpack.c.l.b16 %v8883
    %v9811 = vunpack.c.h.b16 %v8883
    %v9812 = vunpack.c.l.b16 %v8884
    %v9813 = vunpack.c.h.b16 %v8884
    %v9814 = vunpack.c.l.b16 %v8885
    %v9815 = vunpack.c.h.b16 %v8885
    %v9816 = vunpack.c.l.b16 %v8886
    %v9817 = vunpack.c.h.b16 %v8886
    %v9818 = vunpack.c.l.b16 %v8887
    %v9819 = vunpack.c.h.b16 %v8887
    %v9820 = vunpack.c.l.b16 %v8888
    %v9821 = vunpack.c.h.b16 %v8888
    %v9822 = vunpack.c.l.b16 %v8889
    %v9823 = vunpack.c.h.b16 %v8889
    %v9824 = vunpack.c.l.b16 %v8890
    %v9825 = vunpack.c.h.b16 %v8890
    %v9826 = vunpack.c.l.b16 %v8891
    %v9827 = vunpack.c.h.b16 %v8891
    %v9828 = vunpack.c.l.b16 %v8892
    %v9829 = vunpack.c.h.b16 %v8892
    %v9830 = vunpack.c.l.b16 %v8893
    %v9831 = vunpack.c.h.b16 %v8893
    %v9832 = vpack.c.b16 %v9772, %v9768
    %v9833 = vpack.c.b16 %v9773, %v9769
    %v9834 = vpack.c.b16 %v9774, %v9770
    %v9835 = vpack.c.b16 %v9775, %v9771
    %v9836 = vpack.c.b16 %v9780, %v9776
    %v9837 = vpack.c.b16 %v9781, %v9777
    %v9838 = vpack.c.b16 %v9782, %v9778
    %v9839 = vpack.c.b16 %v9783, %v9779
    %v9840 = vpack.c.b16 %v9788, %v9784
    %v9841 = vpack.c.b16 %v9789, %v9785
    %v9842 = vpack.c.b16 %v9790, %v9786
    %v9843 = vpack.c.b16 %v9791, %v9787
    %v9844 = vpack.c.b16 %v9796, %v9792
    %v9845 = vpack.c.b16 %v9797, %v9793
    %v9846 = vpack.c.b16 %v9798, %v9794
    %v9847 = vpack.c.b16 %v9799, %v9795
    %v9848 = vpack.c.b16 %v9804, %v9800
    %v9849 = vpack.c.b16 %v9805, %v9801
    %v9850 = vpack.c.b16 %v9806, %v9802
    %v9851 = vpack.c.b16 %v9807, %v9803
    %v9852 = vpack.c.b16 %v9812, %v9808
    %v9853 = vpack.c.b16 %v9813, %v9809
    %v9854 = vpack.c.b16 %v9814, %v9810
    %v9855 = vpack.c.b16 %v9815, %v9811
    %v9856 = vpack.c.b16 %v9820, %v9816
    %v9857 = vpack.c.b16 %v9821, %v9817
    %v9858 = vpack.c.b16 %v9822, %v9818
    %v9859 = vpack.c.b16 %v9823, %v9819
    %v9860 = vpack.c.b16 %v9828, %v9824
    %v9861 = vpack.c.b16 %v9829, %v9825
    %v9862 = vpack.c.b16 %v9830, %v9826
    %v9863 = vpack.c.b16 %v9831, %v9827
    %9896 = vmatprep.subr.bf16.mxu0 %v9833
    %9897 = vmatpush1.bf16.msra.mxu0 %v9832
    %9898 = vmatprep.subr.bf16.mxu0 %v9837
    %9899 = vmatpush1.bf16.msra.mxu0 %v9836
    %9900 = vmatprep.subr.bf16.mxu0 %v9841
    %9901 = vmatpush1.bf16.msra.mxu0 %v9840
    %9902 = vmatprep.subr.bf16.mxu0 %v9845
    %9903 = vmatpush1.bf16.msra.mxu0 %v9844
    %9904 = vmatprep.subr.bf16.mxu0 %v9849
    %9905 = vmatpush1.bf16.msra.mxu0 %v9848
    %9906 = vmatprep.subr.bf16.mxu0 %v9853
    %9907 = vmatpush1.bf16.msra.mxu0 %v9852
    %9908 = vmatprep.subr.bf16.mxu0 %v9857
    %9909 = vmatpush1.bf16.msra.mxu0 %v9856
    %9910 = vmatprep.subr.bf16.mxu0 %v9861
    %9911 = vmatpush1.bf16.msra.mxu0 %v9860
    %9912 = vmatprep.subr.bf16.mxu0 0
    %9913 = vmatpush1.bf16.msra.mxu0 0
    %9914 = vmatprep.subr.bf16.mxu0 0
    %9915 = vmatpush1.bf16.msra.mxu0 0
    %9916 = vmatprep.subr.bf16.mxu0 0
    %9917 = vmatpush1.bf16.msra.mxu0 0
    %9918 = vmatprep.subr.bf16.mxu0 0
    %9919 = vmatpush1.bf16.msra.mxu0 0
    %9920 = vmatprep.subr.bf16.mxu0 0
    %9921 = vmatpush1.bf16.msra.mxu0 0
    %9922 = vmatprep.subr.bf16.mxu0 0
    %9923 = vmatpush1.bf16.msra.mxu0 0
    %9924 = vmatprep.subr.bf16.mxu0 0
    %9925 = vmatpush1.bf16.msra.mxu0 0
    %9926 = vmatprep.subr.bf16.mxu0 0
    %9927 = vmatpush1.bf16.msra.mxu0 0
    %9928 = vmatprep.mubr.bf16.mxu0 0
    %9929 = vmatmul.mubr.bf16.gmra.mrb[0].mxu0 %v8861
    %v9930 = vpop.f32.mrb[0].mxu0
    %v9931 = vadd.f32 %v9397, %v9930
    %v9932 = vpop.f32.mrb[0].mxu0
    %v9933 = vadd.f32 %v9399, %v9932
    %v9934 = vpop.f32.mrb[0].mxu0
    %v9935 = vpop.f32.mrb[0].mxu0
    %9936 = vdwg.mxu0
    %9937 = vmatprep.subr.bf16.mxu0 %v9835
    %9938 = vmatpush1.bf16.msra.mxu0 %v9834
    %9939 = vmatprep.subr.bf16.mxu0 %v9839
    %9940 = vmatpush1.bf16.msra.mxu0 %v9838
    %9941 = vmatprep.subr.bf16.mxu0 %v9843
    %9942 = vmatpush1.bf16.msra.mxu0 %v9842
    %9943 = vmatprep.subr.bf16.mxu0 %v9847
    %9944 = vmatpush1.bf16.msra.mxu0 %v9846
    %9945 = vmatprep.subr.bf16.mxu0 %v9851
    %9946 = vmatpush1.bf16.msra.mxu0 %v9850
    %9947 = vmatprep.subr.bf16.mxu0 %v9855
    %9948 = vmatpush1.bf16.msra.mxu0 %v9854
    %9949 = vmatprep.subr.bf16.mxu0 %v9859
    %9950 = vmatpush1.bf16.msra.mxu0 %v9858
    %9951 = vmatprep.subr.bf16.mxu0 %v9863
    %9952 = vmatpush1.bf16.msra.mxu0 %v9862
    %9953 = vmatprep.subr.bf16.mxu0 0
    %9954 = vmatpush1.bf16.msra.mxu0 0
    %9955 = vmatprep.subr.bf16.mxu0 0
    %9956 = vmatpush1.bf16.msra.mxu0 0
    %9957 = vmatprep.subr.bf16.mxu0 0
    %9958 = vmatpush1.bf16.msra.mxu0 0
    %9959 = vmatprep.subr.bf16.mxu0 0
    %9960 = vmatpush1.bf16.msra.mxu0 0
    %9961 = vmatprep.subr.bf16.mxu0 0
    %9962 = vmatpush1.bf16.msra.mxu0 0
    %9963 = vmatprep.subr.bf16.mxu0 0
    %9964 = vmatpush1.bf16.msra.mxu0 0
    %9965 = vmatprep.subr.bf16.mxu0 0
    %9966 = vmatpush1.bf16.msra.mxu0 0
    %9967 = vmatprep.subr.bf16.mxu0 0
    %9968 = vmatpush1.bf16.msra.mxu0 0
    %9969 = vmatprep.mubr.bf16.mxu0 0
    %9970 = vmatmul.mubr.bf16.gmra.mrb[0].mxu0 %v8861
    %v9971 = vpop.f32.mrb[0].mxu0
    %v9972 = vadd.f32 %v9438, %v9971
    %v9973 = vpop.f32.mrb[0].mxu0
    %v9974 = vadd.f32 %v9440, %v9973
    %v9975 = vpop.f32.mrb[0].mxu0
    %v9976 = vpop.f32.mrb[0].mxu0
    %9977 = vdwg.mxu0
    %v9978 = vld [vmem:[%s1299] sm:$0xf]
    %v9980 = vlaneseq
    %v9981 = vshrl.u32 %v9980, 7
    %v9982 = vsub.s32 0, %v9981
    %v9983 = vrot.slane %v9978, %v9982
    %v9984 = vlaneseq
    %v9985 = vshrl.u32 %v9984, 7
    %v9986 = vsub.s32 1, %v9985
    %v9987 = vrot.slane %v9978, %v9986
    %v9988 = vlaneseq
    %v9989 = vshrl.u32 %v9988, 7
    %v9990 = vsub.s32 2, %v9989
    %v9991 = vrot.slane %v9978, %v9990
    %v9992 = vlaneseq
    %v9993 = vshrl.u32 %v9992, 7
    %v9994 = vsub.s32 3, %v9993
    %v9995 = vrot.slane %v9978, %v9994
    %v10000 = vadd.f32 %v9931, %v9983
    %v10001 = vadd.f32 %v9933, %v9987
    %v10002 = vadd.f32 %v9972, %v9991
    %v10003 = vadd.f32 %v9974, %v9995
    %v10004 = vxor.u32 %v10000, 2147483648
    %v10005 = vmul.f32 %v10004, 1.442695
    %v10006 = vpow.pop %v10005
    %v10007 = vadd.f32 %v10006, 1.0
    %v10008 = vrcp.pop %v10007
    %v10009 = vmul.f32 1.0, %v10008
    %v10010 = vxor.u32 %v10001, 2147483648
    %v10011 = vmul.f32 %v10010, 1.442695
    %v10012 = vpow.pop %v10011
    %v10013 = vadd.f32 %v10012, 1.0
    %v10014 = vrcp.pop %v10013
    %v10015 = vmul.f32 1.0, %v10014
    %v10016 = vtanh.pop %v10002
    %v10017 = vxor.u32 %v10003, 2147483648
    %v10018 = vmul.f32 %v10017, 1.442695
    %v10019 = vpow.pop %v10018
    %v10020 = vadd.f32 %v10019, 1.0
    %v10021 = vrcp.pop %v10020
    %v10022 = vmul.f32 1.0, %v10021
    %v10023 = vmul.f32 %v10015, %v8826
    %v10024 = vmul.f32 %v10009, %v10016
    %v10025 = vadd.f32 %v10023, %v10024
    %v10026 = vtanh.pop %v10025
    %v10027 = vmul.f32 %v10022, %v10026
    %10029 = vset.pattern.permute.xlu0 0
    %10030 = vperm.xlu0 %10029, %v117
    %v10031 = vpop.permute.xlu0 %10030
    %v10033 = vmul.f32 %v10031, %v9735
    %10035 = vset.pattern.permute.xlu0 0
    %10036 = vperm.xlu0 %10035, %v118
    %v10037 = vpop.permute.xlu0 %10036
    %v10039 = vmul.f32 %v10037, %v10027
    %v10040 = vpack.c.bf16 %v10033, %v10033
    %s10041 = scalar_lea.vmem [#allocation11], 7
    %10042 = vst [vmem:[%s10041] sm:$0x1] %v10040
    %v10043 = vpack.c.bf16 %v10039, %v10039
    %10044 = vst [vmem:[#allocation12] sm:$0x1] %v10043
    %10046 = vset.pattern.permute.xlu0 0
    %10047 = vperm.xlu0 %10046, %v133
    %v10048 = vpop.permute.xlu0 %10047
    %v10050 = vmul.f32 %v10048, %v8813
    %v10051 = vadd.f32 %v10033, %v10050
    %10053 = vset.pattern.permute.xlu0 0
    %10054 = vperm.xlu0 %10053, %v134
    %v10055 = vpop.permute.xlu0 %10054
    %v10057 = vmul.f32 %v10055, %v8820
    %v10058 = vadd.f32 %v10039, %v10057
    %v10059 = vmul.f32 %v10031, %v9733
    %v10060 = vmul.f32 %v10048, %v8823
    %v10061 = vadd.f32 %v10059, %v10060
    %v10062 = vmul.f32 %v10037, %v10025
    %v10063 = vmul.f32 %v10055, %v8826
    %v10064 = vadd.f32 %v10062, %v10063
    %10065 = vst [vmem:[#allocation2] sm:$0x3] %v10051
    %10066 = vst [vmem:[#allocation3] sm:$0x3] %v10058
    %10067 = vst [vmem:[#allocation4] sm:$0x3] %v10061
    %10068 = vst [vmem:[#allocation5] sm:$0x3] %v10064
    // Predicated region
    $region42: #{tpu_custom_call.1} parent=1 // pred_check
      _
    $region43: #{tpu_custom_call.1} parent=1 // pred_check_branch
      %10070 = sbr.rel (0) target = $region45
    $region44: #{tpu_custom_call.1} parent=1 // pred_region
      %s10072 = ssub.s32 128, 128
      %10073 = vsyncadd [#allocation8], %s10072
      %s10074 = sshll.u32 [#allocation11], 4
      %s10075 = int_to_ptr.vmem [resolvable:$true] %s10074
      %10080 = dma.vmem_to_hbm [thread:$0]  %s10075, 128, %s7, [#allocation8], 16, 16, 1
    $region45: #{tpu_custom_call.1} parent=1 // pred_fallthru
      _
    // Predicated region
    $region46: #{tpu_custom_call.1} parent=1 // pred_check
      _
    $region47: #{tpu_custom_call.1} parent=1 // pred_check_branch
      %10082 = sbr.rel (0) target = $region49
    $region48: #{tpu_custom_call.1} parent=1 // pred_region
      %s10083 = ssub.s32 0, 0
      %s10084 = smul.u32 8, %s10083
      %s10086 = ssub.s32 128, 128
      %10087 = vsyncadd [#allocation13], %s10086
      %s10088 = smul.addr %s10084, 16
      %s10089 = scalar_lea.hbm %s8, %s10088
      %s10090 = sshll.u32 [#allocation12], 4
      %s10091 = int_to_ptr.vmem [resolvable:$true] %s10090
      %10096 = dma.vmem_to_hbm [thread:$0]  %s10091, 128, %s10089, [#allocation13], 16, 16, 1
    $region49: #{tpu_custom_call.1} parent=1 // pred_fallthru
      _
    // Predicated region
    $region50: #{tpu_custom_call.1} parent=1 // pred_check
      _
    $region51: #{tpu_custom_call.1} parent=1 // pred_check_branch
      %10098 = sbr.rel (0) target = $region53
    $region52: #{tpu_custom_call.1} parent=1 // pred_region
      %10099 = dma.done [#allocation8], 128
    $region53: #{tpu_custom_call.1} parent=1 // pred_fallthru
      _
    // Predicated region
    $region54: #{tpu_custom_call.1} parent=1 // pred_check
      _
    $region55: #{tpu_custom_call.1} parent=1 // pred_check_branch
      %10101 = sbr.rel (0) target = $region57
    $region56: #{tpu_custom_call.1} parent=1 // pred_region
      %10102 = dma.done [#allocation13], 128
    $region57: #{tpu_custom_call.1} parent=1 // pred_fallthru
      _
    %10103 = vsyncpa [#allocation7], 1
    %10104 = vsyncpa [#allocation10], 1
    %10105 = vsyncpa [#allocation8], 1
    %10106 = vsyncpa [#allocation13], 1

</llo_original>
